<compile_context>
chip_gen: v7x
topology: tpu7x:2x2x1
jax: 0.10.0
libtpu: 0.0.40
codegen_flags: <defaults>
</compile_context>

<pallas_src>
import functools

import jax
import jax.numpy as jnp
from jax.experimental import pallas as pl
from jax.experimental.pallas import tpu as pltpu

# ----------------------------------------------------------------------------
# Small synthetic hyper-parameters (shapes consistent with dctts Hyper)
# ----------------------------------------------------------------------------
VOCAB = "PE abcdefghijklmnopqrstuvwxyz'.?"   # padding char 'P' at index 0
PAD_IDX = VOCAB.find("P")
DIM_E = 32          # char embedding dim
DIM_D = 32          # decoder dim; encoder channels = 2 * DIM_D
C2 = 2 * DIM_D      # 64


def _make_hw_cfg():
    cfg = []
    for _ in range(2):
        for j in range(4):
            cfg.append((3, 3 ** j))        # kernel=3, dilation=3**j
    for j in [1, 0]:
        for _ in range(2):
            cfg.append((3 ** j, 1))        # kernel=3 then kernel=1, dilation=1
    for k, _ in cfg:
        assert k % 2 == 1, "even kernel sizes would truncate 'same' padding"
    return tuple(cfg)


HW_CFG = _make_hw_cfg()                     # 12 highway layers (10 K=3, 2 K=1)
HALO = 32                                   # >= max pad (27), bf16-sublane aligned


# ----------------------------------------------------------------------------
# Fused Pallas kernel: embedding + full conv stack, activation stays in VMEM
# ----------------------------------------------------------------------------
def _text_encoder_kernel(tok_ref, emb_ref, w0_ref, b0_ref, w1_ref, b1_ref,
                         wh3_ref, wh1_ref, bh_ref, k_ref, v_ref, xpad_ref,
                         *, Bb, T, C2, hw_cfg, halo):
    M = Bb * T
    V = emb_ref.shape[0]
    dim_d = C2 // 2

    # ---- char embedding as one-hot @ table (keeps the gather on the MXU) ----
    tok = tok_ref[...]                                            # (Bb, T, 1) i32
    iota = jax.lax.broadcasted_iota(jnp.int32, (Bb, T, V), 2)
    onehot = (iota == tok).astype(jnp.bfloat16).reshape(M, V)
    x = jnp.dot(onehot, emb_ref[...],
                preferred_element_type=jnp.float32)               # (M, DIM_E) f32
    # padding row of the table is zero -> padding_idx semantics preserved.

    # ---- conv_0 (1x1) + ReLU, conv_1 (1x1); dropout = identity ----
    x = jnp.dot(x.astype(jnp.bfloat16), w0_ref[...],
                preferred_element_type=jnp.float32) + b0_ref[...]
    x = jnp.maximum(x, 0.0)                                       # (M, C2) f32
    x = jnp.dot(x.astype(jnp.bfloat16), w1_ref[...],
                preferred_element_type=jnp.float32) + b1_ref[...]

    # ---- zero ONLY the halo strips (interior is rewritten per K=3 layer) ----
    xpad_ref[:, :halo, :] = jnp.zeros((Bb, halo, C2), dtype=xpad_ref.dtype)
    xpad_ref[:, halo + T:2 * halo + T, :] = jnp.zeros(
        (Bb, halo, C2), dtype=xpad_ref.dtype)

    # ---- 12 highway conv layers, fully unrolled, activations VMEM-resident ----
    i3 = 0   # index into stacked K=3 weights
    i1 = 0   # index into stacked K=1 weights
    for li, (K, dil) in enumerate(hw_cfg):
        b = bh_ref[li:li + 1, :]                                  # (1, 2*C2) f32
        if K == 1:
            acc = jnp.dot(x.astype(jnp.bfloat16), wh1_ref[i1],
                          preferred_element_type=jnp.float32) + b
            i1 += 1
        else:
            pad = (K - 1) * dil // 2
            # refresh interior (bf16); halo stays zero
            xpad_ref[:, halo:halo + T, :] = (
                x.astype(jnp.bfloat16).reshape(Bb, T, C2))
            # K accumulated small dots instead of lane-concat + one wide dot
            acc = b
            for t in range(K):
                start = halo - pad + t * dil
                tap = xpad_ref[:, start:start + T, :].reshape(M, C2)   # bf16
                acc = acc + jnp.dot(
                    tap, wh3_ref[i3, t * C2:(t + 1) * C2, :],
                    preferred_element_type=jnp.float32)
            i3 += 1
        # HighwayConv1d: H1, H2 = chunk(acc, 2); out = sigmoid(H1)*H2 + (1-s)*x
        gate = jax.nn.sigmoid(acc[:, :C2])                        # f32 (v5e-safe)
        x = x + gate * (acc[:, C2:] - x)

    # ---- chunk + NCT transpose in-kernel: two lane-layout (dim_d, T) stores ----
    for bi in range(Bb):
        xt = x[bi * T:(bi + 1) * T, :].T                          # (C2, T) f32
        k_ref[bi] = xt[:dim_d, :].astype(k_ref.dtype)
        v_ref[bi] = xt[dim_d:, :].astype(v_ref.dtype)


# ----------------------------------------------------------------------------
# Deterministic parameter construction (synthetic weights, no checkpoint)
# ----------------------------------------------------------------------------
def build_params(key):
    params = {}
    counter = [0]

    def nxt():
        counter[0] += 1
        return jax.random.fold_in(key, counter[0])

    # char embedding (padding_idx row zeroed, like nn.Embedding(padding_idx=...))
    emb = jax.random.normal(nxt(), (len(VOCAB), DIM_E), jnp.float32) * 0.1
    emb = emb.at[PAD_IDX].set(0.0)
    params["embed"] = emb.astype(jnp.bfloat16)

    def conv_w(kern, cin, cout):
        scale = 1.0 / jnp.sqrt(jnp.float32(kern * cin))
        return jax.random.normal(nxt(), (kern, cin, cout), jnp.float32) * scale

    # conv_0: dim_e -> 2*dim_d, k=1 ; conv_1: 2*dim_d -> 2*dim_d, k=1
    params["conv0_w"] = conv_w(1, DIM_E, C2)[0].astype(jnp.bfloat16)   # (DIM_E, C2)
    params["conv0_b"] = jax.random.normal(nxt(), (1, C2), jnp.float32) * 0.05
    params["conv1_w"] = conv_w(1, C2, C2)[0].astype(jnp.bfloat16)      # (C2, C2)
    params["conv1_b"] = jax.random.normal(nxt(), (1, C2), jnp.float32) * 0.05

    # highway conv stack: pre-reshape each (K, C, 2C) weight to (K*C, 2C) and
    # stack by kernel size so the fused kernel takes 3 arrays, not 24.
    w3, w1, bs = [], [], []
    for (kern, _) in HW_CFG:
        w = conv_w(kern, C2, 2 * C2).reshape(kern * C2, 2 * C2)
        (w3 if kern == 3 else w1).append(w.astype(jnp.bfloat16))
        bs.append(jax.random.normal(nxt(), (2 * C2,), jnp.float32) * 0.05)
    params["hw_w3"] = jnp.stack(w3)          # (10, 3*C2, 2*C2) bf16
    params["hw_w1"] = jnp.stack(w1)          # ( 2,   C2, 2*C2) bf16
    params["hw_b"] = jnp.stack(bs)           # (12, 2*C2) f32
    return params


def _pick_block_b(B, T, rows_target=256):
    """Largest divisor of B whose block gives ~rows_target matmul rows."""
    want = max(1, rows_target // max(T, 1))
    bb = 1
    for d in range(1, B + 1):
        if B % d == 0 and d <= want:
            bb = d
    return bb


# ----------------------------------------------------------------------------
# TextEncoder forward (single fused pallas_call, batch-parallel grid)
# ----------------------------------------------------------------------------
def text_encoder(tokens, params, *, block_b=None, rows_target=256):
    """tokens: (B, T) int32 char ids.  Returns (k, v), each (B, DIM_D, T)."""
    B, T = tokens.shape
    if block_b is None:
        block_b = _pick_block_b(B, T, rows_target)
    if B % block_b != 0:
        raise ValueError(f"block_b={block_b} must divide B={B}")
    grid = (B // block_b,)
    tpad = T + 2 * HALO

    kernel = functools.partial(
        _text_encoder_kernel, Bb=block_b, T=T, C2=C2, hw_cfg=HW_CFG, halo=HALO)

    def const_spec(shape):          # full-array block, constant index -> resident
        return pl.BlockSpec(shape, lambda g, _s=shape: (0,) * len(_s))

    in_specs = [
        pl.BlockSpec((block_b, T, 1), lambda g: (g, 0, 0)),        # tokens
        const_spec(params["embed"].shape),
        const_spec(params["conv0_w"].shape),
        const_spec(params["conv0_b"].shape),
        const_spec(params["conv1_w"].shape),
        const_spec(params["conv1_b"].shape),
        const_spec(params["hw_w3"].shape),
        const_spec(params["hw_w1"].shape),
        const_spec(params["hw_b"].shape),
    ]
    out_specs = (
        pl.BlockSpec((block_b, DIM_D, T), lambda g: (g, 0, 0)),    # k
        pl.BlockSpec((block_b, DIM_D, T), lambda g: (g, 0, 0)),    # v
    )
    out_shape = (
        jax.ShapeDtypeStruct((B, DIM_D, T), jnp.float32),
        jax.ShapeDtypeStruct((B, DIM_D, T), jnp.float32),
    )

    # ---- advisory cost estimate + explicit VMEM ceiling (v7x has 64 MiB) ----
    n_k3 = sum(1 for k, _ in HW_CFG if k == 3)
    n_k1 = len(HW_CFG) - n_k3
    m_total = B * T
    flops = 2 * m_total * (len(VOCAB) * DIM_E + DIM_E * C2 + C2 * C2)
    flops += 2 * m_total * C2 * (2 * C2) * (3 * n_k3 + n_k1)
    transcendentals = len(HW_CFG) * m_total * C2
    param_bytes = sum(int(v.size) * v.dtype.itemsize for v in params.values())
    bytes_accessed = 4 * B * T + param_bytes + 2 * B * DIM_D * T * 4

    xpad_bytes = block_b * tpad * C2 * 2                           # bf16 scratch
    io_bytes = 2 * (block_b * T * 4) + 2 * 2 * (block_b * DIM_D * T * 4)
    act_slack = 16 * block_b * T * (2 * C2) * 4                    # unrolled temps
    vmem_limit = int(min(32 * 2 ** 20,
                         max(16 * 2 ** 20,
                             2 * param_bytes + xpad_bytes + io_bytes
                             + act_slack + (4 << 20))))

    k_out, v_out = pl.pallas_call(
        kernel,
        grid=grid,
        out_shape=out_shape,
        in_specs=in_specs,
        out_specs=out_specs,
        scratch_shapes=[pltpu.VMEM((block_b, tpad, C2), jnp.bfloat16)],
        compiler_params=pltpu.CompilerParams(
            dimension_semantics=("parallel",),
            vmem_limit_bytes=vmem_limit),
        cost_estimate=pl.CostEstimate(
            flops=flops, transcendentals=transcendentals,
            bytes_accessed=bytes_accessed),
    )(
        tokens.reshape(B, T, 1),
        params["embed"],
        params["conv0_w"], params["conv0_b"],
        params["conv1_w"], params["conv1_b"],
        params["hw_w3"], params["hw_w1"], params["hw_b"],
    )
    return k_out, v_out


# ----------------------------------------------------------------------------
# Pure-JAX reference (same eval-mode semantics) for correctness checking
# ----------------------------------------------------------------------------
def text_encoder_ref(tokens, params):
    B, T = tokens.shape
    x = params["embed"].astype(jnp.float32)[tokens]                 # (B, T, DIM_E)
    x = x @ params["conv0_w"].astype(jnp.float32) + params["conv0_b"]
    x = jnp.maximum(x, 0.0)
    x = x @ params["conv1_w"].astype(jnp.float32) + params["conv1_b"]
    i3 = i1 = 0
    for li, (K, dil) in enumerate(HW_CFG):
        b = params["hw_b"][li]
        if K == 1:
            acc = x @ params["hw_w1"][i1].astype(jnp.float32) + b
            i1 += 1
        else:
            pad = (K - 1) * dil // 2
            xp = jnp.pad(x, ((0, 0), (pad, pad), (0, 0)))
            w = params["hw_w3"][i3].astype(jnp.float32).reshape(K, C2, 2 * C2)
            acc = b
            for t in range(K):
                acc = acc + xp[:, t * dil:t * dil + T, :] @ w[t]
            i3 += 1
        gate = jax.nn.sigmoid(acc[..., :C2])
        x = gate * acc[..., C2:] + (1.0 - gate) * x
    k = jnp.transpose(x[..., :DIM_D], (0, 2, 1))
    v = jnp.transpose(x[..., DIM_D:], (0, 2, 1))
    return k, v


# ----------------------------------------------------------------------------
if __name__ == "__main__":
    root = jax.random.PRNGKey(0)
    B, T = 4, 64                       # small demo; block_b=2 -> 2 grid steps
    tok_key, param_key = jax.random.split(root)
    tokens = jax.random.randint(tok_key, (B, T), 0, len(VOCAB), dtype=jnp.int32)

    params = build_params(param_key)

    fwd = jax.jit(functools.partial(text_encoder, block_b=2))
    k_out, v_out = fwd(tokens, params)
    jax.block_until_ready((k_out, v_out))

    assert k_out.shape == (B, DIM_D, T), k_out.shape
    assert v_out.shape == (B, DIM_D, T), v_out.shape
    assert k_out.dtype == jnp.float32 and v_out.dtype == jnp.float32
    assert bool(jnp.all(jnp.isfinite(k_out))) and bool(jnp.all(jnp.isfinite(v_out)))

    # correctness vs pure-JAX reference (bf16 matmul operands -> small drift)
    k_ref, v_ref = text_encoder_ref(tokens, params)
    err = max(float(jnp.max(jnp.abs(k_out - k_ref))),
              float(jnp.max(jnp.abs(v_out - v_ref))))
    assert err < 5e-2, f"max abs error vs reference = {err}"

    print("KERNEL_OK")
</pallas_src>

<mosaic_0001>
module attributes {stable_mosaic.version = 11 : i64} {
  func.func @_text_encoder_kernel(%arg0: i32, %arg1: memref<2x64x1xi32, #tpu.memory_space<vmem>>, %arg2: memref<32x32xbf16, #tpu.memory_space<vmem>>, %arg3: memref<32x64xbf16, #tpu.memory_space<vmem>>, %arg4: memref<1x64xf32, #tpu.memory_space<vmem>>, %arg5: memref<64x64xbf16, #tpu.memory_space<vmem>>, %arg6: memref<1x64xf32, #tpu.memory_space<vmem>>, %arg7: memref<10x192x128xbf16, #tpu.memory_space<vmem>>, %arg8: memref<2x64x128xbf16, #tpu.memory_space<vmem>>, %arg9: memref<12x128xf32, #tpu.memory_space<vmem>>, %arg10: memref<2x32x64xf32, #tpu.memory_space<vmem>>, %arg11: memref<2x32x64xf32, #tpu.memory_space<vmem>>, %arg12: memref<2x128x64xbf16, #tpu.memory_space<vmem>>) attributes {dimension_semantics = [#tpu.dimension_semantics<parallel>], iteration_bounds = array<i64: 2>, scalar_prefetch = 0 : i64, scratch_operands = 1 : i64, tpu.core_type = #tpu.core_type<tc>, window_params = [{transform_indices = @transform_0, window_bounds = array<i64: 2, 64, 1>}, {pipeline_mode = #tpu.pipeline_mode<synchronous>, transform_indices = @transform_1, window_bounds = array<i64: 32, 32>}, {pipeline_mode = #tpu.pipeline_mode<synchronous>, transform_indices = @transform_2, window_bounds = array<i64: 32, 64>}, {pipeline_mode = #tpu.pipeline_mode<synchronous>, transform_indices = @transform_3, window_bounds = array<i64: 1, 64>}, {pipeline_mode = #tpu.pipeline_mode<synchronous>, transform_indices = @transform_4, window_bounds = array<i64: 64, 64>}, {pipeline_mode = #tpu.pipeline_mode<synchronous>, transform_indices = @transform_5, window_bounds = array<i64: 1, 64>}, {pipeline_mode = #tpu.pipeline_mode<synchronous>, transform_indices = @transform_6, window_bounds = array<i64: 10, 192, 128>}, {pipeline_mode = #tpu.pipeline_mode<synchronous>, transform_indices = @transform_7, window_bounds = array<i64: 2, 64, 128>}, {pipeline_mode = #tpu.pipeline_mode<synchronous>, transform_indices = @transform_8, window_bounds = array<i64: 12, 128>}, {transform_indices = @transform_9, window_bounds = array<i64: 2, 32, 64>}, {transform_indices = @transform_10, window_bounds = array<i64: 2, 32, 64>}]} {
    %c0 = arith.constant 0 : index
    %c0_0 = arith.constant 0 : index
    %c0_1 = arith.constant 0 : index
    %0 = vector.load %arg1[%c0, %c0_0, %c0_1] : memref<2x64x1xi32, #tpu.memory_space<vmem>>, vector<2x64x1xi32>
    %1 = tpu.iota {dimensions = array<i32: 2>} : vector<2x64x32xi32>
    %2 = vector.broadcast %0 : vector<2x64x1xi32> to vector<2x64x32xi32>
    %3 = arith.cmpi eq, %1, %2 : vector<2x64x32xi32>
    %4 = arith.extui %3 : vector<2x64x32xi1> to vector<2x64x32xi32>
    %5 = arith.sitofp %4 : vector<2x64x32xi32> to vector<2x64x32xf32>
    %6 = arith.truncf %5 : vector<2x64x32xf32> to vector<2x64x32xbf16>
    %7 = vector.shape_cast %6 : vector<2x64x32xbf16> to vector<128x32xbf16>
    %c0_2 = arith.constant 0 : index
    %c0_3 = arith.constant 0 : index
    %8 = vector.load %arg2[%c0_2, %c0_3] : memref<32x32xbf16, #tpu.memory_space<vmem>>, vector<32x32xbf16>
    %cst = arith.constant dense<0.000000e+00> : vector<128x32xf32>
    %9 = tpu.matmul %7, %8, %cst {dimension_numbers = #tpu.dot_dimension_numbers<[1], [0], [0], [1], [0, 0, 1, 1], [], []>} : vector<128x32xbf16>, vector<32x32xbf16>, vector<128x32xf32> -> vector<128x32xf32>
    %10 = arith.truncf %9 : vector<128x32xf32> to vector<128x32xbf16>
    %c0_4 = arith.constant 0 : index
    %c0_5 = arith.constant 0 : index
    %11 = vector.load %arg3[%c0_4, %c0_5] : memref<32x64xbf16, #tpu.memory_space<vmem>>, vector<32x64xbf16>
    %cst_6 = arith.constant dense<0.000000e+00> : vector<128x64xf32>
    %12 = tpu.matmul %10, %11, %cst_6 {dimension_numbers = #tpu.dot_dimension_numbers<[1], [0], [0], [1], [0, 0, 1, 1], [], []>} : vector<128x32xbf16>, vector<32x64xbf16>, vector<128x64xf32> -> vector<128x64xf32>
    %c0_7 = arith.constant 0 : index
    %c0_8 = arith.constant 0 : index
    %13 = vector.load %arg4[%c0_7, %c0_8] : memref<1x64xf32, #tpu.memory_space<vmem>>, vector<1x64xf32>
    %14 = vector.broadcast %13 : vector<1x64xf32> to vector<128x64xf32>
    %15 = arith.addf %12, %14 : vector<128x64xf32>
    %cst_9 = arith.constant 0.000000e+00 : f32
    %16 = vector.broadcast %cst_9 : f32 to vector<128x64xf32>
    %17 = arith.maximumf %15, %16 : vector<128x64xf32>
    %18 = arith.truncf %17 : vector<128x64xf32> to vector<128x64xbf16>
    %c0_10 = arith.constant 0 : index
    %c0_11 = arith.constant 0 : index
    %19 = vector.load %arg5[%c0_10, %c0_11] : memref<64x64xbf16, #tpu.memory_space<vmem>>, vector<64x64xbf16>
    %cst_12 = arith.constant dense<0.000000e+00> : vector<128x64xf32>
    %20 = tpu.matmul %18, %19, %cst_12 {dimension_numbers = #tpu.dot_dimension_numbers<[1], [0], [0], [1], [0, 0, 1, 1], [], []>} : vector<128x64xbf16>, vector<64x64xbf16>, vector<128x64xf32> -> vector<128x64xf32>
    %c0_13 = arith.constant 0 : index
    %c0_14 = arith.constant 0 : index
    %21 = vector.load %arg6[%c0_13, %c0_14] : memref<1x64xf32, #tpu.memory_space<vmem>>, vector<1x64xf32>
    %22 = vector.broadcast %21 : vector<1x64xf32> to vector<128x64xf32>
    %23 = arith.addf %20, %22 : vector<128x64xf32>
    %cst_15 = arith.constant 0.000000e+00 : bf16
    %24 = vector.broadcast %cst_15 : bf16 to vector<2x32x64xbf16>
    %c0_16 = arith.constant 0 : index
    %c0_17 = arith.constant 0 : index
    %c0_18 = arith.constant 0 : index
    %25 = vector.load %arg12[%c0_16, %c0_17, %c0_18] : memref<2x128x64xbf16, #tpu.memory_space<vmem>>, vector<2x32x64xbf16>
    tpu.vector_store %arg12[%c0_16, %c0_17, %c0_18], %24 {strides = array<i32>} : memref<2x128x64xbf16, #tpu.memory_space<vmem>>, vector<2x32x64xbf16>,
    %cst_19 = arith.constant 0.000000e+00 : bf16
    %26 = vector.broadcast %cst_19 : bf16 to vector<2x32x64xbf16>
    %c0_20 = arith.constant 0 : index
    %c96 = arith.constant 96 : index
    %c0_21 = arith.constant 0 : index
    %27 = vector.load %arg12[%c0_20, %c96, %c0_21] : memref<2x128x64xbf16, #tpu.memory_space<vmem>>, vector<2x32x64xbf16>
    tpu.vector_store %arg12[%c0_20, %c96, %c0_21], %26 {strides = array<i32>} : memref<2x128x64xbf16, #tpu.memory_space<vmem>>, vector<2x32x64xbf16>,
    %c0_22 = arith.constant 0 : index
    %c0_23 = arith.constant 0 : index
    %28 = vector.load %arg9[%c0_22, %c0_23] : memref<12x128xf32, #tpu.memory_space<vmem>>, vector<1x128xf32>
    %29 = arith.truncf %23 : vector<128x64xf32> to vector<128x64xbf16>
    %30 = vector.shape_cast %29 : vector<128x64xbf16> to vector<2x64x64xbf16>
    %c0_24 = arith.constant 0 : index
    %c32 = arith.constant 32 : index
    %c0_25 = arith.constant 0 : index
    %31 = vector.load %arg12[%c0_24, %c32, %c0_25] : memref<2x128x64xbf16, #tpu.memory_space<vmem>>, vector<2x64x64xbf16>
    tpu.vector_store %arg12[%c0_24, %c32, %c0_25], %30 {strides = array<i32>} : memref<2x128x64xbf16, #tpu.memory_space<vmem>>, vector<2x64x64xbf16>,
    %c0_26 = arith.constant 0 : index
    %c31 = arith.constant 31 : index
    %c0_27 = arith.constant 0 : index
    %32 = vector.load %arg12[%c0_26, %c31, %c0_27] : memref<2x128x64xbf16, #tpu.memory_space<vmem>>, vector<2x64x64xbf16>
    %33 = vector.shape_cast %32 : vector<2x64x64xbf16> to vector<128x64xbf16>
    %c0_28 = arith.constant 0 : index
    %c0_29 = arith.constant 0 : index
    %c0_30 = arith.constant 0 : index
    %34 = vector.load %arg7[%c0_28, %c0_29, %c0_30] : memref<10x192x128xbf16, #tpu.memory_space<vmem>>, vector<1x64x128xbf16>
    %35 = vector.shape_cast %34 : vector<1x64x128xbf16> to vector<64x128xbf16>
    %cst_31 = arith.constant dense<0.000000e+00> : vector<128x128xf32>
    %36 = tpu.matmul %33, %35, %cst_31 {dimension_numbers = #tpu.dot_dimension_numbers<[1], [0], [0], [1], [0, 0, 1, 1], [], []>} : vector<128x64xbf16>, vector<64x128xbf16>, vector<128x128xf32> -> vector<128x128xf32>
    %37 = vector.broadcast %28 : vector<1x128xf32> to vector<128x128xf32>
    %38 = arith.addf %37, %36 : vector<128x128xf32>
    %c0_32 = arith.constant 0 : index
    %c32_33 = arith.constant 32 : index
    %c0_34 = arith.constant 0 : index
    %39 = vector.load %arg12[%c0_32, %c32_33, %c0_34] : memref<2x128x64xbf16, #tpu.memory_space<vmem>>, vector<2x64x64xbf16>
    %40 = vector.shape_cast %39 : vector<2x64x64xbf16> to vector<128x64xbf16>
    %c0_35 = arith.constant 0 : index
    %c64 = arith.constant 64 : index
    %c0_36 = arith.constant 0 : index
    %41 = vector.load %arg7[%c0_35, %c64, %c0_36] : memref<10x192x128xbf16, #tpu.memory_space<vmem>>, vector<1x64x128xbf16>
    %42 = vector.shape_cast %41 : vector<1x64x128xbf16> to vector<64x128xbf16>
    %cst_37 = arith.constant dense<0.000000e+00> : vector<128x128xf32>
    %43 = tpu.matmul %40, %42, %cst_37 {dimension_numbers = #tpu.dot_dimension_numbers<[1], [0], [0], [1], [0, 0, 1, 1], [], []>} : vector<128x64xbf16>, vector<64x128xbf16>, vector<128x128xf32> -> vector<128x128xf32>
    %44 = arith.addf %38, %43 : vector<128x128xf32>
    %c0_38 = arith.constant 0 : index
    %c33 = arith.constant 33 : index
    %c0_39 = arith.constant 0 : index
    %45 = vector.load %arg12[%c0_38, %c33, %c0_39] : memref<2x128x64xbf16, #tpu.memory_space<vmem>>, vector<2x64x64xbf16>
    %46 = vector.shape_cast %45 : vector<2x64x64xbf16> to vector<128x64xbf16>
    %c0_40 = arith.constant 0 : index
    %c128 = arith.constant 128 : index
    %c0_41 = arith.constant 0 : index
    %47 = vector.load %arg7[%c0_40, %c128, %c0_41] : memref<10x192x128xbf16, #tpu.memory_space<vmem>>, vector<1x64x128xbf16>
    %48 = vector.shape_cast %47 : vector<1x64x128xbf16> to vector<64x128xbf16>
    %cst_42 = arith.constant dense<0.000000e+00> : vector<128x128xf32>
    %49 = tpu.matmul %46, %48, %cst_42 {dimension_numbers = #tpu.dot_dimension_numbers<[1], [0], [0], [1], [0, 0, 1, 1], [], []>} : vector<128x64xbf16>, vector<64x128xbf16>, vector<128x128xf32> -> vector<128x128xf32>
    %50 = arith.addf %44, %49 : vector<128x128xf32>
    %51 = vector.extract_strided_slice %50 {offsets = [0, 0], sizes = [128, 64], strides = [1, 1]} : vector<128x128xf32> to vector<128x64xf32>
    %52 = arith.negf %51 : vector<128x64xf32>
    %53 = math.exp %52 : vector<128x64xf32>
    %cst_43 = arith.constant 1.000000e+00 : f32
    %54 = vector.broadcast %cst_43 : f32 to vector<128x64xf32>
    %55 = arith.addf %54, %53 : vector<128x64xf32>
    %56 = arith.divf %54, %55 : vector<128x64xf32>
    %57 = vector.extract_strided_slice %50 {offsets = [0, 64], sizes = [128, 64], strides = [1, 1]} : vector<128x128xf32> to vector<128x64xf32>
    %58 = arith.subf %57, %23 : vector<128x64xf32>
    %59 = arith.mulf %56, %58 : vector<128x64xf32>
    %60 = arith.addf %23, %59 : vector<128x64xf32>
    %c1 = arith.constant 1 : index
    %c0_44 = arith.constant 0 : index
    %61 = vector.load %arg9[%c1, %c0_44] : memref<12x128xf32, #tpu.memory_space<vmem>>, vector<1x128xf32>
    %62 = arith.truncf %60 : vector<128x64xf32> to vector<128x64xbf16>
    %63 = vector.shape_cast %62 : vector<128x64xbf16> to vector<2x64x64xbf16>
    %c0_45 = arith.constant 0 : index
    %c32_46 = arith.constant 32 : index
    %c0_47 = arith.constant 0 : index
    %64 = vector.load %arg12[%c0_45, %c32_46, %c0_47] : memref<2x128x64xbf16, #tpu.memory_space<vmem>>, vector<2x64x64xbf16>
    tpu.vector_store %arg12[%c0_45, %c32_46, %c0_47], %63 {strides = array<i32>} : memref<2x128x64xbf16, #tpu.memory_space<vmem>>, vector<2x64x64xbf16>,
    %c0_48 = arith.constant 0 : index
    %c29 = arith.constant 29 : index
    %c0_49 = arith.constant 0 : index
    %65 = vector.load %arg12[%c0_48, %c29, %c0_49] : memref<2x128x64xbf16, #tpu.memory_space<vmem>>, vector<2x64x64xbf16>
    %66 = vector.shape_cast %65 : vector<2x64x64xbf16> to vector<128x64xbf16>
    %c1_50 = arith.constant 1 : index
    %c0_51 = arith.constant 0 : index
    %c0_52 = arith.constant 0 : index
    %67 = vector.load %arg7[%c1_50, %c0_51, %c0_52] : memref<10x192x128xbf16, #tpu.memory_space<vmem>>, vector<1x64x128xbf16>
    %68 = vector.shape_cast %67 : vector<1x64x128xbf16> to vector<64x128xbf16>
    %cst_53 = arith.constant dense<0.000000e+00> : vector<128x128xf32>
    %69 = tpu.matmul %66, %68, %cst_53 {dimension_numbers = #tpu.dot_dimension_numbers<[1], [0], [0], [1], [0, 0, 1, 1], [], []>} : vector<128x64xbf16>, vector<64x128xbf16>, vector<128x128xf32> -> vector<128x128xf32>
    %70 = vector.broadcast %61 : vector<1x128xf32> to vector<128x128xf32>
    %71 = arith.addf %70, %69 : vector<128x128xf32>
    %c0_54 = arith.constant 0 : index
    %c32_55 = arith.constant 32 : index
    %c0_56 = arith.constant 0 : index
    %72 = vector.load %arg12[%c0_54, %c32_55, %c0_56] : memref<2x128x64xbf16, #tpu.memory_space<vmem>>, vector<2x64x64xbf16>
    %73 = vector.shape_cast %72 : vector<2x64x64xbf16> to vector<128x64xbf16>
    %c1_57 = arith.constant 1 : index
    %c64_58 = arith.constant 64 : index
    %c0_59 = arith.constant 0 : index
    %74 = vector.load %arg7[%c1_57, %c64_58, %c0_59] : memref<10x192x128xbf16, #tpu.memory_space<vmem>>, vector<1x64x128xbf16>
    %75 = vector.shape_cast %74 : vector<1x64x128xbf16> to vector<64x128xbf16>
    %cst_60 = arith.constant dense<0.000000e+00> : vector<128x128xf32>
    %76 = tpu.matmul %73, %75, %cst_60 {dimension_numbers = #tpu.dot_dimension_numbers<[1], [0], [0], [1], [0, 0, 1, 1], [], []>} : vector<128x64xbf16>, vector<64x128xbf16>, vector<128x128xf32> -> vector<128x128xf32>
    %77 = arith.addf %71, %76 : vector<128x128xf32>
    %c0_61 = arith.constant 0 : index
    %c35 = arith.constant 35 : index
    %c0_62 = arith.constant 0 : index
    %78 = vector.load %arg12[%c0_61, %c35, %c0_62] : memref<2x128x64xbf16, #tpu.memory_space<vmem>>, vector<2x64x64xbf16>
    %79 = vector.shape_cast %78 : vector<2x64x64xbf16> to vector<128x64xbf16>
    %c1_63 = arith.constant 1 : index
    %c128_64 = arith.constant 128 : index
    %c0_65 = arith.constant 0 : index
    %80 = vector.load %arg7[%c1_63, %c128_64, %c0_65] : memref<10x192x128xbf16, #tpu.memory_space<vmem>>, vector<1x64x128xbf16>
    %81 = vector.shape_cast %80 : vector<1x64x128xbf16> to vector<64x128xbf16>
    %cst_66 = arith.constant dense<0.000000e+00> : vector<128x128xf32>
    %82 = tpu.matmul %79, %81, %cst_66 {dimension_numbers = #tpu.dot_dimension_numbers<[1], [0], [0], [1], [0, 0, 1, 1], [], []>} : vector<128x64xbf16>, vector<64x128xbf16>, vector<128x128xf32> -> vector<128x128xf32>
    %83 = arith.addf %77, %82 : vector<128x128xf32>
    %84 = vector.extract_strided_slice %83 {offsets = [0, 0], sizes = [128, 64], strides = [1, 1]} : vector<128x128xf32> to vector<128x64xf32>
    %85 = arith.negf %84 : vector<128x64xf32>
    %86 = math.exp %85 : vector<128x64xf32>
    %cst_67 = arith.constant 1.000000e+00 : f32
    %87 = vector.broadcast %cst_67 : f32 to vector<128x64xf32>
    %88 = arith.addf %87, %86 : vector<128x64xf32>
    %89 = arith.divf %87, %88 : vector<128x64xf32>
    %90 = vector.extract_strided_slice %83 {offsets = [0, 64], sizes = [128, 64], strides = [1, 1]} : vector<128x128xf32> to vector<128x64xf32>
    %91 = arith.subf %90, %60 : vector<128x64xf32>
    %92 = arith.mulf %89, %91 : vector<128x64xf32>
    %93 = arith.addf %60, %92 : vector<128x64xf32>
    %c2 = arith.constant 2 : index
    %c0_68 = arith.constant 0 : index
    %94 = vector.load %arg9[%c2, %c0_68] : memref<12x128xf32, #tpu.memory_space<vmem>>, vector<1x128xf32>
    %95 = arith.truncf %93 : vector<128x64xf32> to vector<128x64xbf16>
    %96 = vector.shape_cast %95 : vector<128x64xbf16> to vector<2x64x64xbf16>
    %c0_69 = arith.constant 0 : index
    %c32_70 = arith.constant 32 : index
    %c0_71 = arith.constant 0 : index
    %97 = vector.load %arg12[%c0_69, %c32_70, %c0_71] : memref<2x128x64xbf16, #tpu.memory_space<vmem>>, vector<2x64x64xbf16>
    tpu.vector_store %arg12[%c0_69, %c32_70, %c0_71], %96 {strides = array<i32>} : memref<2x128x64xbf16, #tpu.memory_space<vmem>>, vector<2x64x64xbf16>,
    %c0_72 = arith.constant 0 : index
    %c23 = arith.constant 23 : index
    %c0_73 = arith.constant 0 : index
    %98 = vector.load %arg12[%c0_72, %c23, %c0_73] : memref<2x128x64xbf16, #tpu.memory_space<vmem>>, vector<2x64x64xbf16>
    %99 = vector.shape_cast %98 : vector<2x64x64xbf16> to vector<128x64xbf16>
    %c2_74 = arith.constant 2 : index
    %c0_75 = arith.constant 0 : index
    %c0_76 = arith.constant 0 : index
    %100 = vector.load %arg7[%c2_74, %c0_75, %c0_76] : memref<10x192x128xbf16, #tpu.memory_space<vmem>>, vector<1x64x128xbf16>
    %101 = vector.shape_cast %100 : vector<1x64x128xbf16> to vector<64x128xbf16>
    %cst_77 = arith.constant dense<0.000000e+00> : vector<128x128xf32>
    %102 = tpu.matmul %99, %101, %cst_77 {dimension_numbers = #tpu.dot_dimension_numbers<[1], [0], [0], [1], [0, 0, 1, 1], [], []>} : vector<128x64xbf16>, vector<64x128xbf16>, vector<128x128xf32> -> vector<128x128xf32>
    %103 = vector.broadcast %94 : vector<1x128xf32> to vector<128x128xf32>
    %104 = arith.addf %103, %102 : vector<128x128xf32>
    %c0_78 = arith.constant 0 : index
    %c32_79 = arith.constant 32 : index
    %c0_80 = arith.constant 0 : index
    %105 = vector.load %arg12[%c0_78, %c32_79, %c0_80] : memref<2x128x64xbf16, #tpu.memory_space<vmem>>, vector<2x64x64xbf16>
    %106 = vector.shape_cast %105 : vector<2x64x64xbf16> to vector<128x64xbf16>
    %c2_81 = arith.constant 2 : index
    %c64_82 = arith.constant 64 : index
    %c0_83 = arith.constant 0 : index
    %107 = vector.load %arg7[%c2_81, %c64_82, %c0_83] : memref<10x192x128xbf16, #tpu.memory_space<vmem>>, vector<1x64x128xbf16>
    %108 = vector.shape_cast %107 : vector<1x64x128xbf16> to vector<64x128xbf16>
    %cst_84 = arith.constant dense<0.000000e+00> : vector<128x128xf32>
    %109 = tpu.matmul %106, %108, %cst_84 {dimension_numbers = #tpu.dot_dimension_numbers<[1], [0], [0], [1], [0, 0, 1, 1], [], []>} : vector<128x64xbf16>, vector<64x128xbf16>, vector<128x128xf32> -> vector<128x128xf32>
    %110 = arith.addf %104, %109 : vector<128x128xf32>
    %c0_85 = arith.constant 0 : index
    %c41 = arith.constant 41 : index
    %c0_86 = arith.constant 0 : index
    %111 = vector.load %arg12[%c0_85, %c41, %c0_86] : memref<2x128x64xbf16, #tpu.memory_space<vmem>>, vector<2x64x64xbf16>
    %112 = vector.shape_cast %111 : vector<2x64x64xbf16> to vector<128x64xbf16>
    %c2_87 = arith.constant 2 : index
    %c128_88 = arith.constant 128 : index
    %c0_89 = arith.constant 0 : index
    %113 = vector.load %arg7[%c2_87, %c128_88, %c0_89] : memref<10x192x128xbf16, #tpu.memory_space<vmem>>, vector<1x64x128xbf16>
    %114 = vector.shape_cast %113 : vector<1x64x128xbf16> to vector<64x128xbf16>
    %cst_90 = arith.constant dense<0.000000e+00> : vector<128x128xf32>
    %115 = tpu.matmul %112, %114, %cst_90 {dimension_numbers = #tpu.dot_dimension_numbers<[1], [0], [0], [1], [0, 0, 1, 1], [], []>} : vector<128x64xbf16>, vector<64x128xbf16>, vector<128x128xf32> -> vector<128x128xf32>
    %116 = arith.addf %110, %115 : vector<128x128xf32>
    %117 = vector.extract_strided_slice %116 {offsets = [0, 0], sizes = [128, 64], strides = [1, 1]} : vector<128x128xf32> to vector<128x64xf32>
    %118 = arith.negf %117 : vector<128x64xf32>
    %119 = math.exp %118 : vector<128x64xf32>
    %cst_91 = arith.constant 1.000000e+00 : f32
    %120 = vector.broadcast %cst_91 : f32 to vector<128x64xf32>
    %121 = arith.addf %120, %119 : vector<128x64xf32>
    %122 = arith.divf %120, %121 : vector<128x64xf32>
    %123 = vector.extract_strided_slice %116 {offsets = [0, 64], sizes = [128, 64], strides = [1, 1]} : vector<128x128xf32> to vector<128x64xf32>
    %124 = arith.subf %123, %93 : vector<128x64xf32>
    %125 = arith.mulf %122, %124 : vector<128x64xf32>
    %126 = arith.addf %93, %125 : vector<128x64xf32>
    %c3 = arith.constant 3 : index
    %c0_92 = arith.constant 0 : index
    %127 = vector.load %arg9[%c3, %c0_92] : memref<12x128xf32, #tpu.memory_space<vmem>>, vector<1x128xf32>
    %128 = arith.truncf %126 : vector<128x64xf32> to vector<128x64xbf16>
    %129 = vector.shape_cast %128 : vector<128x64xbf16> to vector<2x64x64xbf16>
    %c0_93 = arith.constant 0 : index
    %c32_94 = arith.constant 32 : index
    %c0_95 = arith.constant 0 : index
    %130 = vector.load %arg12[%c0_93, %c32_94, %c0_95] : memref<2x128x64xbf16, #tpu.memory_space<vmem>>, vector<2x64x64xbf16>
    tpu.vector_store %arg12[%c0_93, %c32_94, %c0_95], %129 {strides = array<i32>} : memref<2x128x64xbf16, #tpu.memory_space<vmem>>, vector<2x64x64xbf16>,
    %c0_96 = arith.constant 0 : index
    %c5 = arith.constant 5 : index
    %c0_97 = arith.constant 0 : index
    %131 = vector.load %arg12[%c0_96, %c5, %c0_97] : memref<2x128x64xbf16, #tpu.memory_space<vmem>>, vector<2x64x64xbf16>
    %132 = vector.shape_cast %131 : vector<2x64x64xbf16> to vector<128x64xbf16>
    %c3_98 = arith.constant 3 : index
    %c0_99 = arith.constant 0 : index
    %c0_100 = arith.constant 0 : index
    %133 = vector.load %arg7[%c3_98, %c0_99, %c0_100] : memref<10x192x128xbf16, #tpu.memory_space<vmem>>, vector<1x64x128xbf16>
    %134 = vector.shape_cast %133 : vector<1x64x128xbf16> to vector<64x128xbf16>
    %cst_101 = arith.constant dense<0.000000e+00> : vector<128x128xf32>
    %135 = tpu.matmul %132, %134, %cst_101 {dimension_numbers = #tpu.dot_dimension_numbers<[1], [0], [0], [1], [0, 0, 1, 1], [], []>} : vector<128x64xbf16>, vector<64x128xbf16>, vector<128x128xf32> -> vector<128x128xf32>
    %136 = vector.broadcast %127 : vector<1x128xf32> to vector<128x128xf32>
    %137 = arith.addf %136, %135 : vector<128x128xf32>
    %c0_102 = arith.constant 0 : index
    %c32_103 = arith.constant 32 : index
    %c0_104 = arith.constant 0 : index
    %138 = vector.load %arg12[%c0_102, %c32_103, %c0_104] : memref<2x128x64xbf16, #tpu.memory_space<vmem>>, vector<2x64x64xbf16>
    %139 = vector.shape_cast %138 : vector<2x64x64xbf16> to vector<128x64xbf16>
    %c3_105 = arith.constant 3 : index
    %c64_106 = arith.constant 64 : index
    %c0_107 = arith.constant 0 : index
    %140 = vector.load %arg7[%c3_105, %c64_106, %c0_107] : memref<10x192x128xbf16, #tpu.memory_space<vmem>>, vector<1x64x128xbf16>
    %141 = vector.shape_cast %140 : vector<1x64x128xbf16> to vector<64x128xbf16>
    %cst_108 = arith.constant dense<0.000000e+00> : vector<128x128xf32>
    %142 = tpu.matmul %139, %141, %cst_108 {dimension_numbers = #tpu.dot_dimension_numbers<[1], [0], [0], [1], [0, 0, 1, 1], [], []>} : vector<128x64xbf16>, vector<64x128xbf16>, vector<128x128xf32> -> vector<128x128xf32>
    %143 = arith.addf %137, %142 : vector<128x128xf32>
    %c0_109 = arith.constant 0 : index
    %c59 = arith.constant 59 : index
    %c0_110 = arith.constant 0 : index
    %144 = vector.load %arg12[%c0_109, %c59, %c0_110] : memref<2x128x64xbf16, #tpu.memory_space<vmem>>, vector<2x64x64xbf16>
    %145 = vector.shape_cast %144 : vector<2x64x64xbf16> to vector<128x64xbf16>
    %c3_111 = arith.constant 3 : index
    %c128_112 = arith.constant 128 : index
    %c0_113 = arith.constant 0 : index
    %146 = vector.load %arg7[%c3_111, %c128_112, %c0_113] : memref<10x192x128xbf16, #tpu.memory_space<vmem>>, vector<1x64x128xbf16>
    %147 = vector.shape_cast %146 : vector<1x64x128xbf16> to vector<64x128xbf16>
    %cst_114 = arith.constant dense<0.000000e+00> : vector<128x128xf32>
    %148 = tpu.matmul %145, %147, %cst_114 {dimension_numbers = #tpu.dot_dimension_numbers<[1], [0], [0], [1], [0, 0, 1, 1], [], []>} : vector<128x64xbf16>, vector<64x128xbf16>, vector<128x128xf32> -> vector<128x128xf32>
    %149 = arith.addf %143, %148 : vector<128x128xf32>
    %150 = vector.extract_strided_slice %149 {offsets = [0, 0], sizes = [128, 64], strides = [1, 1]} : vector<128x128xf32> to vector<128x64xf32>
    %151 = arith.negf %150 : vector<128x64xf32>
    %152 = math.exp %151 : vector<128x64xf32>
    %cst_115 = arith.constant 1.000000e+00 : f32
    %153 = vector.broadcast %cst_115 : f32 to vector<128x64xf32>
    %154 = arith.addf %153, %152 : vector<128x64xf32>
    %155 = arith.divf %153, %154 : vector<128x64xf32>
    %156 = vector.extract_strided_slice %149 {offsets = [0, 64], sizes = [128, 64], strides = [1, 1]} : vector<128x128xf32> to vector<128x64xf32>
    %157 = arith.subf %156, %126 : vector<128x64xf32>
    %158 = arith.mulf %155, %157 : vector<128x64xf32>
    %159 = arith.addf %126, %158 : vector<128x64xf32>
    %c4 = arith.constant 4 : index
    %c0_116 = arith.constant 0 : index
    %160 = vector.load %arg9[%c4, %c0_116] : memref<12x128xf32, #tpu.memory_space<vmem>>, vector<1x128xf32>
    %161 = arith.truncf %159 : vector<128x64xf32> to vector<128x64xbf16>
    %162 = vector.shape_cast %161 : vector<128x64xbf16> to vector<2x64x64xbf16>
    %c0_117 = arith.constant 0 : index
    %c32_118 = arith.constant 32 : index
    %c0_119 = arith.constant 0 : index
    %163 = vector.load %arg12[%c0_117, %c32_118, %c0_119] : memref<2x128x64xbf16, #tpu.memory_space<vmem>>, vector<2x64x64xbf16>
    tpu.vector_store %arg12[%c0_117, %c32_118, %c0_119], %162 {strides = array<i32>} : memref<2x128x64xbf16, #tpu.memory_space<vmem>>, vector<2x64x64xbf16>,
    %c0_120 = arith.constant 0 : index
    %c31_121 = arith.constant 31 : index
    %c0_122 = arith.constant 0 : index
    %164 = vector.load %arg12[%c0_120, %c31_121, %c0_122] : memref<2x128x64xbf16, #tpu.memory_space<vmem>>, vector<2x64x64xbf16>
    %165 = vector.shape_cast %164 : vector<2x64x64xbf16> to vector<128x64xbf16>
    %c4_123 = arith.constant 4 : index
    %c0_124 = arith.constant 0 : index
    %c0_125 = arith.constant 0 : index
    %166 = vector.load %arg7[%c4_123, %c0_124, %c0_125] : memref<10x192x128xbf16, #tpu.memory_space<vmem>>, vector<1x64x128xbf16>
    %167 = vector.shape_cast %166 : vector<1x64x128xbf16> to vector<64x128xbf16>
    %cst_126 = arith.constant dense<0.000000e+00> : vector<128x128xf32>
    %168 = tpu.matmul %165, %167, %cst_126 {dimension_numbers = #tpu.dot_dimension_numbers<[1], [0], [0], [1], [0, 0, 1, 1], [], []>} : vector<128x64xbf16>, vector<64x128xbf16>, vector<128x128xf32> -> vector<128x128xf32>
    %169 = vector.broadcast %160 : vector<1x128xf32> to vector<128x128xf32>
    %170 = arith.addf %169, %168 : vector<128x128xf32>
    %c0_127 = arith.constant 0 : index
    %c32_128 = arith.constant 32 : index
    %c0_129 = arith.constant 0 : index
    %171 = vector.load %arg12[%c0_127, %c32_128, %c0_129] : memref<2x128x64xbf16, #tpu.memory_space<vmem>>, vector<2x64x64xbf16>
    %172 = vector.shape_cast %171 : vector<2x64x64xbf16> to vector<128x64xbf16>
    %c4_130 = arith.constant 4 : index
    %c64_131 = arith.constant 64 : index
    %c0_132 = arith.constant 0 : index
    %173 = vector.load %arg7[%c4_130, %c64_131, %c0_132] : memref<10x192x128xbf16, #tpu.memory_space<vmem>>, vector<1x64x128xbf16>
    %174 = vector.shape_cast %173 : vector<1x64x128xbf16> to vector<64x128xbf16>
    %cst_133 = arith.constant dense<0.000000e+00> : vector<128x128xf32>
    %175 = tpu.matmul %172, %174, %cst_133 {dimension_numbers = #tpu.dot_dimension_numbers<[1], [0], [0], [1], [0, 0, 1, 1], [], []>} : vector<128x64xbf16>, vector<64x128xbf16>, vector<128x128xf32> -> vector<128x128xf32>
    %176 = arith.addf %170, %175 : vector<128x128xf32>
    %c0_134 = arith.constant 0 : index
    %c33_135 = arith.constant 33 : index
    %c0_136 = arith.constant 0 : index
    %177 = vector.load %arg12[%c0_134, %c33_135, %c0_136] : memref<2x128x64xbf16, #tpu.memory_space<vmem>>, vector<2x64x64xbf16>
    %178 = vector.shape_cast %177 : vector<2x64x64xbf16> to vector<128x64xbf16>
    %c4_137 = arith.constant 4 : index
    %c128_138 = arith.constant 128 : index
    %c0_139 = arith.constant 0 : index
    %179 = vector.load %arg7[%c4_137, %c128_138, %c0_139] : memref<10x192x128xbf16, #tpu.memory_space<vmem>>, vector<1x64x128xbf16>
    %180 = vector.shape_cast %179 : vector<1x64x128xbf16> to vector<64x128xbf16>
    %cst_140 = arith.constant dense<0.000000e+00> : vector<128x128xf32>
    %181 = tpu.matmul %178, %180, %cst_140 {dimension_numbers = #tpu.dot_dimension_numbers<[1], [0], [0], [1], [0, 0, 1, 1], [], []>} : vector<128x64xbf16>, vector<64x128xbf16>, vector<128x128xf32> -> vector<128x128xf32>
    %182 = arith.addf %176, %181 : vector<128x128xf32>
    %183 = vector.extract_strided_slice %182 {offsets = [0, 0], sizes = [128, 64], strides = [1, 1]} : vector<128x128xf32> to vector<128x64xf32>
    %184 = arith.negf %183 : vector<128x64xf32>
    %185 = math.exp %184 : vector<128x64xf32>
    %cst_141 = arith.constant 1.000000e+00 : f32
    %186 = vector.broadcast %cst_141 : f32 to vector<128x64xf32>
    %187 = arith.addf %186, %185 : vector<128x64xf32>
    %188 = arith.divf %186, %187 : vector<128x64xf32>
    %189 = vector.extract_strided_slice %182 {offsets = [0, 64], sizes = [128, 64], strides = [1, 1]} : vector<128x128xf32> to vector<128x64xf32>
    %190 = arith.subf %189, %159 : vector<128x64xf32>
    %191 = arith.mulf %188, %190 : vector<128x64xf32>
    %192 = arith.addf %159, %191 : vector<128x64xf32>
    %c5_142 = arith.constant 5 : index
    %c0_143 = arith.constant 0 : index
    %193 = vector.load %arg9[%c5_142, %c0_143] : memref<12x128xf32, #tpu.memory_space<vmem>>, vector<1x128xf32>
    %194 = arith.truncf %192 : vector<128x64xf32> to vector<128x64xbf16>
    %195 = vector.shape_cast %194 : vector<128x64xbf16> to vector<2x64x64xbf16>
    %c0_144 = arith.constant 0 : index
    %c32_145 = arith.constant 32 : index
    %c0_146 = arith.constant 0 : index
    %196 = vector.load %arg12[%c0_144, %c32_145, %c0_146] : memref<2x128x64xbf16, #tpu.memory_space<vmem>>, vector<2x64x64xbf16>
    tpu.vector_store %arg12[%c0_144, %c32_145, %c0_146], %195 {strides = array<i32>} : memref<2x128x64xbf16, #tpu.memory_space<vmem>>, vector<2x64x64xbf16>,
    %c0_147 = arith.constant 0 : index
    %c29_148 = arith.constant 29 : index
    %c0_149 = arith.constant 0 : index
    %197 = vector.load %arg12[%c0_147, %c29_148, %c0_149] : memref<2x128x64xbf16, #tpu.memory_space<vmem>>, vector<2x64x64xbf16>
    %198 = vector.shape_cast %197 : vector<2x64x64xbf16> to vector<128x64xbf16>
    %c5_150 = arith.constant 5 : index
    %c0_151 = arith.constant 0 : index
    %c0_152 = arith.constant 0 : index
    %199 = vector.load %arg7[%c5_150, %c0_151, %c0_152] : memref<10x192x128xbf16, #tpu.memory_space<vmem>>, vector<1x64x128xbf16>
    %200 = vector.shape_cast %199 : vector<1x64x128xbf16> to vector<64x128xbf16>
    %cst_153 = arith.constant dense<0.000000e+00> : vector<128x128xf32>
    %201 = tpu.matmul %198, %200, %cst_153 {dimension_numbers = #tpu.dot_dimension_numbers<[1], [0], [0], [1], [0, 0, 1, 1], [], []>} : vector<128x64xbf16>, vector<64x128xbf16>, vector<128x128xf32> -> vector<128x128xf32>
    %202 = vector.broadcast %193 : vector<1x128xf32> to vector<128x128xf32>
    %203 = arith.addf %202, %201 : vector<128x128xf32>
    %c0_154 = arith.constant 0 : index
    %c32_155 = arith.constant 32 : index
    %c0_156 = arith.constant 0 : index
    %204 = vector.load %arg12[%c0_154, %c32_155, %c0_156] : memref<2x128x64xbf16, #tpu.memory_space<vmem>>, vector<2x64x64xbf16>
    %205 = vector.shape_cast %204 : vector<2x64x64xbf16> to vector<128x64xbf16>
    %c5_157 = arith.constant 5 : index
    %c64_158 = arith.constant 64 : index
    %c0_159 = arith.constant 0 : index
    %206 = vector.load %arg7[%c5_157, %c64_158, %c0_159] : memref<10x192x128xbf16, #tpu.memory_space<vmem>>, vector<1x64x128xbf16>
    %207 = vector.shape_cast %206 : vector<1x64x128xbf16> to vector<64x128xbf16>
    %cst_160 = arith.constant dense<0.000000e+00> : vector<128x128xf32>
    %208 = tpu.matmul %205, %207, %cst_160 {dimension_numbers = #tpu.dot_dimension_numbers<[1], [0], [0], [1], [0, 0, 1, 1], [], []>} : vector<128x64xbf16>, vector<64x128xbf16>, vector<128x128xf32> -> vector<128x128xf32>
    %209 = arith.addf %203, %208 : vector<128x128xf32>
    %c0_161 = arith.constant 0 : index
    %c35_162 = arith.constant 35 : index
    %c0_163 = arith.constant 0 : index
    %210 = vector.load %arg12[%c0_161, %c35_162, %c0_163] : memref<2x128x64xbf16, #tpu.memory_space<vmem>>, vector<2x64x64xbf16>
    %211 = vector.shape_cast %210 : vector<2x64x64xbf16> to vector<128x64xbf16>
    %c5_164 = arith.constant 5 : index
    %c128_165 = arith.constant 128 : index
    %c0_166 = arith.constant 0 : index
    %212 = vector.load %arg7[%c5_164, %c128_165, %c0_166] : memref<10x192x128xbf16, #tpu.memory_space<vmem>>, vector<1x64x128xbf16>
    %213 = vector.shape_cast %212 : vector<1x64x128xbf16> to vector<64x128xbf16>
    %cst_167 = arith.constant dense<0.000000e+00> : vector<128x128xf32>
    %214 = tpu.matmul %211, %213, %cst_167 {dimension_numbers = #tpu.dot_dimension_numbers<[1], [0], [0], [1], [0, 0, 1, 1], [], []>} : vector<128x64xbf16>, vector<64x128xbf16>, vector<128x128xf32> -> vector<128x128xf32>
    %215 = arith.addf %209, %214 : vector<128x128xf32>
    %216 = vector.extract_strided_slice %215 {offsets = [0, 0], sizes = [128, 64], strides = [1, 1]} : vector<128x128xf32> to vector<128x64xf32>
    %217 = arith.negf %216 : vector<128x64xf32>
    %218 = math.exp %217 : vector<128x64xf32>
    %cst_168 = arith.constant 1.000000e+00 : f32
    %219 = vector.broadcast %cst_168 : f32 to vector<128x64xf32>
    %220 = arith.addf %219, %218 : vector<128x64xf32>
    %221 = arith.divf %219, %220 : vector<128x64xf32>
    %222 = vector.extract_strided_slice %215 {offsets = [0, 64], sizes = [128, 64], strides = [1, 1]} : vector<128x128xf32> to vector<128x64xf32>
    %223 = arith.subf %222, %192 : vector<128x64xf32>
    %224 = arith.mulf %221, %223 : vector<128x64xf32>
    %225 = arith.addf %192, %224 : vector<128x64xf32>
    %c6 = arith.constant 6 : index
    %c0_169 = arith.constant 0 : index
    %226 = vector.load %arg9[%c6, %c0_169] : memref<12x128xf32, #tpu.memory_space<vmem>>, vector<1x128xf32>
    %227 = arith.truncf %225 : vector<128x64xf32> to vector<128x64xbf16>
    %228 = vector.shape_cast %227 : vector<128x64xbf16> to vector<2x64x64xbf16>
    %c0_170 = arith.constant 0 : index
    %c32_171 = arith.constant 32 : index
    %c0_172 = arith.constant 0 : index
    %229 = vector.load %arg12[%c0_170, %c32_171, %c0_172] : memref<2x128x64xbf16, #tpu.memory_space<vmem>>, vector<2x64x64xbf16>
    tpu.vector_store %arg12[%c0_170, %c32_171, %c0_172], %228 {strides = array<i32>} : memref<2x128x64xbf16, #tpu.memory_space<vmem>>, vector<2x64x64xbf16>,
    %c0_173 = arith.constant 0 : index
    %c23_174 = arith.constant 23 : index
    %c0_175 = arith.constant 0 : index
    %230 = vector.load %arg12[%c0_173, %c23_174, %c0_175] : memref<2x128x64xbf16, #tpu.memory_space<vmem>>, vector<2x64x64xbf16>
    %231 = vector.shape_cast %230 : vector<2x64x64xbf16> to vector<128x64xbf16>
    %c6_176 = arith.constant 6 : index
    %c0_177 = arith.constant 0 : index
    %c0_178 = arith.constant 0 : index
    %232 = vector.load %arg7[%c6_176, %c0_177, %c0_178] : memref<10x192x128xbf16, #tpu.memory_space<vmem>>, vector<1x64x128xbf16>
    %233 = vector.shape_cast %232 : vector<1x64x128xbf16> to vector<64x128xbf16>
    %cst_179 = arith.constant dense<0.000000e+00> : vector<128x128xf32>
    %234 = tpu.matmul %231, %233, %cst_179 {dimension_numbers = #tpu.dot_dimension_numbers<[1], [0], [0], [1], [0, 0, 1, 1], [], []>} : vector<128x64xbf16>, vector<64x128xbf16>, vector<128x128xf32> -> vector<128x128xf32>
    %235 = vector.broadcast %226 : vector<1x128xf32> to vector<128x128xf32>
    %236 = arith.addf %235, %234 : vector<128x128xf32>
    %c0_180 = arith.constant 0 : index
    %c32_181 = arith.constant 32 : index
    %c0_182 = arith.constant 0 : index
    %237 = vector.load %arg12[%c0_180, %c32_181, %c0_182] : memref<2x128x64xbf16, #tpu.memory_space<vmem>>, vector<2x64x64xbf16>
    %238 = vector.shape_cast %237 : vector<2x64x64xbf16> to vector<128x64xbf16>
    %c6_183 = arith.constant 6 : index
    %c64_184 = arith.constant 64 : index
    %c0_185 = arith.constant 0 : index
    %239 = vector.load %arg7[%c6_183, %c64_184, %c0_185] : memref<10x192x128xbf16, #tpu.memory_space<vmem>>, vector<1x64x128xbf16>
    %240 = vector.shape_cast %239 : vector<1x64x128xbf16> to vector<64x128xbf16>
    %cst_186 = arith.constant dense<0.000000e+00> : vector<128x128xf32>
    %241 = tpu.matmul %238, %240, %cst_186 {dimension_numbers = #tpu.dot_dimension_numbers<[1], [0], [0], [1], [0, 0, 1, 1], [], []>} : vector<128x64xbf16>, vector<64x128xbf16>, vector<128x128xf32> -> vector<128x128xf32>
    %242 = arith.addf %236, %241 : vector<128x128xf32>
    %c0_187 = arith.constant 0 : index
    %c41_188 = arith.constant 41 : index
    %c0_189 = arith.constant 0 : index
    %243 = vector.load %arg12[%c0_187, %c41_188, %c0_189] : memref<2x128x64xbf16, #tpu.memory_space<vmem>>, vector<2x64x64xbf16>
    %244 = vector.shape_cast %243 : vector<2x64x64xbf16> to vector<128x64xbf16>
    %c6_190 = arith.constant 6 : index
    %c128_191 = arith.constant 128 : index
    %c0_192 = arith.constant 0 : index
    %245 = vector.load %arg7[%c6_190, %c128_191, %c0_192] : memref<10x192x128xbf16, #tpu.memory_space<vmem>>, vector<1x64x128xbf16>
    %246 = vector.shape_cast %245 : vector<1x64x128xbf16> to vector<64x128xbf16>
    %cst_193 = arith.constant dense<0.000000e+00> : vector<128x128xf32>
    %247 = tpu.matmul %244, %246, %cst_193 {dimension_numbers = #tpu.dot_dimension_numbers<[1], [0], [0], [1], [0, 0, 1, 1], [], []>} : vector<128x64xbf16>, vector<64x128xbf16>, vector<128x128xf32> -> vector<128x128xf32>
    %248 = arith.addf %242, %247 : vector<128x128xf32>
    %249 = vector.extract_strided_slice %248 {offsets = [0, 0], sizes = [128, 64], strides = [1, 1]} : vector<128x128xf32> to vector<128x64xf32>
    %250 = arith.negf %249 : vector<128x64xf32>
    %251 = math.exp %250 : vector<128x64xf32>
    %cst_194 = arith.constant 1.000000e+00 : f32
    %252 = vector.broadcast %cst_194 : f32 to vector<128x64xf32>
    %253 = arith.addf %252, %251 : vector<128x64xf32>
    %254 = arith.divf %252, %253 : vector<128x64xf32>
    %255 = vector.extract_strided_slice %248 {offsets = [0, 64], sizes = [128, 64], strides = [1, 1]} : vector<128x128xf32> to vector<128x64xf32>
    %256 = arith.subf %255, %225 : vector<128x64xf32>
    %257 = arith.mulf %254, %256 : vector<128x64xf32>
    %258 = arith.addf %225, %257 : vector<128x64xf32>
    %c7 = arith.constant 7 : index
    %c0_195 = arith.constant 0 : index
    %259 = vector.load %arg9[%c7, %c0_195] : memref<12x128xf32, #tpu.memory_space<vmem>>, vector<1x128xf32>
    %260 = arith.truncf %258 : vector<128x64xf32> to vector<128x64xbf16>
    %261 = vector.shape_cast %260 : vector<128x64xbf16> to vector<2x64x64xbf16>
    %c0_196 = arith.constant 0 : index
    %c32_197 = arith.constant 32 : index
    %c0_198 = arith.constant 0 : index
    %262 = vector.load %arg12[%c0_196, %c32_197, %c0_198] : memref<2x128x64xbf16, #tpu.memory_space<vmem>>, vector<2x64x64xbf16>
    tpu.vector_store %arg12[%c0_196, %c32_197, %c0_198], %261 {strides = array<i32>} : memref<2x128x64xbf16, #tpu.memory_space<vmem>>, vector<2x64x64xbf16>,
    %c0_199 = arith.constant 0 : index
    %c5_200 = arith.constant 5 : index
    %c0_201 = arith.constant 0 : index
    %263 = vector.load %arg12[%c0_199, %c5_200, %c0_201] : memref<2x128x64xbf16, #tpu.memory_space<vmem>>, vector<2x64x64xbf16>
    %264 = vector.shape_cast %263 : vector<2x64x64xbf16> to vector<128x64xbf16>
    %c7_202 = arith.constant 7 : index
    %c0_203 = arith.constant 0 : index
    %c0_204 = arith.constant 0 : index
    %265 = vector.load %arg7[%c7_202, %c0_203, %c0_204] : memref<10x192x128xbf16, #tpu.memory_space<vmem>>, vector<1x64x128xbf16>
    %266 = vector.shape_cast %265 : vector<1x64x128xbf16> to vector<64x128xbf16>
    %cst_205 = arith.constant dense<0.000000e+00> : vector<128x128xf32>
    %267 = tpu.matmul %264, %266, %cst_205 {dimension_numbers = #tpu.dot_dimension_numbers<[1], [0], [0], [1], [0, 0, 1, 1], [], []>} : vector<128x64xbf16>, vector<64x128xbf16>, vector<128x128xf32> -> vector<128x128xf32>
    %268 = vector.broadcast %259 : vector<1x128xf32> to vector<128x128xf32>
    %269 = arith.addf %268, %267 : vector<128x128xf32>
    %c0_206 = arith.constant 0 : index
    %c32_207 = arith.constant 32 : index
    %c0_208 = arith.constant 0 : index
    %270 = vector.load %arg12[%c0_206, %c32_207, %c0_208] : memref<2x128x64xbf16, #tpu.memory_space<vmem>>, vector<2x64x64xbf16>
    %271 = vector.shape_cast %270 : vector<2x64x64xbf16> to vector<128x64xbf16>
    %c7_209 = arith.constant 7 : index
    %c64_210 = arith.constant 64 : index
    %c0_211 = arith.constant 0 : index
    %272 = vector.load %arg7[%c7_209, %c64_210, %c0_211] : memref<10x192x128xbf16, #tpu.memory_space<vmem>>, vector<1x64x128xbf16>
    %273 = vector.shape_cast %272 : vector<1x64x128xbf16> to vector<64x128xbf16>
    %cst_212 = arith.constant dense<0.000000e+00> : vector<128x128xf32>
    %274 = tpu.matmul %271, %273, %cst_212 {dimension_numbers = #tpu.dot_dimension_numbers<[1], [0], [0], [1], [0, 0, 1, 1], [], []>} : vector<128x64xbf16>, vector<64x128xbf16>, vector<128x128xf32> -> vector<128x128xf32>
    %275 = arith.addf %269, %274 : vector<128x128xf32>
    %c0_213 = arith.constant 0 : index
    %c59_214 = arith.constant 59 : index
    %c0_215 = arith.constant 0 : index
    %276 = vector.load %arg12[%c0_213, %c59_214, %c0_215] : memref<2x128x64xbf16, #tpu.memory_space<vmem>>, vector<2x64x64xbf16>
    %277 = vector.shape_cast %276 : vector<2x64x64xbf16> to vector<128x64xbf16>
    %c7_216 = arith.constant 7 : index
    %c128_217 = arith.constant 128 : index
    %c0_218 = arith.constant 0 : index
    %278 = vector.load %arg7[%c7_216, %c128_217, %c0_218] : memref<10x192x128xbf16, #tpu.memory_space<vmem>>, vector<1x64x128xbf16>
    %279 = vector.shape_cast %278 : vector<1x64x128xbf16> to vector<64x128xbf16>
    %cst_219 = arith.constant dense<0.000000e+00> : vector<128x128xf32>
    %280 = tpu.matmul %277, %279, %cst_219 {dimension_numbers = #tpu.dot_dimension_numbers<[1], [0], [0], [1], [0, 0, 1, 1], [], []>} : vector<128x64xbf16>, vector<64x128xbf16>, vector<128x128xf32> -> vector<128x128xf32>
    %281 = arith.addf %275, %280 : vector<128x128xf32>
    %282 = vector.extract_strided_slice %281 {offsets = [0, 0], sizes = [128, 64], strides = [1, 1]} : vector<128x128xf32> to vector<128x64xf32>
    %283 = arith.negf %282 : vector<128x64xf32>
    %284 = math.exp %283 : vector<128x64xf32>
    %cst_220 = arith.constant 1.000000e+00 : f32
    %285 = vector.broadcast %cst_220 : f32 to vector<128x64xf32>
    %286 = arith.addf %285, %284 : vector<128x64xf32>
    %287 = arith.divf %285, %286 : vector<128x64xf32>
    %288 = vector.extract_strided_slice %281 {offsets = [0, 64], sizes = [128, 64], strides = [1, 1]} : vector<128x128xf32> to vector<128x64xf32>
    %289 = arith.subf %288, %258 : vector<128x64xf32>
    %290 = arith.mulf %287, %289 : vector<128x64xf32>
    %291 = arith.addf %258, %290 : vector<128x64xf32>
    %c8 = arith.constant 8 : index
    %c0_221 = arith.constant 0 : index
    %292 = vector.load %arg9[%c8, %c0_221] : memref<12x128xf32, #tpu.memory_space<vmem>>, vector<1x128xf32>
    %293 = arith.truncf %291 : vector<128x64xf32> to vector<128x64xbf16>
    %294 = vector.shape_cast %293 : vector<128x64xbf16> to vector<2x64x64xbf16>
    %c0_222 = arith.constant 0 : index
    %c32_223 = arith.constant 32 : index
    %c0_224 = arith.constant 0 : index
    %295 = vector.load %arg12[%c0_222, %c32_223, %c0_224] : memref<2x128x64xbf16, #tpu.memory_space<vmem>>, vector<2x64x64xbf16>
    tpu.vector_store %arg12[%c0_222, %c32_223, %c0_224], %294 {strides = array<i32>} : memref<2x128x64xbf16, #tpu.memory_space<vmem>>, vector<2x64x64xbf16>,
    %c0_225 = arith.constant 0 : index
    %c31_226 = arith.constant 31 : index
    %c0_227 = arith.constant 0 : index
    %296 = vector.load %arg12[%c0_225, %c31_226, %c0_227] : memref<2x128x64xbf16, #tpu.memory_space<vmem>>, vector<2x64x64xbf16>
    %297 = vector.shape_cast %296 : vector<2x64x64xbf16> to vector<128x64xbf16>
    %c8_228 = arith.constant 8 : index
    %c0_229 = arith.constant 0 : index
    %c0_230 = arith.constant 0 : index
    %298 = vector.load %arg7[%c8_228, %c0_229, %c0_230] : memref<10x192x128xbf16, #tpu.memory_space<vmem>>, vector<1x64x128xbf16>
    %299 = vector.shape_cast %298 : vector<1x64x128xbf16> to vector<64x128xbf16>
    %cst_231 = arith.constant dense<0.000000e+00> : vector<128x128xf32>
    %300 = tpu.matmul %297, %299, %cst_231 {dimension_numbers = #tpu.dot_dimension_numbers<[1], [0], [0], [1], [0, 0, 1, 1], [], []>} : vector<128x64xbf16>, vector<64x128xbf16>, vector<128x128xf32> -> vector<128x128xf32>
    %301 = vector.broadcast %292 : vector<1x128xf32> to vector<128x128xf32>
    %302 = arith.addf %301, %300 : vector<128x128xf32>
    %c0_232 = arith.constant 0 : index
    %c32_233 = arith.constant 32 : index
    %c0_234 = arith.constant 0 : index
    %303 = vector.load %arg12[%c0_232, %c32_233, %c0_234] : memref<2x128x64xbf16, #tpu.memory_space<vmem>>, vector<2x64x64xbf16>
    %304 = vector.shape_cast %303 : vector<2x64x64xbf16> to vector<128x64xbf16>
    %c8_235 = arith.constant 8 : index
    %c64_236 = arith.constant 64 : index
    %c0_237 = arith.constant 0 : index
    %305 = vector.load %arg7[%c8_235, %c64_236, %c0_237] : memref<10x192x128xbf16, #tpu.memory_space<vmem>>, vector<1x64x128xbf16>
    %306 = vector.shape_cast %305 : vector<1x64x128xbf16> to vector<64x128xbf16>
    %cst_238 = arith.constant dense<0.000000e+00> : vector<128x128xf32>
    %307 = tpu.matmul %304, %306, %cst_238 {dimension_numbers = #tpu.dot_dimension_numbers<[1], [0], [0], [1], [0, 0, 1, 1], [], []>} : vector<128x64xbf16>, vector<64x128xbf16>, vector<128x128xf32> -> vector<128x128xf32>
    %308 = arith.addf %302, %307 : vector<128x128xf32>
    %c0_239 = arith.constant 0 : index
    %c33_240 = arith.constant 33 : index
    %c0_241 = arith.constant 0 : index
    %309 = vector.load %arg12[%c0_239, %c33_240, %c0_241] : memref<2x128x64xbf16, #tpu.memory_space<vmem>>, vector<2x64x64xbf16>
    %310 = vector.shape_cast %309 : vector<2x64x64xbf16> to vector<128x64xbf16>
    %c8_242 = arith.constant 8 : index
    %c128_243 = arith.constant 128 : index
    %c0_244 = arith.constant 0 : index
    %311 = vector.load %arg7[%c8_242, %c128_243, %c0_244] : memref<10x192x128xbf16, #tpu.memory_space<vmem>>, vector<1x64x128xbf16>
    %312 = vector.shape_cast %311 : vector<1x64x128xbf16> to vector<64x128xbf16>
    %cst_245 = arith.constant dense<0.000000e+00> : vector<128x128xf32>
    %313 = tpu.matmul %310, %312, %cst_245 {dimension_numbers = #tpu.dot_dimension_numbers<[1], [0], [0], [1], [0, 0, 1, 1], [], []>} : vector<128x64xbf16>, vector<64x128xbf16>, vector<128x128xf32> -> vector<128x128xf32>
    %314 = arith.addf %308, %313 : vector<128x128xf32>
    %315 = vector.extract_strided_slice %314 {offsets = [0, 0], sizes = [128, 64], strides = [1, 1]} : vector<128x128xf32> to vector<128x64xf32>
    %316 = arith.negf %315 : vector<128x64xf32>
    %317 = math.exp %316 : vector<128x64xf32>
    %cst_246 = arith.constant 1.000000e+00 : f32
    %318 = vector.broadcast %cst_246 : f32 to vector<128x64xf32>
    %319 = arith.addf %318, %317 : vector<128x64xf32>
    %320 = arith.divf %318, %319 : vector<128x64xf32>
    %321 = vector.extract_strided_slice %314 {offsets = [0, 64], sizes = [128, 64], strides = [1, 1]} : vector<128x128xf32> to vector<128x64xf32>
    %322 = arith.subf %321, %291 : vector<128x64xf32>
    %323 = arith.mulf %320, %322 : vector<128x64xf32>
    %324 = arith.addf %291, %323 : vector<128x64xf32>
    %c9 = arith.constant 9 : index
    %c0_247 = arith.constant 0 : index
    %325 = vector.load %arg9[%c9, %c0_247] : memref<12x128xf32, #tpu.memory_space<vmem>>, vector<1x128xf32>
    %326 = arith.truncf %324 : vector<128x64xf32> to vector<128x64xbf16>
    %327 = vector.shape_cast %326 : vector<128x64xbf16> to vector<2x64x64xbf16>
    %c0_248 = arith.constant 0 : index
    %c32_249 = arith.constant 32 : index
    %c0_250 = arith.constant 0 : index
    %328 = vector.load %arg12[%c0_248, %c32_249, %c0_250] : memref<2x128x64xbf16, #tpu.memory_space<vmem>>, vector<2x64x64xbf16>
    tpu.vector_store %arg12[%c0_248, %c32_249, %c0_250], %327 {strides = array<i32>} : memref<2x128x64xbf16, #tpu.memory_space<vmem>>, vector<2x64x64xbf16>,
    %c0_251 = arith.constant 0 : index
    %c31_252 = arith.constant 31 : index
    %c0_253 = arith.constant 0 : index
    %329 = vector.load %arg12[%c0_251, %c31_252, %c0_253] : memref<2x128x64xbf16, #tpu.memory_space<vmem>>, vector<2x64x64xbf16>
    %330 = vector.shape_cast %329 : vector<2x64x64xbf16> to vector<128x64xbf16>
    %c9_254 = arith.constant 9 : index
    %c0_255 = arith.constant 0 : index
    %c0_256 = arith.constant 0 : index
    %331 = vector.load %arg7[%c9_254, %c0_255, %c0_256] : memref<10x192x128xbf16, #tpu.memory_space<vmem>>, vector<1x64x128xbf16>
    %332 = vector.shape_cast %331 : vector<1x64x128xbf16> to vector<64x128xbf16>
    %cst_257 = arith.constant dense<0.000000e+00> : vector<128x128xf32>
    %333 = tpu.matmul %330, %332, %cst_257 {dimension_numbers = #tpu.dot_dimension_numbers<[1], [0], [0], [1], [0, 0, 1, 1], [], []>} : vector<128x64xbf16>, vector<64x128xbf16>, vector<128x128xf32> -> vector<128x128xf32>
    %334 = vector.broadcast %325 : vector<1x128xf32> to vector<128x128xf32>
    %335 = arith.addf %334, %333 : vector<128x128xf32>
    %c0_258 = arith.constant 0 : index
    %c32_259 = arith.constant 32 : index
    %c0_260 = arith.constant 0 : index
    %336 = vector.load %arg12[%c0_258, %c32_259, %c0_260] : memref<2x128x64xbf16, #tpu.memory_space<vmem>>, vector<2x64x64xbf16>
    %337 = vector.shape_cast %336 : vector<2x64x64xbf16> to vector<128x64xbf16>
    %c9_261 = arith.constant 9 : index
    %c64_262 = arith.constant 64 : index
    %c0_263 = arith.constant 0 : index
    %338 = vector.load %arg7[%c9_261, %c64_262, %c0_263] : memref<10x192x128xbf16, #tpu.memory_space<vmem>>, vector<1x64x128xbf16>
    %339 = vector.shape_cast %338 : vector<1x64x128xbf16> to vector<64x128xbf16>
    %cst_264 = arith.constant dense<0.000000e+00> : vector<128x128xf32>
    %340 = tpu.matmul %337, %339, %cst_264 {dimension_numbers = #tpu.dot_dimension_numbers<[1], [0], [0], [1], [0, 0, 1, 1], [], []>} : vector<128x64xbf16>, vector<64x128xbf16>, vector<128x128xf32> -> vector<128x128xf32>
    %341 = arith.addf %335, %340 : vector<128x128xf32>
    %c0_265 = arith.constant 0 : index
    %c33_266 = arith.constant 33 : index
    %c0_267 = arith.constant 0 : index
    %342 = vector.load %arg12[%c0_265, %c33_266, %c0_267] : memref<2x128x64xbf16, #tpu.memory_space<vmem>>, vector<2x64x64xbf16>
    %343 = vector.shape_cast %342 : vector<2x64x64xbf16> to vector<128x64xbf16>
    %c9_268 = arith.constant 9 : index
    %c128_269 = arith.constant 128 : index
    %c0_270 = arith.constant 0 : index
    %344 = vector.load %arg7[%c9_268, %c128_269, %c0_270] : memref<10x192x128xbf16, #tpu.memory_space<vmem>>, vector<1x64x128xbf16>
    %345 = vector.shape_cast %344 : vector<1x64x128xbf16> to vector<64x128xbf16>
    %cst_271 = arith.constant dense<0.000000e+00> : vector<128x128xf32>
    %346 = tpu.matmul %343, %345, %cst_271 {dimension_numbers = #tpu.dot_dimension_numbers<[1], [0], [0], [1], [0, 0, 1, 1], [], []>} : vector<128x64xbf16>, vector<64x128xbf16>, vector<128x128xf32> -> vector<128x128xf32>
    %347 = arith.addf %341, %346 : vector<128x128xf32>
    %348 = vector.extract_strided_slice %347 {offsets = [0, 0], sizes = [128, 64], strides = [1, 1]} : vector<128x128xf32> to vector<128x64xf32>
    %349 = arith.negf %348 : vector<128x64xf32>
    %350 = math.exp %349 : vector<128x64xf32>
    %cst_272 = arith.constant 1.000000e+00 : f32
    %351 = vector.broadcast %cst_272 : f32 to vector<128x64xf32>
    %352 = arith.addf %351, %350 : vector<128x64xf32>
    %353 = arith.divf %351, %352 : vector<128x64xf32>
    %354 = vector.extract_strided_slice %347 {offsets = [0, 64], sizes = [128, 64], strides = [1, 1]} : vector<128x128xf32> to vector<128x64xf32>
    %355 = arith.subf %354, %324 : vector<128x64xf32>
    %356 = arith.mulf %353, %355 : vector<128x64xf32>
    %357 = arith.addf %324, %356 : vector<128x64xf32>
    %c10 = arith.constant 10 : index
    %c0_273 = arith.constant 0 : index
    %358 = vector.load %arg9[%c10, %c0_273] : memref<12x128xf32, #tpu.memory_space<vmem>>, vector<1x128xf32>
    %359 = arith.truncf %357 : vector<128x64xf32> to vector<128x64xbf16>
    %c0_274 = arith.constant 0 : index
    %c0_275 = arith.constant 0 : index
    %c0_276 = arith.constant 0 : index
    %360 = vector.load %arg8[%c0_274, %c0_275, %c0_276] : memref<2x64x128xbf16, #tpu.memory_space<vmem>>, vector<1x64x128xbf16>
    %361 = vector.shape_cast %360 : vector<1x64x128xbf16> to vector<64x128xbf16>
    %cst_277 = arith.constant dense<0.000000e+00> : vector<128x128xf32>
    %362 = tpu.matmul %359, %361, %cst_277 {dimension_numbers = #tpu.dot_dimension_numbers<[1], [0], [0], [1], [0, 0, 1, 1], [], []>} : vector<128x64xbf16>, vector<64x128xbf16>, vector<128x128xf32> -> vector<128x128xf32>
    %363 = vector.broadcast %358 : vector<1x128xf32> to vector<128x128xf32>
    %364 = arith.addf %362, %363 : vector<128x128xf32>
    %365 = vector.extract_strided_slice %364 {offsets = [0, 0], sizes = [128, 64], strides = [1, 1]} : vector<128x128xf32> to vector<128x64xf32>
    %366 = arith.negf %365 : vector<128x64xf32>
    %367 = math.exp %366 : vector<128x64xf32>
    %cst_278 = arith.constant 1.000000e+00 : f32
    %368 = vector.broadcast %cst_278 : f32 to vector<128x64xf32>
    %369 = arith.addf %368, %367 : vector<128x64xf32>
    %370 = arith.divf %368, %369 : vector<128x64xf32>
    %371 = vector.extract_strided_slice %364 {offsets = [0, 64], sizes = [128, 64], strides = [1, 1]} : vector<128x128xf32> to vector<128x64xf32>
    %372 = arith.subf %371, %357 : vector<128x64xf32>
    %373 = arith.mulf %370, %372 : vector<128x64xf32>
    %374 = arith.addf %357, %373 : vector<128x64xf32>
    %c11 = arith.constant 11 : index
    %c0_279 = arith.constant 0 : index
    %375 = vector.load %arg9[%c11, %c0_279] : memref<12x128xf32, #tpu.memory_space<vmem>>, vector<1x128xf32>
    %376 = arith.truncf %374 : vector<128x64xf32> to vector<128x64xbf16>
    %c1_280 = arith.constant 1 : index
    %c0_281 = arith.constant 0 : index
    %c0_282 = arith.constant 0 : index
    %377 = vector.load %arg8[%c1_280, %c0_281, %c0_282] : memref<2x64x128xbf16, #tpu.memory_space<vmem>>, vector<1x64x128xbf16>
    %378 = vector.shape_cast %377 : vector<1x64x128xbf16> to vector<64x128xbf16>
    %cst_283 = arith.constant dense<0.000000e+00> : vector<128x128xf32>
    %379 = tpu.matmul %376, %378, %cst_283 {dimension_numbers = #tpu.dot_dimension_numbers<[1], [0], [0], [1], [0, 0, 1, 1], [], []>} : vector<128x64xbf16>, vector<64x128xbf16>, vector<128x128xf32> -> vector<128x128xf32>
    %380 = vector.broadcast %375 : vector<1x128xf32> to vector<128x128xf32>
    %381 = arith.addf %379, %380 : vector<128x128xf32>
    %382 = vector.extract_strided_slice %381 {offsets = [0, 0], sizes = [128, 64], strides = [1, 1]} : vector<128x128xf32> to vector<128x64xf32>
    %383 = arith.negf %382 : vector<128x64xf32>
    %384 = math.exp %383 : vector<128x64xf32>
    %cst_284 = arith.constant 1.000000e+00 : f32
    %385 = vector.broadcast %cst_284 : f32 to vector<128x64xf32>
    %386 = arith.addf %385, %384 : vector<128x64xf32>
    %387 = arith.divf %385, %386 : vector<128x64xf32>
    %388 = vector.extract_strided_slice %381 {offsets = [0, 64], sizes = [128, 64], strides = [1, 1]} : vector<128x128xf32> to vector<128x64xf32>
    %389 = arith.subf %388, %374 : vector<128x64xf32>
    %390 = arith.mulf %387, %389 : vector<128x64xf32>
    %391 = arith.addf %374, %390 : vector<128x64xf32>
    %392 = vector.extract_strided_slice %391 {offsets = [0, 0], sizes = [64, 64], strides = [1, 1]} : vector<128x64xf32> to vector<64x64xf32>
    %393 = tpu.transpose %392, [1, 0] : vector<64x64xf32> -> vector<64x64xf32>
    %394 = vector.extract_strided_slice %393 {offsets = [0, 0], sizes = [32, 64], strides = [1, 1]} : vector<64x64xf32> to vector<32x64xf32>
    %c0_285 = arith.constant 0 : index
    %c0_286 = arith.constant 0 : index
    %c0_287 = arith.constant 0 : index
    %395 = vector.load %arg10[%c0_285, %c0_286, %c0_287] : memref<2x32x64xf32, #tpu.memory_space<vmem>>, vector<1x32x64xf32>
    %396 = vector.shape_cast %395 : vector<1x32x64xf32> to vector<32x64xf32>
    %397 = vector.shape_cast %394 : vector<32x64xf32> to vector<1x32x64xf32>
    tpu.vector_store %arg10[%c0_285, %c0_286, %c0_287], %397 {strides = array<i32>} : memref<2x32x64xf32, #tpu.memory_space<vmem>>, vector<1x32x64xf32>,
    %398 = vector.extract_strided_slice %393 {offsets = [32, 0], sizes = [32, 64], strides = [1, 1]} : vector<64x64xf32> to vector<32x64xf32>
    %c0_288 = arith.constant 0 : index
    %c0_289 = arith.constant 0 : index
    %c0_290 = arith.constant 0 : index
    %399 = vector.load %arg11[%c0_288, %c0_289, %c0_290] : memref<2x32x64xf32, #tpu.memory_space<vmem>>, vector<1x32x64xf32>
    %400 = vector.shape_cast %399 : vector<1x32x64xf32> to vector<32x64xf32>
    %401 = vector.shape_cast %398 : vector<32x64xf32> to vector<1x32x64xf32>
    tpu.vector_store %arg11[%c0_288, %c0_289, %c0_290], %401 {strides = array<i32>} : memref<2x32x64xf32, #tpu.memory_space<vmem>>, vector<1x32x64xf32>,
    %402 = vector.extract_strided_slice %391 {offsets = [64, 0], sizes = [64, 64], strides = [1, 1]} : vector<128x64xf32> to vector<64x64xf32>
    %403 = tpu.transpose %402, [1, 0] : vector<64x64xf32> -> vector<64x64xf32>
    %404 = vector.extract_strided_slice %403 {offsets = [0, 0], sizes = [32, 64], strides = [1, 1]} : vector<64x64xf32> to vector<32x64xf32>
    %c1_291 = arith.constant 1 : index
    %c0_292 = arith.constant 0 : index
    %c0_293 = arith.constant 0 : index
    %405 = vector.load %arg10[%c1_291, %c0_292, %c0_293] : memref<2x32x64xf32, #tpu.memory_space<vmem>>, vector<1x32x64xf32>
    %406 = vector.shape_cast %405 : vector<1x32x64xf32> to vector<32x64xf32>
    %407 = vector.shape_cast %404 : vector<32x64xf32> to vector<1x32x64xf32>
    tpu.vector_store %arg10[%c1_291, %c0_292, %c0_293], %407 {strides = array<i32>} : memref<2x32x64xf32, #tpu.memory_space<vmem>>, vector<1x32x64xf32>,
    %408 = vector.extract_strided_slice %403 {offsets = [32, 0], sizes = [32, 64], strides = [1, 1]} : vector<64x64xf32> to vector<32x64xf32>
    %c1_294 = arith.constant 1 : index
    %c0_295 = arith.constant 0 : index
    %c0_296 = arith.constant 0 : index
    %409 = vector.load %arg11[%c1_294, %c0_295, %c0_296] : memref<2x32x64xf32, #tpu.memory_space<vmem>>, vector<1x32x64xf32>
    %410 = vector.shape_cast %409 : vector<1x32x64xf32> to vector<32x64xf32>
    %411 = vector.shape_cast %408 : vector<32x64xf32> to vector<1x32x64xf32>
    tpu.vector_store %arg11[%c1_294, %c0_295, %c0_296], %411 {strides = array<i32>} : memref<2x32x64xf32, #tpu.memory_space<vmem>>, vector<1x32x64xf32>,
    return
  }
  func.func @transform_0(%arg0: i32) -> (i32, i32, i32) {
    %c0_i32 = arith.constant 0 : i32
    %c0_i32_0 = arith.constant 0 : i32
    %c0_i32_1 = arith.constant 0 : i32
    return %arg0, %c0_i32, %c0_i32_0 : i32, i32, i32
  }
  func.func @transform_1(%arg0: i32) -> (i32, i32) {
    %c0_i32 = arith.constant 0 : i32
    %c0_i32_0 = arith.constant 0 : i32
    %c0_i32_1 = arith.constant 0 : i32
    return %c0_i32, %c0_i32_0 : i32, i32
  }
  func.func @transform_2(%arg0: i32) -> (i32, i32) {
    %c0_i32 = arith.constant 0 : i32
    %c0_i32_0 = arith.constant 0 : i32
    %c0_i32_1 = arith.constant 0 : i32
    return %c0_i32, %c0_i32_0 : i32, i32
  }
  func.func @transform_3(%arg0: i32) -> (i32, i32) {
    %c0_i32 = arith.constant 0 : i32
    %c0_i32_0 = arith.constant 0 : i32
    %c0_i32_1 = arith.constant 0 : i32
    return %c0_i32, %c0_i32_0 : i32, i32
  }
  func.func @transform_4(%arg0: i32) -> (i32, i32) {
    %c0_i32 = arith.constant 0 : i32
    %c0_i32_0 = arith.constant 0 : i32
    %c0_i32_1 = arith.constant 0 : i32
    return %c0_i32, %c0_i32_0 : i32, i32
  }
  func.func @transform_5(%arg0: i32) -> (i32, i32) {
    %c0_i32 = arith.constant 0 : i32
    %c0_i32_0 = arith.constant 0 : i32
    %c0_i32_1 = arith.constant 0 : i32
    return %c0_i32, %c0_i32_0 : i32, i32
  }
  func.func @transform_6(%arg0: i32) -> (i32, i32, i32) {
    %c0_i32 = arith.constant 0 : i32
    %c0_i32_0 = arith.constant 0 : i32
    %c0_i32_1 = arith.constant 0 : i32
    %c0_i32_2 = arith.constant 0 : i32
    return %c0_i32, %c0_i32_0, %c0_i32_1 : i32, i32, i32
  }
  func.func @transform_7(%arg0: i32) -> (i32, i32, i32) {
    %c0_i32 = arith.constant 0 : i32
    %c0_i32_0 = arith.constant 0 : i32
    %c0_i32_1 = arith.constant 0 : i32
    %c0_i32_2 = arith.constant 0 : i32
    return %c0_i32, %c0_i32_0, %c0_i32_1 : i32, i32, i32
  }
  func.func @transform_8(%arg0: i32) -> (i32, i32) {
    %c0_i32 = arith.constant 0 : i32
    %c0_i32_0 = arith.constant 0 : i32
    %c0_i32_1 = arith.constant 0 : i32
    return %c0_i32, %c0_i32_0 : i32, i32
  }
  func.func @transform_9(%arg0: i32) -> (i32, i32, i32) {
    %c0_i32 = arith.constant 0 : i32
    %c0_i32_0 = arith.constant 0 : i32
    %c0_i32_1 = arith.constant 0 : i32
    return %arg0, %c0_i32, %c0_i32_0 : i32, i32, i32
  }
  func.func @transform_10(%arg0: i32) -> (i32, i32, i32) {
    %c0_i32 = arith.constant 0 : i32
    %c0_i32_0 = arith.constant 0 : i32
    %c0_i32_1 = arith.constant 0 : i32
    return %arg0, %c0_i32, %c0_i32_0 : i32, i32, i32
  }
}

</mosaic_0001>

<llo_original>
// kernel: text_encoder.1
$region0: #{text_encoder.1}
  #allocation0 [shape = 'u32[]', space=smem, size = 0x4, offset = 0x4, fixed_abs, tag = 'smem constant byte address 0x4 - core index']
  #allocation1 [shape = 'u32[144,128]{1,0:T(1,128)}', space=vmem, size = 0x12000, scoped, tag = 'internal scratch']
  #allocation2 [shape = 'bf16[2,128,64]{2,1,0:T(16,128)(2,1)}', space=vmem, size = 0x10000, scoped, tag = 'scratch operand']
  %s0 = inlined_call_operand.vmem [shape: s32[4,64,1], index: 0, kind: input, shape index: {}]
  %s1 = inlined_call_operand.vmem [shape: bf16[32,32], index: 1, kind: input, shape index: {}]
  %s2 = inlined_call_operand.vmem [shape: bf16[32,64], index: 2, kind: input, shape index: {}]
  %s3 = inlined_call_operand.vmem [shape: f32[1,64], index: 3, kind: input, shape index: {}]
  %s4 = inlined_call_operand.vmem [shape: bf16[64,64], index: 4, kind: input, shape index: {}]
  %s5 = inlined_call_operand.vmem [shape: f32[1,64], index: 5, kind: input, shape index: {}]
  %s6 = inlined_call_operand.hbm [shape: bf16[10,192,128], index: 6, kind: input, shape index: {}]
  %s7 = inlined_call_operand.vmem [shape: bf16[2,64,128], index: 7, kind: input, shape index: {}]
  %s8 = inlined_call_operand.vmem [shape: f32[12,128], index: 8, kind: input, shape index: {}]
  %s9 = inlined_call_operand.hbm [shape: f32[4,32,64], index: 9, kind: output, shape index: {0}]
  %s10 = inlined_call_operand.hbm [shape: f32[4,32,64], index: 10, kind: output, shape index: {1}]
  %11 = xla_tuple %s9, %s10
  %s12 = sld [smem:[#allocation0]]
  $region81: #{text_encoder.1} parent=0
    _
  %s14 = ssub.s32 1, %s12
  %s15 = scalar_select 0, %s14, %s12
  $region1: #{text_encoder.1} parent=0
    #allocation3 [shape = 'u8[491520]{0}', space=vmem, size = 0x78000, scoped, tag = 'input window, operand 6, single buffered']
    #allocation4 [shape = 's32[2]{0}', space=sflag, size = 0x8, scoped, tag = 'scoped memory for text_encoder.1']
    #allocation5 [shape = 's32[2]{0}', space=sflag, size = 0x8, scoped, tag = 'scoped memory for text_encoder.1']
    #allocation6 [shape = 'u8[65536]{0}', space=vmem, size = 0x10000, scoped, tag = 'output window, operand 0']
    #allocation7 [shape = 'u8[65536]{0}', space=vmem, size = 0x10000, scoped, tag = 'output window, operand 1']
    #allocation8 [shape = 's32[2]{0}', space=sflag, size = 0x8, scoped, tag = 'scoped memory for text_encoder.1']
    %16 = vsyncpa [#allocation4], 0
    %17 = vsyncpa [#allocation5], 0
    %s18 = scalar_lea.sflag [#allocation5], 1
    %19 = vsyncpa %s18, 0
    %20 = vsyncpa [#allocation8], 0
    %s21 = scalar_lea.sflag [#allocation8], 1
    %22 = vsyncpa %s21, 0
    loop: start=0, step=1, limit=4
    $region2: #{text_encoder.1} parent=1 // loop_pre_header
      _
    $region3: #{text_encoder.1} parent=1 // loop_header
      %s24 = sphi 0, %s28
      %p25 = scmp.ge.s32.totalorder %s24, 4
      %s34 = sphi 0, %s36
      %s37 = sphi 0, %s34
      %s38 = sphi 0, %s37
      %s54 = sphi 0, %s38
      %s58 = sphi 0, %s58
      %s60 = sphi 0, %s58
      %s61 = sphi 0, %s60
      %s75 = sphi 0, %s61
      %s79 = sphi 0, %s79
      %s81 = sphi 0, %s79
      %s82 = sphi 0, %s81
      %s96 = sphi 0, %s82
      %s100 = sphi 0, %s100
      %s102 = sphi 0, %s100
      %s103 = sphi 0, %s102
      %s117 = sphi 0, %s103
      %s121 = sphi 0, %s121
      %s123 = sphi 0, %s121
      %s124 = sphi 0, %s123
      %s138 = sphi 0, %s124
      %s142 = sphi 0, %s142
      %s144 = sphi 0, %s142
      %s145 = sphi 0, %s144
      %s159 = sphi 0, %s145
      %s163 = sphi 0, %s163
      %s165 = sphi 0, %s163
      %s166 = sphi 0, %s165
      %s180 = sphi 0, %s166
      %s184 = sphi 0, %s184
      %s186 = sphi 0, %s184
      %s187 = sphi 0, %s186
      %s201 = sphi 0, %s187
      %s205 = sphi 0, %s205
      %s207 = sphi 0, %s205
      %s208 = sphi 0, %s207
      %s222 = sphi 0, %s208
      %s228 = sphi 0, %s230
      %s231 = sphi 0, %s228
      %s232 = sphi 0, %s231
      %s248 = sphi 0, %s232
      %s254 = sphi 0, %s256
      %s257 = sphi 0, %s254
      %s258 = sphi 0, %s257
      %s274 = sphi 0, %s258
    $region4: #{text_encoder.1} parent=1 // loop_header_branch
      %27 = sbr.rel (%p25) target = $region8
    $region5: #{text_encoder.1} parent=1 // loop_body
      %s29 = ssub.s32 %s24, 1
      %s30 = ssub.s32 %s24, 2
      %s31 = sadd.s32 %s24, 1
      %s32 = ssub.s32 %s24, %s31
      %p33 = scmp.eq.s32.totalorder %s32, 0
      %s35 = sadd.s32 %s34, 1
      %s36 = scalar_select %p33, %s34, %s35
      %p39 = pneg %p33
      %p40 = scmp.eq.s32.totalorder %s24, 1
      %p41 = por %p39, %p40
      %p42 = scmp.ne.s32.totalorder %s34, %s37
      %p43 = scmp.eq.s32.totalorder %s24, 0
      %p44 = por %p42, %p43
      %p45 = scmp.ne.s32.totalorder %s34, %s37
      %p46 = scmp.eq.s32.totalorder %s29, 1
      %p47 = por %p45, %p46
      %p48 = scmp.ne.s32.totalorder %s37, %s38
      %p49 = scmp.eq.s32.totalorder %s29, 0
      %p50 = por %p48, %p49
      %p51 = scmp.ne.s32.totalorder %s37, %s38
      %p52 = scmp.eq.s32.totalorder %s30, 1
      %p53 = por %p51, %p52
      %p55 = scmp.ne.s32.totalorder %s38, %s54
      %p56 = scmp.eq.s32.totalorder %s30, 0
      %p57 = por %p55, %p56
      %s59 = sadd.s32 %s58, 1
      %p62 = scmp.eq.s32.totalorder %s24, 1
      %p63 = scmp.ne.s32.totalorder %s58, %s60
      %p64 = scmp.eq.s32.totalorder %s24, 0
      %p65 = por %p63, %p64
      %p66 = scmp.ne.s32.totalorder %s58, %s60
      %p67 = scmp.eq.s32.totalorder %s29, 1
      %p68 = por %p66, %p67
      %p69 = scmp.ne.s32.totalorder %s60, %s61
      %p70 = scmp.eq.s32.totalorder %s29, 0
      %p71 = por %p69, %p70
      %p72 = scmp.ne.s32.totalorder %s60, %s61
      %p73 = scmp.eq.s32.totalorder %s30, 1
      %p74 = por %p72, %p73
      %p76 = scmp.ne.s32.totalorder %s61, %s75
      %p77 = scmp.eq.s32.totalorder %s30, 0
      %p78 = por %p76, %p77
      %s80 = sadd.s32 %s79, 1
      %p83 = scmp.eq.s32.totalorder %s24, 1
      %p84 = scmp.ne.s32.totalorder %s79, %s81
      %p85 = scmp.eq.s32.totalorder %s24, 0
      %p86 = por %p84, %p85
      %p87 = scmp.ne.s32.totalorder %s79, %s81
      %p88 = scmp.eq.s32.totalorder %s29, 1
      %p89 = por %p87, %p88
      %p90 = scmp.ne.s32.totalorder %s81, %s82
      %p91 = scmp.eq.s32.totalorder %s29, 0
      %p92 = por %p90, %p91
      %p93 = scmp.ne.s32.totalorder %s81, %s82
      %p94 = scmp.eq.s32.totalorder %s30, 1
      %p95 = por %p93, %p94
      %p97 = scmp.ne.s32.totalorder %s82, %s96
      %p98 = scmp.eq.s32.totalorder %s30, 0
      %p99 = por %p97, %p98
      %s101 = sadd.s32 %s100, 1
      %p104 = scmp.eq.s32.totalorder %s24, 1
      %p105 = scmp.ne.s32.totalorder %s100, %s102
      %p106 = scmp.eq.s32.totalorder %s24, 0
      %p107 = por %p105, %p106
      %p108 = scmp.ne.s32.totalorder %s100, %s102
      %p109 = scmp.eq.s32.totalorder %s29, 1
      %p110 = por %p108, %p109
      %p111 = scmp.ne.s32.totalorder %s102, %s103
      %p112 = scmp.eq.s32.totalorder %s29, 0
      %p113 = por %p111, %p112
      %p114 = scmp.ne.s32.totalorder %s102, %s103
      %p115 = scmp.eq.s32.totalorder %s30, 1
      %p116 = por %p114, %p115
      %p118 = scmp.ne.s32.totalorder %s103, %s117
      %p119 = scmp.eq.s32.totalorder %s30, 0
      %p120 = por %p118, %p119
      %s122 = sadd.s32 %s121, 1
      %p125 = scmp.eq.s32.totalorder %s24, 1
      %p126 = scmp.ne.s32.totalorder %s121, %s123
      %p127 = scmp.eq.s32.totalorder %s24, 0
      %p128 = por %p126, %p127
      %p129 = scmp.ne.s32.totalorder %s121, %s123
      %p130 = scmp.eq.s32.totalorder %s29, 1
      %p131 = por %p129, %p130
      %p132 = scmp.ne.s32.totalorder %s123, %s124
      %p133 = scmp.eq.s32.totalorder %s29, 0
      %p134 = por %p132, %p133
      %p135 = scmp.ne.s32.totalorder %s123, %s124
      %p136 = scmp.eq.s32.totalorder %s30, 1
      %p137 = por %p135, %p136
      %p139 = scmp.ne.s32.totalorder %s124, %s138
      %p140 = scmp.eq.s32.totalorder %s30, 0
      %p141 = por %p139, %p140
      %s143 = sadd.s32 %s142, 1
      %p146 = scmp.eq.s32.totalorder %s24, 1
      %p147 = scmp.ne.s32.totalorder %s142, %s144
      %p148 = scmp.eq.s32.totalorder %s24, 0
      %p149 = por %p147, %p148
      %p150 = scmp.ne.s32.totalorder %s142, %s144
      %p151 = scmp.eq.s32.totalorder %s29, 1
      %p152 = por %p150, %p151
      %p153 = scmp.ne.s32.totalorder %s144, %s145
      %p154 = scmp.eq.s32.totalorder %s29, 0
      %p155 = por %p153, %p154
      %p156 = scmp.ne.s32.totalorder %s144, %s145
      %p157 = scmp.eq.s32.totalorder %s30, 1
      %p158 = por %p156, %p157
      %p160 = scmp.ne.s32.totalorder %s145, %s159
      %p161 = scmp.eq.s32.totalorder %s30, 0
      %p162 = por %p160, %p161
      %s164 = sadd.s32 %s163, 1
      %p167 = scmp.eq.s32.totalorder %s24, 1
      %p168 = scmp.ne.s32.totalorder %s163, %s165
      %p169 = scmp.eq.s32.totalorder %s24, 0
      %p170 = por %p168, %p169
      %p171 = scmp.ne.s32.totalorder %s163, %s165
      %p172 = scmp.eq.s32.totalorder %s29, 1
      %p173 = por %p171, %p172
      %p174 = scmp.ne.s32.totalorder %s165, %s166
      %p175 = scmp.eq.s32.totalorder %s29, 0
      %p176 = por %p174, %p175
      %p177 = scmp.ne.s32.totalorder %s165, %s166
      %p178 = scmp.eq.s32.totalorder %s30, 1
      %p179 = por %p177, %p178
      %p181 = scmp.ne.s32.totalorder %s166, %s180
      %p182 = scmp.eq.s32.totalorder %s30, 0
      %p183 = por %p181, %p182
      %s185 = sadd.s32 %s184, 1
      %p188 = scmp.eq.s32.totalorder %s24, 1
      %p189 = scmp.ne.s32.totalorder %s184, %s186
      %p190 = scmp.eq.s32.totalorder %s24, 0
      %p191 = por %p189, %p190
      %p192 = scmp.ne.s32.totalorder %s184, %s186
      %p193 = scmp.eq.s32.totalorder %s29, 1
      %p194 = por %p192, %p193
      %p195 = scmp.ne.s32.totalorder %s186, %s187
      %p196 = scmp.eq.s32.totalorder %s29, 0
      %p197 = por %p195, %p196
      %p198 = scmp.ne.s32.totalorder %s186, %s187
      %p199 = scmp.eq.s32.totalorder %s30, 1
      %p200 = por %p198, %p199
      %p202 = scmp.ne.s32.totalorder %s187, %s201
      %p203 = scmp.eq.s32.totalorder %s30, 0
      %p204 = por %p202, %p203
      %s206 = sadd.s32 %s205, 1
      %p209 = scmp.eq.s32.totalorder %s24, 1
      %p210 = scmp.ne.s32.totalorder %s205, %s207
      %p211 = scmp.eq.s32.totalorder %s24, 0
      %p212 = por %p210, %p211
      %p213 = scmp.ne.s32.totalorder %s205, %s207
      %p214 = scmp.eq.s32.totalorder %s29, 1
      %p215 = por %p213, %p214
      %p216 = scmp.ne.s32.totalorder %s207, %s208
      %p217 = scmp.eq.s32.totalorder %s29, 0
      %p218 = por %p216, %p217
      %p219 = scmp.ne.s32.totalorder %s207, %s208
      %p220 = scmp.eq.s32.totalorder %s30, 1
      %p221 = por %p219, %p220
      %p223 = scmp.ne.s32.totalorder %s208, %s222
      %p224 = scmp.eq.s32.totalorder %s30, 0
      %p225 = por %p223, %p224
      %s226 = ssub.s32 %s24, %s31
      %p227 = scmp.eq.s32.totalorder %s226, 0
      %s229 = sadd.s32 %s228, 1
      %s230 = scalar_select %p227, %s228, %s229
      %p233 = pneg %p227
      %p234 = scmp.eq.s32.totalorder %s24, 1
      %p235 = por %p233, %p234
      %p236 = scmp.ne.s32.totalorder %s228, %s231
      %p237 = scmp.eq.s32.totalorder %s24, 0
      %p238 = por %p236, %p237
      %p239 = scmp.ne.s32.totalorder %s228, %s231
      %p240 = scmp.eq.s32.totalorder %s29, 1
      %p241 = por %p239, %p240
      %p242 = scmp.ne.s32.totalorder %s231, %s232
      %p243 = scmp.eq.s32.totalorder %s29, 0
      %p244 = por %p242, %p243
      %p245 = scmp.ne.s32.totalorder %s231, %s232
      %p246 = scmp.eq.s32.totalorder %s30, 1
      %p247 = por %p245, %p246
      %p249 = scmp.ne.s32.totalorder %s232, %s248
      %p250 = scmp.eq.s32.totalorder %s30, 0
      %p251 = por %p249, %p250
      %s252 = ssub.s32 %s24, %s31
      %p253 = scmp.eq.s32.totalorder %s252, 0
      %s255 = sadd.s32 %s254, 1
      %s256 = scalar_select %p253, %s254, %s255
      %p259 = pneg %p253
      %p260 = scmp.eq.s32.totalorder %s24, 1
      %p261 = por %p259, %p260
      %p262 = scmp.ne.s32.totalorder %s254, %s257
      %p263 = scmp.eq.s32.totalorder %s24, 0
      %p264 = por %p262, %p263
      %p265 = scmp.ne.s32.totalorder %s254, %s257
      %p266 = scmp.eq.s32.totalorder %s29, 1
      %p267 = por %p265, %p266
      %p268 = scmp.ne.s32.totalorder %s257, %s258
      %p269 = scmp.eq.s32.totalorder %s29, 0
      %p270 = por %p268, %p269
      %p271 = scmp.ne.s32.totalorder %s257, %s258
      %p272 = scmp.eq.s32.totalorder %s30, 1
      %p273 = por %p271, %p272
      %p275 = scmp.ne.s32.totalorder %s258, %s274
      %p276 = scmp.eq.s32.totalorder %s30, 0
      %p277 = por %p275, %p276
      %p278 = scmp.le.s32.totalorder 1, %s24
      %p279 = scmp.lt.s32.totalorder %s24, 3
      %p280 = pnand %p278, %p279
      %p281 = pneg %p280
      // Predicated region
      $region9: #{text_encoder.1} parent=5 // pred_check
        _
      $region10: #{text_encoder.1} parent=5 // pred_check_branch
        %283 = sbr.rel (%p280) target = $region12
      $region11: #{text_encoder.1} parent=5 // pred_region
        %s284 = ssub.s32 %s24, 1
        // Predicated region
        $region13: #{text_encoder.1} parent=11 // pred_check
          %p285 = pneg %p71
        $region14: #{text_encoder.1} parent=11 // pred_check_branch
          %287 = sbr.rel (%p285) target = $region16
        $region15: #{text_encoder.1} parent=11 // pred_region
          _
        $region16: #{text_encoder.1} parent=11 // pred_fallthru
          _
        // Predicated region
        $region17: #{text_encoder.1} parent=11 // pred_check
          %p288 = pneg %p92
        $region18: #{text_encoder.1} parent=11 // pred_check_branch
          %290 = sbr.rel (%p288) target = $region20
        $region19: #{text_encoder.1} parent=11 // pred_region
          _
        $region20: #{text_encoder.1} parent=11 // pred_fallthru
          _
        // Predicated region
        $region21: #{text_encoder.1} parent=11 // pred_check
          %p291 = pneg %p113
        $region22: #{text_encoder.1} parent=11 // pred_check_branch
          %293 = sbr.rel (%p291) target = $region24
        $region23: #{text_encoder.1} parent=11 // pred_region
          _
        $region24: #{text_encoder.1} parent=11 // pred_fallthru
          _
        // Predicated region
        $region25: #{text_encoder.1} parent=11 // pred_check
          %p294 = pneg %p134
        $region26: #{text_encoder.1} parent=11 // pred_check_branch
          %296 = sbr.rel (%p294) target = $region28
        $region27: #{text_encoder.1} parent=11 // pred_region
          _
        $region28: #{text_encoder.1} parent=11 // pred_fallthru
          _
        // Predicated region
        $region29: #{text_encoder.1} parent=11 // pred_check
          %p297 = pneg %p155
        $region30: #{text_encoder.1} parent=11 // pred_check_branch
          %299 = sbr.rel (%p297) target = $region32
        $region31: #{text_encoder.1} parent=11 // pred_region
          _
        $region32: #{text_encoder.1} parent=11 // pred_fallthru
          _
        // Predicated region
        $region33: #{text_encoder.1} parent=11 // pred_check
          %p300 = pneg %p176
        $region34: #{text_encoder.1} parent=11 // pred_check_branch
          %302 = sbr.rel (%p300) target = $region36
        $region35: #{text_encoder.1} parent=11 // pred_region
          %s304 = ssub.s32 15360, 15360
          %305 = vsyncadd [#allocation4], %s304
          %s306 = sshll.u32 [#allocation3], 4
          %s307 = int_to_ptr.vmem [resolvable:$true] %s306
          %312 = dma.hbm_to_vmem [thread:$0]  %s6, 15360, %s307, [#allocation4], 64, 64, 4
        $region36: #{text_encoder.1} parent=11 // pred_fallthru
          _
        // Predicated region
        $region37: #{text_encoder.1} parent=11 // pred_check
          %p313 = pneg %p197
        $region38: #{text_encoder.1} parent=11 // pred_check_branch
          %315 = sbr.rel (%p313) target = $region40
        $region39: #{text_encoder.1} parent=11 // pred_region
          _
        $region40: #{text_encoder.1} parent=11 // pred_fallthru
          _
        // Predicated region
        $region41: #{text_encoder.1} parent=11 // pred_check
          %p316 = pneg %p218
        $region42: #{text_encoder.1} parent=11 // pred_check_branch
          %318 = sbr.rel (%p316) target = $region44
        $region43: #{text_encoder.1} parent=11 // pred_region
          _
        $region44: #{text_encoder.1} parent=11 // pred_fallthru
          _
      $region12: #{text_encoder.1} parent=5 // pred_fallthru
        _
      %p319 = scmp.lt.s32.totalorder %s24, 2
      // Predicated region
      $region45: #{text_encoder.1} parent=5 // pred_check
        %p320 = pneg %p319
      $region46: #{text_encoder.1} parent=5 // pred_check_branch
        %322 = sbr.rel (%p320) target = $region48
      $region47: #{text_encoder.1} parent=5 // pred_region
        // Predicated region
        $region49: #{text_encoder.1} parent=47 // pred_check
          %p323 = pneg %p44
        $region50: #{text_encoder.1} parent=47 // pred_check_branch
          %325 = sbr.rel (%p323) target = $region52
        $region51: #{text_encoder.1} parent=47 // pred_region
          %s326 = smul.u32 2, %s24
          %p327 = scmp.lt.s32.totalorder %s326, 3
          %s328 = scalar_select %p327, %s326, 3
          %s329 = smul.addr %s328, 8
          %s330 = smul.addr %s329, 8
          %s331 = scalar_lea.vmem %s0, %s330
          %s332 = smul.u32 2, %s24
        $region52: #{text_encoder.1} parent=47 // pred_fallthru
          _
      $region48: #{text_encoder.1} parent=5 // pred_fallthru
        _
      %p333 = scmp.le.s32.totalorder 1, %s24
      %p334 = scmp.lt.s32.totalorder %s24, 3
      %p335 = pnand %p333, %p334
      %p336 = pneg %p335
      // Predicated region
      $region53: #{text_encoder.1} parent=5 // pred_check
        _
      $region54: #{text_encoder.1} parent=5 // pred_check_branch
        %338 = sbr.rel (%p335) target = $region56
      $region55: #{text_encoder.1} parent=5 // pred_region
        %s339 = ssub.s32 %s24, 1
        // Predicated region
        $region57: #{text_encoder.1} parent=55 // pred_check
          %p340 = pneg %p176
        $region58: #{text_encoder.1} parent=55 // pred_check_branch
          %342 = sbr.rel (%p340) target = $region60
        $region59: #{text_encoder.1} parent=55 // pred_region
          %343 = dma.done [#allocation4], 15360
        $region60: #{text_encoder.1} parent=55 // pred_fallthru
          _
        %s344 = smul.u32 2, %s29
        %p345 = scmp.lt.s32.totalorder %s344, 3
        %s346 = scalar_select %p345, %s344, 3
        %s347 = smul.addr %s346, 8
        %s348 = smul.addr %s347, 8
        %s349 = scalar_lea.vmem %s0, %s348
        %p350 = pneg %p50
        %p351 = pneg %p47
        %p352 = pneg %p71
        %p353 = pneg %p68
        %p354 = pneg %p92
        %p355 = pneg %p89
        %p356 = pneg %p113
        %p357 = pneg %p110
        %p358 = pneg %p134
        %p359 = pneg %p131
        %p360 = pneg %p155
        %p361 = pneg %p152
        %p362 = pneg %p176
        %p363 = pneg %p173
        %p364 = pneg %p197
        %p365 = pneg %p194
        %p366 = pneg %p218
        %p367 = pneg %p215
        %p368 = pneg %p244
        %p369 = pneg %p241
        %s370 = sand.u32 %s231, 1
        %s371 = scalar_lea.sflag [#allocation5], %s370
        %s372 = sand.u32 %s231, 1
        %s373 = smul.addr %s372, 64
        %s374 = scalar_lea.vmem [#allocation6], %s373
        %p375 = pneg %p270
        %p376 = pneg %p267
        %s377 = sand.u32 %s257, 1
        %s378 = scalar_lea.sflag [#allocation8], %s377
        %s379 = sand.u32 %s257, 1
        %s380 = smul.addr %s379, 64
        %s381 = scalar_lea.vmem [#allocation7], %s380
        %s382 = smul.u32 2, %s29
        %p383 = scmp.lt.s32.totalorder %s382, 3
        %s384 = scalar_select %p383, %s382, 3
        %s385 = smul.addr %s384, 8
        %s386 = smul.addr %s385, 8
        %s387 = scalar_lea.vmem %s0, %s386
        %s388 = smul.u32 2, %s29
        %s389 = smul.u32 2, %s29
        %s390 = smul.u32 2, %s29
        %v392 = vld [vmem:[%s387] sm:$0xff]
        %v393 = vld [vmem:[%s387 + $0x8] sm:$0xff]
        %v394 = vld [vmem:[%s387 + $0x10] sm:$0xff]
        %v395 = vld [vmem:[%s387 + $0x18] sm:$0xff]
        %v396 = vld [vmem:[%s387 + $0x20] sm:$0xff]
        %v397 = vld [vmem:[%s387 + $0x28] sm:$0xff]
        %v398 = vld [vmem:[%s387 + $0x30] sm:$0xff]
        %v399 = vld [vmem:[%s387 + $0x38] sm:$0xff]
        %v400 = vld [vmem:[%s387 + $0x40] sm:$0xff]
        %v401 = vld [vmem:[%s387 + $0x48] sm:$0xff]
        %v402 = vld [vmem:[%s387 + $0x50] sm:$0xff]
        %v403 = vld [vmem:[%s387 + $0x58] sm:$0xff]
        %v404 = vld [vmem:[%s387 + $0x60] sm:$0xff]
        %v405 = vld [vmem:[%s387 + $0x68] sm:$0xff]
        %v406 = vld [vmem:[%s387 + $0x70] sm:$0xff]
        %v407 = vld [vmem:[%s387 + $0x78] sm:$0xff]
        %v408 = vlaneseq
        %v409 = vand.u32 %v408, 127
        %410 = vset.pattern.permute.xlu0 0
        %411 = vperm.xlu0 %410, %v392
        %v412 = vpop.permute.xlu0 %411
        %413 = vset.pattern.permute.xlu0 0
        %414 = vperm.xlu0 %413, %v393
        %v415 = vpop.permute.xlu0 %414
        %416 = vset.pattern.permute.xlu0 0
        %417 = vperm.xlu0 %416, %v394
        %v418 = vpop.permute.xlu0 %417
        %419 = vset.pattern.permute.xlu0 0
        %420 = vperm.xlu0 %419, %v395
        %v421 = vpop.permute.xlu0 %420
        %422 = vset.pattern.permute.xlu0 0
        %423 = vperm.xlu0 %422, %v396
        %v424 = vpop.permute.xlu0 %423
        %425 = vset.pattern.permute.xlu0 0
        %426 = vperm.xlu0 %425, %v397
        %v427 = vpop.permute.xlu0 %426
        %428 = vset.pattern.permute.xlu0 0
        %429 = vperm.xlu0 %428, %v398
        %v430 = vpop.permute.xlu0 %429
        %431 = vset.pattern.permute.xlu0 0
        %432 = vperm.xlu0 %431, %v399
        %v433 = vpop.permute.xlu0 %432
        %434 = vset.pattern.permute.xlu0 0
        %435 = vperm.xlu0 %434, %v400
        %v436 = vpop.permute.xlu0 %435
        %437 = vset.pattern.permute.xlu0 0
        %438 = vperm.xlu0 %437, %v401
        %v439 = vpop.permute.xlu0 %438
        %440 = vset.pattern.permute.xlu0 0
        %441 = vperm.xlu0 %440, %v402
        %v442 = vpop.permute.xlu0 %441
        %443 = vset.pattern.permute.xlu0 0
        %444 = vperm.xlu0 %443, %v403
        %v445 = vpop.permute.xlu0 %444
        %446 = vset.pattern.permute.xlu0 0
        %447 = vperm.xlu0 %446, %v404
        %v448 = vpop.permute.xlu0 %447
        %449 = vset.pattern.permute.xlu0 0
        %450 = vperm.xlu0 %449, %v405
        %v451 = vpop.permute.xlu0 %450
        %452 = vset.pattern.permute.xlu0 0
        %453 = vperm.xlu0 %452, %v406
        %v454 = vpop.permute.xlu0 %453
        %455 = vset.pattern.permute.xlu0 0
        %456 = vperm.xlu0 %455, %v407
        %v457 = vpop.permute.xlu0 %456
        %vm458 = vcmp.eq.s32.totalorder %v409, %v412
        %vm459 = vcmp.eq.s32.totalorder %v409, %v415
        %vm460 = vcmp.eq.s32.totalorder %v409, %v418
        %vm461 = vcmp.eq.s32.totalorder %v409, %v421
        %vm462 = vcmp.eq.s32.totalorder %v409, %v424
        %vm463 = vcmp.eq.s32.totalorder %v409, %v427
        %vm464 = vcmp.eq.s32.totalorder %v409, %v430
        %vm465 = vcmp.eq.s32.totalorder %v409, %v433
        %vm466 = vcmp.eq.s32.totalorder %v409, %v436
        %vm467 = vcmp.eq.s32.totalorder %v409, %v439
        %vm468 = vcmp.eq.s32.totalorder %v409, %v442
        %vm469 = vcmp.eq.s32.totalorder %v409, %v445
        %vm470 = vcmp.eq.s32.totalorder %v409, %v448
        %vm471 = vcmp.eq.s32.totalorder %v409, %v451
        %vm472 = vcmp.eq.s32.totalorder %v409, %v454
        %vm473 = vcmp.eq.s32.totalorder %v409, %v457
        %v474 = vsel %vm458, 1, 0
        %v475 = vsel %vm459, 1, 0
        %v476 = vsel %vm460, 1, 0
        %v477 = vsel %vm461, 1, 0
        %v478 = vsel %vm462, 1, 0
        %v479 = vsel %vm463, 1, 0
        %v480 = vsel %vm464, 1, 0
        %v481 = vsel %vm465, 1, 0
        %v482 = vsel %vm466, 1, 0
        %v483 = vsel %vm467, 1, 0
        %v484 = vsel %vm468, 1, 0
        %v485 = vsel %vm469, 1, 0
        %v486 = vsel %vm470, 1, 0
        %v487 = vsel %vm471, 1, 0
        %v488 = vsel %vm472, 1, 0
        %v489 = vsel %vm473, 1, 0
        %v490 = vcvt.s32.f32 %v474
        %v491 = vcvt.s32.f32 %v475
        %v492 = vcvt.s32.f32 %v476
        %v493 = vcvt.s32.f32 %v477
        %v494 = vcvt.s32.f32 %v478
        %v495 = vcvt.s32.f32 %v479
        %v496 = vcvt.s32.f32 %v480
        %v497 = vcvt.s32.f32 %v481
        %v498 = vcvt.s32.f32 %v482
        %v499 = vcvt.s32.f32 %v483
        %v500 = vcvt.s32.f32 %v484
        %v501 = vcvt.s32.f32 %v485
        %v502 = vcvt.s32.f32 %v486
        %v503 = vcvt.s32.f32 %v487
        %v504 = vcvt.s32.f32 %v488
        %v505 = vcvt.s32.f32 %v489
        %v506 = vpack.c.bf16 %v491, %v490
        %v507 = vpack.c.bf16 %v493, %v492
        %v508 = vpack.c.bf16 %v495, %v494
        %v509 = vpack.c.bf16 %v497, %v496
        %v510 = vpack.c.bf16 %v499, %v498
        %v511 = vpack.c.bf16 %v501, %v500
        %v512 = vpack.c.bf16 %v503, %v502
        %v513 = vpack.c.bf16 %v505, %v504
        %v514 = vld [vmem:[%s1] sm:$0xf]
        %v515 = vld [vmem:[%s1 + $0x4] sm:$0xf]
        %v516 = vld [vmem:[%s1 + $0x8] sm:$0xf]
        %v517 = vld [vmem:[%s1 + $0xc] sm:$0xf]
        %v522 = vunpack.c.l.b16 %v514
        %v523 = vunpack.c.l.b16 %v515
        %v524 = vunpack.c.l.b16 %v516
        %v525 = vunpack.c.l.b16 %v517
        %v526 = vpack.c.b16 %v523, %v522
        %v527 = vpack.c.b16 %v525, %v524
        %vm530 = vcmask 261120
        %v532 = vsel %vm530, %v506, 0
        %v535 = vsel %vm530, %v507, 0
        %v538 = vsel %vm530, %v508, 0
        %v541 = vsel %vm530, %v509, 0
        %v544 = vsel %vm530, %v510, 0
        %v547 = vsel %vm530, %v511, 0
        %v550 = vsel %vm530, %v512, 0
        %v553 = vsel %vm530, %v513, 0
        %555 = vmatprep.subr.bf16.mxu0 0
        %556 = vmatpush1.bf16.msra.mxu0 %v526
        %557 = vmatprep.subr.bf16.mxu0 0
        %558 = vmatpush1.bf16.msra.mxu0 %v527
        %559 = vmatprep.subr.bf16.mxu0 0
        %560 = vmatpush1.bf16.msra.mxu0 0
        %561 = vmatprep.subr.bf16.mxu0 0
        %562 = vmatpush1.bf16.msra.mxu0 0
        %563 = vmatprep.subr.bf16.mxu0 0
        %564 = vmatpush1.bf16.msra.mxu0 0
        %565 = vmatprep.subr.bf16.mxu0 0
        %566 = vmatpush1.bf16.msra.mxu0 0
        %567 = vmatprep.subr.bf16.mxu0 0
        %568 = vmatpush1.bf16.msra.mxu0 0
        %569 = vmatprep.subr.bf16.mxu0 0
        %570 = vmatpush1.bf16.msra.mxu0 0
        %571 = vmatprep.subr.bf16.mxu0 0
        %572 = vmatpush1.bf16.msra.mxu0 0
        %573 = vmatprep.subr.bf16.mxu0 0
        %574 = vmatpush1.bf16.msra.mxu0 0
        %575 = vmatprep.subr.bf16.mxu0 0
        %576 = vmatpush1.bf16.msra.mxu0 0
        %577 = vmatprep.subr.bf16.mxu0 0
        %578 = vmatpush1.bf16.msra.mxu0 0
        %579 = vmatprep.subr.bf16.mxu0 0
        %580 = vmatpush1.bf16.msra.mxu0 0
        %581 = vmatprep.subr.bf16.mxu0 0
        %582 = vmatpush1.bf16.msra.mxu0 0
        %583 = vmatprep.subr.bf16.mxu0 0
        %584 = vmatpush1.bf16.msra.mxu0 0
        %585 = vmatprep.subr.bf16.mxu0 0
        %586 = vmatpush1.bf16.msra.mxu0 0
        %587 = vmatprep.mubr.bf16.mxu0 0
        %588 = vmatmul.mubr.bf16.gmra.mrb[0].mxu0 %v532
        %v589 = vpop.f32.mrb[0].mxu0
        %v590 = vadd.f32 0.0, %v589
        %v591 = vpop.f32.mrb[0].mxu0
        %v592 = vpop.f32.mrb[0].mxu0
        %v593 = vadd.f32 0.0, %v592
        %v594 = vpop.f32.mrb[0].mxu0
        %595 = vmatprep.mubr.bf16.mxu0 0
        %596 = vmatmul.mubr.bf16.gmra.mrb[0].mxu0 %v535
        %v597 = vpop.f32.mrb[0].mxu0
        %v598 = vadd.f32 0.0, %v597
        %v599 = vpop.f32.mrb[0].mxu0
        %v600 = vpop.f32.mrb[0].mxu0
        %v601 = vadd.f32 0.0, %v600
        %v602 = vpop.f32.mrb[0].mxu0
        %603 = vmatprep.mubr.bf16.mxu0 0
        %604 = vmatmul.mubr.bf16.gmra.mrb[0].mxu0 %v538
        %v605 = vpop.f32.mrb[0].mxu0
        %v606 = vadd.f32 0.0, %v605
        %v607 = vpop.f32.mrb[0].mxu0
        %v608 = vpop.f32.mrb[0].mxu0
        %v609 = vadd.f32 0.0, %v608
        %v610 = vpop.f32.mrb[0].mxu0
        %611 = vmatprep.mubr.bf16.mxu0 0
        %612 = vmatmul.mubr.bf16.gmra.mrb[0].mxu0 %v541
        %v613 = vpop.f32.mrb[0].mxu0
        %v614 = vadd.f32 0.0, %v613
        %v615 = vpop.f32.mrb[0].mxu0
        %v616 = vpop.f32.mrb[0].mxu0
        %v617 = vadd.f32 0.0, %v616
        %v618 = vpop.f32.mrb[0].mxu0
        %619 = vmatprep.mubr.bf16.mxu0 0
        %620 = vmatmul.mubr.bf16.gmra.mrb[0].mxu0 %v544
        %v621 = vpop.f32.mrb[0].mxu0
        %v622 = vadd.f32 0.0, %v621
        %v623 = vpop.f32.mrb[0].mxu0
        %v624 = vpop.f32.mrb[0].mxu0
        %v625 = vadd.f32 0.0, %v624
        %v626 = vpop.f32.mrb[0].mxu0
        %627 = vmatprep.mubr.bf16.mxu0 0
        %628 = vmatmul.mubr.bf16.gmra.mrb[0].mxu0 %v547
        %v629 = vpop.f32.mrb[0].mxu0
        %v630 = vadd.f32 0.0, %v629
        %v631 = vpop.f32.mrb[0].mxu0
        %v632 = vpop.f32.mrb[0].mxu0
        %v633 = vadd.f32 0.0, %v632
        %v634 = vpop.f32.mrb[0].mxu0
        %635 = vmatprep.mubr.bf16.mxu0 0
        %636 = vmatmul.mubr.bf16.gmra.mrb[0].mxu0 %v550
        %v637 = vpop.f32.mrb[0].mxu0
        %v638 = vadd.f32 0.0, %v637
        %v639 = vpop.f32.mrb[0].mxu0
        %v640 = vpop.f32.mrb[0].mxu0
        %v641 = vadd.f32 0.0, %v640
        %v642 = vpop.f32.mrb[0].mxu0
        %643 = vmatprep.mubr.bf16.mxu0 0
        %644 = vmatmul.mubr.bf16.gmra.mrb[0].mxu0 %v553
        %v645 = vpop.f32.mrb[0].mxu0
        %v646 = vadd.f32 0.0, %v645
        %v647 = vpop.f32.mrb[0].mxu0
        %v648 = vpop.f32.mrb[0].mxu0
        %v649 = vadd.f32 0.0, %v648
        %v650 = vpop.f32.mrb[0].mxu0
        %651 = vdwg.mxu0
        %v652 = vpack.c.bf16 %v593, %v590
        %v653 = vpack.c.bf16 %v601, %v598
        %v654 = vpack.c.bf16 %v609, %v606
        %v655 = vpack.c.bf16 %v617, %v614
        %v656 = vpack.c.bf16 %v625, %v622
        %v657 = vpack.c.bf16 %v633, %v630
        %v658 = vpack.c.bf16 %v641, %v638
        %v659 = vpack.c.bf16 %v649, %v646
        %v660 = vld [vmem:[%s2] sm:$0xf]
        %v661 = vld [vmem:[%s2 + $0x4] sm:$0xf]
        %v662 = vld [vmem:[%s2 + $0x8] sm:$0xf]
        %v663 = vld [vmem:[%s2 + $0xc] sm:$0xf]
        %v664 = vld [vmem:[%s3] sm:$0x1]
        %v666 = vlaneseq
        %v667 = vshrl.u32 %v666, 7
        %v668 = vsub.s32 0, %v667
        %v669 = vrot.slane %v664, %v668
        %v675 = vunpack.c.l.b16 %v660
        %v676 = vunpack.c.l.b16 %v661
        %v677 = vunpack.c.l.b16 %v662
        %v678 = vunpack.c.l.b16 %v663
        %v679 = vpack.c.b16 %v676, %v675
        %v680 = vpack.c.b16 %v678, %v677
        %v684 = vsel %vm530, %v652, 0
        %v687 = vsel %vm530, %v653, 0
        %v690 = vsel %vm530, %v654, 0
        %v693 = vsel %vm530, %v655, 0
        %v696 = vsel %vm530, %v656, 0
        %v699 = vsel %vm530, %v657, 0
        %v702 = vsel %vm530, %v658, 0
        %v705 = vsel %vm530, %v659, 0
        %707 = vmatprep.subr.bf16.mxu0 0
        %708 = vmatpush1.bf16.msra.mxu0 %v679
        %709 = vmatprep.subr.bf16.mxu0 0
        %710 = vmatpush1.bf16.msra.mxu0 %v680
        %711 = vmatprep.subr.bf16.mxu0 0
        %712 = vmatpush1.bf16.msra.mxu0 0
        %713 = vmatprep.subr.bf16.mxu0 0
        %714 = vmatpush1.bf16.msra.mxu0 0
        %715 = vmatprep.subr.bf16.mxu0 0
        %716 = vmatpush1.bf16.msra.mxu0 0
        %717 = vmatprep.subr.bf16.mxu0 0
        %718 = vmatpush1.bf16.msra.mxu0 0
        %719 = vmatprep.subr.bf16.mxu0 0
        %720 = vmatpush1.bf16.msra.mxu0 0
        %721 = vmatprep.subr.bf16.mxu0 0
        %722 = vmatpush1.bf16.msra.mxu0 0
        %723 = vmatprep.subr.bf16.mxu0 0
        %724 = vmatpush1.bf16.msra.mxu0 0
        %725 = vmatprep.subr.bf16.mxu0 0
        %726 = vmatpush1.bf16.msra.mxu0 0
        %727 = vmatprep.subr.bf16.mxu0 0
        %728 = vmatpush1.bf16.msra.mxu0 0
        %729 = vmatprep.subr.bf16.mxu0 0
        %730 = vmatpush1.bf16.msra.mxu0 0
        %731 = vmatprep.subr.bf16.mxu0 0
        %732 = vmatpush1.bf16.msra.mxu0 0
        %733 = vmatprep.subr.bf16.mxu0 0
        %734 = vmatpush1.bf16.msra.mxu0 0
        %735 = vmatprep.subr.bf16.mxu0 0
        %736 = vmatpush1.bf16.msra.mxu0 0
        %737 = vmatprep.subr.bf16.mxu0 0
        %738 = vmatpush1.bf16.msra.mxu0 0
        %739 = vmatprep.mubr.bf16.mxu0 0
        %740 = vmatmul.mubr.bf16.gmra.mrb[0].mxu0 %v684
        %v741 = vpop.f32.mrb[0].mxu0
        %v742 = vadd.f32 %v669, %v741
        %v743 = vpop.f32.mrb[0].mxu0
        %v744 = vpop.f32.mrb[0].mxu0
        %v745 = vadd.f32 %v669, %v744
        %v746 = vpop.f32.mrb[0].mxu0
        %747 = vmatprep.mubr.bf16.mxu0 0
        %748 = vmatmul.mubr.bf16.gmra.mrb[0].mxu0 %v687
        %v749 = vpop.f32.mrb[0].mxu0
        %v750 = vadd.f32 %v669, %v749
        %v751 = vpop.f32.mrb[0].mxu0
        %v752 = vpop.f32.mrb[0].mxu0
        %v753 = vadd.f32 %v669, %v752
        %v754 = vpop.f32.mrb[0].mxu0
        %755 = vmatprep.mubr.bf16.mxu0 0
        %756 = vmatmul.mubr.bf16.gmra.mrb[0].mxu0 %v690
        %v757 = vpop.f32.mrb[0].mxu0
        %v758 = vadd.f32 %v669, %v757
        %v759 = vpop.f32.mrb[0].mxu0
        %v760 = vpop.f32.mrb[0].mxu0
        %v761 = vadd.f32 %v669, %v760
        %v762 = vpop.f32.mrb[0].mxu0
        %763 = vmatprep.mubr.bf16.mxu0 0
        %764 = vmatmul.mubr.bf16.gmra.mrb[0].mxu0 %v693
        %v765 = vpop.f32.mrb[0].mxu0
        %v766 = vadd.f32 %v669, %v765
        %v767 = vpop.f32.mrb[0].mxu0
        %v768 = vpop.f32.mrb[0].mxu0
        %v769 = vadd.f32 %v669, %v768
        %v770 = vpop.f32.mrb[0].mxu0
        %771 = vmatprep.mubr.bf16.mxu0 0
        %772 = vmatmul.mubr.bf16.gmra.mrb[0].mxu0 %v696
        %v773 = vpop.f32.mrb[0].mxu0
        %v774 = vadd.f32 %v669, %v773
        %v775 = vpop.f32.mrb[0].mxu0
        %v776 = vpop.f32.mrb[0].mxu0
        %v777 = vadd.f32 %v669, %v776
        %v778 = vpop.f32.mrb[0].mxu0
        %779 = vmatprep.mubr.bf16.mxu0 0
        %780 = vmatmul.mubr.bf16.gmra.mrb[0].mxu0 %v699
        %v781 = vpop.f32.mrb[0].mxu0
        %v782 = vadd.f32 %v669, %v781
        %v783 = vpop.f32.mrb[0].mxu0
        %v784 = vpop.f32.mrb[0].mxu0
        %v785 = vadd.f32 %v669, %v784
        %v786 = vpop.f32.mrb[0].mxu0
        %787 = vmatprep.mubr.bf16.mxu0 0
        %788 = vmatmul.mubr.bf16.gmra.mrb[0].mxu0 %v702
        %v789 = vpop.f32.mrb[0].mxu0
        %v790 = vadd.f32 %v669, %v789
        %v791 = vpop.f32.mrb[0].mxu0
        %v792 = vpop.f32.mrb[0].mxu0
        %v793 = vadd.f32 %v669, %v792
        %v794 = vpop.f32.mrb[0].mxu0
        %795 = vmatprep.mubr.bf16.mxu0 0
        %796 = vmatmul.mubr.bf16.gmra.mrb[0].mxu0 %v705
        %v797 = vpop.f32.mrb[0].mxu0
        %v798 = vadd.f32 %v669, %v797
        %v799 = vpop.f32.mrb[0].mxu0
        %v800 = vpop.f32.mrb[0].mxu0
        %v801 = vadd.f32 %v669, %v800
        %v802 = vpop.f32.mrb[0].mxu0
        %803 = vdwg.mxu0
        %v804 = vmax.f32 %v742, 0.0
        %v805 = vmax.f32 %v745, 0.0
        %v806 = vmax.f32 %v750, 0.0
        %v807 = vmax.f32 %v753, 0.0
        %v808 = vmax.f32 %v758, 0.0
        %v809 = vmax.f32 %v761, 0.0
        %v810 = vmax.f32 %v766, 0.0
        %v811 = vmax.f32 %v769, 0.0
        %v812 = vmax.f32 %v774, 0.0
        %v813 = vmax.f32 %v777, 0.0
        %v814 = vmax.f32 %v782, 0.0
        %v815 = vmax.f32 %v785, 0.0
        %v816 = vmax.f32 %v790, 0.0
        %v817 = vmax.f32 %v793, 0.0
        %v818 = vmax.f32 %v798, 0.0
        %v819 = vmax.f32 %v801, 0.0
        %v820 = vpack.c.bf16 %v805, %v804
        %v821 = vpack.c.bf16 %v807, %v806
        %v822 = vpack.c.bf16 %v809, %v808
        %v823 = vpack.c.bf16 %v811, %v810
        %v824 = vpack.c.bf16 %v813, %v812
        %v825 = vpack.c.bf16 %v815, %v814
        %v826 = vpack.c.bf16 %v817, %v816
        %v827 = vpack.c.bf16 %v819, %v818
        %v828 = vld [vmem:[%s4] sm:$0xf]
        %v829 = vld [vmem:[%s4 + $0x4] sm:$0xf]
        %v830 = vld [vmem:[%s4 + $0x8] sm:$0xf]
        %v831 = vld [vmem:[%s4 + $0xc] sm:$0xf]
        %v832 = vld [vmem:[%s4 + $0x10] sm:$0xf]
        %v833 = vld [vmem:[%s4 + $0x14] sm:$0xf]
        %v834 = vld [vmem:[%s4 + $0x18] sm:$0xf]
        %v835 = vld [vmem:[%s4 + $0x1c] sm:$0xf]
        %v836 = vld [vmem:[%s5] sm:$0x1]
        %v838 = vlaneseq
        %v839 = vshrl.u32 %v838, 7
        %v840 = vsub.s32 0, %v839
        %v841 = vrot.slane %v836, %v840
        %v851 = vunpack.c.l.b16 %v828
        %v852 = vunpack.c.l.b16 %v829
        %v853 = vunpack.c.l.b16 %v830
        %v854 = vunpack.c.l.b16 %v831
        %v855 = vunpack.c.l.b16 %v832
        %v856 = vunpack.c.l.b16 %v833
        %v857 = vunpack.c.l.b16 %v834
        %v858 = vunpack.c.l.b16 %v835
        %v859 = vpack.c.b16 %v852, %v851
        %v860 = vpack.c.b16 %v854, %v853
        %v861 = vpack.c.b16 %v856, %v855
        %v862 = vpack.c.b16 %v858, %v857
        %vm867 = vcmask 523264
        %v869 = vsel %vm867, %v820, 0
        %v872 = vsel %vm867, %v821, 0
        %v875 = vsel %vm867, %v822, 0
        %v878 = vsel %vm867, %v823, 0
        %v881 = vsel %vm867, %v824, 0
        %v884 = vsel %vm867, %v825, 0
        %v887 = vsel %vm867, %v826, 0
        %v890 = vsel %vm867, %v827, 0
        %892 = vmatprep.subr.bf16.mxu0 0
        %893 = vmatpush1.bf16.msra.mxu0 %v859
        %894 = vmatprep.subr.bf16.mxu0 0
        %895 = vmatpush1.bf16.msra.mxu0 %v860
        %896 = vmatprep.subr.bf16.mxu0 0
        %897 = vmatpush1.bf16.msra.mxu0 %v861
        %898 = vmatprep.subr.bf16.mxu0 0
        %899 = vmatpush1.bf16.msra.mxu0 %v862
        %900 = vmatprep.subr.bf16.mxu0 0
        %901 = vmatpush1.bf16.msra.mxu0 0
        %902 = vmatprep.subr.bf16.mxu0 0
        %903 = vmatpush1.bf16.msra.mxu0 0
        %904 = vmatprep.subr.bf16.mxu0 0
        %905 = vmatpush1.bf16.msra.mxu0 0
        %906 = vmatprep.subr.bf16.mxu0 0
        %907 = vmatpush1.bf16.msra.mxu0 0
        %908 = vmatprep.subr.bf16.mxu0 0
        %909 = vmatpush1.bf16.msra.mxu0 0
        %910 = vmatprep.subr.bf16.mxu0 0
        %911 = vmatpush1.bf16.msra.mxu0 0
        %912 = vmatprep.subr.bf16.mxu0 0
        %913 = vmatpush1.bf16.msra.mxu0 0
        %914 = vmatprep.subr.bf16.mxu0 0
        %915 = vmatpush1.bf16.msra.mxu0 0
        %916 = vmatprep.subr.bf16.mxu0 0
        %917 = vmatpush1.bf16.msra.mxu0 0
        %918 = vmatprep.subr.bf16.mxu0 0
        %919 = vmatpush1.bf16.msra.mxu0 0
        %920 = vmatprep.subr.bf16.mxu0 0
        %921 = vmatpush1.bf16.msra.mxu0 0
        %922 = vmatprep.subr.bf16.mxu0 0
        %923 = vmatpush1.bf16.msra.mxu0 0
        %924 = vmatprep.mubr.bf16.mxu0 0
        %925 = vmatmul.mubr.bf16.gmra.mrb[0].mxu0 %v869
        %v926 = vpop.f32.mrb[0].mxu0
        %v927 = vadd.f32 %v841, %v926
        %v928 = vpop.f32.mrb[0].mxu0
        %v929 = vpop.f32.mrb[0].mxu0
        %v930 = vadd.f32 %v841, %v929
        %v931 = vpop.f32.mrb[0].mxu0
        %932 = vmatprep.mubr.bf16.mxu0 0
        %933 = vmatmul.mubr.bf16.gmra.mrb[0].mxu0 %v872
        %v934 = vpop.f32.mrb[0].mxu0
        %v935 = vadd.f32 %v841, %v934
        %v936 = vpop.f32.mrb[0].mxu0
        %v937 = vpop.f32.mrb[0].mxu0
        %v938 = vadd.f32 %v841, %v937
        %v939 = vpop.f32.mrb[0].mxu0
        %940 = vmatprep.mubr.bf16.mxu0 0
        %941 = vmatmul.mubr.bf16.gmra.mrb[0].mxu0 %v875
        %v942 = vpop.f32.mrb[0].mxu0
        %v943 = vadd.f32 %v841, %v942
        %v944 = vpop.f32.mrb[0].mxu0
        %v945 = vpop.f32.mrb[0].mxu0
        %v946 = vadd.f32 %v841, %v945
        %v947 = vpop.f32.mrb[0].mxu0
        %948 = vmatprep.mubr.bf16.mxu0 0
        %949 = vmatmul.mubr.bf16.gmra.mrb[0].mxu0 %v878
        %v950 = vpop.f32.mrb[0].mxu0
        %v951 = vadd.f32 %v841, %v950
        %v952 = vpop.f32.mrb[0].mxu0
        %v953 = vpop.f32.mrb[0].mxu0
        %v954 = vadd.f32 %v841, %v953
        %v955 = vpop.f32.mrb[0].mxu0
        %956 = vmatprep.mubr.bf16.mxu0 0
        %957 = vmatmul.mubr.bf16.gmra.mrb[0].mxu0 %v881
        %v958 = vpop.f32.mrb[0].mxu0
        %v959 = vadd.f32 %v841, %v958
        %v960 = vpop.f32.mrb[0].mxu0
        %v961 = vpop.f32.mrb[0].mxu0
        %v962 = vadd.f32 %v841, %v961
        %v963 = vpop.f32.mrb[0].mxu0
        %964 = vmatprep.mubr.bf16.mxu0 0
        %965 = vmatmul.mubr.bf16.gmra.mrb[0].mxu0 %v884
        %v966 = vpop.f32.mrb[0].mxu0
        %v967 = vadd.f32 %v841, %v966
        %v968 = vpop.f32.mrb[0].mxu0
        %v969 = vpop.f32.mrb[0].mxu0
        %v970 = vadd.f32 %v841, %v969
        %v971 = vpop.f32.mrb[0].mxu0
        %972 = vmatprep.mubr.bf16.mxu0 0
        %973 = vmatmul.mubr.bf16.gmra.mrb[0].mxu0 %v887
        %v974 = vpop.f32.mrb[0].mxu0
        %v975 = vadd.f32 %v841, %v974
        %v976 = vpop.f32.mrb[0].mxu0
        %v977 = vpop.f32.mrb[0].mxu0
        %v978 = vadd.f32 %v841, %v977
        %v979 = vpop.f32.mrb[0].mxu0
        %980 = vmatprep.mubr.bf16.mxu0 0
        %981 = vmatmul.mubr.bf16.gmra.mrb[0].mxu0 %v890
        %v982 = vpop.f32.mrb[0].mxu0
        %v983 = vadd.f32 %v841, %v982
        %v984 = vpop.f32.mrb[0].mxu0
        %v985 = vpop.f32.mrb[0].mxu0
        %v986 = vadd.f32 %v841, %v985
        %v987 = vpop.f32.mrb[0].mxu0
        %988 = vdwg.mxu0
        %989 = vst.msk [vmem:[#allocation2] sm:$0xff] %vm867, 0
        %990 = vst.msk [vmem:[#allocation2 + $0x8] sm:$0xff] %vm867, 0
        %991 = vst.msk [vmem:[#allocation2 + $0x40] sm:$0xff] %vm867, 0
        %992 = vst.msk [vmem:[#allocation2 + $0x48] sm:$0xff] %vm867, 0
        %993 = vst.msk [vmem:[#allocation2 + $0x30] sm:$0xff] %vm867, 0
        %994 = vst.msk [vmem:[#allocation2 + $0x38] sm:$0xff] %vm867, 0
        %995 = vst.msk [vmem:[#allocation2 + $0x70] sm:$0xff] %vm867, 0
        %996 = vst.msk [vmem:[#allocation2 + $0x78] sm:$0xff] %vm867, 0
        %v997 = vld [vmem:[%s8] sm:$0x1]
        %v998 = vpack.c.bf16 %v930, %v927
        %v999 = vpack.c.bf16 %v938, %v935
        %v1000 = vpack.c.bf16 %v946, %v943
        %v1001 = vpack.c.bf16 %v954, %v951
        %v1002 = vpack.c.bf16 %v962, %v959
        %v1003 = vpack.c.bf16 %v970, %v967
        %v1004 = vpack.c.bf16 %v978, %v975
        %v1005 = vpack.c.bf16 %v986, %v983
        %1006 = vst.msk [vmem:[#allocation2 + $0x10] sm:$0xff] %vm867, %v998
        %1007 = vst.msk [vmem:[#allocation2 + $0x18] sm:$0xff] %vm867, %v999
        %1008 = vst.msk [vmem:[#allocation2 + $0x20] sm:$0xff] %vm867, %v1000
        %1009 = vst.msk [vmem:[#allocation2 + $0x28] sm:$0xff] %vm867, %v1001
        %1010 = vst.msk [vmem:[#allocation2 + $0x50] sm:$0xff] %vm867, %v1002
        %1011 = vst.msk [vmem:[#allocation2 + $0x58] sm:$0xff] %vm867, %v1003
        %1012 = vst.msk [vmem:[#allocation2 + $0x60] sm:$0xff] %vm867, %v1004
        %1013 = vst.msk [vmem:[#allocation2 + $0x68] sm:$0xff] %vm867, %v1005
        %v1014 = vld [vmem:[#allocation2 + $0x8] sm:$0x80]
        %v1015 = vld [vmem:[#allocation2 + $0x10] sm:$0xff]
        %v1016 = vld [vmem:[#allocation2 + $0x18] sm:$0xff]
        %v1017 = vld [vmem:[#allocation2 + $0x20] sm:$0xff]
        %v1018 = vld [vmem:[#allocation2 + $0x28] sm:$0xff]
        %v1019 = vld [vmem:[#allocation2 + $0x48] sm:$0x80]
        %v1020 = vld [vmem:[#allocation2 + $0x50] sm:$0xff]
        %v1021 = vld [vmem:[#allocation2 + $0x58] sm:$0xff]
        %v1022 = vld [vmem:[#allocation2 + $0x60] sm:$0xff]
        %v1023 = vld [vmem:[#allocation2 + $0x68] sm:$0xff]
        %vm1024 = vsmask.f32 256
        %v1026 = vshrl.u32 %v1014, 16
        %v1028 = vrot.slane %v1026, 7
        %v1030 = vshrl.u32 %v1015, 16
        %v1032 = vrot.slane %v1030, 7
        %v1033 = vshll.u32 %v1015, 16
        %v1035 = vor.u32 %v1032, %v1033
        %v1036 = vsel %vm1024, %v1028, %v1035
        %v1038 = vshrl.u32 %v1016, 16
        %v1040 = vrot.slane %v1038, 7
        %v1041 = vshll.u32 %v1016, 16
        %v1043 = vor.u32 %v1040, %v1041
        %v1044 = vsel %vm1024, %v1032, %v1043
        %v1046 = vshrl.u32 %v1017, 16
        %v1048 = vrot.slane %v1046, 7
        %v1049 = vshll.u32 %v1017, 16
        %v1051 = vor.u32 %v1048, %v1049
        %v1052 = vsel %vm1024, %v1040, %v1051
        %v1054 = vshrl.u32 %v1018, 16
        %v1056 = vrot.slane %v1054, 7
        %v1057 = vshll.u32 %v1018, 16
        %v1059 = vor.u32 %v1056, %v1057
        %v1060 = vsel %vm1024, %v1048, %v1059
        %v1062 = vshrl.u32 %v1019, 16
        %v1064 = vrot.slane %v1062, 7
        %v1066 = vshrl.u32 %v1020, 16
        %v1068 = vrot.slane %v1066, 7
        %v1069 = vshll.u32 %v1020, 16
        %v1071 = vor.u32 %v1068, %v1069
        %v1072 = vsel %vm1024, %v1064, %v1071
        %v1074 = vshrl.u32 %v1021, 16
        %v1076 = vrot.slane %v1074, 7
        %v1077 = vshll.u32 %v1021, 16
        %v1079 = vor.u32 %v1076, %v1077
        %v1080 = vsel %vm1024, %v1068, %v1079
        %v1082 = vshrl.u32 %v1022, 16
        %v1084 = vrot.slane %v1082, 7
        %v1085 = vshll.u32 %v1022, 16
        %v1087 = vor.u32 %v1084, %v1085
        %v1088 = vsel %vm1024, %v1076, %v1087
        %v1090 = vshrl.u32 %v1023, 16
        %v1092 = vrot.slane %v1090, 7
        %v1093 = vshll.u32 %v1023, 16
        %v1095 = vor.u32 %v1092, %v1093
        %v1096 = vsel %vm1024, %v1084, %v1095
        %v1097 = vld [vmem:[#allocation3] sm:$0xf]
        %v1098 = vld [vmem:[#allocation3 + $0x4] sm:$0xf]
        %v1099 = vld [vmem:[#allocation3 + $0x8] sm:$0xf]
        %v1100 = vld [vmem:[#allocation3 + $0xc] sm:$0xf]
        %v1101 = vld [vmem:[#allocation3 + $0x10] sm:$0xf]
        %v1102 = vld [vmem:[#allocation3 + $0x14] sm:$0xf]
        %v1103 = vld [vmem:[#allocation3 + $0x18] sm:$0xf]
        %v1104 = vld [vmem:[#allocation3 + $0x1c] sm:$0xf]
        %v1113 = vunpack.c.l.b16 %v1097
        %v1114 = vunpack.c.l.b16 %v1098
        %v1115 = vunpack.c.l.b16 %v1099
        %v1116 = vunpack.c.l.b16 %v1100
        %v1117 = vunpack.c.l.b16 %v1101
        %v1118 = vunpack.c.l.b16 %v1102
        %v1119 = vunpack.c.l.b16 %v1103
        %v1120 = vunpack.c.l.b16 %v1104
        %v1121 = vpack.c.b16 %v1114, %v1113
        %v1122 = vpack.c.b16 %v1116, %v1115
        %v1123 = vpack.c.b16 %v1118, %v1117
        %v1124 = vpack.c.b16 %v1120, %v1119
        %v1130 = vsel %vm867, %v1036, 0
        %v1133 = vsel %vm867, %v1044, 0
        %v1136 = vsel %vm867, %v1052, 0
        %v1139 = vsel %vm867, %v1060, 0
        %v1142 = vsel %vm867, %v1072, 0
        %v1145 = vsel %vm867, %v1080, 0
        %v1148 = vsel %vm867, %v1088, 0
        %v1151 = vsel %vm867, %v1096, 0
        %1153 = vmatprep.subr.bf16.mxu0 0
        %1154 = vmatpush1.bf16.msra.mxu0 %v1121
        %1155 = vmatprep.subr.bf16.mxu0 0
        %1156 = vmatpush1.bf16.msra.mxu0 %v1122
        %1157 = vmatprep.subr.bf16.mxu0 0
        %1158 = vmatpush1.bf16.msra.mxu0 %v1123
        %1159 = vmatprep.subr.bf16.mxu0 0
        %1160 = vmatpush1.bf16.msra.mxu0 %v1124
        %1161 = vmatprep.subr.bf16.mxu0 0
        %1162 = vmatpush1.bf16.msra.mxu0 0
        %1163 = vmatprep.subr.bf16.mxu0 0
        %1164 = vmatpush1.bf16.msra.mxu0 0
        %1165 = vmatprep.subr.bf16.mxu0 0
        %1166 = vmatpush1.bf16.msra.mxu0 0
        %1167 = vmatprep.subr.bf16.mxu0 0
        %1168 = vmatpush1.bf16.msra.mxu0 0
        %1169 = vmatprep.subr.bf16.mxu0 0
        %1170 = vmatpush1.bf16.msra.mxu0 0
        %1171 = vmatprep.subr.bf16.mxu0 0
        %1172 = vmatpush1.bf16.msra.mxu0 0
        %1173 = vmatprep.subr.bf16.mxu0 0
        %1174 = vmatpush1.bf16.msra.mxu0 0
        %1175 = vmatprep.subr.bf16.mxu0 0
        %1176 = vmatpush1.bf16.msra.mxu0 0
        %1177 = vmatprep.subr.bf16.mxu0 0
        %1178 = vmatpush1.bf16.msra.mxu0 0
        %1179 = vmatprep.subr.bf16.mxu0 0
        %1180 = vmatpush1.bf16.msra.mxu0 0
        %1181 = vmatprep.subr.bf16.mxu0 0
        %1182 = vmatpush1.bf16.msra.mxu0 0
        %1183 = vmatprep.subr.bf16.mxu0 0
        %1184 = vmatpush1.bf16.msra.mxu0 0
        %1185 = vmatprep.mubr.bf16.mxu0 0
        %1186 = vmatmul.mubr.bf16.gmra.mrb[0].mxu0 %v1130
        %v1187 = vpop.f32.mrb[0].mxu0
        %v1188 = vadd.f32 0.0, %v1187
        %v1189 = vpop.f32.mrb[0].mxu0
        %v1190 = vpop.f32.mrb[0].mxu0
        %v1191 = vadd.f32 0.0, %v1190
        %v1192 = vpop.f32.mrb[0].mxu0
        %1193 = vmatprep.mubr.bf16.mxu0 0
        %1194 = vmatmul.mubr.bf16.gmra.mrb[0].mxu0 %v1133
        %v1195 = vpop.f32.mrb[0].mxu0
        %v1196 = vadd.f32 0.0, %v1195
        %v1197 = vpop.f32.mrb[0].mxu0
        %v1198 = vpop.f32.mrb[0].mxu0
        %v1199 = vadd.f32 0.0, %v1198
        %v1200 = vpop.f32.mrb[0].mxu0
        %1201 = vmatprep.mubr.bf16.mxu0 0
        %1202 = vmatmul.mubr.bf16.gmra.mrb[0].mxu0 %v1136
        %v1203 = vpop.f32.mrb[0].mxu0
        %v1204 = vadd.f32 0.0, %v1203
        %v1205 = vpop.f32.mrb[0].mxu0
        %v1206 = vpop.f32.mrb[0].mxu0
        %v1207 = vadd.f32 0.0, %v1206
        %v1208 = vpop.f32.mrb[0].mxu0
        %1209 = vmatprep.mubr.bf16.mxu0 0
        %1210 = vmatmul.mubr.bf16.gmra.mrb[0].mxu0 %v1139
        %v1211 = vpop.f32.mrb[0].mxu0
        %v1212 = vadd.f32 0.0, %v1211
        %v1213 = vpop.f32.mrb[0].mxu0
        %v1214 = vpop.f32.mrb[0].mxu0
        %v1215 = vadd.f32 0.0, %v1214
        %v1216 = vpop.f32.mrb[0].mxu0
        %1217 = vmatprep.mubr.bf16.mxu0 0
        %1218 = vmatmul.mubr.bf16.gmra.mrb[0].mxu0 %v1142
        %v1219 = vpop.f32.mrb[0].mxu0
        %v1220 = vadd.f32 0.0, %v1219
        %v1221 = vpop.f32.mrb[0].mxu0
        %v1222 = vpop.f32.mrb[0].mxu0
        %v1223 = vadd.f32 0.0, %v1222
        %v1224 = vpop.f32.mrb[0].mxu0
        %1225 = vmatprep.mubr.bf16.mxu0 0
        %1226 = vmatmul.mubr.bf16.gmra.mrb[0].mxu0 %v1145
        %v1227 = vpop.f32.mrb[0].mxu0
        %v1228 = vadd.f32 0.0, %v1227
        %v1229 = vpop.f32.mrb[0].mxu0
        %v1230 = vpop.f32.mrb[0].mxu0
        %v1231 = vadd.f32 0.0, %v1230
        %v1232 = vpop.f32.mrb[0].mxu0
        %1233 = vmatprep.mubr.bf16.mxu0 0
        %1234 = vmatmul.mubr.bf16.gmra.mrb[0].mxu0 %v1148
        %v1235 = vpop.f32.mrb[0].mxu0
        %v1236 = vadd.f32 0.0, %v1235
        %v1237 = vpop.f32.mrb[0].mxu0
        %v1238 = vpop.f32.mrb[0].mxu0
        %v1239 = vadd.f32 0.0, %v1238
        %v1240 = vpop.f32.mrb[0].mxu0
        %1241 = vmatprep.mubr.bf16.mxu0 0
        %1242 = vmatmul.mubr.bf16.gmra.mrb[0].mxu0 %v1151
        %v1243 = vpop.f32.mrb[0].mxu0
        %v1244 = vadd.f32 0.0, %v1243
        %v1245 = vpop.f32.mrb[0].mxu0
        %v1246 = vpop.f32.mrb[0].mxu0
        %v1247 = vadd.f32 0.0, %v1246
        %v1248 = vpop.f32.mrb[0].mxu0
        %1249 = vdwg.mxu0
        %v1250 = vlaneseq
        %v1251 = vshrl.u32 %v1250, 7
        %v1252 = vsub.s32 0, %v1251
        %v1253 = vrot.slane %v997, %v1252
        %v1254 = vadd.f32 %v1253, %v1188
        %v1255 = vadd.f32 %v1253, %v1191
        %v1256 = vadd.f32 %v1253, %v1196
        %v1257 = vadd.f32 %v1253, %v1199
        %v1258 = vadd.f32 %v1253, %v1204
        %v1259 = vadd.f32 %v1253, %v1207
        %v1260 = vadd.f32 %v1253, %v1212
        %v1261 = vadd.f32 %v1253, %v1215
        %v1262 = vadd.f32 %v1253, %v1220
        %v1263 = vadd.f32 %v1253, %v1223
        %v1264 = vadd.f32 %v1253, %v1228
        %v1265 = vadd.f32 %v1253, %v1231
        %v1266 = vadd.f32 %v1253, %v1236
        %v1267 = vadd.f32 %v1253, %v1239
        %v1268 = vadd.f32 %v1253, %v1244
        %v1269 = vadd.f32 %v1253, %v1247
        %v1270 = vld [vmem:[#allocation3 + $0x20] sm:$0xf]
        %v1271 = vld [vmem:[#allocation3 + $0x24] sm:$0xf]
        %v1272 = vld [vmem:[#allocation3 + $0x28] sm:$0xf]
        %v1273 = vld [vmem:[#allocation3 + $0x2c] sm:$0xf]
        %v1274 = vld [vmem:[#allocation3 + $0x30] sm:$0xf]
        %v1275 = vld [vmem:[#allocation3 + $0x34] sm:$0xf]
        %v1276 = vld [vmem:[#allocation3 + $0x38] sm:$0xf]
        %v1277 = vld [vmem:[#allocation3 + $0x3c] sm:$0xf]
        %v1286 = vunpack.c.l.b16 %v1270
        %v1287 = vunpack.c.l.b16 %v1271
        %v1288 = vunpack.c.l.b16 %v1272
        %v1289 = vunpack.c.l.b16 %v1273
        %v1290 = vunpack.c.l.b16 %v1274
        %v1291 = vunpack.c.l.b16 %v1275
        %v1292 = vunpack.c.l.b16 %v1276
        %v1293 = vunpack.c.l.b16 %v1277
        %v1294 = vpack.c.b16 %v1287, %v1286
        %v1295 = vpack.c.b16 %v1289, %v1288
        %v1296 = vpack.c.b16 %v1291, %v1290
        %v1297 = vpack.c.b16 %v1293, %v1292
        %v1302 = vsel %vm867, %v1015, 0
        %v1304 = vsel %vm867, %v1016, 0
        %v1306 = vsel %vm867, %v1017, 0
        %v1308 = vsel %vm867, %v1018, 0
        %v1310 = vsel %vm867, %v1020, 0
        %v1312 = vsel %vm867, %v1021, 0
        %v1314 = vsel %vm867, %v1022, 0
        %v1316 = vsel %vm867, %v1023, 0
        %1318 = vmatprep.subr.bf16.mxu0 0
        %1319 = vmatpush1.bf16.msra.mxu0 %v1294
        %1320 = vmatprep.subr.bf16.mxu0 0
        %1321 = vmatpush1.bf16.msra.mxu0 %v1295
        %1322 = vmatprep.subr.bf16.mxu0 0
        %1323 = vmatpush1.bf16.msra.mxu0 %v1296
        %1324 = vmatprep.subr.bf16.mxu0 0
        %1325 = vmatpush1.bf16.msra.mxu0 %v1297
        %1326 = vmatprep.subr.bf16.mxu0 0
        %1327 = vmatpush1.bf16.msra.mxu0 0
        %1328 = vmatprep.subr.bf16.mxu0 0
        %1329 = vmatpush1.bf16.msra.mxu0 0
        %1330 = vmatprep.subr.bf16.mxu0 0
        %1331 = vmatpush1.bf16.msra.mxu0 0
        %1332 = vmatprep.subr.bf16.mxu0 0
        %1333 = vmatpush1.bf16.msra.mxu0 0
        %1334 = vmatprep.subr.bf16.mxu0 0
        %1335 = vmatpush1.bf16.msra.mxu0 0
        %1336 = vmatprep.subr.bf16.mxu0 0
        %1337 = vmatpush1.bf16.msra.mxu0 0
        %1338 = vmatprep.subr.bf16.mxu0 0
        %1339 = vmatpush1.bf16.msra.mxu0 0
        %1340 = vmatprep.subr.bf16.mxu0 0
        %1341 = vmatpush1.bf16.msra.mxu0 0
        %1342 = vmatprep.subr.bf16.mxu0 0
        %1343 = vmatpush1.bf16.msra.mxu0 0
        %1344 = vmatprep.subr.bf16.mxu0 0
        %1345 = vmatpush1.bf16.msra.mxu0 0
        %1346 = vmatprep.subr.bf16.mxu0 0
        %1347 = vmatpush1.bf16.msra.mxu0 0
        %1348 = vmatprep.subr.bf16.mxu0 0
        %1349 = vmatpush1.bf16.msra.mxu0 0
        %1350 = vmatprep.mubr.bf16.mxu0 0
        %1351 = vmatmul.mubr.bf16.gmra.mrb[0].mxu0 %v1302
        %v1352 = vpop.f32.mrb[0].mxu0
        %v1353 = vadd.f32 0.0, %v1352
        %v1354 = vpop.f32.mrb[0].mxu0
        %v1355 = vpop.f32.mrb[0].mxu0
        %v1356 = vadd.f32 0.0, %v1355
        %v1357 = vpop.f32.mrb[0].mxu0
        %1358 = vmatprep.mubr.bf16.mxu0 0
        %1359 = vmatmul.mubr.bf16.gmra.mrb[0].mxu0 %v1304
        %v1360 = vpop.f32.mrb[0].mxu0
        %v1361 = vadd.f32 0.0, %v1360
        %v1362 = vpop.f32.mrb[0].mxu0
        %v1363 = vpop.f32.mrb[0].mxu0
        %v1364 = vadd.f32 0.0, %v1363
        %v1365 = vpop.f32.mrb[0].mxu0
        %1366 = vmatprep.mubr.bf16.mxu0 0
        %1367 = vmatmul.mubr.bf16.gmra.mrb[0].mxu0 %v1306
        %v1368 = vpop.f32.mrb[0].mxu0
        %v1369 = vadd.f32 0.0, %v1368
        %v1370 = vpop.f32.mrb[0].mxu0
        %v1371 = vpop.f32.mrb[0].mxu0
        %v1372 = vadd.f32 0.0, %v1371
        %v1373 = vpop.f32.mrb[0].mxu0
        %1374 = vmatprep.mubr.bf16.mxu0 0
        %1375 = vmatmul.mubr.bf16.gmra.mrb[0].mxu0 %v1308
        %v1376 = vpop.f32.mrb[0].mxu0
        %v1377 = vadd.f32 0.0, %v1376
        %v1378 = vpop.f32.mrb[0].mxu0
        %v1379 = vpop.f32.mrb[0].mxu0
        %v1380 = vadd.f32 0.0, %v1379
        %v1381 = vpop.f32.mrb[0].mxu0
        %1382 = vmatprep.mubr.bf16.mxu0 0
        %1383 = vmatmul.mubr.bf16.gmra.mrb[0].mxu0 %v1310
        %v1384 = vpop.f32.mrb[0].mxu0
        %v1385 = vadd.f32 0.0, %v1384
        %v1386 = vpop.f32.mrb[0].mxu0
        %v1387 = vpop.f32.mrb[0].mxu0
        %v1388 = vadd.f32 0.0, %v1387
        %v1389 = vpop.f32.mrb[0].mxu0
        %1390 = vmatprep.mubr.bf16.mxu0 0
        %1391 = vmatmul.mubr.bf16.gmra.mrb[0].mxu0 %v1312
        %v1392 = vpop.f32.mrb[0].mxu0
        %v1393 = vadd.f32 0.0, %v1392
        %v1394 = vpop.f32.mrb[0].mxu0
        %v1395 = vpop.f32.mrb[0].mxu0
        %v1396 = vadd.f32 0.0, %v1395
        %v1397 = vpop.f32.mrb[0].mxu0
        %1398 = vmatprep.mubr.bf16.mxu0 0
        %1399 = vmatmul.mubr.bf16.gmra.mrb[0].mxu0 %v1314
        %v1400 = vpop.f32.mrb[0].mxu0
        %v1401 = vadd.f32 0.0, %v1400
        %v1402 = vpop.f32.mrb[0].mxu0
        %v1403 = vpop.f32.mrb[0].mxu0
        %v1404 = vadd.f32 0.0, %v1403
        %v1405 = vpop.f32.mrb[0].mxu0
        %1406 = vmatprep.mubr.bf16.mxu0 0
        %1407 = vmatmul.mubr.bf16.gmra.mrb[0].mxu0 %v1316
        %v1408 = vpop.f32.mrb[0].mxu0
        %v1409 = vadd.f32 0.0, %v1408
        %v1410 = vpop.f32.mrb[0].mxu0
        %v1411 = vpop.f32.mrb[0].mxu0
        %v1412 = vadd.f32 0.0, %v1411
        %v1413 = vpop.f32.mrb[0].mxu0
        %1414 = vdwg.mxu0
        %v1415 = vadd.f32 %v1254, %v1353
        %v1416 = vadd.f32 %v1255, %v1356
        %v1417 = vadd.f32 %v1256, %v1361
        %v1418 = vadd.f32 %v1257, %v1364
        %v1419 = vadd.f32 %v1258, %v1369
        %v1420 = vadd.f32 %v1259, %v1372
        %v1421 = vadd.f32 %v1260, %v1377
        %v1422 = vadd.f32 %v1261, %v1380
        %v1423 = vadd.f32 %v1262, %v1385
        %v1424 = vadd.f32 %v1263, %v1388
        %v1425 = vadd.f32 %v1264, %v1393
        %v1426 = vadd.f32 %v1265, %v1396
        %v1427 = vadd.f32 %v1266, %v1401
        %v1428 = vadd.f32 %v1267, %v1404
        %v1429 = vadd.f32 %v1268, %v1409
        %v1430 = vadd.f32 %v1269, %v1412
        %v1431 = vld [vmem:[#allocation2 + $0x10] sm:$0xff]
        %v1432 = vld [vmem:[#allocation2 + $0x18] sm:$0xff]
        %v1433 = vld [vmem:[#allocation2 + $0x20] sm:$0xff]
        %v1434 = vld [vmem:[#allocation2 + $0x28] sm:$0xff]
        %v1435 = vld [vmem:[#allocation2 + $0x30] sm:$0x1]
        %v1436 = vld [vmem:[#allocation2 + $0x50] sm:$0xff]
        %v1437 = vld [vmem:[#allocation2 + $0x58] sm:$0xff]
        %v1438 = vld [vmem:[#allocation2 + $0x60] sm:$0xff]
        %v1439 = vld [vmem:[#allocation2 + $0x68] sm:$0xff]
        %v1440 = vld [vmem:[#allocation2 + $0x70] sm:$0x1]
        %vm1441 = vsmask.f32 7424
        %v1443 = vshrl.u32 %v1431, 16
        %v1445 = vshll.u32 %v1431, 16
        %v1447 = vrot.slane %v1445, 1
        %v1448 = vor.u32 %v1443, %v1447
        %v1450 = vshll.u32 %v1432, 16
        %v1452 = vrot.slane %v1450, 1
        %v1453 = vsel %vm1441, %v1448, %v1452
        %v1454 = vshrl.u32 %v1432, 16
        %v1456 = vor.u32 %v1454, %v1452
        %v1458 = vshll.u32 %v1433, 16
        %v1460 = vrot.slane %v1458, 1
        %v1461 = vsel %vm1441, %v1456, %v1460
        %v1462 = vshrl.u32 %v1433, 16
        %v1464 = vor.u32 %v1462, %v1460
        %v1466 = vshll.u32 %v1434, 16
        %v1468 = vrot.slane %v1466, 1
        %v1469 = vsel %vm1441, %v1464, %v1468
        %v1470 = vshrl.u32 %v1434, 16
        %v1472 = vor.u32 %v1470, %v1468
        %v1474 = vshll.u32 %v1435, 16
        %v1476 = vrot.slane %v1474, 1
        %v1477 = vsel %vm1441, %v1472, %v1476
        %v1479 = vshrl.u32 %v1436, 16
        %v1481 = vshll.u32 %v1436, 16
        %v1483 = vrot.slane %v1481, 1
        %v1484 = vor.u32 %v1479, %v1483
        %v1486 = vshll.u32 %v1437, 16
        %v1488 = vrot.slane %v1486, 1
        %v1489 = vsel %vm1441, %v1484, %v1488
        %v1490 = vshrl.u32 %v1437, 16
        %v1492 = vor.u32 %v1490, %v1488
        %v1494 = vshll.u32 %v1438, 16
        %v1496 = vrot.slane %v1494, 1
        %v1497 = vsel %vm1441, %v1492, %v1496
        %v1498 = vshrl.u32 %v1438, 16
        %v1500 = vor.u32 %v1498, %v1496
        %v1502 = vshll.u32 %v1439, 16
        %v1504 = vrot.slane %v1502, 1
        %v1505 = vsel %vm1441, %v1500, %v1504
        %v1506 = vshrl.u32 %v1439, 16
        %v1508 = vor.u32 %v1506, %v1504
        %v1510 = vshll.u32 %v1440, 16
        %v1512 = vrot.slane %v1510, 1
        %v1513 = vsel %vm1441, %v1508, %v1512
        %v1514 = vld [vmem:[#allocation3 + $0x40] sm:$0xf]
        %v1515 = vld [vmem:[#allocation3 + $0x44] sm:$0xf]
        %v1516 = vld [vmem:[#allocation3 + $0x48] sm:$0xf]
        %v1517 = vld [vmem:[#allocation3 + $0x4c] sm:$0xf]
        %v1518 = vld [vmem:[#allocation3 + $0x50] sm:$0xf]
        %v1519 = vld [vmem:[#allocation3 + $0x54] sm:$0xf]
        %v1520 = vld [vmem:[#allocation3 + $0x58] sm:$0xf]
        %v1521 = vld [vmem:[#allocation3 + $0x5c] sm:$0xf]
        %v1530 = vunpack.c.l.b16 %v1514
        %v1531 = vunpack.c.l.b16 %v1515
        %v1532 = vunpack.c.l.b16 %v1516
        %v1533 = vunpack.c.l.b16 %v1517
        %v1534 = vunpack.c.l.b16 %v1518
        %v1535 = vunpack.c.l.b16 %v1519
        %v1536 = vunpack.c.l.b16 %v1520
        %v1537 = vunpack.c.l.b16 %v1521
        %v1538 = vpack.c.b16 %v1531, %v1530
        %v1539 = vpack.c.b16 %v1533, %v1532
        %v1540 = vpack.c.b16 %v1535, %v1534
        %v1541 = vpack.c.b16 %v1537, %v1536
        %v1547 = vsel %vm867, %v1453, 0
        %v1550 = vsel %vm867, %v1461, 0
        %v1553 = vsel %vm867, %v1469, 0
        %v1556 = vsel %vm867, %v1477, 0
        %v1559 = vsel %vm867, %v1489, 0
        %v1562 = vsel %vm867, %v1497, 0
        %v1565 = vsel %vm867, %v1505, 0
        %v1568 = vsel %vm867, %v1513, 0
        %1570 = vmatprep.subr.bf16.mxu0 0
        %1571 = vmatpush1.bf16.msra.mxu0 %v1538
        %1572 = vmatprep.subr.bf16.mxu0 0
        %1573 = vmatpush1.bf16.msra.mxu0 %v1539
        %1574 = vmatprep.subr.bf16.mxu0 0
        %1575 = vmatpush1.bf16.msra.mxu0 %v1540
        %1576 = vmatprep.subr.bf16.mxu0 0
        %1577 = vmatpush1.bf16.msra.mxu0 %v1541
        %1578 = vmatprep.subr.bf16.mxu0 0
        %1579 = vmatpush1.bf16.msra.mxu0 0
        %1580 = vmatprep.subr.bf16.mxu0 0
        %1581 = vmatpush1.bf16.msra.mxu0 0
        %1582 = vmatprep.subr.bf16.mxu0 0
        %1583 = vmatpush1.bf16.msra.mxu0 0
        %1584 = vmatprep.subr.bf16.mxu0 0
        %1585 = vmatpush1.bf16.msra.mxu0 0
        %1586 = vmatprep.subr.bf16.mxu0 0
        %1587 = vmatpush1.bf16.msra.mxu0 0
        %1588 = vmatprep.subr.bf16.mxu0 0
        %1589 = vmatpush1.bf16.msra.mxu0 0
        %1590 = vmatprep.subr.bf16.mxu0 0
        %1591 = vmatpush1.bf16.msra.mxu0 0
        %1592 = vmatprep.subr.bf16.mxu0 0
        %1593 = vmatpush1.bf16.msra.mxu0 0
        %1594 = vmatprep.subr.bf16.mxu0 0
        %1595 = vmatpush1.bf16.msra.mxu0 0
        %1596 = vmatprep.subr.bf16.mxu0 0
        %1597 = vmatpush1.bf16.msra.mxu0 0
        %1598 = vmatprep.subr.bf16.mxu0 0
        %1599 = vmatpush1.bf16.msra.mxu0 0
        %1600 = vmatprep.subr.bf16.mxu0 0
        %1601 = vmatpush1.bf16.msra.mxu0 0
        %1602 = vmatprep.mubr.bf16.mxu0 0
        %1603 = vmatmul.mubr.bf16.gmra.mrb[0].mxu0 %v1547
        %v1604 = vpop.f32.mrb[0].mxu0
        %v1605 = vadd.f32 0.0, %v1604
        %v1606 = vpop.f32.mrb[0].mxu0
        %v1607 = vpop.f32.mrb[0].mxu0
        %v1608 = vadd.f32 0.0, %v1607
        %v1609 = vpop.f32.mrb[0].mxu0
        %1610 = vmatprep.mubr.bf16.mxu0 0
        %1611 = vmatmul.mubr.bf16.gmra.mrb[0].mxu0 %v1550
        %v1612 = vpop.f32.mrb[0].mxu0
        %v1613 = vadd.f32 0.0, %v1612
        %v1614 = vpop.f32.mrb[0].mxu0
        %v1615 = vpop.f32.mrb[0].mxu0
        %v1616 = vadd.f32 0.0, %v1615
        %v1617 = vpop.f32.mrb[0].mxu0
        %1618 = vmatprep.mubr.bf16.mxu0 0
        %1619 = vmatmul.mubr.bf16.gmra.mrb[0].mxu0 %v1553
        %v1620 = vpop.f32.mrb[0].mxu0
        %v1621 = vadd.f32 0.0, %v1620
        %v1622 = vpop.f32.mrb[0].mxu0
        %v1623 = vpop.f32.mrb[0].mxu0
        %v1624 = vadd.f32 0.0, %v1623
        %v1625 = vpop.f32.mrb[0].mxu0
        %1626 = vmatprep.mubr.bf16.mxu0 0
        %1627 = vmatmul.mubr.bf16.gmra.mrb[0].mxu0 %v1556
        %v1628 = vpop.f32.mrb[0].mxu0
        %v1629 = vadd.f32 0.0, %v1628
        %v1630 = vpop.f32.mrb[0].mxu0
        %v1631 = vpop.f32.mrb[0].mxu0
        %v1632 = vadd.f32 0.0, %v1631
        %v1633 = vpop.f32.mrb[0].mxu0
        %1634 = vmatprep.mubr.bf16.mxu0 0
        %1635 = vmatmul.mubr.bf16.gmra.mrb[0].mxu0 %v1559
        %v1636 = vpop.f32.mrb[0].mxu0
        %v1637 = vadd.f32 0.0, %v1636
        %v1638 = vpop.f32.mrb[0].mxu0
        %v1639 = vpop.f32.mrb[0].mxu0
        %v1640 = vadd.f32 0.0, %v1639
        %v1641 = vpop.f32.mrb[0].mxu0
        %1642 = vmatprep.mubr.bf16.mxu0 0
        %1643 = vmatmul.mubr.bf16.gmra.mrb[0].mxu0 %v1562
        %v1644 = vpop.f32.mrb[0].mxu0
        %v1645 = vadd.f32 0.0, %v1644
        %v1646 = vpop.f32.mrb[0].mxu0
        %v1647 = vpop.f32.mrb[0].mxu0
        %v1648 = vadd.f32 0.0, %v1647
        %v1649 = vpop.f32.mrb[0].mxu0
        %1650 = vmatprep.mubr.bf16.mxu0 0
        %1651 = vmatmul.mubr.bf16.gmra.mrb[0].mxu0 %v1565
        %v1652 = vpop.f32.mrb[0].mxu0
        %v1653 = vadd.f32 0.0, %v1652
        %v1654 = vpop.f32.mrb[0].mxu0
        %v1655 = vpop.f32.mrb[0].mxu0
        %v1656 = vadd.f32 0.0, %v1655
        %v1657 = vpop.f32.mrb[0].mxu0
        %1658 = vmatprep.mubr.bf16.mxu0 0
        %1659 = vmatmul.mubr.bf16.gmra.mrb[0].mxu0 %v1568
        %v1660 = vpop.f32.mrb[0].mxu0
        %v1661 = vadd.f32 0.0, %v1660
        %v1662 = vpop.f32.mrb[0].mxu0
        %v1663 = vpop.f32.mrb[0].mxu0
        %v1664 = vadd.f32 0.0, %v1663
        %v1665 = vpop.f32.mrb[0].mxu0
        %1666 = vdwg.mxu0
        %v1667 = vadd.f32 %v1415, %v1605
        %v1668 = vadd.f32 %v1416, %v1608
        %v1669 = vadd.f32 %v1417, %v1613
        %v1670 = vadd.f32 %v1418, %v1616
        %v1671 = vadd.f32 %v1419, %v1621
        %v1672 = vadd.f32 %v1420, %v1624
        %v1673 = vadd.f32 %v1421, %v1629
        %v1674 = vadd.f32 %v1422, %v1632
        %v1675 = vadd.f32 %v1423, %v1637
        %v1676 = vadd.f32 %v1424, %v1640
        %v1677 = vadd.f32 %v1425, %v1645
        %v1678 = vadd.f32 %v1426, %v1648
        %v1679 = vadd.f32 %v1427, %v1653
        %v1680 = vadd.f32 %v1428, %v1656
        %v1681 = vadd.f32 %v1429, %v1661
        %v1682 = vadd.f32 %v1430, %v1664
        %v1683 = vxor.u32 %v1667, 2147483648
        %v1684 = vxor.u32 %v1668, 2147483648
        %v1685 = vxor.u32 %v1669, 2147483648
        %v1686 = vxor.u32 %v1670, 2147483648
        %v1687 = vxor.u32 %v1671, 2147483648
        %v1688 = vxor.u32 %v1672, 2147483648
        %v1689 = vxor.u32 %v1673, 2147483648
        %v1690 = vxor.u32 %v1674, 2147483648
        %v1691 = vxor.u32 %v1675, 2147483648
        %v1692 = vxor.u32 %v1676, 2147483648
        %v1693 = vxor.u32 %v1677, 2147483648
        %v1694 = vxor.u32 %v1678, 2147483648
        %v1695 = vxor.u32 %v1679, 2147483648
        %v1696 = vxor.u32 %v1680, 2147483648
        %v1697 = vxor.u32 %v1681, 2147483648
        %v1698 = vxor.u32 %v1682, 2147483648
        %v1699 = vmul.f32 %v1683, 1.442695
        %v1700 = vpow.pop %v1699
        %v1701 = vmul.f32 %v1684, 1.442695
        %v1702 = vpow.pop %v1701
        %v1703 = vmul.f32 %v1685, 1.442695
        %v1704 = vpow.pop %v1703
        %v1705 = vmul.f32 %v1686, 1.442695
        %v1706 = vpow.pop %v1705
        %v1707 = vmul.f32 %v1687, 1.442695
        %v1708 = vpow.pop %v1707
        %v1709 = vmul.f32 %v1688, 1.442695
        %v1710 = vpow.pop %v1709
        %v1711 = vmul.f32 %v1689, 1.442695
        %v1712 = vpow.pop %v1711
        %v1713 = vmul.f32 %v1690, 1.442695
        %v1714 = vpow.pop %v1713
        %v1715 = vmul.f32 %v1691, 1.442695
        %v1716 = vpow.pop %v1715
        %v1717 = vmul.f32 %v1692, 1.442695
        %v1718 = vpow.pop %v1717
        %v1719 = vmul.f32 %v1693, 1.442695
        %v1720 = vpow.pop %v1719
        %v1721 = vmul.f32 %v1694, 1.442695
        %v1722 = vpow.pop %v1721
        %v1723 = vmul.f32 %v1695, 1.442695
        %v1724 = vpow.pop %v1723
        %v1725 = vmul.f32 %v1696, 1.442695
        %v1726 = vpow.pop %v1725
        %v1727 = vmul.f32 %v1697, 1.442695
        %v1728 = vpow.pop %v1727
        %v1729 = vmul.f32 %v1698, 1.442695
        %v1730 = vpow.pop %v1729
        %v1731 = vadd.f32 %v1700, 1.0
        %v1732 = vadd.f32 %v1702, 1.0
        %v1733 = vadd.f32 %v1704, 1.0
        %v1734 = vadd.f32 %v1706, 1.0
        %v1735 = vadd.f32 %v1708, 1.0
        %v1736 = vadd.f32 %v1710, 1.0
        %v1737 = vadd.f32 %v1712, 1.0
        %v1738 = vadd.f32 %v1714, 1.0
        %v1739 = vadd.f32 %v1716, 1.0
        %v1740 = vadd.f32 %v1718, 1.0
        %v1741 = vadd.f32 %v1720, 1.0
        %v1742 = vadd.f32 %v1722, 1.0
        %v1743 = vadd.f32 %v1724, 1.0
        %v1744 = vadd.f32 %v1726, 1.0
        %v1745 = vadd.f32 %v1728, 1.0
        %v1746 = vadd.f32 %v1730, 1.0
        %v1747 = vrcp.pop %v1731
        %v1748 = vmul.f32 1.0, %v1747
        %v1749 = vrcp.pop %v1732
        %v1750 = vmul.f32 1.0, %v1749
        %v1751 = vrcp.pop %v1733
        %v1752 = vmul.f32 1.0, %v1751
        %v1753 = vrcp.pop %v1734
        %v1754 = vmul.f32 1.0, %v1753
        %v1755 = vrcp.pop %v1735
        %v1756 = vmul.f32 1.0, %v1755
        %v1757 = vrcp.pop %v1736
        %v1758 = vmul.f32 1.0, %v1757
        %v1759 = vrcp.pop %v1737
        %v1760 = vmul.f32 1.0, %v1759
        %v1761 = vrcp.pop %v1738
        %v1762 = vmul.f32 1.0, %v1761
        %v1763 = vrcp.pop %v1739
        %v1764 = vmul.f32 1.0, %v1763
        %v1765 = vrcp.pop %v1740
        %v1766 = vmul.f32 1.0, %v1765
        %v1767 = vrcp.pop %v1741
        %v1768 = vmul.f32 1.0, %v1767
        %v1769 = vrcp.pop %v1742
        %v1770 = vmul.f32 1.0, %v1769
        %v1771 = vrcp.pop %v1743
        %v1772 = vmul.f32 1.0, %v1771
        %v1773 = vrcp.pop %v1744
        %v1774 = vmul.f32 1.0, %v1773
        %v1775 = vrcp.pop %v1745
        %v1776 = vmul.f32 1.0, %v1775
        %v1777 = vrcp.pop %v1746
        %v1778 = vmul.f32 1.0, %v1777
        %1795 = vrot.lane.b32.xlu0 %v927, 64
        %v1796 = vpop.permute.xlu0 %1795
        %1797 = vrot.lane.b32.xlu0 %v930, 64
        %v1798 = vpop.permute.xlu0 %1797
        %1799 = vrot.lane.b32.xlu0 %v935, 64
        %v1800 = vpop.permute.xlu0 %1799
        %1801 = vrot.lane.b32.xlu0 %v938, 64
        %v1802 = vpop.permute.xlu0 %1801
        %1803 = vrot.lane.b32.xlu0 %v943, 64
        %v1804 = vpop.permute.xlu0 %1803
        %1805 = vrot.lane.b32.xlu0 %v946, 64
        %v1806 = vpop.permute.xlu0 %1805
        %1807 = vrot.lane.b32.xlu0 %v951, 64
        %v1808 = vpop.permute.xlu0 %1807
        %1809 = vrot.lane.b32.xlu0 %v954, 64
        %v1810 = vpop.permute.xlu0 %1809
        %1811 = vrot.lane.b32.xlu0 %v959, 64
        %v1812 = vpop.permute.xlu0 %1811
        %1813 = vrot.lane.b32.xlu0 %v962, 64
        %v1814 = vpop.permute.xlu0 %1813
        %1815 = vrot.lane.b32.xlu0 %v967, 64
        %v1816 = vpop.permute.xlu0 %1815
        %1817 = vrot.lane.b32.xlu0 %v970, 64
        %v1818 = vpop.permute.xlu0 %1817
        %1819 = vrot.lane.b32.xlu0 %v975, 64
        %v1820 = vpop.permute.xlu0 %1819
        %1821 = vrot.lane.b32.xlu0 %v978, 64
        %v1822 = vpop.permute.xlu0 %1821
        %1823 = vrot.lane.b32.xlu0 %v983, 64
        %v1824 = vpop.permute.xlu0 %1823
        %1825 = vrot.lane.b32.xlu0 %v986, 64
        %v1826 = vpop.permute.xlu0 %1825
        %v1843 = vsub.f32 %v1667, %v1796
        %v1844 = vsub.f32 %v1668, %v1798
        %v1845 = vsub.f32 %v1669, %v1800
        %v1846 = vsub.f32 %v1670, %v1802
        %v1847 = vsub.f32 %v1671, %v1804
        %v1848 = vsub.f32 %v1672, %v1806
        %v1849 = vsub.f32 %v1673, %v1808
        %v1850 = vsub.f32 %v1674, %v1810
        %v1851 = vsub.f32 %v1675, %v1812
        %v1852 = vsub.f32 %v1676, %v1814
        %v1853 = vsub.f32 %v1677, %v1816
        %v1854 = vsub.f32 %v1678, %v1818
        %v1855 = vsub.f32 %v1679, %v1820
        %v1856 = vsub.f32 %v1680, %v1822
        %v1857 = vsub.f32 %v1681, %v1824
        %v1858 = vsub.f32 %v1682, %v1826
        %1875 = vrot.lane.b32.xlu0 %v1843, 64
        %v1876 = vpop.permute.xlu0 %1875
        %1877 = vrot.lane.b32.xlu0 %v1844, 64
        %v1878 = vpop.permute.xlu0 %1877
        %1879 = vrot.lane.b32.xlu0 %v1845, 64
        %v1880 = vpop.permute.xlu0 %1879
        %1881 = vrot.lane.b32.xlu0 %v1846, 64
        %v1882 = vpop.permute.xlu0 %1881
        %1883 = vrot.lane.b32.xlu0 %v1847, 64
        %v1884 = vpop.permute.xlu0 %1883
        %1885 = vrot.lane.b32.xlu0 %v1848, 64
        %v1886 = vpop.permute.xlu0 %1885
        %1887 = vrot.lane.b32.xlu0 %v1849, 64
        %v1888 = vpop.permute.xlu0 %1887
        %1889 = vrot.lane.b32.xlu0 %v1850, 64
        %v1890 = vpop.permute.xlu0 %1889
        %1891 = vrot.lane.b32.xlu0 %v1851, 64
        %v1892 = vpop.permute.xlu0 %1891
        %1893 = vrot.lane.b32.xlu0 %v1852, 64
        %v1894 = vpop.permute.xlu0 %1893
        %1895 = vrot.lane.b32.xlu0 %v1853, 64
        %v1896 = vpop.permute.xlu0 %1895
        %1897 = vrot.lane.b32.xlu0 %v1854, 64
        %v1898 = vpop.permute.xlu0 %1897
        %1899 = vrot.lane.b32.xlu0 %v1855, 64
        %v1900 = vpop.permute.xlu0 %1899
        %1901 = vrot.lane.b32.xlu0 %v1856, 64
        %v1902 = vpop.permute.xlu0 %1901
        %1903 = vrot.lane.b32.xlu0 %v1857, 64
        %v1904 = vpop.permute.xlu0 %1903
        %1905 = vrot.lane.b32.xlu0 %v1858, 64
        %v1906 = vpop.permute.xlu0 %1905
        %v1923 = vmul.f32 %v1748, %v1876
        %v1924 = vmul.f32 %v1750, %v1878
        %v1925 = vmul.f32 %v1752, %v1880
        %v1926 = vmul.f32 %v1754, %v1882
        %v1927 = vmul.f32 %v1756, %v1884
        %v1928 = vmul.f32 %v1758, %v1886
        %v1929 = vmul.f32 %v1760, %v1888
        %v1930 = vmul.f32 %v1762, %v1890
        %v1931 = vmul.f32 %v1764, %v1892
        %v1932 = vmul.f32 %v1766, %v1894
        %v1933 = vmul.f32 %v1768, %v1896
        %v1934 = vmul.f32 %v1770, %v1898
        %v1935 = vmul.f32 %v1772, %v1900
        %v1936 = vmul.f32 %v1774, %v1902
        %v1937 = vmul.f32 %v1776, %v1904
        %v1938 = vmul.f32 %v1778, %v1906
        %v1939 = vadd.f32 %v927, %v1923
        %v1940 = vadd.f32 %v930, %v1924
        %v1941 = vadd.f32 %v935, %v1925
        %v1942 = vadd.f32 %v938, %v1926
        %v1943 = vadd.f32 %v943, %v1927
        %v1944 = vadd.f32 %v946, %v1928
        %v1945 = vadd.f32 %v951, %v1929
        %v1946 = vadd.f32 %v954, %v1930
        %v1947 = vadd.f32 %v959, %v1931
        %v1948 = vadd.f32 %v962, %v1932
        %v1949 = vadd.f32 %v967, %v1933
        %v1950 = vadd.f32 %v970, %v1934
        %v1951 = vadd.f32 %v975, %v1935
        %v1952 = vadd.f32 %v978, %v1936
        %v1953 = vadd.f32 %v983, %v1937
        %v1954 = vadd.f32 %v986, %v1938
        %v1955 = vld [vmem:[%s8 + $0x1] sm:$0x1]
        %v1956 = vpack.c.bf16 %v1940, %v1939
        %v1957 = vpack.c.bf16 %v1942, %v1941
        %v1958 = vpack.c.bf16 %v1944, %v1943
        %v1959 = vpack.c.bf16 %v1946, %v1945
        %v1960 = vpack.c.bf16 %v1948, %v1947
        %v1961 = vpack.c.bf16 %v1950, %v1949
        %v1962 = vpack.c.bf16 %v1952, %v1951
        %v1963 = vpack.c.bf16 %v1954, %v1953
        %1964 = vst.msk [vmem:[#allocation2 + $0x10] sm:$0xff] %vm867, %v1956
        %1965 = vst.msk [vmem:[#allocation2 + $0x18] sm:$0xff] %vm867, %v1957
        %1966 = vst.msk [vmem:[#allocation2 + $0x20] sm:$0xff] %vm867, %v1958
        %1967 = vst.msk [vmem:[#allocation2 + $0x28] sm:$0xff] %vm867, %v1959
        %1968 = vst.msk [vmem:[#allocation2 + $0x50] sm:$0xff] %vm867, %v1960
        %1969 = vst.msk [vmem:[#allocation2 + $0x58] sm:$0xff] %vm867, %v1961
        %1970 = vst.msk [vmem:[#allocation2 + $0x60] sm:$0xff] %vm867, %v1962
        %1971 = vst.msk [vmem:[#allocation2 + $0x68] sm:$0xff] %vm867, %v1963
        %v1972 = vld [vmem:[#allocation2 + $0x8] sm:$0xc0]
        %v1973 = vld [vmem:[#allocation2 + $0x10] sm:$0xff]
        %v1974 = vld [vmem:[#allocation2 + $0x18] sm:$0xff]
        %v1975 = vld [vmem:[#allocation2 + $0x20] sm:$0xff]
        %v1976 = vld [vmem:[#allocation2 + $0x28] sm:$0x7f]
        %v1977 = vld [vmem:[#allocation2 + $0x48] sm:$0xc0]
        %v1978 = vld [vmem:[#allocation2 + $0x50] sm:$0xff]
        %v1979 = vld [vmem:[#allocation2 + $0x58] sm:$0xff]
        %v1980 = vld [vmem:[#allocation2 + $0x60] sm:$0xff]
        %v1981 = vld [vmem:[#allocation2 + $0x68] sm:$0x7f]
        %vm1982 = vsmask.f32 1280
        %v1984 = vshrl.u32 %v1972, 16
        %v1986 = vrot.slane %v1984, 6
        %v1987 = vshll.u32 %v1972, 16
        %v1989 = vrot.slane %v1987, 7
        %v1990 = vor.u32 %v1986, %v1989
        %v1992 = vshrl.u32 %v1973, 16
        %v1994 = vrot.slane %v1992, 6
        %v1995 = vshll.u32 %v1973, 16
        %v1997 = vrot.slane %v1995, 7
        %v1998 = vor.u32 %v1994, %v1997
        %v1999 = vsel %vm1982, %v1990, %v1998
        %v2001 = vshrl.u32 %v1974, 16
        %v2003 = vrot.slane %v2001, 6
        %v2004 = vshll.u32 %v1974, 16
        %v2006 = vrot.slane %v2004, 7
        %v2007 = vor.u32 %v2003, %v2006
        %v2008 = vsel %vm1982, %v1998, %v2007
        %v2010 = vshrl.u32 %v1975, 16
        %v2012 = vrot.slane %v2010, 6
        %v2013 = vshll.u32 %v1975, 16
        %v2015 = vrot.slane %v2013, 7
        %v2016 = vor.u32 %v2012, %v2015
        %v2017 = vsel %vm1982, %v2007, %v2016
        %v2019 = vshrl.u32 %v1976, 16
        %v2021 = vrot.slane %v2019, 6
        %v2022 = vshll.u32 %v1976, 16
        %v2024 = vrot.slane %v2022, 7
        %v2025 = vor.u32 %v2021, %v2024
        %v2026 = vsel %vm1982, %v2016, %v2025
        %v2028 = vshrl.u32 %v1977, 16
        %v2030 = vrot.slane %v2028, 6
        %v2031 = vshll.u32 %v1977, 16
        %v2033 = vrot.slane %v2031, 7
        %v2034 = vor.u32 %v2030, %v2033
        %v2036 = vshrl.u32 %v1978, 16
        %v2038 = vrot.slane %v2036, 6
        %v2039 = vshll.u32 %v1978, 16
        %v2041 = vrot.slane %v2039, 7
        %v2042 = vor.u32 %v2038, %v2041
        %v2043 = vsel %vm1982, %v2034, %v2042
        %v2045 = vshrl.u32 %v1979, 16
        %v2047 = vrot.slane %v2045, 6
        %v2048 = vshll.u32 %v1979, 16
        %v2050 = vrot.slane %v2048, 7
        %v2051 = vor.u32 %v2047, %v2050
        %v2052 = vsel %vm1982, %v2042, %v2051
        %v2054 = vshrl.u32 %v1980, 16
        %v2056 = vrot.slane %v2054, 6
        %v2057 = vshll.u32 %v1980, 16
        %v2059 = vrot.slane %v2057, 7
        %v2060 = vor.u32 %v2056, %v2059
        %v2061 = vsel %vm1982, %v2051, %v2060
        %v2063 = vshrl.u32 %v1981, 16
        %v2065 = vrot.slane %v2063, 6
        %v2066 = vshll.u32 %v1981, 16
        %v2068 = vrot.slane %v2066, 7
        %v2069 = vor.u32 %v2065, %v2068
        %v2070 = vsel %vm1982, %v2060, %v2069
        %s2071 = scalar_lea.vmem [#allocation3], 96
        %v2072 = vld [vmem:[%s2071] sm:$0xf]
        %v2073 = vld [vmem:[%s2071 + $0x4] sm:$0xf]
        %v2074 = vld [vmem:[%s2071 + $0x8] sm:$0xf]
        %v2075 = vld [vmem:[%s2071 + $0xc] sm:$0xf]
        %v2076 = vld [vmem:[%s2071 + $0x10] sm:$0xf]
        %v2077 = vld [vmem:[%s2071 + $0x14] sm:$0xf]
        %v2078 = vld [vmem:[%s2071 + $0x18] sm:$0xf]
        %v2079 = vld [vmem:[%s2071 + $0x1c] sm:$0xf]
        %v2088 = vunpack.c.l.b16 %v2072
        %v2089 = vunpack.c.l.b16 %v2073
        %v2090 = vunpack.c.l.b16 %v2074
        %v2091 = vunpack.c.l.b16 %v2075
        %v2092 = vunpack.c.l.b16 %v2076
        %v2093 = vunpack.c.l.b16 %v2077
        %v2094 = vunpack.c.l.b16 %v2078
        %v2095 = vunpack.c.l.b16 %v2079
        %v2096 = vpack.c.b16 %v2089, %v2088
        %v2097 = vpack.c.b16 %v2091, %v2090
        %v2098 = vpack.c.b16 %v2093, %v2092
        %v2099 = vpack.c.b16 %v2095, %v2094
        %v2105 = vsel %vm867, %v1999, 0
        %v2108 = vsel %vm867, %v2008, 0
        %v2111 = vsel %vm867, %v2017, 0
        %v2114 = vsel %vm867, %v2026, 0
        %v2117 = vsel %vm867, %v2043, 0
        %v2120 = vsel %vm867, %v2052, 0
        %v2123 = vsel %vm867, %v2061, 0
        %v2126 = vsel %vm867, %v2070, 0
        %2128 = vmatprep.subr.bf16.mxu0 0
        %2129 = vmatpush1.bf16.msra.mxu0 %v2096
        %2130 = vmatprep.subr.bf16.mxu0 0
        %2131 = vmatpush1.bf16.msra.mxu0 %v2097
        %2132 = vmatprep.subr.bf16.mxu0 0
        %2133 = vmatpush1.bf16.msra.mxu0 %v2098
        %2134 = vmatprep.subr.bf16.mxu0 0
        %2135 = vmatpush1.bf16.msra.mxu0 %v2099
        %2136 = vmatprep.subr.bf16.mxu0 0
        %2137 = vmatpush1.bf16.msra.mxu0 0
        %2138 = vmatprep.subr.bf16.mxu0 0
        %2139 = vmatpush1.bf16.msra.mxu0 0
        %2140 = vmatprep.subr.bf16.mxu0 0
        %2141 = vmatpush1.bf16.msra.mxu0 0
        %2142 = vmatprep.subr.bf16.mxu0 0
        %2143 = vmatpush1.bf16.msra.mxu0 0
        %2144 = vmatprep.subr.bf16.mxu0 0
        %2145 = vmatpush1.bf16.msra.mxu0 0
        %2146 = vmatprep.subr.bf16.mxu0 0
        %2147 = vmatpush1.bf16.msra.mxu0 0
        %2148 = vmatprep.subr.bf16.mxu0 0
        %2149 = vmatpush1.bf16.msra.mxu0 0
        %2150 = vmatprep.subr.bf16.mxu0 0
        %2151 = vmatpush1.bf16.msra.mxu0 0
        %2152 = vmatprep.subr.bf16.mxu0 0
        %2153 = vmatpush1.bf16.msra.mxu0 0
        %2154 = vmatprep.subr.bf16.mxu0 0
        %2155 = vmatpush1.bf16.msra.mxu0 0
        %2156 = vmatprep.subr.bf16.mxu0 0
        %2157 = vmatpush1.bf16.msra.mxu0 0
        %2158 = vmatprep.subr.bf16.mxu0 0
        %2159 = vmatpush1.bf16.msra.mxu0 0
        %2160 = vmatprep.mubr.bf16.mxu0 0
        %2161 = vmatmul.mubr.bf16.gmra.mrb[0].mxu0 %v2105
        %v2162 = vpop.f32.mrb[0].mxu0
        %v2163 = vadd.f32 0.0, %v2162
        %v2164 = vpop.f32.mrb[0].mxu0
        %v2165 = vpop.f32.mrb[0].mxu0
        %v2166 = vadd.f32 0.0, %v2165
        %v2167 = vpop.f32.mrb[0].mxu0
        %2168 = vmatprep.mubr.bf16.mxu0 0
        %2169 = vmatmul.mubr.bf16.gmra.mrb[0].mxu0 %v2108
        %v2170 = vpop.f32.mrb[0].mxu0
        %v2171 = vadd.f32 0.0, %v2170
        %v2172 = vpop.f32.mrb[0].mxu0
        %v2173 = vpop.f32.mrb[0].mxu0
        %v2174 = vadd.f32 0.0, %v2173
        %v2175 = vpop.f32.mrb[0].mxu0
        %2176 = vmatprep.mubr.bf16.mxu0 0
        %2177 = vmatmul.mubr.bf16.gmra.mrb[0].mxu0 %v2111
        %v2178 = vpop.f32.mrb[0].mxu0
        %v2179 = vadd.f32 0.0, %v2178
        %v2180 = vpop.f32.mrb[0].mxu0
        %v2181 = vpop.f32.mrb[0].mxu0
        %v2182 = vadd.f32 0.0, %v2181
        %v2183 = vpop.f32.mrb[0].mxu0
        %2184 = vmatprep.mubr.bf16.mxu0 0
        %2185 = vmatmul.mubr.bf16.gmra.mrb[0].mxu0 %v2114
        %v2186 = vpop.f32.mrb[0].mxu0
        %v2187 = vadd.f32 0.0, %v2186
        %v2188 = vpop.f32.mrb[0].mxu0
        %v2189 = vpop.f32.mrb[0].mxu0
        %v2190 = vadd.f32 0.0, %v2189
        %v2191 = vpop.f32.mrb[0].mxu0
        %2192 = vmatprep.mubr.bf16.mxu0 0
        %2193 = vmatmul.mubr.bf16.gmra.mrb[0].mxu0 %v2117
        %v2194 = vpop.f32.mrb[0].mxu0
        %v2195 = vadd.f32 0.0, %v2194
        %v2196 = vpop.f32.mrb[0].mxu0
        %v2197 = vpop.f32.mrb[0].mxu0
        %v2198 = vadd.f32 0.0, %v2197
        %v2199 = vpop.f32.mrb[0].mxu0
        %2200 = vmatprep.mubr.bf16.mxu0 0
        %2201 = vmatmul.mubr.bf16.gmra.mrb[0].mxu0 %v2120
        %v2202 = vpop.f32.mrb[0].mxu0
        %v2203 = vadd.f32 0.0, %v2202
        %v2204 = vpop.f32.mrb[0].mxu0
        %v2205 = vpop.f32.mrb[0].mxu0
        %v2206 = vadd.f32 0.0, %v2205
        %v2207 = vpop.f32.mrb[0].mxu0
        %2208 = vmatprep.mubr.bf16.mxu0 0
        %2209 = vmatmul.mubr.bf16.gmra.mrb[0].mxu0 %v2123
        %v2210 = vpop.f32.mrb[0].mxu0
        %v2211 = vadd.f32 0.0, %v2210
        %v2212 = vpop.f32.mrb[0].mxu0
        %v2213 = vpop.f32.mrb[0].mxu0
        %v2214 = vadd.f32 0.0, %v2213
        %v2215 = vpop.f32.mrb[0].mxu0
        %2216 = vmatprep.mubr.bf16.mxu0 0
        %2217 = vmatmul.mubr.bf16.gmra.mrb[0].mxu0 %v2126
        %v2218 = vpop.f32.mrb[0].mxu0
        %v2219 = vadd.f32 0.0, %v2218
        %v2220 = vpop.f32.mrb[0].mxu0
        %v2221 = vpop.f32.mrb[0].mxu0
        %v2222 = vadd.f32 0.0, %v2221
        %v2223 = vpop.f32.mrb[0].mxu0
        %2224 = vdwg.mxu0
        %v2225 = vlaneseq
        %v2226 = vshrl.u32 %v2225, 7
        %v2227 = vsub.s32 0, %v2226
        %v2228 = vrot.slane %v1955, %v2227
        %v2229 = vadd.f32 %v2228, %v2163
        %v2230 = vadd.f32 %v2228, %v2166
        %v2231 = vadd.f32 %v2228, %v2171
        %v2232 = vadd.f32 %v2228, %v2174
        %v2233 = vadd.f32 %v2228, %v2179
        %v2234 = vadd.f32 %v2228, %v2182
        %v2235 = vadd.f32 %v2228, %v2187
        %v2236 = vadd.f32 %v2228, %v2190
        %v2237 = vadd.f32 %v2228, %v2195
        %v2238 = vadd.f32 %v2228, %v2198
        %v2239 = vadd.f32 %v2228, %v2203
        %v2240 = vadd.f32 %v2228, %v2206
        %v2241 = vadd.f32 %v2228, %v2211
        %v2242 = vadd.f32 %v2228, %v2214
        %v2243 = vadd.f32 %v2228, %v2219
        %v2244 = vadd.f32 %v2228, %v2222
        %v2245 = vld [vmem:[#allocation2 + $0x28] sm:$0xff]
        %v2246 = vld [vmem:[#allocation2 + $0x68] sm:$0xff]
        %v2247 = vld [vmem:[%s2071 + $0x20] sm:$0xf]
        %v2248 = vld [vmem:[%s2071 + $0x24] sm:$0xf]
        %v2249 = vld [vmem:[%s2071 + $0x28] sm:$0xf]
        %v2250 = vld [vmem:[%s2071 + $0x2c] sm:$0xf]
        %v2251 = vld [vmem:[%s2071 + $0x30] sm:$0xf]
        %v2252 = vld [vmem:[%s2071 + $0x34] sm:$0xf]
        %v2253 = vld [vmem:[%s2071 + $0x38] sm:$0xf]
        %v2254 = vld [vmem:[%s2071 + $0x3c] sm:$0xf]
        %v2263 = vunpack.c.l.b16 %v2247
        %v2264 = vunpack.c.l.b16 %v2248
        %v2265 = vunpack.c.l.b16 %v2249
        %v2266 = vunpack.c.l.b16 %v2250
        %v2267 = vunpack.c.l.b16 %v2251
        %v2268 = vunpack.c.l.b16 %v2252
        %v2269 = vunpack.c.l.b16 %v2253
        %v2270 = vunpack.c.l.b16 %v2254
        %v2271 = vpack.c.b16 %v2264, %v2263
        %v2272 = vpack.c.b16 %v2266, %v2265
        %v2273 = vpack.c.b16 %v2268, %v2267
        %v2274 = vpack.c.b16 %v2270, %v2269
        %v2279 = vsel %vm867, %v1973, 0
        %v2281 = vsel %vm867, %v1974, 0
        %v2283 = vsel %vm867, %v1975, 0
        %v2286 = vsel %vm867, %v2245, 0
        %v2288 = vsel %vm867, %v1978, 0
        %v2290 = vsel %vm867, %v1979, 0
        %v2292 = vsel %vm867, %v1980, 0
        %v2295 = vsel %vm867, %v2246, 0
        %2297 = vmatprep.subr.bf16.mxu0 0
        %2298 = vmatpush1.bf16.msra.mxu0 %v2271
        %2299 = vmatprep.subr.bf16.mxu0 0
        %2300 = vmatpush1.bf16.msra.mxu0 %v2272
        %2301 = vmatprep.subr.bf16.mxu0 0
        %2302 = vmatpush1.bf16.msra.mxu0 %v2273
        %2303 = vmatprep.subr.bf16.mxu0 0
        %2304 = vmatpush1.bf16.msra.mxu0 %v2274
        %2305 = vmatprep.subr.bf16.mxu0 0
        %2306 = vmatpush1.bf16.msra.mxu0 0
        %2307 = vmatprep.subr.bf16.mxu0 0
        %2308 = vmatpush1.bf16.msra.mxu0 0
        %2309 = vmatprep.subr.bf16.mxu0 0
        %2310 = vmatpush1.bf16.msra.mxu0 0
        %2311 = vmatprep.subr.bf16.mxu0 0
        %2312 = vmatpush1.bf16.msra.mxu0 0
        %2313 = vmatprep.subr.bf16.mxu0 0
        %2314 = vmatpush1.bf16.msra.mxu0 0
        %2315 = vmatprep.subr.bf16.mxu0 0
        %2316 = vmatpush1.bf16.msra.mxu0 0
        %2317 = vmatprep.subr.bf16.mxu0 0
        %2318 = vmatpush1.bf16.msra.mxu0 0
        %2319 = vmatprep.subr.bf16.mxu0 0
        %2320 = vmatpush1.bf16.msra.mxu0 0
        %2321 = vmatprep.subr.bf16.mxu0 0
        %2322 = vmatpush1.bf16.msra.mxu0 0
        %2323 = vmatprep.subr.bf16.mxu0 0
        %2324 = vmatpush1.bf16.msra.mxu0 0
        %2325 = vmatprep.subr.bf16.mxu0 0
        %2326 = vmatpush1.bf16.msra.mxu0 0
        %2327 = vmatprep.subr.bf16.mxu0 0
        %2328 = vmatpush1.bf16.msra.mxu0 0
        %2329 = vmatprep.mubr.bf16.mxu0 0
        %2330 = vmatmul.mubr.bf16.gmra.mrb[0].mxu0 %v2279
        %v2331 = vpop.f32.mrb[0].mxu0
        %v2332 = vadd.f32 0.0, %v2331
        %v2333 = vpop.f32.mrb[0].mxu0
        %v2334 = vpop.f32.mrb[0].mxu0
        %v2335 = vadd.f32 0.0, %v2334
        %v2336 = vpop.f32.mrb[0].mxu0
        %2337 = vmatprep.mubr.bf16.mxu0 0
        %2338 = vmatmul.mubr.bf16.gmra.mrb[0].mxu0 %v2281
        %v2339 = vpop.f32.mrb[0].mxu0
        %v2340 = vadd.f32 0.0, %v2339
        %v2341 = vpop.f32.mrb[0].mxu0
        %v2342 = vpop.f32.mrb[0].mxu0
        %v2343 = vadd.f32 0.0, %v2342
        %v2344 = vpop.f32.mrb[0].mxu0
        %2345 = vmatprep.mubr.bf16.mxu0 0
        %2346 = vmatmul.mubr.bf16.gmra.mrb[0].mxu0 %v2283
        %v2347 = vpop.f32.mrb[0].mxu0
        %v2348 = vadd.f32 0.0, %v2347
        %v2349 = vpop.f32.mrb[0].mxu0
        %v2350 = vpop.f32.mrb[0].mxu0
        %v2351 = vadd.f32 0.0, %v2350
        %v2352 = vpop.f32.mrb[0].mxu0
        %2353 = vmatprep.mubr.bf16.mxu0 0
        %2354 = vmatmul.mubr.bf16.gmra.mrb[0].mxu0 %v2286
        %v2355 = vpop.f32.mrb[0].mxu0
        %v2356 = vadd.f32 0.0, %v2355
        %v2357 = vpop.f32.mrb[0].mxu0
        %v2358 = vpop.f32.mrb[0].mxu0
        %v2359 = vadd.f32 0.0, %v2358
        %v2360 = vpop.f32.mrb[0].mxu0
        %2361 = vmatprep.mubr.bf16.mxu0 0
        %2362 = vmatmul.mubr.bf16.gmra.mrb[0].mxu0 %v2288
        %v2363 = vpop.f32.mrb[0].mxu0
        %v2364 = vadd.f32 0.0, %v2363
        %v2365 = vpop.f32.mrb[0].mxu0
        %v2366 = vpop.f32.mrb[0].mxu0
        %v2367 = vadd.f32 0.0, %v2366
        %v2368 = vpop.f32.mrb[0].mxu0
        %2369 = vmatprep.mubr.bf16.mxu0 0
        %2370 = vmatmul.mubr.bf16.gmra.mrb[0].mxu0 %v2290
        %v2371 = vpop.f32.mrb[0].mxu0
        %v2372 = vadd.f32 0.0, %v2371
        %v2373 = vpop.f32.mrb[0].mxu0
        %v2374 = vpop.f32.mrb[0].mxu0
        %v2375 = vadd.f32 0.0, %v2374
        %v2376 = vpop.f32.mrb[0].mxu0
        %2377 = vmatprep.mubr.bf16.mxu0 0
        %2378 = vmatmul.mubr.bf16.gmra.mrb[0].mxu0 %v2292
        %v2379 = vpop.f32.mrb[0].mxu0
        %v2380 = vadd.f32 0.0, %v2379
        %v2381 = vpop.f32.mrb[0].mxu0
        %v2382 = vpop.f32.mrb[0].mxu0
        %v2383 = vadd.f32 0.0, %v2382
        %v2384 = vpop.f32.mrb[0].mxu0
        %2385 = vmatprep.mubr.bf16.mxu0 0
        %2386 = vmatmul.mubr.bf16.gmra.mrb[0].mxu0 %v2295
        %v2387 = vpop.f32.mrb[0].mxu0
        %v2388 = vadd.f32 0.0, %v2387
        %v2389 = vpop.f32.mrb[0].mxu0
        %v2390 = vpop.f32.mrb[0].mxu0
        %v2391 = vadd.f32 0.0, %v2390
        %v2392 = vpop.f32.mrb[0].mxu0
        %2393 = vdwg.mxu0
        %v2394 = vadd.f32 %v2229, %v2332
        %v2395 = vadd.f32 %v2230, %v2335
        %v2396 = vadd.f32 %v2231, %v2340
        %v2397 = vadd.f32 %v2232, %v2343
        %v2398 = vadd.f32 %v2233, %v2348
        %v2399 = vadd.f32 %v2234, %v2351
        %v2400 = vadd.f32 %v2235, %v2356
        %v2401 = vadd.f32 %v2236, %v2359
        %v2402 = vadd.f32 %v2237, %v2364
        %v2403 = vadd.f32 %v2238, %v2367
        %v2404 = vadd.f32 %v2239, %v2372
        %v2405 = vadd.f32 %v2240, %v2375
        %v2406 = vadd.f32 %v2241, %v2380
        %v2407 = vadd.f32 %v2242, %v2383
        %v2408 = vadd.f32 %v2243, %v2388
        %v2409 = vadd.f32 %v2244, %v2391
        %v2410 = vld [vmem:[#allocation2 + $0x10] sm:$0xfe]
        %v2411 = vld [vmem:[#allocation2 + $0x18] sm:$0xff]
        %v2412 = vld [vmem:[#allocation2 + $0x20] sm:$0xff]
        %v2413 = vld [vmem:[#allocation2 + $0x28] sm:$0xff]
        %v2414 = vld [vmem:[#allocation2 + $0x30] sm:$0x3]
        %v2415 = vld [vmem:[#allocation2 + $0x50] sm:$0xfe]
        %v2416 = vld [vmem:[#allocation2 + $0x58] sm:$0xff]
        %v2417 = vld [vmem:[#allocation2 + $0x60] sm:$0xff]
        %v2418 = vld [vmem:[#allocation2 + $0x68] sm:$0xff]
        %v2419 = vld [vmem:[#allocation2 + $0x70] sm:$0x3]
        %vm2420 = vsmask.f32 6400
        %v2422 = vshrl.u32 %v2410, 16
        %v2424 = vrot.slane %v2422, 1
        %v2425 = vshll.u32 %v2410, 16
        %v2427 = vrot.slane %v2425, 2
        %v2428 = vor.u32 %v2424, %v2427
        %v2430 = vshrl.u32 %v2411, 16
        %v2432 = vrot.slane %v2430, 1
        %v2433 = vshll.u32 %v2411, 16
        %v2435 = vrot.slane %v2433, 2
        %v2436 = vor.u32 %v2432, %v2435
        %v2437 = vsel %vm2420, %v2428, %v2436
        %v2439 = vshrl.u32 %v2412, 16
        %v2441 = vrot.slane %v2439, 1
        %v2442 = vshll.u32 %v2412, 16
        %v2444 = vrot.slane %v2442, 2
        %v2445 = vor.u32 %v2441, %v2444
        %v2446 = vsel %vm2420, %v2436, %v2445
        %v2448 = vshrl.u32 %v2413, 16
        %v2450 = vrot.slane %v2448, 1
        %v2451 = vshll.u32 %v2413, 16
        %v2453 = vrot.slane %v2451, 2
        %v2454 = vor.u32 %v2450, %v2453
        %v2455 = vsel %vm2420, %v2445, %v2454
        %v2457 = vshrl.u32 %v2414, 16
        %v2459 = vrot.slane %v2457, 1
        %v2460 = vshll.u32 %v2414, 16
        %v2462 = vrot.slane %v2460, 2
        %v2463 = vor.u32 %v2459, %v2462
        %v2464 = vsel %vm2420, %v2454, %v2463
        %v2466 = vshrl.u32 %v2415, 16
        %v2468 = vrot.slane %v2466, 1
        %v2469 = vshll.u32 %v2415, 16
        %v2471 = vrot.slane %v2469, 2
        %v2472 = vor.u32 %v2468, %v2471
        %v2474 = vshrl.u32 %v2416, 16
        %v2476 = vrot.slane %v2474, 1
        %v2477 = vshll.u32 %v2416, 16
        %v2479 = vrot.slane %v2477, 2
        %v2480 = vor.u32 %v2476, %v2479
        %v2481 = vsel %vm2420, %v2472, %v2480
        %v2483 = vshrl.u32 %v2417, 16
        %v2485 = vrot.slane %v2483, 1
        %v2486 = vshll.u32 %v2417, 16
        %v2488 = vrot.slane %v2486, 2
        %v2489 = vor.u32 %v2485, %v2488
        %v2490 = vsel %vm2420, %v2480, %v2489
        %v2492 = vshrl.u32 %v2418, 16
        %v2494 = vrot.slane %v2492, 1
        %v2495 = vshll.u32 %v2418, 16
        %v2497 = vrot.slane %v2495, 2
        %v2498 = vor.u32 %v2494, %v2497
        %v2499 = vsel %vm2420, %v2489, %v2498
        %v2501 = vshrl.u32 %v2419, 16
        %v2503 = vrot.slane %v2501, 1
        %v2504 = vshll.u32 %v2419, 16
        %v2506 = vrot.slane %v2504, 2
        %v2507 = vor.u32 %v2503, %v2506
        %v2508 = vsel %vm2420, %v2498, %v2507
        %v2509 = vld [vmem:[%s2071 + $0x40] sm:$0xf]
        %v2510 = vld [vmem:[%s2071 + $0x44] sm:$0xf]
        %v2511 = vld [vmem:[%s2071 + $0x48] sm:$0xf]
        %v2512 = vld [vmem:[%s2071 + $0x4c] sm:$0xf]
        %v2513 = vld [vmem:[%s2071 + $0x50] sm:$0xf]
        %v2514 = vld [vmem:[%s2071 + $0x54] sm:$0xf]
        %v2515 = vld [vmem:[%s2071 + $0x58] sm:$0xf]
        %v2516 = vld [vmem:[%s2071 + $0x5c] sm:$0xf]
        %v2525 = vunpack.c.l.b16 %v2509
        %v2526 = vunpack.c.l.b16 %v2510
        %v2527 = vunpack.c.l.b16 %v2511
        %v2528 = vunpack.c.l.b16 %v2512
        %v2529 = vunpack.c.l.b16 %v2513
        %v2530 = vunpack.c.l.b16 %v2514
        %v2531 = vunpack.c.l.b16 %v2515
        %v2532 = vunpack.c.l.b16 %v2516
        %v2533 = vpack.c.b16 %v2526, %v2525
        %v2534 = vpack.c.b16 %v2528, %v2527
        %v2535 = vpack.c.b16 %v2530, %v2529
        %v2536 = vpack.c.b16 %v2532, %v2531
        %v2542 = vsel %vm867, %v2437, 0
        %v2545 = vsel %vm867, %v2446, 0
        %v2548 = vsel %vm867, %v2455, 0
        %v2551 = vsel %vm867, %v2464, 0
        %v2554 = vsel %vm867, %v2481, 0
        %v2557 = vsel %vm867, %v2490, 0
        %v2560 = vsel %vm867, %v2499, 0
        %v2563 = vsel %vm867, %v2508, 0
        %2565 = vmatprep.subr.bf16.mxu0 0
        %2566 = vmatpush1.bf16.msra.mxu0 %v2533
        %2567 = vmatprep.subr.bf16.mxu0 0
        %2568 = vmatpush1.bf16.msra.mxu0 %v2534
        %2569 = vmatprep.subr.bf16.mxu0 0
        %2570 = vmatpush1.bf16.msra.mxu0 %v2535
        %2571 = vmatprep.subr.bf16.mxu0 0
        %2572 = vmatpush1.bf16.msra.mxu0 %v2536
        %2573 = vmatprep.subr.bf16.mxu0 0
        %2574 = vmatpush1.bf16.msra.mxu0 0
        %2575 = vmatprep.subr.bf16.mxu0 0
        %2576 = vmatpush1.bf16.msra.mxu0 0
        %2577 = vmatprep.subr.bf16.mxu0 0
        %2578 = vmatpush1.bf16.msra.mxu0 0
        %2579 = vmatprep.subr.bf16.mxu0 0
        %2580 = vmatpush1.bf16.msra.mxu0 0
        %2581 = vmatprep.subr.bf16.mxu0 0
        %2582 = vmatpush1.bf16.msra.mxu0 0
        %2583 = vmatprep.subr.bf16.mxu0 0
        %2584 = vmatpush1.bf16.msra.mxu0 0
        %2585 = vmatprep.subr.bf16.mxu0 0
        %2586 = vmatpush1.bf16.msra.mxu0 0
        %2587 = vmatprep.subr.bf16.mxu0 0
        %2588 = vmatpush1.bf16.msra.mxu0 0
        %2589 = vmatprep.subr.bf16.mxu0 0
        %2590 = vmatpush1.bf16.msra.mxu0 0
        %2591 = vmatprep.subr.bf16.mxu0 0
        %2592 = vmatpush1.bf16.msra.mxu0 0
        %2593 = vmatprep.subr.bf16.mxu0 0
        %2594 = vmatpush1.bf16.msra.mxu0 0
        %2595 = vmatprep.subr.bf16.mxu0 0
        %2596 = vmatpush1.bf16.msra.mxu0 0
        %2597 = vmatprep.mubr.bf16.mxu0 0
        %2598 = vmatmul.mubr.bf16.gmra.mrb[0].mxu0 %v2542
        %v2599 = vpop.f32.mrb[0].mxu0
        %v2600 = vadd.f32 0.0, %v2599
        %v2601 = vpop.f32.mrb[0].mxu0
        %v2602 = vpop.f32.mrb[0].mxu0
        %v2603 = vadd.f32 0.0, %v2602
        %v2604 = vpop.f32.mrb[0].mxu0
        %2605 = vmatprep.mubr.bf16.mxu0 0
        %2606 = vmatmul.mubr.bf16.gmra.mrb[0].mxu0 %v2545
        %v2607 = vpop.f32.mrb[0].mxu0
        %v2608 = vadd.f32 0.0, %v2607
        %v2609 = vpop.f32.mrb[0].mxu0
        %v2610 = vpop.f32.mrb[0].mxu0
        %v2611 = vadd.f32 0.0, %v2610
        %v2612 = vpop.f32.mrb[0].mxu0
        %2613 = vmatprep.mubr.bf16.mxu0 0
        %2614 = vmatmul.mubr.bf16.gmra.mrb[0].mxu0 %v2548
        %v2615 = vpop.f32.mrb[0].mxu0
        %v2616 = vadd.f32 0.0, %v2615
        %v2617 = vpop.f32.mrb[0].mxu0
        %v2618 = vpop.f32.mrb[0].mxu0
        %v2619 = vadd.f32 0.0, %v2618
        %v2620 = vpop.f32.mrb[0].mxu0
        %2621 = vmatprep.mubr.bf16.mxu0 0
        %2622 = vmatmul.mubr.bf16.gmra.mrb[0].mxu0 %v2551
        %v2623 = vpop.f32.mrb[0].mxu0
        %v2624 = vadd.f32 0.0, %v2623
        %v2625 = vpop.f32.mrb[0].mxu0
        %v2626 = vpop.f32.mrb[0].mxu0
        %v2627 = vadd.f32 0.0, %v2626
        %v2628 = vpop.f32.mrb[0].mxu0
        %2629 = vmatprep.mubr.bf16.mxu0 0
        %2630 = vmatmul.mubr.bf16.gmra.mrb[0].mxu0 %v2554
        %v2631 = vpop.f32.mrb[0].mxu0
        %v2632 = vadd.f32 0.0, %v2631
        %v2633 = vpop.f32.mrb[0].mxu0
        %v2634 = vpop.f32.mrb[0].mxu0
        %v2635 = vadd.f32 0.0, %v2634
        %v2636 = vpop.f32.mrb[0].mxu0
        %2637 = vmatprep.mubr.bf16.mxu0 0
        %2638 = vmatmul.mubr.bf16.gmra.mrb[0].mxu0 %v2557
        %v2639 = vpop.f32.mrb[0].mxu0
        %v2640 = vadd.f32 0.0, %v2639
        %v2641 = vpop.f32.mrb[0].mxu0
        %v2642 = vpop.f32.mrb[0].mxu0
        %v2643 = vadd.f32 0.0, %v2642
        %v2644 = vpop.f32.mrb[0].mxu0
        %2645 = vmatprep.mubr.bf16.mxu0 0
        %2646 = vmatmul.mubr.bf16.gmra.mrb[0].mxu0 %v2560
        %v2647 = vpop.f32.mrb[0].mxu0
        %v2648 = vadd.f32 0.0, %v2647
        %v2649 = vpop.f32.mrb[0].mxu0
        %v2650 = vpop.f32.mrb[0].mxu0
        %v2651 = vadd.f32 0.0, %v2650
        %v2652 = vpop.f32.mrb[0].mxu0
        %2653 = vmatprep.mubr.bf16.mxu0 0
        %2654 = vmatmul.mubr.bf16.gmra.mrb[0].mxu0 %v2563
        %v2655 = vpop.f32.mrb[0].mxu0
        %v2656 = vadd.f32 0.0, %v2655
        %v2657 = vpop.f32.mrb[0].mxu0
        %v2658 = vpop.f32.mrb[0].mxu0
        %v2659 = vadd.f32 0.0, %v2658
        %v2660 = vpop.f32.mrb[0].mxu0
        %2661 = vdwg.mxu0
        %v2662 = vadd.f32 %v2394, %v2600
        %v2663 = vadd.f32 %v2395, %v2603
        %v2664 = vadd.f32 %v2396, %v2608
        %v2665 = vadd.f32 %v2397, %v2611
        %v2666 = vadd.f32 %v2398, %v2616
        %v2667 = vadd.f32 %v2399, %v2619
        %v2668 = vadd.f32 %v2400, %v2624
        %v2669 = vadd.f32 %v2401, %v2627
        %v2670 = vadd.f32 %v2402, %v2632
        %v2671 = vadd.f32 %v2403, %v2635
        %v2672 = vadd.f32 %v2404, %v2640
        %v2673 = vadd.f32 %v2405, %v2643
        %v2674 = vadd.f32 %v2406, %v2648
        %v2675 = vadd.f32 %v2407, %v2651
        %v2676 = vadd.f32 %v2408, %v2656
        %v2677 = vadd.f32 %v2409, %v2659
        %v2678 = vxor.u32 %v2662, 2147483648
        %v2679 = vxor.u32 %v2663, 2147483648
        %v2680 = vxor.u32 %v2664, 2147483648
        %v2681 = vxor.u32 %v2665, 2147483648
        %v2682 = vxor.u32 %v2666, 2147483648
        %v2683 = vxor.u32 %v2667, 2147483648
        %v2684 = vxor.u32 %v2668, 2147483648
        %v2685 = vxor.u32 %v2669, 2147483648
        %v2686 = vxor.u32 %v2670, 2147483648
        %v2687 = vxor.u32 %v2671, 2147483648
        %v2688 = vxor.u32 %v2672, 2147483648
        %v2689 = vxor.u32 %v2673, 2147483648
        %v2690 = vxor.u32 %v2674, 2147483648
        %v2691 = vxor.u32 %v2675, 2147483648
        %v2692 = vxor.u32 %v2676, 2147483648
        %v2693 = vxor.u32 %v2677, 2147483648
        %v2694 = vmul.f32 %v2678, 1.442695
        %v2695 = vpow.pop %v2694
        %v2696 = vmul.f32 %v2679, 1.442695
        %v2697 = vpow.pop %v2696
        %v2698 = vmul.f32 %v2680, 1.442695
        %v2699 = vpow.pop %v2698
        %v2700 = vmul.f32 %v2681, 1.442695
        %v2701 = vpow.pop %v2700
        %v2702 = vmul.f32 %v2682, 1.442695
        %v2703 = vpow.pop %v2702
        %v2704 = vmul.f32 %v2683, 1.442695
        %v2705 = vpow.pop %v2704
        %v2706 = vmul.f32 %v2684, 1.442695
        %v2707 = vpow.pop %v2706
        %v2708 = vmul.f32 %v2685, 1.442695
        %v2709 = vpow.pop %v2708
        %v2710 = vmul.f32 %v2686, 1.442695
        %v2711 = vpow.pop %v2710
        %v2712 = vmul.f32 %v2687, 1.442695
        %v2713 = vpow.pop %v2712
        %v2714 = vmul.f32 %v2688, 1.442695
        %v2715 = vpow.pop %v2714
        %v2716 = vmul.f32 %v2689, 1.442695
        %v2717 = vpow.pop %v2716
        %v2718 = vmul.f32 %v2690, 1.442695
        %v2719 = vpow.pop %v2718
        %v2720 = vmul.f32 %v2691, 1.442695
        %v2721 = vpow.pop %v2720
        %v2722 = vmul.f32 %v2692, 1.442695
        %v2723 = vpow.pop %v2722
        %v2724 = vmul.f32 %v2693, 1.442695
        %v2725 = vpow.pop %v2724
        %v2726 = vadd.f32 %v2695, 1.0
        %v2727 = vadd.f32 %v2697, 1.0
        %v2728 = vadd.f32 %v2699, 1.0
        %v2729 = vadd.f32 %v2701, 1.0
        %v2730 = vadd.f32 %v2703, 1.0
        %v2731 = vadd.f32 %v2705, 1.0
        %v2732 = vadd.f32 %v2707, 1.0
        %v2733 = vadd.f32 %v2709, 1.0
        %v2734 = vadd.f32 %v2711, 1.0
        %v2735 = vadd.f32 %v2713, 1.0
        %v2736 = vadd.f32 %v2715, 1.0
        %v2737 = vadd.f32 %v2717, 1.0
        %v2738 = vadd.f32 %v2719, 1.0
        %v2739 = vadd.f32 %v2721, 1.0
        %v2740 = vadd.f32 %v2723, 1.0
        %v2741 = vadd.f32 %v2725, 1.0
        %v2742 = vrcp.pop %v2726
        %v2743 = vmul.f32 1.0, %v2742
        %v2744 = vrcp.pop %v2727
        %v2745 = vmul.f32 1.0, %v2744
        %v2746 = vrcp.pop %v2728
        %v2747 = vmul.f32 1.0, %v2746
        %v2748 = vrcp.pop %v2729
        %v2749 = vmul.f32 1.0, %v2748
        %v2750 = vrcp.pop %v2730
        %v2751 = vmul.f32 1.0, %v2750
        %v2752 = vrcp.pop %v2731
        %v2753 = vmul.f32 1.0, %v2752
        %v2754 = vrcp.pop %v2732
        %v2755 = vmul.f32 1.0, %v2754
        %v2756 = vrcp.pop %v2733
        %v2757 = vmul.f32 1.0, %v2756
        %v2758 = vrcp.pop %v2734
        %v2759 = vmul.f32 1.0, %v2758
        %v2760 = vrcp.pop %v2735
        %v2761 = vmul.f32 1.0, %v2760
        %v2762 = vrcp.pop %v2736
        %v2763 = vmul.f32 1.0, %v2762
        %v2764 = vrcp.pop %v2737
        %v2765 = vmul.f32 1.0, %v2764
        %v2766 = vrcp.pop %v2738
        %v2767 = vmul.f32 1.0, %v2766
        %v2768 = vrcp.pop %v2739
        %v2769 = vmul.f32 1.0, %v2768
        %v2770 = vrcp.pop %v2740
        %v2771 = vmul.f32 1.0, %v2770
        %v2772 = vrcp.pop %v2741
        %v2773 = vmul.f32 1.0, %v2772
        %2790 = vrot.lane.b32.xlu0 %v1939, 64
        %v2791 = vpop.permute.xlu0 %2790
        %2792 = vrot.lane.b32.xlu0 %v1940, 64
        %v2793 = vpop.permute.xlu0 %2792
        %2794 = vrot.lane.b32.xlu0 %v1941, 64
        %v2795 = vpop.permute.xlu0 %2794
        %2796 = vrot.lane.b32.xlu0 %v1942, 64
        %v2797 = vpop.permute.xlu0 %2796
        %2798 = vrot.lane.b32.xlu0 %v1943, 64
        %v2799 = vpop.permute.xlu0 %2798
        %2800 = vrot.lane.b32.xlu0 %v1944, 64
        %v2801 = vpop.permute.xlu0 %2800
        %2802 = vrot.lane.b32.xlu0 %v1945, 64
        %v2803 = vpop.permute.xlu0 %2802
        %2804 = vrot.lane.b32.xlu0 %v1946, 64
        %v2805 = vpop.permute.xlu0 %2804
        %2806 = vrot.lane.b32.xlu0 %v1947, 64
        %v2807 = vpop.permute.xlu0 %2806
        %2808 = vrot.lane.b32.xlu0 %v1948, 64
        %v2809 = vpop.permute.xlu0 %2808
        %2810 = vrot.lane.b32.xlu0 %v1949, 64
        %v2811 = vpop.permute.xlu0 %2810
        %2812 = vrot.lane.b32.xlu0 %v1950, 64
        %v2813 = vpop.permute.xlu0 %2812
        %2814 = vrot.lane.b32.xlu0 %v1951, 64
        %v2815 = vpop.permute.xlu0 %2814
        %2816 = vrot.lane.b32.xlu0 %v1952, 64
        %v2817 = vpop.permute.xlu0 %2816
        %2818 = vrot.lane.b32.xlu0 %v1953, 64
        %v2819 = vpop.permute.xlu0 %2818
        %2820 = vrot.lane.b32.xlu0 %v1954, 64
        %v2821 = vpop.permute.xlu0 %2820
        %v2838 = vsub.f32 %v2662, %v2791
        %v2839 = vsub.f32 %v2663, %v2793
        %v2840 = vsub.f32 %v2664, %v2795
        %v2841 = vsub.f32 %v2665, %v2797
        %v2842 = vsub.f32 %v2666, %v2799
        %v2843 = vsub.f32 %v2667, %v2801
        %v2844 = vsub.f32 %v2668, %v2803
        %v2845 = vsub.f32 %v2669, %v2805
        %v2846 = vsub.f32 %v2670, %v2807
        %v2847 = vsub.f32 %v2671, %v2809
        %v2848 = vsub.f32 %v2672, %v2811
        %v2849 = vsub.f32 %v2673, %v2813
        %v2850 = vsub.f32 %v2674, %v2815
        %v2851 = vsub.f32 %v2675, %v2817
        %v2852 = vsub.f32 %v2676, %v2819
        %v2853 = vsub.f32 %v2677, %v2821
        %2870 = vrot.lane.b32.xlu0 %v2838, 64
        %v2871 = vpop.permute.xlu0 %2870
        %2872 = vrot.lane.b32.xlu0 %v2839, 64
        %v2873 = vpop.permute.xlu0 %2872
        %2874 = vrot.lane.b32.xlu0 %v2840, 64
        %v2875 = vpop.permute.xlu0 %2874
        %2876 = vrot.lane.b32.xlu0 %v2841, 64
        %v2877 = vpop.permute.xlu0 %2876
        %2878 = vrot.lane.b32.xlu0 %v2842, 64
        %v2879 = vpop.permute.xlu0 %2878
        %2880 = vrot.lane.b32.xlu0 %v2843, 64
        %v2881 = vpop.permute.xlu0 %2880
        %2882 = vrot.lane.b32.xlu0 %v2844, 64
        %v2883 = vpop.permute.xlu0 %2882
        %2884 = vrot.lane.b32.xlu0 %v2845, 64
        %v2885 = vpop.permute.xlu0 %2884
        %2886 = vrot.lane.b32.xlu0 %v2846, 64
        %v2887 = vpop.permute.xlu0 %2886
        %2888 = vrot.lane.b32.xlu0 %v2847, 64
        %v2889 = vpop.permute.xlu0 %2888
        %2890 = vrot.lane.b32.xlu0 %v2848, 64
        %v2891 = vpop.permute.xlu0 %2890
        %2892 = vrot.lane.b32.xlu0 %v2849, 64
        %v2893 = vpop.permute.xlu0 %2892
        %2894 = vrot.lane.b32.xlu0 %v2850, 64
        %v2895 = vpop.permute.xlu0 %2894
        %2896 = vrot.lane.b32.xlu0 %v2851, 64
        %v2897 = vpop.permute.xlu0 %2896
        %2898 = vrot.lane.b32.xlu0 %v2852, 64
        %v2899 = vpop.permute.xlu0 %2898
        %2900 = vrot.lane.b32.xlu0 %v2853, 64
        %v2901 = vpop.permute.xlu0 %2900
        %v2918 = vmul.f32 %v2743, %v2871
        %v2919 = vmul.f32 %v2745, %v2873
        %v2920 = vmul.f32 %v2747, %v2875
        %v2921 = vmul.f32 %v2749, %v2877
        %v2922 = vmul.f32 %v2751, %v2879
        %v2923 = vmul.f32 %v2753, %v2881
        %v2924 = vmul.f32 %v2755, %v2883
        %v2925 = vmul.f32 %v2757, %v2885
        %v2926 = vmul.f32 %v2759, %v2887
        %v2927 = vmul.f32 %v2761, %v2889
        %v2928 = vmul.f32 %v2763, %v2891
        %v2929 = vmul.f32 %v2765, %v2893
        %v2930 = vmul.f32 %v2767, %v2895
        %v2931 = vmul.f32 %v2769, %v2897
        %v2932 = vmul.f32 %v2771, %v2899
        %v2933 = vmul.f32 %v2773, %v2901
        %v2934 = vadd.f32 %v1939, %v2918
        %v2935 = vadd.f32 %v1940, %v2919
        %v2936 = vadd.f32 %v1941, %v2920
        %v2937 = vadd.f32 %v1942, %v2921
        %v2938 = vadd.f32 %v1943, %v2922
        %v2939 = vadd.f32 %v1944, %v2923
        %v2940 = vadd.f32 %v1945, %v2924
        %v2941 = vadd.f32 %v1946, %v2925
        %v2942 = vadd.f32 %v1947, %v2926
        %v2943 = vadd.f32 %v1948, %v2927
        %v2944 = vadd.f32 %v1949, %v2928
        %v2945 = vadd.f32 %v1950, %v2929
        %v2946 = vadd.f32 %v1951, %v2930
        %v2947 = vadd.f32 %v1952, %v2931
        %v2948 = vadd.f32 %v1953, %v2932
        %v2949 = vadd.f32 %v1954, %v2933
        %v2950 = vld [vmem:[%s8 + $0x2] sm:$0x1]
        %v2951 = vpack.c.bf16 %v2935, %v2934
        %v2952 = vpack.c.bf16 %v2937, %v2936
        %v2953 = vpack.c.bf16 %v2939, %v2938
        %v2954 = vpack.c.bf16 %v2941, %v2940
        %v2955 = vpack.c.bf16 %v2943, %v2942
        %v2956 = vpack.c.bf16 %v2945, %v2944
        %v2957 = vpack.c.bf16 %v2947, %v2946
        %v2958 = vpack.c.bf16 %v2949, %v2948
        %2959 = vst.msk [vmem:[#allocation2 + $0x10] sm:$0xff] %vm867, %v2951
        %2960 = vst.msk [vmem:[#allocation2 + $0x18] sm:$0xff] %vm867, %v2952
        %2961 = vst.msk [vmem:[#allocation2 + $0x20] sm:$0xff] %vm867, %v2953
        %2962 = vst.msk [vmem:[#allocation2 + $0x28] sm:$0xff] %vm867, %v2954
        %2963 = vst.msk [vmem:[#allocation2 + $0x50] sm:$0xff] %vm867, %v2955
        %2964 = vst.msk [vmem:[#allocation2 + $0x58] sm:$0xff] %vm867, %v2956
        %2965 = vst.msk [vmem:[#allocation2 + $0x60] sm:$0xff] %vm867, %v2957
        %2966 = vst.msk [vmem:[#allocation2 + $0x68] sm:$0xff] %vm867, %v2958
        %v2967 = vld [vmem:[#allocation2 + $0x8] sm:$0xf8]
        %v2968 = vld [vmem:[#allocation2 + $0x10] sm:$0xff]
        %v2969 = vld [vmem:[#allocation2 + $0x18] sm:$0xff]
        %v2970 = vld [vmem:[#allocation2 + $0x20] sm:$0xff]
        %v2971 = vld [vmem:[#allocation2 + $0x28] sm:$0xf]
        %v2972 = vld [vmem:[#allocation2 + $0x48] sm:$0xf8]
        %v2973 = vld [vmem:[#allocation2 + $0x50] sm:$0xff]
        %v2974 = vld [vmem:[#allocation2 + $0x58] sm:$0xff]
        %v2975 = vld [vmem:[#allocation2 + $0x60] sm:$0xff]
        %v2976 = vld [vmem:[#allocation2 + $0x68] sm:$0xf]
        %vm2977 = vsmask.f32 4352
        %v2979 = vshrl.u32 %v2967, 16
        %v2981 = vrot.slane %v2979, 3
        %v2982 = vshll.u32 %v2967, 16
        %v2984 = vrot.slane %v2982, 4
        %v2985 = vor.u32 %v2981, %v2984
        %v2987 = vshrl.u32 %v2968, 16
        %v2989 = vrot.slane %v2987, 3
        %v2990 = vshll.u32 %v2968, 16
        %v2992 = vrot.slane %v2990, 4
        %v2993 = vor.u32 %v2989, %v2992
        %v2994 = vsel %vm2977, %v2985, %v2993
        %v2996 = vshrl.u32 %v2969, 16
        %v2998 = vrot.slane %v2996, 3
        %v2999 = vshll.u32 %v2969, 16
        %v3001 = vrot.slane %v2999, 4
        %v3002 = vor.u32 %v2998, %v3001
        %v3003 = vsel %vm2977, %v2993, %v3002
        %v3005 = vshrl.u32 %v2970, 16
        %v3007 = vrot.slane %v3005, 3
        %v3008 = vshll.u32 %v2970, 16
        %v3010 = vrot.slane %v3008, 4
        %v3011 = vor.u32 %v3007, %v3010
        %v3012 = vsel %vm2977, %v3002, %v3011
        %v3014 = vshrl.u32 %v2971, 16
        %v3016 = vrot.slane %v3014, 3
        %v3017 = vshll.u32 %v2971, 16
        %v3019 = vrot.slane %v3017, 4
        %v3020 = vor.u32 %v3016, %v3019
        %v3021 = vsel %vm2977, %v3011, %v3020
        %v3023 = vshrl.u32 %v2972, 16
        %v3025 = vrot.slane %v3023, 3
        %v3026 = vshll.u32 %v2972, 16
        %v3028 = vrot.slane %v3026, 4
        %v3029 = vor.u32 %v3025, %v3028
        %v3031 = vshrl.u32 %v2973, 16
        %v3033 = vrot.slane %v3031, 3
        %v3034 = vshll.u32 %v2973, 16
        %v3036 = vrot.slane %v3034, 4
        %v3037 = vor.u32 %v3033, %v3036
        %v3038 = vsel %vm2977, %v3029, %v3037
        %v3040 = vshrl.u32 %v2974, 16
        %v3042 = vrot.slane %v3040, 3
        %v3043 = vshll.u32 %v2974, 16
        %v3045 = vrot.slane %v3043, 4
        %v3046 = vor.u32 %v3042, %v3045
        %v3047 = vsel %vm2977, %v3037, %v3046
        %v3049 = vshrl.u32 %v2975, 16
        %v3051 = vrot.slane %v3049, 3
        %v3052 = vshll.u32 %v2975, 16
        %v3054 = vrot.slane %v3052, 4
        %v3055 = vor.u32 %v3051, %v3054
        %v3056 = vsel %vm2977, %v3046, %v3055
        %v3058 = vshrl.u32 %v2976, 16
        %v3060 = vrot.slane %v3058, 3
        %v3061 = vshll.u32 %v2976, 16
        %v3063 = vrot.slane %v3061, 4
        %v3064 = vor.u32 %v3060, %v3063
        %v3065 = vsel %vm2977, %v3055, %v3064
        %s3066 = scalar_lea.vmem [#allocation3], 192
        %v3067 = vld [vmem:[%s3066] sm:$0xf]
        %v3068 = vld [vmem:[%s3066 + $0x4] sm:$0xf]
        %v3069 = vld [vmem:[%s3066 + $0x8] sm:$0xf]
        %v3070 = vld [vmem:[%s3066 + $0xc] sm:$0xf]
        %v3071 = vld [vmem:[%s3066 + $0x10] sm:$0xf]
        %v3072 = vld [vmem:[%s3066 + $0x14] sm:$0xf]
        %v3073 = vld [vmem:[%s3066 + $0x18] sm:$0xf]
        %v3074 = vld [vmem:[%s3066 + $0x1c] sm:$0xf]
        %v3083 = vunpack.c.l.b16 %v3067
        %v3084 = vunpack.c.l.b16 %v3068
        %v3085 = vunpack.c.l.b16 %v3069
        %v3086 = vunpack.c.l.b16 %v3070
        %v3087 = vunpack.c.l.b16 %v3071
        %v3088 = vunpack.c.l.b16 %v3072
        %v3089 = vunpack.c.l.b16 %v3073
        %v3090 = vunpack.c.l.b16 %v3074
        %v3091 = vpack.c.b16 %v3084, %v3083
        %v3092 = vpack.c.b16 %v3086, %v3085
        %v3093 = vpack.c.b16 %v3088, %v3087
        %v3094 = vpack.c.b16 %v3090, %v3089
        %v3100 = vsel %vm867, %v2994, 0
        %v3103 = vsel %vm867, %v3003, 0
        %v3106 = vsel %vm867, %v3012, 0
        %v3109 = vsel %vm867, %v3021, 0
        %v3112 = vsel %vm867, %v3038, 0
        %v3115 = vsel %vm867, %v3047, 0
        %v3118 = vsel %vm867, %v3056, 0
        %v3121 = vsel %vm867, %v3065, 0
        %3123 = vmatprep.subr.bf16.mxu0 0
        %3124 = vmatpush1.bf16.msra.mxu0 %v3091
        %3125 = vmatprep.subr.bf16.mxu0 0
        %3126 = vmatpush1.bf16.msra.mxu0 %v3092
        %3127 = vmatprep.subr.bf16.mxu0 0
        %3128 = vmatpush1.bf16.msra.mxu0 %v3093
        %3129 = vmatprep.subr.bf16.mxu0 0
        %3130 = vmatpush1.bf16.msra.mxu0 %v3094
        %3131 = vmatprep.subr.bf16.mxu0 0
        %3132 = vmatpush1.bf16.msra.mxu0 0
        %3133 = vmatprep.subr.bf16.mxu0 0
        %3134 = vmatpush1.bf16.msra.mxu0 0
        %3135 = vmatprep.subr.bf16.mxu0 0
        %3136 = vmatpush1.bf16.msra.mxu0 0
        %3137 = vmatprep.subr.bf16.mxu0 0
        %3138 = vmatpush1.bf16.msra.mxu0 0
        %3139 = vmatprep.subr.bf16.mxu0 0
        %3140 = vmatpush1.bf16.msra.mxu0 0
        %3141 = vmatprep.subr.bf16.mxu0 0
        %3142 = vmatpush1.bf16.msra.mxu0 0
        %3143 = vmatprep.subr.bf16.mxu0 0
        %3144 = vmatpush1.bf16.msra.mxu0 0
        %3145 = vmatprep.subr.bf16.mxu0 0
        %3146 = vmatpush1.bf16.msra.mxu0 0
        %3147 = vmatprep.subr.bf16.mxu0 0
        %3148 = vmatpush1.bf16.msra.mxu0 0
        %3149 = vmatprep.subr.bf16.mxu0 0
        %3150 = vmatpush1.bf16.msra.mxu0 0
        %3151 = vmatprep.subr.bf16.mxu0 0
        %3152 = vmatpush1.bf16.msra.mxu0 0
        %3153 = vmatprep.subr.bf16.mxu0 0
        %3154 = vmatpush1.bf16.msra.mxu0 0
        %3155 = vmatprep.mubr.bf16.mxu0 0
        %3156 = vmatmul.mubr.bf16.gmra.mrb[0].mxu0 %v3100
        %v3157 = vpop.f32.mrb[0].mxu0
        %v3158 = vadd.f32 0.0, %v3157
        %v3159 = vpop.f32.mrb[0].mxu0
        %v3160 = vpop.f32.mrb[0].mxu0
        %v3161 = vadd.f32 0.0, %v3160
        %v3162 = vpop.f32.mrb[0].mxu0
        %3163 = vmatprep.mubr.bf16.mxu0 0
        %3164 = vmatmul.mubr.bf16.gmra.mrb[0].mxu0 %v3103
        %v3165 = vpop.f32.mrb[0].mxu0
        %v3166 = vadd.f32 0.0, %v3165
        %v3167 = vpop.f32.mrb[0].mxu0
        %v3168 = vpop.f32.mrb[0].mxu0
        %v3169 = vadd.f32 0.0, %v3168
        %v3170 = vpop.f32.mrb[0].mxu0
        %3171 = vmatprep.mubr.bf16.mxu0 0
        %3172 = vmatmul.mubr.bf16.gmra.mrb[0].mxu0 %v3106
        %v3173 = vpop.f32.mrb[0].mxu0
        %v3174 = vadd.f32 0.0, %v3173
        %v3175 = vpop.f32.mrb[0].mxu0
        %v3176 = vpop.f32.mrb[0].mxu0
        %v3177 = vadd.f32 0.0, %v3176
        %v3178 = vpop.f32.mrb[0].mxu0
        %3179 = vmatprep.mubr.bf16.mxu0 0
        %3180 = vmatmul.mubr.bf16.gmra.mrb[0].mxu0 %v3109
        %v3181 = vpop.f32.mrb[0].mxu0
        %v3182 = vadd.f32 0.0, %v3181
        %v3183 = vpop.f32.mrb[0].mxu0
        %v3184 = vpop.f32.mrb[0].mxu0
        %v3185 = vadd.f32 0.0, %v3184
        %v3186 = vpop.f32.mrb[0].mxu0
        %3187 = vmatprep.mubr.bf16.mxu0 0
        %3188 = vmatmul.mubr.bf16.gmra.mrb[0].mxu0 %v3112
        %v3189 = vpop.f32.mrb[0].mxu0
        %v3190 = vadd.f32 0.0, %v3189
        %v3191 = vpop.f32.mrb[0].mxu0
        %v3192 = vpop.f32.mrb[0].mxu0
        %v3193 = vadd.f32 0.0, %v3192
        %v3194 = vpop.f32.mrb[0].mxu0
        %3195 = vmatprep.mubr.bf16.mxu0 0
        %3196 = vmatmul.mubr.bf16.gmra.mrb[0].mxu0 %v3115
        %v3197 = vpop.f32.mrb[0].mxu0
        %v3198 = vadd.f32 0.0, %v3197
        %v3199 = vpop.f32.mrb[0].mxu0
        %v3200 = vpop.f32.mrb[0].mxu0
        %v3201 = vadd.f32 0.0, %v3200
        %v3202 = vpop.f32.mrb[0].mxu0
        %3203 = vmatprep.mubr.bf16.mxu0 0
        %3204 = vmatmul.mubr.bf16.gmra.mrb[0].mxu0 %v3118
        %v3205 = vpop.f32.mrb[0].mxu0
        %v3206 = vadd.f32 0.0, %v3205
        %v3207 = vpop.f32.mrb[0].mxu0
        %v3208 = vpop.f32.mrb[0].mxu0
        %v3209 = vadd.f32 0.0, %v3208
        %v3210 = vpop.f32.mrb[0].mxu0
        %3211 = vmatprep.mubr.bf16.mxu0 0
        %3212 = vmatmul.mubr.bf16.gmra.mrb[0].mxu0 %v3121
        %v3213 = vpop.f32.mrb[0].mxu0
        %v3214 = vadd.f32 0.0, %v3213
        %v3215 = vpop.f32.mrb[0].mxu0
        %v3216 = vpop.f32.mrb[0].mxu0
        %v3217 = vadd.f32 0.0, %v3216
        %v3218 = vpop.f32.mrb[0].mxu0
        %3219 = vdwg.mxu0
        %v3220 = vlaneseq
        %v3221 = vshrl.u32 %v3220, 7
        %v3222 = vsub.s32 0, %v3221
        %v3223 = vrot.slane %v2950, %v3222
        %v3224 = vadd.f32 %v3223, %v3158
        %v3225 = vadd.f32 %v3223, %v3161
        %v3226 = vadd.f32 %v3223, %v3166
        %v3227 = vadd.f32 %v3223, %v3169
        %v3228 = vadd.f32 %v3223, %v3174
        %v3229 = vadd.f32 %v3223, %v3177
        %v3230 = vadd.f32 %v3223, %v3182
        %v3231 = vadd.f32 %v3223, %v3185
        %v3232 = vadd.f32 %v3223, %v3190
        %v3233 = vadd.f32 %v3223, %v3193
        %v3234 = vadd.f32 %v3223, %v3198
        %v3235 = vadd.f32 %v3223, %v3201
        %v3236 = vadd.f32 %v3223, %v3206
        %v3237 = vadd.f32 %v3223, %v3209
        %v3238 = vadd.f32 %v3223, %v3214
        %v3239 = vadd.f32 %v3223, %v3217
        %v3240 = vld [vmem:[#allocation2 + $0x28] sm:$0xff]
        %v3241 = vld [vmem:[#allocation2 + $0x68] sm:$0xff]
        %v3242 = vld [vmem:[%s3066 + $0x20] sm:$0xf]
        %v3243 = vld [vmem:[%s3066 + $0x24] sm:$0xf]
        %v3244 = vld [vmem:[%s3066 + $0x28] sm:$0xf]
        %v3245 = vld [vmem:[%s3066 + $0x2c] sm:$0xf]
        %v3246 = vld [vmem:[%s3066 + $0x30] sm:$0xf]
        %v3247 = vld [vmem:[%s3066 + $0x34] sm:$0xf]
        %v3248 = vld [vmem:[%s3066 + $0x38] sm:$0xf]
        %v3249 = vld [vmem:[%s3066 + $0x3c] sm:$0xf]
        %v3258 = vunpack.c.l.b16 %v3242
        %v3259 = vunpack.c.l.b16 %v3243
        %v3260 = vunpack.c.l.b16 %v3244
        %v3261 = vunpack.c.l.b16 %v3245
        %v3262 = vunpack.c.l.b16 %v3246
        %v3263 = vunpack.c.l.b16 %v3247
        %v3264 = vunpack.c.l.b16 %v3248
        %v3265 = vunpack.c.l.b16 %v3249
        %v3266 = vpack.c.b16 %v3259, %v3258
        %v3267 = vpack.c.b16 %v3261, %v3260
        %v3268 = vpack.c.b16 %v3263, %v3262
        %v3269 = vpack.c.b16 %v3265, %v3264
        %v3274 = vsel %vm867, %v2968, 0
        %v3276 = vsel %vm867, %v2969, 0
        %v3278 = vsel %vm867, %v2970, 0
        %v3281 = vsel %vm867, %v3240, 0
        %v3283 = vsel %vm867, %v2973, 0
        %v3285 = vsel %vm867, %v2974, 0
        %v3287 = vsel %vm867, %v2975, 0
        %v3290 = vsel %vm867, %v3241, 0
        %3292 = vmatprep.subr.bf16.mxu0 0
        %3293 = vmatpush1.bf16.msra.mxu0 %v3266
        %3294 = vmatprep.subr.bf16.mxu0 0
        %3295 = vmatpush1.bf16.msra.mxu0 %v3267
        %3296 = vmatprep.subr.bf16.mxu0 0
        %3297 = vmatpush1.bf16.msra.mxu0 %v3268
        %3298 = vmatprep.subr.bf16.mxu0 0
        %3299 = vmatpush1.bf16.msra.mxu0 %v3269
        %3300 = vmatprep.subr.bf16.mxu0 0
        %3301 = vmatpush1.bf16.msra.mxu0 0
        %3302 = vmatprep.subr.bf16.mxu0 0
        %3303 = vmatpush1.bf16.msra.mxu0 0
        %3304 = vmatprep.subr.bf16.mxu0 0
        %3305 = vmatpush1.bf16.msra.mxu0 0
        %3306 = vmatprep.subr.bf16.mxu0 0
        %3307 = vmatpush1.bf16.msra.mxu0 0
        %3308 = vmatprep.subr.bf16.mxu0 0
        %3309 = vmatpush1.bf16.msra.mxu0 0
        %3310 = vmatprep.subr.bf16.mxu0 0
        %3311 = vmatpush1.bf16.msra.mxu0 0
        %3312 = vmatprep.subr.bf16.mxu0 0
        %3313 = vmatpush1.bf16.msra.mxu0 0
        %3314 = vmatprep.subr.bf16.mxu0 0
        %3315 = vmatpush1.bf16.msra.mxu0 0
        %3316 = vmatprep.subr.bf16.mxu0 0
        %3317 = vmatpush1.bf16.msra.mxu0 0
        %3318 = vmatprep.subr.bf16.mxu0 0
        %3319 = vmatpush1.bf16.msra.mxu0 0
        %3320 = vmatprep.subr.bf16.mxu0 0
        %3321 = vmatpush1.bf16.msra.mxu0 0
        %3322 = vmatprep.subr.bf16.mxu0 0
        %3323 = vmatpush1.bf16.msra.mxu0 0
        %3324 = vmatprep.mubr.bf16.mxu0 0
        %3325 = vmatmul.mubr.bf16.gmra.mrb[0].mxu0 %v3274
        %v3326 = vpop.f32.mrb[0].mxu0
        %v3327 = vadd.f32 0.0, %v3326
        %v3328 = vpop.f32.mrb[0].mxu0
        %v3329 = vpop.f32.mrb[0].mxu0
        %v3330 = vadd.f32 0.0, %v3329
        %v3331 = vpop.f32.mrb[0].mxu0
        %3332 = vmatprep.mubr.bf16.mxu0 0
        %3333 = vmatmul.mubr.bf16.gmra.mrb[0].mxu0 %v3276
        %v3334 = vpop.f32.mrb[0].mxu0
        %v3335 = vadd.f32 0.0, %v3334
        %v3336 = vpop.f32.mrb[0].mxu0
        %v3337 = vpop.f32.mrb[0].mxu0
        %v3338 = vadd.f32 0.0, %v3337
        %v3339 = vpop.f32.mrb[0].mxu0
        %3340 = vmatprep.mubr.bf16.mxu0 0
        %3341 = vmatmul.mubr.bf16.gmra.mrb[0].mxu0 %v3278
        %v3342 = vpop.f32.mrb[0].mxu0
        %v3343 = vadd.f32 0.0, %v3342
        %v3344 = vpop.f32.mrb[0].mxu0
        %v3345 = vpop.f32.mrb[0].mxu0
        %v3346 = vadd.f32 0.0, %v3345
        %v3347 = vpop.f32.mrb[0].mxu0
        %3348 = vmatprep.mubr.bf16.mxu0 0
        %3349 = vmatmul.mubr.bf16.gmra.mrb[0].mxu0 %v3281
        %v3350 = vpop.f32.mrb[0].mxu0
        %v3351 = vadd.f32 0.0, %v3350
        %v3352 = vpop.f32.mrb[0].mxu0
        %v3353 = vpop.f32.mrb[0].mxu0
        %v3354 = vadd.f32 0.0, %v3353
        %v3355 = vpop.f32.mrb[0].mxu0
        %3356 = vmatprep.mubr.bf16.mxu0 0
        %3357 = vmatmul.mubr.bf16.gmra.mrb[0].mxu0 %v3283
        %v3358 = vpop.f32.mrb[0].mxu0
        %v3359 = vadd.f32 0.0, %v3358
        %v3360 = vpop.f32.mrb[0].mxu0
        %v3361 = vpop.f32.mrb[0].mxu0
        %v3362 = vadd.f32 0.0, %v3361
        %v3363 = vpop.f32.mrb[0].mxu0
        %3364 = vmatprep.mubr.bf16.mxu0 0
        %3365 = vmatmul.mubr.bf16.gmra.mrb[0].mxu0 %v3285
        %v3366 = vpop.f32.mrb[0].mxu0
        %v3367 = vadd.f32 0.0, %v3366
        %v3368 = vpop.f32.mrb[0].mxu0
        %v3369 = vpop.f32.mrb[0].mxu0
        %v3370 = vadd.f32 0.0, %v3369
        %v3371 = vpop.f32.mrb[0].mxu0
        %3372 = vmatprep.mubr.bf16.mxu0 0
        %3373 = vmatmul.mubr.bf16.gmra.mrb[0].mxu0 %v3287
        %v3374 = vpop.f32.mrb[0].mxu0
        %v3375 = vadd.f32 0.0, %v3374
        %v3376 = vpop.f32.mrb[0].mxu0
        %v3377 = vpop.f32.mrb[0].mxu0
        %v3378 = vadd.f32 0.0, %v3377
        %v3379 = vpop.f32.mrb[0].mxu0
        %3380 = vmatprep.mubr.bf16.mxu0 0
        %3381 = vmatmul.mubr.bf16.gmra.mrb[0].mxu0 %v3290
        %v3382 = vpop.f32.mrb[0].mxu0
        %v3383 = vadd.f32 0.0, %v3382
        %v3384 = vpop.f32.mrb[0].mxu0
        %v3385 = vpop.f32.mrb[0].mxu0
        %v3386 = vadd.f32 0.0, %v3385
        %v3387 = vpop.f32.mrb[0].mxu0
        %3388 = vdwg.mxu0
        %v3389 = vadd.f32 %v3224, %v3327
        %v3390 = vadd.f32 %v3225, %v3330
        %v3391 = vadd.f32 %v3226, %v3335
        %v3392 = vadd.f32 %v3227, %v3338
        %v3393 = vadd.f32 %v3228, %v3343
        %v3394 = vadd.f32 %v3229, %v3346
        %v3395 = vadd.f32 %v3230, %v3351
        %v3396 = vadd.f32 %v3231, %v3354
        %v3397 = vadd.f32 %v3232, %v3359
        %v3398 = vadd.f32 %v3233, %v3362
        %v3399 = vadd.f32 %v3234, %v3367
        %v3400 = vadd.f32 %v3235, %v3370
        %v3401 = vadd.f32 %v3236, %v3375
        %v3402 = vadd.f32 %v3237, %v3378
        %v3403 = vadd.f32 %v3238, %v3383
        %v3404 = vadd.f32 %v3239, %v3386
        %v3405 = vld [vmem:[#allocation2 + $0x10] sm:$0xf0]
        %v3406 = vld [vmem:[#allocation2 + $0x18] sm:$0xff]
        %v3407 = vld [vmem:[#allocation2 + $0x20] sm:$0xff]
        %v3408 = vld [vmem:[#allocation2 + $0x28] sm:$0xff]
        %v3409 = vld [vmem:[#allocation2 + $0x30] sm:$0x1f]
        %v3410 = vld [vmem:[#allocation2 + $0x50] sm:$0xf0]
        %v3411 = vld [vmem:[#allocation2 + $0x58] sm:$0xff]
        %v3412 = vld [vmem:[#allocation2 + $0x60] sm:$0xff]
        %v3413 = vld [vmem:[#allocation2 + $0x68] sm:$0xff]
        %v3414 = vld [vmem:[#allocation2 + $0x70] sm:$0x1f]
        %vm3415 = vsmask.f32 3328
        %v3417 = vshrl.u32 %v3405, 16
        %v3419 = vrot.slane %v3417, 4
        %v3420 = vshll.u32 %v3405, 16
        %v3422 = vrot.slane %v3420, 5
        %v3423 = vor.u32 %v3419, %v3422
        %v3425 = vshrl.u32 %v3406, 16
        %v3427 = vrot.slane %v3425, 4
        %v3428 = vshll.u32 %v3406, 16
        %v3430 = vrot.slane %v3428, 5
        %v3431 = vor.u32 %v3427, %v3430
        %v3432 = vsel %vm3415, %v3423, %v3431
        %v3434 = vshrl.u32 %v3407, 16
        %v3436 = vrot.slane %v3434, 4
        %v3437 = vshll.u32 %v3407, 16
        %v3439 = vrot.slane %v3437, 5
        %v3440 = vor.u32 %v3436, %v3439
        %v3441 = vsel %vm3415, %v3431, %v3440
        %v3443 = vshrl.u32 %v3408, 16
        %v3445 = vrot.slane %v3443, 4
        %v3446 = vshll.u32 %v3408, 16
        %v3448 = vrot.slane %v3446, 5
        %v3449 = vor.u32 %v3445, %v3448
        %v3450 = vsel %vm3415, %v3440, %v3449
        %v3452 = vshrl.u32 %v3409, 16
        %v3454 = vrot.slane %v3452, 4
        %v3455 = vshll.u32 %v3409, 16
        %v3457 = vrot.slane %v3455, 5
        %v3458 = vor.u32 %v3454, %v3457
        %v3459 = vsel %vm3415, %v3449, %v3458
        %v3461 = vshrl.u32 %v3410, 16
        %v3463 = vrot.slane %v3461, 4
        %v3464 = vshll.u32 %v3410, 16
        %v3466 = vrot.slane %v3464, 5
        %v3467 = vor.u32 %v3463, %v3466
        %v3469 = vshrl.u32 %v3411, 16
        %v3471 = vrot.slane %v3469, 4
        %v3472 = vshll.u32 %v3411, 16
        %v3474 = vrot.slane %v3472, 5
        %v3475 = vor.u32 %v3471, %v3474
        %v3476 = vsel %vm3415, %v3467, %v3475
        %v3478 = vshrl.u32 %v3412, 16
        %v3480 = vrot.slane %v3478, 4
        %v3481 = vshll.u32 %v3412, 16
        %v3483 = vrot.slane %v3481, 5
        %v3484 = vor.u32 %v3480, %v3483
        %v3485 = vsel %vm3415, %v3475, %v3484
        %v3487 = vshrl.u32 %v3413, 16
        %v3489 = vrot.slane %v3487, 4
        %v3490 = vshll.u32 %v3413, 16
        %v3492 = vrot.slane %v3490, 5
        %v3493 = vor.u32 %v3489, %v3492
        %v3494 = vsel %vm3415, %v3484, %v3493
        %v3496 = vshrl.u32 %v3414, 16
        %v3498 = vrot.slane %v3496, 4
        %v3499 = vshll.u32 %v3414, 16
        %v3501 = vrot.slane %v3499, 5
        %v3502 = vor.u32 %v3498, %v3501
        %v3503 = vsel %vm3415, %v3493, %v3502
        %v3504 = vld [vmem:[%s3066 + $0x40] sm:$0xf]
        %v3505 = vld [vmem:[%s3066 + $0x44] sm:$0xf]
        %v3506 = vld [vmem:[%s3066 + $0x48] sm:$0xf]
        %v3507 = vld [vmem:[%s3066 + $0x4c] sm:$0xf]
        %v3508 = vld [vmem:[%s3066 + $0x50] sm:$0xf]
        %v3509 = vld [vmem:[%s3066 + $0x54] sm:$0xf]
        %v3510 = vld [vmem:[%s3066 + $0x58] sm:$0xf]
        %v3511 = vld [vmem:[%s3066 + $0x5c] sm:$0xf]
        %v3520 = vunpack.c.l.b16 %v3504
        %v3521 = vunpack.c.l.b16 %v3505
        %v3522 = vunpack.c.l.b16 %v3506
        %v3523 = vunpack.c.l.b16 %v3507
        %v3524 = vunpack.c.l.b16 %v3508
        %v3525 = vunpack.c.l.b16 %v3509
        %v3526 = vunpack.c.l.b16 %v3510
        %v3527 = vunpack.c.l.b16 %v3511
        %v3528 = vpack.c.b16 %v3521, %v3520
        %v3529 = vpack.c.b16 %v3523, %v3522
        %v3530 = vpack.c.b16 %v3525, %v3524
        %v3531 = vpack.c.b16 %v3527, %v3526
        %v3537 = vsel %vm867, %v3432, 0
        %v3540 = vsel %vm867, %v3441, 0
        %v3543 = vsel %vm867, %v3450, 0
        %v3546 = vsel %vm867, %v3459, 0
        %v3549 = vsel %vm867, %v3476, 0
        %v3552 = vsel %vm867, %v3485, 0
        %v3555 = vsel %vm867, %v3494, 0
        %v3558 = vsel %vm867, %v3503, 0
        %3560 = vmatprep.subr.bf16.mxu0 0
        %3561 = vmatpush1.bf16.msra.mxu0 %v3528
        %3562 = vmatprep.subr.bf16.mxu0 0
        %3563 = vmatpush1.bf16.msra.mxu0 %v3529
        %3564 = vmatprep.subr.bf16.mxu0 0
        %3565 = vmatpush1.bf16.msra.mxu0 %v3530
        %3566 = vmatprep.subr.bf16.mxu0 0
        %3567 = vmatpush1.bf16.msra.mxu0 %v3531
        %3568 = vmatprep.subr.bf16.mxu0 0
        %3569 = vmatpush1.bf16.msra.mxu0 0
        %3570 = vmatprep.subr.bf16.mxu0 0
        %3571 = vmatpush1.bf16.msra.mxu0 0
        %3572 = vmatprep.subr.bf16.mxu0 0
        %3573 = vmatpush1.bf16.msra.mxu0 0
        %3574 = vmatprep.subr.bf16.mxu0 0
        %3575 = vmatpush1.bf16.msra.mxu0 0
        %3576 = vmatprep.subr.bf16.mxu0 0
        %3577 = vmatpush1.bf16.msra.mxu0 0
        %3578 = vmatprep.subr.bf16.mxu0 0
        %3579 = vmatpush1.bf16.msra.mxu0 0
        %3580 = vmatprep.subr.bf16.mxu0 0
        %3581 = vmatpush1.bf16.msra.mxu0 0
        %3582 = vmatprep.subr.bf16.mxu0 0
        %3583 = vmatpush1.bf16.msra.mxu0 0
        %3584 = vmatprep.subr.bf16.mxu0 0
        %3585 = vmatpush1.bf16.msra.mxu0 0
        %3586 = vmatprep.subr.bf16.mxu0 0
        %3587 = vmatpush1.bf16.msra.mxu0 0
        %3588 = vmatprep.subr.bf16.mxu0 0
        %3589 = vmatpush1.bf16.msra.mxu0 0
        %3590 = vmatprep.subr.bf16.mxu0 0
        %3591 = vmatpush1.bf16.msra.mxu0 0
        %3592 = vmatprep.mubr.bf16.mxu0 0
        %3593 = vmatmul.mubr.bf16.gmra.mrb[0].mxu0 %v3537
        %v3594 = vpop.f32.mrb[0].mxu0
        %v3595 = vadd.f32 0.0, %v3594
        %v3596 = vpop.f32.mrb[0].mxu0
        %v3597 = vpop.f32.mrb[0].mxu0
        %v3598 = vadd.f32 0.0, %v3597
        %v3599 = vpop.f32.mrb[0].mxu0
        %3600 = vmatprep.mubr.bf16.mxu0 0
        %3601 = vmatmul.mubr.bf16.gmra.mrb[0].mxu0 %v3540
        %v3602 = vpop.f32.mrb[0].mxu0
        %v3603 = vadd.f32 0.0, %v3602
        %v3604 = vpop.f32.mrb[0].mxu0
        %v3605 = vpop.f32.mrb[0].mxu0
        %v3606 = vadd.f32 0.0, %v3605
        %v3607 = vpop.f32.mrb[0].mxu0
        %3608 = vmatprep.mubr.bf16.mxu0 0
        %3609 = vmatmul.mubr.bf16.gmra.mrb[0].mxu0 %v3543
        %v3610 = vpop.f32.mrb[0].mxu0
        %v3611 = vadd.f32 0.0, %v3610
        %v3612 = vpop.f32.mrb[0].mxu0
        %v3613 = vpop.f32.mrb[0].mxu0
        %v3614 = vadd.f32 0.0, %v3613
        %v3615 = vpop.f32.mrb[0].mxu0
        %3616 = vmatprep.mubr.bf16.mxu0 0
        %3617 = vmatmul.mubr.bf16.gmra.mrb[0].mxu0 %v3546
        %v3618 = vpop.f32.mrb[0].mxu0
        %v3619 = vadd.f32 0.0, %v3618
        %v3620 = vpop.f32.mrb[0].mxu0
        %v3621 = vpop.f32.mrb[0].mxu0
        %v3622 = vadd.f32 0.0, %v3621
        %v3623 = vpop.f32.mrb[0].mxu0
        %3624 = vmatprep.mubr.bf16.mxu0 0
        %3625 = vmatmul.mubr.bf16.gmra.mrb[0].mxu0 %v3549
        %v3626 = vpop.f32.mrb[0].mxu0
        %v3627 = vadd.f32 0.0, %v3626
        %v3628 = vpop.f32.mrb[0].mxu0
        %v3629 = vpop.f32.mrb[0].mxu0
        %v3630 = vadd.f32 0.0, %v3629
        %v3631 = vpop.f32.mrb[0].mxu0
        %3632 = vmatprep.mubr.bf16.mxu0 0
        %3633 = vmatmul.mubr.bf16.gmra.mrb[0].mxu0 %v3552
        %v3634 = vpop.f32.mrb[0].mxu0
        %v3635 = vadd.f32 0.0, %v3634
        %v3636 = vpop.f32.mrb[0].mxu0
        %v3637 = vpop.f32.mrb[0].mxu0
        %v3638 = vadd.f32 0.0, %v3637
        %v3639 = vpop.f32.mrb[0].mxu0
        %3640 = vmatprep.mubr.bf16.mxu0 0
        %3641 = vmatmul.mubr.bf16.gmra.mrb[0].mxu0 %v3555
        %v3642 = vpop.f32.mrb[0].mxu0
        %v3643 = vadd.f32 0.0, %v3642
        %v3644 = vpop.f32.mrb[0].mxu0
        %v3645 = vpop.f32.mrb[0].mxu0
        %v3646 = vadd.f32 0.0, %v3645
        %v3647 = vpop.f32.mrb[0].mxu0
        %3648 = vmatprep.mubr.bf16.mxu0 0
        %3649 = vmatmul.mubr.bf16.gmra.mrb[0].mxu0 %v3558
        %v3650 = vpop.f32.mrb[0].mxu0
        %v3651 = vadd.f32 0.0, %v3650
        %v3652 = vpop.f32.mrb[0].mxu0
        %v3653 = vpop.f32.mrb[0].mxu0
        %v3654 = vadd.f32 0.0, %v3653
        %v3655 = vpop.f32.mrb[0].mxu0
        %3656 = vdwg.mxu0
        %v3657 = vadd.f32 %v3389, %v3595
        %v3658 = vadd.f32 %v3390, %v3598
        %v3659 = vadd.f32 %v3391, %v3603
        %v3660 = vadd.f32 %v3392, %v3606
        %v3661 = vadd.f32 %v3393, %v3611
        %v3662 = vadd.f32 %v3394, %v3614
        %v3663 = vadd.f32 %v3395, %v3619
        %v3664 = vadd.f32 %v3396, %v3622
        %v3665 = vadd.f32 %v3397, %v3627
        %v3666 = vadd.f32 %v3398, %v3630
        %v3667 = vadd.f32 %v3399, %v3635
        %v3668 = vadd.f32 %v3400, %v3638
        %v3669 = vadd.f32 %v3401, %v3643
        %v3670 = vadd.f32 %v3402, %v3646
        %v3671 = vadd.f32 %v3403, %v3651
        %v3672 = vadd.f32 %v3404, %v3654
        %v3673 = vxor.u32 %v3657, 2147483648
        %v3674 = vxor.u32 %v3658, 2147483648
        %v3675 = vxor.u32 %v3659, 2147483648
        %v3676 = vxor.u32 %v3660, 2147483648
        %v3677 = vxor.u32 %v3661, 2147483648
        %v3678 = vxor.u32 %v3662, 2147483648
        %v3679 = vxor.u32 %v3663, 2147483648
        %v3680 = vxor.u32 %v3664, 2147483648
        %v3681 = vxor.u32 %v3665, 2147483648
        %v3682 = vxor.u32 %v3666, 2147483648
        %v3683 = vxor.u32 %v3667, 2147483648
        %v3684 = vxor.u32 %v3668, 2147483648
        %v3685 = vxor.u32 %v3669, 2147483648
        %v3686 = vxor.u32 %v3670, 2147483648
        %v3687 = vxor.u32 %v3671, 2147483648
        %v3688 = vxor.u32 %v3672, 2147483648
        %v3689 = vmul.f32 %v3673, 1.442695
        %v3690 = vpow.pop %v3689
        %v3691 = vmul.f32 %v3674, 1.442695
        %v3692 = vpow.pop %v3691
        %v3693 = vmul.f32 %v3675, 1.442695
        %v3694 = vpow.pop %v3693
        %v3695 = vmul.f32 %v3676, 1.442695
        %v3696 = vpow.pop %v3695
        %v3697 = vmul.f32 %v3677, 1.442695
        %v3698 = vpow.pop %v3697
        %v3699 = vmul.f32 %v3678, 1.442695
        %v3700 = vpow.pop %v3699
        %v3701 = vmul.f32 %v3679, 1.442695
        %v3702 = vpow.pop %v3701
        %v3703 = vmul.f32 %v3680, 1.442695
        %v3704 = vpow.pop %v3703
        %v3705 = vmul.f32 %v3681, 1.442695
        %v3706 = vpow.pop %v3705
        %v3707 = vmul.f32 %v3682, 1.442695
        %v3708 = vpow.pop %v3707
        %v3709 = vmul.f32 %v3683, 1.442695
        %v3710 = vpow.pop %v3709
        %v3711 = vmul.f32 %v3684, 1.442695
        %v3712 = vpow.pop %v3711
        %v3713 = vmul.f32 %v3685, 1.442695
        %v3714 = vpow.pop %v3713
        %v3715 = vmul.f32 %v3686, 1.442695
        %v3716 = vpow.pop %v3715
        %v3717 = vmul.f32 %v3687, 1.442695
        %v3718 = vpow.pop %v3717
        %v3719 = vmul.f32 %v3688, 1.442695
        %v3720 = vpow.pop %v3719
        %v3721 = vadd.f32 %v3690, 1.0
        %v3722 = vadd.f32 %v3692, 1.0
        %v3723 = vadd.f32 %v3694, 1.0
        %v3724 = vadd.f32 %v3696, 1.0
        %v3725 = vadd.f32 %v3698, 1.0
        %v3726 = vadd.f32 %v3700, 1.0
        %v3727 = vadd.f32 %v3702, 1.0
        %v3728 = vadd.f32 %v3704, 1.0
        %v3729 = vadd.f32 %v3706, 1.0
        %v3730 = vadd.f32 %v3708, 1.0
        %v3731 = vadd.f32 %v3710, 1.0
        %v3732 = vadd.f32 %v3712, 1.0
        %v3733 = vadd.f32 %v3714, 1.0
        %v3734 = vadd.f32 %v3716, 1.0
        %v3735 = vadd.f32 %v3718, 1.0
        %v3736 = vadd.f32 %v3720, 1.0
        %v3737 = vrcp.pop %v3721
        %v3738 = vmul.f32 1.0, %v3737
        %v3739 = vrcp.pop %v3722
        %v3740 = vmul.f32 1.0, %v3739
        %v3741 = vrcp.pop %v3723
        %v3742 = vmul.f32 1.0, %v3741
        %v3743 = vrcp.pop %v3724
        %v3744 = vmul.f32 1.0, %v3743
        %v3745 = vrcp.pop %v3725
        %v3746 = vmul.f32 1.0, %v3745
        %v3747 = vrcp.pop %v3726
        %v3748 = vmul.f32 1.0, %v3747
        %v3749 = vrcp.pop %v3727
        %v3750 = vmul.f32 1.0, %v3749
        %v3751 = vrcp.pop %v3728
        %v3752 = vmul.f32 1.0, %v3751
        %v3753 = vrcp.pop %v3729
        %v3754 = vmul.f32 1.0, %v3753
        %v3755 = vrcp.pop %v3730
        %v3756 = vmul.f32 1.0, %v3755
        %v3757 = vrcp.pop %v3731
        %v3758 = vmul.f32 1.0, %v3757
        %v3759 = vrcp.pop %v3732
        %v3760 = vmul.f32 1.0, %v3759
        %v3761 = vrcp.pop %v3733
        %v3762 = vmul.f32 1.0, %v3761
        %v3763 = vrcp.pop %v3734
        %v3764 = vmul.f32 1.0, %v3763
        %v3765 = vrcp.pop %v3735
        %v3766 = vmul.f32 1.0, %v3765
        %v3767 = vrcp.pop %v3736
        %v3768 = vmul.f32 1.0, %v3767
        %3785 = vrot.lane.b32.xlu0 %v2934, 64
        %v3786 = vpop.permute.xlu0 %3785
        %3787 = vrot.lane.b32.xlu0 %v2935, 64
        %v3788 = vpop.permute.xlu0 %3787
        %3789 = vrot.lane.b32.xlu0 %v2936, 64
        %v3790 = vpop.permute.xlu0 %3789
        %3791 = vrot.lane.b32.xlu0 %v2937, 64
        %v3792 = vpop.permute.xlu0 %3791
        %3793 = vrot.lane.b32.xlu0 %v2938, 64
        %v3794 = vpop.permute.xlu0 %3793
        %3795 = vrot.lane.b32.xlu0 %v2939, 64
        %v3796 = vpop.permute.xlu0 %3795
        %3797 = vrot.lane.b32.xlu0 %v2940, 64
        %v3798 = vpop.permute.xlu0 %3797
        %3799 = vrot.lane.b32.xlu0 %v2941, 64
        %v3800 = vpop.permute.xlu0 %3799
        %3801 = vrot.lane.b32.xlu0 %v2942, 64
        %v3802 = vpop.permute.xlu0 %3801
        %3803 = vrot.lane.b32.xlu0 %v2943, 64
        %v3804 = vpop.permute.xlu0 %3803
        %3805 = vrot.lane.b32.xlu0 %v2944, 64
        %v3806 = vpop.permute.xlu0 %3805
        %3807 = vrot.lane.b32.xlu0 %v2945, 64
        %v3808 = vpop.permute.xlu0 %3807
        %3809 = vrot.lane.b32.xlu0 %v2946, 64
        %v3810 = vpop.permute.xlu0 %3809
        %3811 = vrot.lane.b32.xlu0 %v2947, 64
        %v3812 = vpop.permute.xlu0 %3811
        %3813 = vrot.lane.b32.xlu0 %v2948, 64
        %v3814 = vpop.permute.xlu0 %3813
        %3815 = vrot.lane.b32.xlu0 %v2949, 64
        %v3816 = vpop.permute.xlu0 %3815
        %v3833 = vsub.f32 %v3657, %v3786
        %v3834 = vsub.f32 %v3658, %v3788
        %v3835 = vsub.f32 %v3659, %v3790
        %v3836 = vsub.f32 %v3660, %v3792
        %v3837 = vsub.f32 %v3661, %v3794
        %v3838 = vsub.f32 %v3662, %v3796
        %v3839 = vsub.f32 %v3663, %v3798
        %v3840 = vsub.f32 %v3664, %v3800
        %v3841 = vsub.f32 %v3665, %v3802
        %v3842 = vsub.f32 %v3666, %v3804
        %v3843 = vsub.f32 %v3667, %v3806
        %v3844 = vsub.f32 %v3668, %v3808
        %v3845 = vsub.f32 %v3669, %v3810
        %v3846 = vsub.f32 %v3670, %v3812
        %v3847 = vsub.f32 %v3671, %v3814
        %v3848 = vsub.f32 %v3672, %v3816
        %3865 = vrot.lane.b32.xlu0 %v3833, 64
        %v3866 = vpop.permute.xlu0 %3865
        %3867 = vrot.lane.b32.xlu0 %v3834, 64
        %v3868 = vpop.permute.xlu0 %3867
        %3869 = vrot.lane.b32.xlu0 %v3835, 64
        %v3870 = vpop.permute.xlu0 %3869
        %3871 = vrot.lane.b32.xlu0 %v3836, 64
        %v3872 = vpop.permute.xlu0 %3871
        %3873 = vrot.lane.b32.xlu0 %v3837, 64
        %v3874 = vpop.permute.xlu0 %3873
        %3875 = vrot.lane.b32.xlu0 %v3838, 64
        %v3876 = vpop.permute.xlu0 %3875
        %3877 = vrot.lane.b32.xlu0 %v3839, 64
        %v3878 = vpop.permute.xlu0 %3877
        %3879 = vrot.lane.b32.xlu0 %v3840, 64
        %v3880 = vpop.permute.xlu0 %3879
        %3881 = vrot.lane.b32.xlu0 %v3841, 64
        %v3882 = vpop.permute.xlu0 %3881
        %3883 = vrot.lane.b32.xlu0 %v3842, 64
        %v3884 = vpop.permute.xlu0 %3883
        %3885 = vrot.lane.b32.xlu0 %v3843, 64
        %v3886 = vpop.permute.xlu0 %3885
        %3887 = vrot.lane.b32.xlu0 %v3844, 64
        %v3888 = vpop.permute.xlu0 %3887
        %3889 = vrot.lane.b32.xlu0 %v3845, 64
        %v3890 = vpop.permute.xlu0 %3889
        %3891 = vrot.lane.b32.xlu0 %v3846, 64
        %v3892 = vpop.permute.xlu0 %3891
        %3893 = vrot.lane.b32.xlu0 %v3847, 64
        %v3894 = vpop.permute.xlu0 %3893
        %3895 = vrot.lane.b32.xlu0 %v3848, 64
        %v3896 = vpop.permute.xlu0 %3895
        %v3913 = vmul.f32 %v3738, %v3866
        %v3914 = vmul.f32 %v3740, %v3868
        %v3915 = vmul.f32 %v3742, %v3870
        %v3916 = vmul.f32 %v3744, %v3872
        %v3917 = vmul.f32 %v3746, %v3874
        %v3918 = vmul.f32 %v3748, %v3876
        %v3919 = vmul.f32 %v3750, %v3878
        %v3920 = vmul.f32 %v3752, %v3880
        %v3921 = vmul.f32 %v3754, %v3882
        %v3922 = vmul.f32 %v3756, %v3884
        %v3923 = vmul.f32 %v3758, %v3886
        %v3924 = vmul.f32 %v3760, %v3888
        %v3925 = vmul.f32 %v3762, %v3890
        %v3926 = vmul.f32 %v3764, %v3892
        %v3927 = vmul.f32 %v3766, %v3894
        %v3928 = vmul.f32 %v3768, %v3896
        %v3929 = vadd.f32 %v2934, %v3913
        %v3930 = vadd.f32 %v2935, %v3914
        %v3931 = vadd.f32 %v2936, %v3915
        %v3932 = vadd.f32 %v2937, %v3916
        %v3933 = vadd.f32 %v2938, %v3917
        %v3934 = vadd.f32 %v2939, %v3918
        %v3935 = vadd.f32 %v2940, %v3919
        %v3936 = vadd.f32 %v2941, %v3920
        %v3937 = vadd.f32 %v2942, %v3921
        %v3938 = vadd.f32 %v2943, %v3922
        %v3939 = vadd.f32 %v2944, %v3923
        %v3940 = vadd.f32 %v2945, %v3924
        %v3941 = vadd.f32 %v2946, %v3925
        %v3942 = vadd.f32 %v2947, %v3926
        %v3943 = vadd.f32 %v2948, %v3927
        %v3944 = vadd.f32 %v2949, %v3928
        %v3945 = vld [vmem:[%s8 + $0x3] sm:$0x1]
        %v3946 = vpack.c.bf16 %v3930, %v3929
        %v3947 = vpack.c.bf16 %v3932, %v3931
        %v3948 = vpack.c.bf16 %v3934, %v3933
        %v3949 = vpack.c.bf16 %v3936, %v3935
        %v3950 = vpack.c.bf16 %v3938, %v3937
        %v3951 = vpack.c.bf16 %v3940, %v3939
        %v3952 = vpack.c.bf16 %v3942, %v3941
        %v3953 = vpack.c.bf16 %v3944, %v3943
        %3954 = vst.msk [vmem:[#allocation2 + $0x10] sm:$0xff] %vm867, %v3946
        %3955 = vst.msk [vmem:[#allocation2 + $0x18] sm:$0xff] %vm867, %v3947
        %3956 = vst.msk [vmem:[#allocation2 + $0x20] sm:$0xff] %vm867, %v3948
        %3957 = vst.msk [vmem:[#allocation2 + $0x28] sm:$0xff] %vm867, %v3949
        %3958 = vst.msk [vmem:[#allocation2 + $0x50] sm:$0xff] %vm867, %v3950
        %3959 = vst.msk [vmem:[#allocation2 + $0x58] sm:$0xff] %vm867, %v3951
        %3960 = vst.msk [vmem:[#allocation2 + $0x60] sm:$0xff] %vm867, %v3952
        %3961 = vst.msk [vmem:[#allocation2 + $0x68] sm:$0xff] %vm867, %v3953
        %v3962 = vld [vmem:[#allocation2] sm:$0xfc]
        %v3963 = vld [vmem:[#allocation2 + $0x8] sm:$0xff]
        %v3964 = vld [vmem:[#allocation2 + $0x10] sm:$0xff]
        %v3965 = vld [vmem:[#allocation2 + $0x18] sm:$0xff]
        %v3966 = vld [vmem:[#allocation2 + $0x20] sm:$0x7]
        %v3967 = vld [vmem:[#allocation2 + $0x40] sm:$0xfc]
        %v3968 = vld [vmem:[#allocation2 + $0x48] sm:$0xff]
        %v3969 = vld [vmem:[#allocation2 + $0x50] sm:$0xff]
        %v3970 = vld [vmem:[#allocation2 + $0x58] sm:$0xff]
        %v3971 = vld [vmem:[#allocation2 + $0x60] sm:$0x7]
        %vm3972 = vsmask.f32 5376
        %v3974 = vshrl.u32 %v3962, 16
        %v3976 = vrot.slane %v3974, 2
        %v3977 = vshll.u32 %v3962, 16
        %v3979 = vrot.slane %v3977, 3
        %v3980 = vor.u32 %v3976, %v3979
        %v3982 = vshrl.u32 %v3963, 16
        %v3984 = vrot.slane %v3982, 2
        %v3985 = vshll.u32 %v3963, 16
        %v3987 = vrot.slane %v3985, 3
        %v3988 = vor.u32 %v3984, %v3987
        %v3989 = vsel %vm3972, %v3980, %v3988
        %v3991 = vshrl.u32 %v3964, 16
        %v3993 = vrot.slane %v3991, 2
        %v3994 = vshll.u32 %v3964, 16
        %v3996 = vrot.slane %v3994, 3
        %v3997 = vor.u32 %v3993, %v3996
        %v3998 = vsel %vm3972, %v3988, %v3997
        %v4000 = vshrl.u32 %v3965, 16
        %v4002 = vrot.slane %v4000, 2
        %v4003 = vshll.u32 %v3965, 16
        %v4005 = vrot.slane %v4003, 3
        %v4006 = vor.u32 %v4002, %v4005
        %v4007 = vsel %vm3972, %v3997, %v4006
        %v4009 = vshrl.u32 %v3966, 16
        %v4011 = vrot.slane %v4009, 2
        %v4012 = vshll.u32 %v3966, 16
        %v4014 = vrot.slane %v4012, 3
        %v4015 = vor.u32 %v4011, %v4014
        %v4016 = vsel %vm3972, %v4006, %v4015
        %v4018 = vshrl.u32 %v3967, 16
        %v4020 = vrot.slane %v4018, 2
        %v4021 = vshll.u32 %v3967, 16
        %v4023 = vrot.slane %v4021, 3
        %v4024 = vor.u32 %v4020, %v4023
        %v4026 = vshrl.u32 %v3968, 16
        %v4028 = vrot.slane %v4026, 2
        %v4029 = vshll.u32 %v3968, 16
        %v4031 = vrot.slane %v4029, 3
        %v4032 = vor.u32 %v4028, %v4031
        %v4033 = vsel %vm3972, %v4024, %v4032
        %v4035 = vshrl.u32 %v3969, 16
        %v4037 = vrot.slane %v4035, 2
        %v4038 = vshll.u32 %v3969, 16
        %v4040 = vrot.slane %v4038, 3
        %v4041 = vor.u32 %v4037, %v4040
        %v4042 = vsel %vm3972, %v4032, %v4041
        %v4044 = vshrl.u32 %v3970, 16
        %v4046 = vrot.slane %v4044, 2
        %v4047 = vshll.u32 %v3970, 16
        %v4049 = vrot.slane %v4047, 3
        %v4050 = vor.u32 %v4046, %v4049
        %v4051 = vsel %vm3972, %v4041, %v4050
        %v4053 = vshrl.u32 %v3971, 16
        %v4055 = vrot.slane %v4053, 2
        %v4056 = vshll.u32 %v3971, 16
        %v4058 = vrot.slane %v4056, 3
        %v4059 = vor.u32 %v4055, %v4058
        %v4060 = vsel %vm3972, %v4050, %v4059
        %s4061 = scalar_lea.vmem [#allocation3], 288
        %v4062 = vld [vmem:[%s4061] sm:$0xf]
        %v4063 = vld [vmem:[%s4061 + $0x4] sm:$0xf]
        %v4064 = vld [vmem:[%s4061 + $0x8] sm:$0xf]
        %v4065 = vld [vmem:[%s4061 + $0xc] sm:$0xf]
        %v4066 = vld [vmem:[%s4061 + $0x10] sm:$0xf]
        %v4067 = vld [vmem:[%s4061 + $0x14] sm:$0xf]
        %v4068 = vld [vmem:[%s4061 + $0x18] sm:$0xf]
        %v4069 = vld [vmem:[%s4061 + $0x1c] sm:$0xf]
        %v4078 = vunpack.c.l.b16 %v4062
        %v4079 = vunpack.c.l.b16 %v4063
        %v4080 = vunpack.c.l.b16 %v4064
        %v4081 = vunpack.c.l.b16 %v4065
        %v4082 = vunpack.c.l.b16 %v4066
        %v4083 = vunpack.c.l.b16 %v4067
        %v4084 = vunpack.c.l.b16 %v4068
        %v4085 = vunpack.c.l.b16 %v4069
        %v4086 = vpack.c.b16 %v4079, %v4078
        %v4087 = vpack.c.b16 %v4081, %v4080
        %v4088 = vpack.c.b16 %v4083, %v4082
        %v4089 = vpack.c.b16 %v4085, %v4084
        %v4095 = vsel %vm867, %v3989, 0
        %v4098 = vsel %vm867, %v3998, 0
        %v4101 = vsel %vm867, %v4007, 0
        %v4104 = vsel %vm867, %v4016, 0
        %v4107 = vsel %vm867, %v4033, 0
        %v4110 = vsel %vm867, %v4042, 0
        %v4113 = vsel %vm867, %v4051, 0
        %v4116 = vsel %vm867, %v4060, 0
        %4118 = vmatprep.subr.bf16.mxu0 0
        %4119 = vmatpush1.bf16.msra.mxu0 %v4086
        %4120 = vmatprep.subr.bf16.mxu0 0
        %4121 = vmatpush1.bf16.msra.mxu0 %v4087
        %4122 = vmatprep.subr.bf16.mxu0 0
        %4123 = vmatpush1.bf16.msra.mxu0 %v4088
        %4124 = vmatprep.subr.bf16.mxu0 0
        %4125 = vmatpush1.bf16.msra.mxu0 %v4089
        %4126 = vmatprep.subr.bf16.mxu0 0
        %4127 = vmatpush1.bf16.msra.mxu0 0
        %4128 = vmatprep.subr.bf16.mxu0 0
        %4129 = vmatpush1.bf16.msra.mxu0 0
        %4130 = vmatprep.subr.bf16.mxu0 0
        %4131 = vmatpush1.bf16.msra.mxu0 0
        %4132 = vmatprep.subr.bf16.mxu0 0
        %4133 = vmatpush1.bf16.msra.mxu0 0
        %4134 = vmatprep.subr.bf16.mxu0 0
        %4135 = vmatpush1.bf16.msra.mxu0 0
        %4136 = vmatprep.subr.bf16.mxu0 0
        %4137 = vmatpush1.bf16.msra.mxu0 0
        %4138 = vmatprep.subr.bf16.mxu0 0
        %4139 = vmatpush1.bf16.msra.mxu0 0
        %4140 = vmatprep.subr.bf16.mxu0 0
        %4141 = vmatpush1.bf16.msra.mxu0 0
        %4142 = vmatprep.subr.bf16.mxu0 0
        %4143 = vmatpush1.bf16.msra.mxu0 0
        %4144 = vmatprep.subr.bf16.mxu0 0
        %4145 = vmatpush1.bf16.msra.mxu0 0
        %4146 = vmatprep.subr.bf16.mxu0 0
        %4147 = vmatpush1.bf16.msra.mxu0 0
        %4148 = vmatprep.subr.bf16.mxu0 0
        %4149 = vmatpush1.bf16.msra.mxu0 0
        %4150 = vmatprep.mubr.bf16.mxu0 0
        %4151 = vmatmul.mubr.bf16.gmra.mrb[0].mxu0 %v4095
        %v4152 = vpop.f32.mrb[0].mxu0
        %v4153 = vadd.f32 0.0, %v4152
        %v4154 = vpop.f32.mrb[0].mxu0
        %v4155 = vpop.f32.mrb[0].mxu0
        %v4156 = vadd.f32 0.0, %v4155
        %v4157 = vpop.f32.mrb[0].mxu0
        %4158 = vmatprep.mubr.bf16.mxu0 0
        %4159 = vmatmul.mubr.bf16.gmra.mrb[0].mxu0 %v4098
        %v4160 = vpop.f32.mrb[0].mxu0
        %v4161 = vadd.f32 0.0, %v4160
        %v4162 = vpop.f32.mrb[0].mxu0
        %v4163 = vpop.f32.mrb[0].mxu0
        %v4164 = vadd.f32 0.0, %v4163
        %v4165 = vpop.f32.mrb[0].mxu0
        %4166 = vmatprep.mubr.bf16.mxu0 0
        %4167 = vmatmul.mubr.bf16.gmra.mrb[0].mxu0 %v4101
        %v4168 = vpop.f32.mrb[0].mxu0
        %v4169 = vadd.f32 0.0, %v4168
        %v4170 = vpop.f32.mrb[0].mxu0
        %v4171 = vpop.f32.mrb[0].mxu0
        %v4172 = vadd.f32 0.0, %v4171
        %v4173 = vpop.f32.mrb[0].mxu0
        %4174 = vmatprep.mubr.bf16.mxu0 0
        %4175 = vmatmul.mubr.bf16.gmra.mrb[0].mxu0 %v4104
        %v4176 = vpop.f32.mrb[0].mxu0
        %v4177 = vadd.f32 0.0, %v4176
        %v4178 = vpop.f32.mrb[0].mxu0
        %v4179 = vpop.f32.mrb[0].mxu0
        %v4180 = vadd.f32 0.0, %v4179
        %v4181 = vpop.f32.mrb[0].mxu0
        %4182 = vmatprep.mubr.bf16.mxu0 0
        %4183 = vmatmul.mubr.bf16.gmra.mrb[0].mxu0 %v4107
        %v4184 = vpop.f32.mrb[0].mxu0
        %v4185 = vadd.f32 0.0, %v4184
        %v4186 = vpop.f32.mrb[0].mxu0
        %v4187 = vpop.f32.mrb[0].mxu0
        %v4188 = vadd.f32 0.0, %v4187
        %v4189 = vpop.f32.mrb[0].mxu0
        %4190 = vmatprep.mubr.bf16.mxu0 0
        %4191 = vmatmul.mubr.bf16.gmra.mrb[0].mxu0 %v4110
        %v4192 = vpop.f32.mrb[0].mxu0
        %v4193 = vadd.f32 0.0, %v4192
        %v4194 = vpop.f32.mrb[0].mxu0
        %v4195 = vpop.f32.mrb[0].mxu0
        %v4196 = vadd.f32 0.0, %v4195
        %v4197 = vpop.f32.mrb[0].mxu0
        %4198 = vmatprep.mubr.bf16.mxu0 0
        %4199 = vmatmul.mubr.bf16.gmra.mrb[0].mxu0 %v4113
        %v4200 = vpop.f32.mrb[0].mxu0
        %v4201 = vadd.f32 0.0, %v4200
        %v4202 = vpop.f32.mrb[0].mxu0
        %v4203 = vpop.f32.mrb[0].mxu0
        %v4204 = vadd.f32 0.0, %v4203
        %v4205 = vpop.f32.mrb[0].mxu0
        %4206 = vmatprep.mubr.bf16.mxu0 0
        %4207 = vmatmul.mubr.bf16.gmra.mrb[0].mxu0 %v4116
        %v4208 = vpop.f32.mrb[0].mxu0
        %v4209 = vadd.f32 0.0, %v4208
        %v4210 = vpop.f32.mrb[0].mxu0
        %v4211 = vpop.f32.mrb[0].mxu0
        %v4212 = vadd.f32 0.0, %v4211
        %v4213 = vpop.f32.mrb[0].mxu0
        %4214 = vdwg.mxu0
        %v4215 = vlaneseq
        %v4216 = vshrl.u32 %v4215, 7
        %v4217 = vsub.s32 0, %v4216
        %v4218 = vrot.slane %v3945, %v4217
        %v4219 = vadd.f32 %v4218, %v4153
        %v4220 = vadd.f32 %v4218, %v4156
        %v4221 = vadd.f32 %v4218, %v4161
        %v4222 = vadd.f32 %v4218, %v4164
        %v4223 = vadd.f32 %v4218, %v4169
        %v4224 = vadd.f32 %v4218, %v4172
        %v4225 = vadd.f32 %v4218, %v4177
        %v4226 = vadd.f32 %v4218, %v4180
        %v4227 = vadd.f32 %v4218, %v4185
        %v4228 = vadd.f32 %v4218, %v4188
        %v4229 = vadd.f32 %v4218, %v4193
        %v4230 = vadd.f32 %v4218, %v4196
        %v4231 = vadd.f32 %v4218, %v4201
        %v4232 = vadd.f32 %v4218, %v4204
        %v4233 = vadd.f32 %v4218, %v4209
        %v4234 = vadd.f32 %v4218, %v4212
        %v4235 = vld [vmem:[#allocation2 + $0x10] sm:$0xff]
        %v4236 = vld [vmem:[#allocation2 + $0x18] sm:$0xff]
        %v4237 = vld [vmem:[#allocation2 + $0x20] sm:$0xff]
        %v4238 = vld [vmem:[#allocation2 + $0x28] sm:$0xff]
        %v4239 = vld [vmem:[#allocation2 + $0x50] sm:$0xff]
        %v4240 = vld [vmem:[#allocation2 + $0x58] sm:$0xff]
        %v4241 = vld [vmem:[#allocation2 + $0x60] sm:$0xff]
        %v4242 = vld [vmem:[#allocation2 + $0x68] sm:$0xff]
        %v4243 = vld [vmem:[%s4061 + $0x20] sm:$0xf]
        %v4244 = vld [vmem:[%s4061 + $0x24] sm:$0xf]
        %v4245 = vld [vmem:[%s4061 + $0x28] sm:$0xf]
        %v4246 = vld [vmem:[%s4061 + $0x2c] sm:$0xf]
        %v4247 = vld [vmem:[%s4061 + $0x30] sm:$0xf]
        %v4248 = vld [vmem:[%s4061 + $0x34] sm:$0xf]
        %v4249 = vld [vmem:[%s4061 + $0x38] sm:$0xf]
        %v4250 = vld [vmem:[%s4061 + $0x3c] sm:$0xf]
        %v4259 = vunpack.c.l.b16 %v4243
        %v4260 = vunpack.c.l.b16 %v4244
        %v4261 = vunpack.c.l.b16 %v4245
        %v4262 = vunpack.c.l.b16 %v4246
        %v4263 = vunpack.c.l.b16 %v4247
        %v4264 = vunpack.c.l.b16 %v4248
        %v4265 = vunpack.c.l.b16 %v4249
        %v4266 = vunpack.c.l.b16 %v4250
        %v4267 = vpack.c.b16 %v4260, %v4259
        %v4268 = vpack.c.b16 %v4262, %v4261
        %v4269 = vpack.c.b16 %v4264, %v4263
        %v4270 = vpack.c.b16 %v4266, %v4265
        %v4276 = vsel %vm867, %v4235, 0
        %v4279 = vsel %vm867, %v4236, 0
        %v4282 = vsel %vm867, %v4237, 0
        %v4285 = vsel %vm867, %v4238, 0
        %v4288 = vsel %vm867, %v4239, 0
        %v4291 = vsel %vm867, %v4240, 0
        %v4294 = vsel %vm867, %v4241, 0
        %v4297 = vsel %vm867, %v4242, 0
        %4299 = vmatprep.subr.bf16.mxu0 0
        %4300 = vmatpush1.bf16.msra.mxu0 %v4267
        %4301 = vmatprep.subr.bf16.mxu0 0
        %4302 = vmatpush1.bf16.msra.mxu0 %v4268
        %4303 = vmatprep.subr.bf16.mxu0 0
        %4304 = vmatpush1.bf16.msra.mxu0 %v4269
        %4305 = vmatprep.subr.bf16.mxu0 0
        %4306 = vmatpush1.bf16.msra.mxu0 %v4270
        %4307 = vmatprep.subr.bf16.mxu0 0
        %4308 = vmatpush1.bf16.msra.mxu0 0
        %4309 = vmatprep.subr.bf16.mxu0 0
        %4310 = vmatpush1.bf16.msra.mxu0 0
        %4311 = vmatprep.subr.bf16.mxu0 0
        %4312 = vmatpush1.bf16.msra.mxu0 0
        %4313 = vmatprep.subr.bf16.mxu0 0
        %4314 = vmatpush1.bf16.msra.mxu0 0
        %4315 = vmatprep.subr.bf16.mxu0 0
        %4316 = vmatpush1.bf16.msra.mxu0 0
        %4317 = vmatprep.subr.bf16.mxu0 0
        %4318 = vmatpush1.bf16.msra.mxu0 0
        %4319 = vmatprep.subr.bf16.mxu0 0
        %4320 = vmatpush1.bf16.msra.mxu0 0
        %4321 = vmatprep.subr.bf16.mxu0 0
        %4322 = vmatpush1.bf16.msra.mxu0 0
        %4323 = vmatprep.subr.bf16.mxu0 0
        %4324 = vmatpush1.bf16.msra.mxu0 0
        %4325 = vmatprep.subr.bf16.mxu0 0
        %4326 = vmatpush1.bf16.msra.mxu0 0
        %4327 = vmatprep.subr.bf16.mxu0 0
        %4328 = vmatpush1.bf16.msra.mxu0 0
        %4329 = vmatprep.subr.bf16.mxu0 0
        %4330 = vmatpush1.bf16.msra.mxu0 0
        %4331 = vmatprep.mubr.bf16.mxu0 0
        %4332 = vmatmul.mubr.bf16.gmra.mrb[0].mxu0 %v4276
        %v4333 = vpop.f32.mrb[0].mxu0
        %v4334 = vadd.f32 0.0, %v4333
        %v4335 = vpop.f32.mrb[0].mxu0
        %v4336 = vpop.f32.mrb[0].mxu0
        %v4337 = vadd.f32 0.0, %v4336
        %v4338 = vpop.f32.mrb[0].mxu0
        %4339 = vmatprep.mubr.bf16.mxu0 0
        %4340 = vmatmul.mubr.bf16.gmra.mrb[0].mxu0 %v4279
        %v4341 = vpop.f32.mrb[0].mxu0
        %v4342 = vadd.f32 0.0, %v4341
        %v4343 = vpop.f32.mrb[0].mxu0
        %v4344 = vpop.f32.mrb[0].mxu0
        %v4345 = vadd.f32 0.0, %v4344
        %v4346 = vpop.f32.mrb[0].mxu0
        %4347 = vmatprep.mubr.bf16.mxu0 0
        %4348 = vmatmul.mubr.bf16.gmra.mrb[0].mxu0 %v4282
        %v4349 = vpop.f32.mrb[0].mxu0
        %v4350 = vadd.f32 0.0, %v4349
        %v4351 = vpop.f32.mrb[0].mxu0
        %v4352 = vpop.f32.mrb[0].mxu0
        %v4353 = vadd.f32 0.0, %v4352
        %v4354 = vpop.f32.mrb[0].mxu0
        %4355 = vmatprep.mubr.bf16.mxu0 0
        %4356 = vmatmul.mubr.bf16.gmra.mrb[0].mxu0 %v4285
        %v4357 = vpop.f32.mrb[0].mxu0
        %v4358 = vadd.f32 0.0, %v4357
        %v4359 = vpop.f32.mrb[0].mxu0
        %v4360 = vpop.f32.mrb[0].mxu0
        %v4361 = vadd.f32 0.0, %v4360
        %v4362 = vpop.f32.mrb[0].mxu0
        %4363 = vmatprep.mubr.bf16.mxu0 0
        %4364 = vmatmul.mubr.bf16.gmra.mrb[0].mxu0 %v4288
        %v4365 = vpop.f32.mrb[0].mxu0
        %v4366 = vadd.f32 0.0, %v4365
        %v4367 = vpop.f32.mrb[0].mxu0
        %v4368 = vpop.f32.mrb[0].mxu0
        %v4369 = vadd.f32 0.0, %v4368
        %v4370 = vpop.f32.mrb[0].mxu0
        %4371 = vmatprep.mubr.bf16.mxu0 0
        %4372 = vmatmul.mubr.bf16.gmra.mrb[0].mxu0 %v4291
        %v4373 = vpop.f32.mrb[0].mxu0
        %v4374 = vadd.f32 0.0, %v4373
        %v4375 = vpop.f32.mrb[0].mxu0
        %v4376 = vpop.f32.mrb[0].mxu0
        %v4377 = vadd.f32 0.0, %v4376
        %v4378 = vpop.f32.mrb[0].mxu0
        %4379 = vmatprep.mubr.bf16.mxu0 0
        %4380 = vmatmul.mubr.bf16.gmra.mrb[0].mxu0 %v4294
        %v4381 = vpop.f32.mrb[0].mxu0
        %v4382 = vadd.f32 0.0, %v4381
        %v4383 = vpop.f32.mrb[0].mxu0
        %v4384 = vpop.f32.mrb[0].mxu0
        %v4385 = vadd.f32 0.0, %v4384
        %v4386 = vpop.f32.mrb[0].mxu0
        %4387 = vmatprep.mubr.bf16.mxu0 0
        %4388 = vmatmul.mubr.bf16.gmra.mrb[0].mxu0 %v4297
        %v4389 = vpop.f32.mrb[0].mxu0
        %v4390 = vadd.f32 0.0, %v4389
        %v4391 = vpop.f32.mrb[0].mxu0
        %v4392 = vpop.f32.mrb[0].mxu0
        %v4393 = vadd.f32 0.0, %v4392
        %v4394 = vpop.f32.mrb[0].mxu0
        %4395 = vdwg.mxu0
        %v4396 = vadd.f32 %v4219, %v4334
        %v4397 = vadd.f32 %v4220, %v4337
        %v4398 = vadd.f32 %v4221, %v4342
        %v4399 = vadd.f32 %v4222, %v4345
        %v4400 = vadd.f32 %v4223, %v4350
        %v4401 = vadd.f32 %v4224, %v4353
        %v4402 = vadd.f32 %v4225, %v4358
        %v4403 = vadd.f32 %v4226, %v4361
        %v4404 = vadd.f32 %v4227, %v4366
        %v4405 = vadd.f32 %v4228, %v4369
        %v4406 = vadd.f32 %v4229, %v4374
        %v4407 = vadd.f32 %v4230, %v4377
        %v4408 = vadd.f32 %v4231, %v4382
        %v4409 = vadd.f32 %v4232, %v4385
        %v4410 = vadd.f32 %v4233, %v4390
        %v4411 = vadd.f32 %v4234, %v4393
        %v4412 = vld [vmem:[#allocation2 + $0x18] sm:$0xe0]
        %v4413 = vld [vmem:[#allocation2 + $0x20] sm:$0xff]
        %v4414 = vld [vmem:[#allocation2 + $0x28] sm:$0xff]
        %v4415 = vld [vmem:[#allocation2 + $0x30] sm:$0xff]
        %v4416 = vld [vmem:[#allocation2 + $0x38] sm:$0x3f]
        %v4417 = vld [vmem:[#allocation2 + $0x58] sm:$0xe0]
        %v4418 = vld [vmem:[#allocation2 + $0x60] sm:$0xff]
        %v4419 = vld [vmem:[#allocation2 + $0x68] sm:$0xff]
        %v4420 = vld [vmem:[#allocation2 + $0x70] sm:$0xff]
        %v4421 = vld [vmem:[#allocation2 + $0x78] sm:$0x3f]
        %vm4422 = vsmask.f32 2304
        %v4424 = vshrl.u32 %v4412, 16
        %v4426 = vrot.slane %v4424, 5
        %v4427 = vshll.u32 %v4412, 16
        %v4429 = vrot.slane %v4427, 6
        %v4430 = vor.u32 %v4426, %v4429
        %v4432 = vshrl.u32 %v4413, 16
        %v4434 = vrot.slane %v4432, 5
        %v4435 = vshll.u32 %v4413, 16
        %v4437 = vrot.slane %v4435, 6
        %v4438 = vor.u32 %v4434, %v4437
        %v4439 = vsel %vm4422, %v4430, %v4438
        %v4441 = vshrl.u32 %v4414, 16
        %v4443 = vrot.slane %v4441, 5
        %v4444 = vshll.u32 %v4414, 16
        %v4446 = vrot.slane %v4444, 6
        %v4447 = vor.u32 %v4443, %v4446
        %v4448 = vsel %vm4422, %v4438, %v4447
        %v4450 = vshrl.u32 %v4415, 16
        %v4452 = vrot.slane %v4450, 5
        %v4453 = vshll.u32 %v4415, 16
        %v4455 = vrot.slane %v4453, 6
        %v4456 = vor.u32 %v4452, %v4455
        %v4457 = vsel %vm4422, %v4447, %v4456
        %v4459 = vshrl.u32 %v4416, 16
        %v4461 = vrot.slane %v4459, 5
        %v4462 = vshll.u32 %v4416, 16
        %v4464 = vrot.slane %v4462, 6
        %v4465 = vor.u32 %v4461, %v4464
        %v4466 = vsel %vm4422, %v4456, %v4465
        %v4468 = vshrl.u32 %v4417, 16
        %v4470 = vrot.slane %v4468, 5
        %v4471 = vshll.u32 %v4417, 16
        %v4473 = vrot.slane %v4471, 6
        %v4474 = vor.u32 %v4470, %v4473
        %v4476 = vshrl.u32 %v4418, 16
        %v4478 = vrot.slane %v4476, 5
        %v4479 = vshll.u32 %v4418, 16
        %v4481 = vrot.slane %v4479, 6
        %v4482 = vor.u32 %v4478, %v4481
        %v4483 = vsel %vm4422, %v4474, %v4482
        %v4485 = vshrl.u32 %v4419, 16
        %v4487 = vrot.slane %v4485, 5
        %v4488 = vshll.u32 %v4419, 16
        %v4490 = vrot.slane %v4488, 6
        %v4491 = vor.u32 %v4487, %v4490
        %v4492 = vsel %vm4422, %v4482, %v4491
        %v4494 = vshrl.u32 %v4420, 16
        %v4496 = vrot.slane %v4494, 5
        %v4497 = vshll.u32 %v4420, 16
        %v4499 = vrot.slane %v4497, 6
        %v4500 = vor.u32 %v4496, %v4499
        %v4501 = vsel %vm4422, %v4491, %v4500
        %v4503 = vshrl.u32 %v4421, 16
        %v4505 = vrot.slane %v4503, 5
        %v4506 = vshll.u32 %v4421, 16
        %v4508 = vrot.slane %v4506, 6
        %v4509 = vor.u32 %v4505, %v4508
        %v4510 = vsel %vm4422, %v4500, %v4509
        %v4511 = vld [vmem:[%s4061 + $0x40] sm:$0xf]
        %v4512 = vld [vmem:[%s4061 + $0x44] sm:$0xf]
        %v4513 = vld [vmem:[%s4061 + $0x48] sm:$0xf]
        %v4514 = vld [vmem:[%s4061 + $0x4c] sm:$0xf]
        %v4515 = vld [vmem:[%s4061 + $0x50] sm:$0xf]
        %v4516 = vld [vmem:[%s4061 + $0x54] sm:$0xf]
        %v4517 = vld [vmem:[%s4061 + $0x58] sm:$0xf]
        %v4518 = vld [vmem:[%s4061 + $0x5c] sm:$0xf]
        %v4527 = vunpack.c.l.b16 %v4511
        %v4528 = vunpack.c.l.b16 %v4512
        %v4529 = vunpack.c.l.b16 %v4513
        %v4530 = vunpack.c.l.b16 %v4514
        %v4531 = vunpack.c.l.b16 %v4515
        %v4532 = vunpack.c.l.b16 %v4516
        %v4533 = vunpack.c.l.b16 %v4517
        %v4534 = vunpack.c.l.b16 %v4518
        %v4535 = vpack.c.b16 %v4528, %v4527
        %v4536 = vpack.c.b16 %v4530, %v4529
        %v4537 = vpack.c.b16 %v4532, %v4531
        %v4538 = vpack.c.b16 %v4534, %v4533
        %v4544 = vsel %vm867, %v4439, 0
        %v4547 = vsel %vm867, %v4448, 0
        %v4550 = vsel %vm867, %v4457, 0
        %v4553 = vsel %vm867, %v4466, 0
        %v4556 = vsel %vm867, %v4483, 0
        %v4559 = vsel %vm867, %v4492, 0
        %v4562 = vsel %vm867, %v4501, 0
        %v4565 = vsel %vm867, %v4510, 0
        %4567 = vmatprep.subr.bf16.mxu0 0
        %4568 = vmatpush1.bf16.msra.mxu0 %v4535
        %4569 = vmatprep.subr.bf16.mxu0 0
        %4570 = vmatpush1.bf16.msra.mxu0 %v4536
        %4571 = vmatprep.subr.bf16.mxu0 0
        %4572 = vmatpush1.bf16.msra.mxu0 %v4537
        %4573 = vmatprep.subr.bf16.mxu0 0
        %4574 = vmatpush1.bf16.msra.mxu0 %v4538
        %4575 = vmatprep.subr.bf16.mxu0 0
        %4576 = vmatpush1.bf16.msra.mxu0 0
        %4577 = vmatprep.subr.bf16.mxu0 0
        %4578 = vmatpush1.bf16.msra.mxu0 0
        %4579 = vmatprep.subr.bf16.mxu0 0
        %4580 = vmatpush1.bf16.msra.mxu0 0
        %4581 = vmatprep.subr.bf16.mxu0 0
        %4582 = vmatpush1.bf16.msra.mxu0 0
        %4583 = vmatprep.subr.bf16.mxu0 0
        %4584 = vmatpush1.bf16.msra.mxu0 0
        %4585 = vmatprep.subr.bf16.mxu0 0
        %4586 = vmatpush1.bf16.msra.mxu0 0
        %4587 = vmatprep.subr.bf16.mxu0 0
        %4588 = vmatpush1.bf16.msra.mxu0 0
        %4589 = vmatprep.subr.bf16.mxu0 0
        %4590 = vmatpush1.bf16.msra.mxu0 0
        %4591 = vmatprep.subr.bf16.mxu0 0
        %4592 = vmatpush1.bf16.msra.mxu0 0
        %4593 = vmatprep.subr.bf16.mxu0 0
        %4594 = vmatpush1.bf16.msra.mxu0 0
        %4595 = vmatprep.subr.bf16.mxu0 0
        %4596 = vmatpush1.bf16.msra.mxu0 0
        %4597 = vmatprep.subr.bf16.mxu0 0
        %4598 = vmatpush1.bf16.msra.mxu0 0
        %4599 = vmatprep.mubr.bf16.mxu0 0
        %4600 = vmatmul.mubr.bf16.gmra.mrb[0].mxu0 %v4544
        %v4601 = vpop.f32.mrb[0].mxu0
        %v4602 = vadd.f32 0.0, %v4601
        %v4603 = vpop.f32.mrb[0].mxu0
        %v4604 = vpop.f32.mrb[0].mxu0
        %v4605 = vadd.f32 0.0, %v4604
        %v4606 = vpop.f32.mrb[0].mxu0
        %4607 = vmatprep.mubr.bf16.mxu0 0
        %4608 = vmatmul.mubr.bf16.gmra.mrb[0].mxu0 %v4547
        %v4609 = vpop.f32.mrb[0].mxu0
        %v4610 = vadd.f32 0.0, %v4609
        %v4611 = vpop.f32.mrb[0].mxu0
        %v4612 = vpop.f32.mrb[0].mxu0
        %v4613 = vadd.f32 0.0, %v4612
        %v4614 = vpop.f32.mrb[0].mxu0
        %4615 = vmatprep.mubr.bf16.mxu0 0
        %4616 = vmatmul.mubr.bf16.gmra.mrb[0].mxu0 %v4550
        %v4617 = vpop.f32.mrb[0].mxu0
        %v4618 = vadd.f32 0.0, %v4617
        %v4619 = vpop.f32.mrb[0].mxu0
        %v4620 = vpop.f32.mrb[0].mxu0
        %v4621 = vadd.f32 0.0, %v4620
        %v4622 = vpop.f32.mrb[0].mxu0
        %4623 = vmatprep.mubr.bf16.mxu0 0
        %4624 = vmatmul.mubr.bf16.gmra.mrb[0].mxu0 %v4553
        %v4625 = vpop.f32.mrb[0].mxu0
        %v4626 = vadd.f32 0.0, %v4625
        %v4627 = vpop.f32.mrb[0].mxu0
        %v4628 = vpop.f32.mrb[0].mxu0
        %v4629 = vadd.f32 0.0, %v4628
        %v4630 = vpop.f32.mrb[0].mxu0
        %4631 = vmatprep.mubr.bf16.mxu0 0
        %4632 = vmatmul.mubr.bf16.gmra.mrb[0].mxu0 %v4556
        %v4633 = vpop.f32.mrb[0].mxu0
        %v4634 = vadd.f32 0.0, %v4633
        %v4635 = vpop.f32.mrb[0].mxu0
        %v4636 = vpop.f32.mrb[0].mxu0
        %v4637 = vadd.f32 0.0, %v4636
        %v4638 = vpop.f32.mrb[0].mxu0
        %4639 = vmatprep.mubr.bf16.mxu0 0
        %4640 = vmatmul.mubr.bf16.gmra.mrb[0].mxu0 %v4559
        %v4641 = vpop.f32.mrb[0].mxu0
        %v4642 = vadd.f32 0.0, %v4641
        %v4643 = vpop.f32.mrb[0].mxu0
        %v4644 = vpop.f32.mrb[0].mxu0
        %v4645 = vadd.f32 0.0, %v4644
        %v4646 = vpop.f32.mrb[0].mxu0
        %4647 = vmatprep.mubr.bf16.mxu0 0
        %4648 = vmatmul.mubr.bf16.gmra.mrb[0].mxu0 %v4562
        %v4649 = vpop.f32.mrb[0].mxu0
        %v4650 = vadd.f32 0.0, %v4649
        %v4651 = vpop.f32.mrb[0].mxu0
        %v4652 = vpop.f32.mrb[0].mxu0
        %v4653 = vadd.f32 0.0, %v4652
        %v4654 = vpop.f32.mrb[0].mxu0
        %4655 = vmatprep.mubr.bf16.mxu0 0
        %4656 = vmatmul.mubr.bf16.gmra.mrb[0].mxu0 %v4565
        %v4657 = vpop.f32.mrb[0].mxu0
        %v4658 = vadd.f32 0.0, %v4657
        %v4659 = vpop.f32.mrb[0].mxu0
        %v4660 = vpop.f32.mrb[0].mxu0
        %v4661 = vadd.f32 0.0, %v4660
        %v4662 = vpop.f32.mrb[0].mxu0
        %4663 = vdwg.mxu0
        %v4664 = vadd.f32 %v4396, %v4602
        %v4665 = vadd.f32 %v4397, %v4605
        %v4666 = vadd.f32 %v4398, %v4610
        %v4667 = vadd.f32 %v4399, %v4613
        %v4668 = vadd.f32 %v4400, %v4618
        %v4669 = vadd.f32 %v4401, %v4621
        %v4670 = vadd.f32 %v4402, %v4626
        %v4671 = vadd.f32 %v4403, %v4629
        %v4672 = vadd.f32 %v4404, %v4634
        %v4673 = vadd.f32 %v4405, %v4637
        %v4674 = vadd.f32 %v4406, %v4642
        %v4675 = vadd.f32 %v4407, %v4645
        %v4676 = vadd.f32 %v4408, %v4650
        %v4677 = vadd.f32 %v4409, %v4653
        %v4678 = vadd.f32 %v4410, %v4658
        %v4679 = vadd.f32 %v4411, %v4661
        %v4680 = vxor.u32 %v4664, 2147483648
        %v4681 = vxor.u32 %v4665, 2147483648
        %v4682 = vxor.u32 %v4666, 2147483648
        %v4683 = vxor.u32 %v4667, 2147483648
        %v4684 = vxor.u32 %v4668, 2147483648
        %v4685 = vxor.u32 %v4669, 2147483648
        %v4686 = vxor.u32 %v4670, 2147483648
        %v4687 = vxor.u32 %v4671, 2147483648
        %v4688 = vxor.u32 %v4672, 2147483648
        %v4689 = vxor.u32 %v4673, 2147483648
        %v4690 = vxor.u32 %v4674, 2147483648
        %v4691 = vxor.u32 %v4675, 2147483648
        %v4692 = vxor.u32 %v4676, 2147483648
        %v4693 = vxor.u32 %v4677, 2147483648
        %v4694 = vxor.u32 %v4678, 2147483648
        %v4695 = vxor.u32 %v4679, 2147483648
        %v4696 = vmul.f32 %v4680, 1.442695
        %v4697 = vpow.pop %v4696
        %v4698 = vmul.f32 %v4681, 1.442695
        %v4699 = vpow.pop %v4698
        %v4700 = vmul.f32 %v4682, 1.442695
        %v4701 = vpow.pop %v4700
        %v4702 = vmul.f32 %v4683, 1.442695
        %v4703 = vpow.pop %v4702
        %v4704 = vmul.f32 %v4684, 1.442695
        %v4705 = vpow.pop %v4704
        %v4706 = vmul.f32 %v4685, 1.442695
        %v4707 = vpow.pop %v4706
        %v4708 = vmul.f32 %v4686, 1.442695
        %v4709 = vpow.pop %v4708
        %v4710 = vmul.f32 %v4687, 1.442695
        %v4711 = vpow.pop %v4710
        %v4712 = vmul.f32 %v4688, 1.442695
        %v4713 = vpow.pop %v4712
        %v4714 = vmul.f32 %v4689, 1.442695
        %v4715 = vpow.pop %v4714
        %v4716 = vmul.f32 %v4690, 1.442695
        %v4717 = vpow.pop %v4716
        %v4718 = vmul.f32 %v4691, 1.442695
        %v4719 = vpow.pop %v4718
        %v4720 = vmul.f32 %v4692, 1.442695
        %v4721 = vpow.pop %v4720
        %v4722 = vmul.f32 %v4693, 1.442695
        %v4723 = vpow.pop %v4722
        %v4724 = vmul.f32 %v4694, 1.442695
        %v4725 = vpow.pop %v4724
        %v4726 = vmul.f32 %v4695, 1.442695
        %v4727 = vpow.pop %v4726
        %v4728 = vadd.f32 %v4697, 1.0
        %v4729 = vadd.f32 %v4699, 1.0
        %v4730 = vadd.f32 %v4701, 1.0
        %v4731 = vadd.f32 %v4703, 1.0
        %v4732 = vadd.f32 %v4705, 1.0
        %v4733 = vadd.f32 %v4707, 1.0
        %v4734 = vadd.f32 %v4709, 1.0
        %v4735 = vadd.f32 %v4711, 1.0
        %v4736 = vadd.f32 %v4713, 1.0
        %v4737 = vadd.f32 %v4715, 1.0
        %v4738 = vadd.f32 %v4717, 1.0
        %v4739 = vadd.f32 %v4719, 1.0
        %v4740 = vadd.f32 %v4721, 1.0
        %v4741 = vadd.f32 %v4723, 1.0
        %v4742 = vadd.f32 %v4725, 1.0
        %v4743 = vadd.f32 %v4727, 1.0
        %v4744 = vrcp.pop %v4728
        %v4745 = vmul.f32 1.0, %v4744
        %v4746 = vrcp.pop %v4729
        %v4747 = vmul.f32 1.0, %v4746
        %v4748 = vrcp.pop %v4730
        %v4749 = vmul.f32 1.0, %v4748
        %v4750 = vrcp.pop %v4731
        %v4751 = vmul.f32 1.0, %v4750
        %v4752 = vrcp.pop %v4732
        %v4753 = vmul.f32 1.0, %v4752
        %v4754 = vrcp.pop %v4733
        %v4755 = vmul.f32 1.0, %v4754
        %v4756 = vrcp.pop %v4734
        %v4757 = vmul.f32 1.0, %v4756
        %v4758 = vrcp.pop %v4735
        %v4759 = vmul.f32 1.0, %v4758
        %v4760 = vrcp.pop %v4736
        %v4761 = vmul.f32 1.0, %v4760
        %v4762 = vrcp.pop %v4737
        %v4763 = vmul.f32 1.0, %v4762
        %v4764 = vrcp.pop %v4738
        %v4765 = vmul.f32 1.0, %v4764
        %v4766 = vrcp.pop %v4739
        %v4767 = vmul.f32 1.0, %v4766
        %v4768 = vrcp.pop %v4740
        %v4769 = vmul.f32 1.0, %v4768
        %v4770 = vrcp.pop %v4741
        %v4771 = vmul.f32 1.0, %v4770
        %v4772 = vrcp.pop %v4742
        %v4773 = vmul.f32 1.0, %v4772
        %v4774 = vrcp.pop %v4743
        %v4775 = vmul.f32 1.0, %v4774
        %4792 = vrot.lane.b32.xlu0 %v3929, 64
        %v4793 = vpop.permute.xlu0 %4792
        %4794 = vrot.lane.b32.xlu0 %v3930, 64
        %v4795 = vpop.permute.xlu0 %4794
        %4796 = vrot.lane.b32.xlu0 %v3931, 64
        %v4797 = vpop.permute.xlu0 %4796
        %4798 = vrot.lane.b32.xlu0 %v3932, 64
        %v4799 = vpop.permute.xlu0 %4798
        %4800 = vrot.lane.b32.xlu0 %v3933, 64
        %v4801 = vpop.permute.xlu0 %4800
        %4802 = vrot.lane.b32.xlu0 %v3934, 64
        %v4803 = vpop.permute.xlu0 %4802
        %4804 = vrot.lane.b32.xlu0 %v3935, 64
        %v4805 = vpop.permute.xlu0 %4804
        %4806 = vrot.lane.b32.xlu0 %v3936, 64
        %v4807 = vpop.permute.xlu0 %4806
        %4808 = vrot.lane.b32.xlu0 %v3937, 64
        %v4809 = vpop.permute.xlu0 %4808
        %4810 = vrot.lane.b32.xlu0 %v3938, 64
        %v4811 = vpop.permute.xlu0 %4810
        %4812 = vrot.lane.b32.xlu0 %v3939, 64
        %v4813 = vpop.permute.xlu0 %4812
        %4814 = vrot.lane.b32.xlu0 %v3940, 64
        %v4815 = vpop.permute.xlu0 %4814
        %4816 = vrot.lane.b32.xlu0 %v3941, 64
        %v4817 = vpop.permute.xlu0 %4816
        %4818 = vrot.lane.b32.xlu0 %v3942, 64
        %v4819 = vpop.permute.xlu0 %4818
        %4820 = vrot.lane.b32.xlu0 %v3943, 64
        %v4821 = vpop.permute.xlu0 %4820
        %4822 = vrot.lane.b32.xlu0 %v3944, 64
        %v4823 = vpop.permute.xlu0 %4822
        %v4840 = vsub.f32 %v4664, %v4793
        %v4841 = vsub.f32 %v4665, %v4795
        %v4842 = vsub.f32 %v4666, %v4797
        %v4843 = vsub.f32 %v4667, %v4799
        %v4844 = vsub.f32 %v4668, %v4801
        %v4845 = vsub.f32 %v4669, %v4803
        %v4846 = vsub.f32 %v4670, %v4805
        %v4847 = vsub.f32 %v4671, %v4807
        %v4848 = vsub.f32 %v4672, %v4809
        %v4849 = vsub.f32 %v4673, %v4811
        %v4850 = vsub.f32 %v4674, %v4813
        %v4851 = vsub.f32 %v4675, %v4815
        %v4852 = vsub.f32 %v4676, %v4817
        %v4853 = vsub.f32 %v4677, %v4819
        %v4854 = vsub.f32 %v4678, %v4821
        %v4855 = vsub.f32 %v4679, %v4823
        %4872 = vrot.lane.b32.xlu0 %v4840, 64
        %v4873 = vpop.permute.xlu0 %4872
        %4874 = vrot.lane.b32.xlu0 %v4841, 64
        %v4875 = vpop.permute.xlu0 %4874
        %4876 = vrot.lane.b32.xlu0 %v4842, 64
        %v4877 = vpop.permute.xlu0 %4876
        %4878 = vrot.lane.b32.xlu0 %v4843, 64
        %v4879 = vpop.permute.xlu0 %4878
        %4880 = vrot.lane.b32.xlu0 %v4844, 64
        %v4881 = vpop.permute.xlu0 %4880
        %4882 = vrot.lane.b32.xlu0 %v4845, 64
        %v4883 = vpop.permute.xlu0 %4882
        %4884 = vrot.lane.b32.xlu0 %v4846, 64
        %v4885 = vpop.permute.xlu0 %4884
        %4886 = vrot.lane.b32.xlu0 %v4847, 64
        %v4887 = vpop.permute.xlu0 %4886
        %4888 = vrot.lane.b32.xlu0 %v4848, 64
        %v4889 = vpop.permute.xlu0 %4888
        %4890 = vrot.lane.b32.xlu0 %v4849, 64
        %v4891 = vpop.permute.xlu0 %4890
        %4892 = vrot.lane.b32.xlu0 %v4850, 64
        %v4893 = vpop.permute.xlu0 %4892
        %4894 = vrot.lane.b32.xlu0 %v4851, 64
        %v4895 = vpop.permute.xlu0 %4894
        %4896 = vrot.lane.b32.xlu0 %v4852, 64
        %v4897 = vpop.permute.xlu0 %4896
        %4898 = vrot.lane.b32.xlu0 %v4853, 64
        %v4899 = vpop.permute.xlu0 %4898
        %4900 = vrot.lane.b32.xlu0 %v4854, 64
        %v4901 = vpop.permute.xlu0 %4900
        %4902 = vrot.lane.b32.xlu0 %v4855, 64
        %v4903 = vpop.permute.xlu0 %4902
        %v4920 = vmul.f32 %v4745, %v4873
        %v4921 = vmul.f32 %v4747, %v4875
        %v4922 = vmul.f32 %v4749, %v4877
        %v4923 = vmul.f32 %v4751, %v4879
        %v4924 = vmul.f32 %v4753, %v4881
        %v4925 = vmul.f32 %v4755, %v4883
        %v4926 = vmul.f32 %v4757, %v4885
        %v4927 = vmul.f32 %v4759, %v4887
        %v4928 = vmul.f32 %v4761, %v4889
        %v4929 = vmul.f32 %v4763, %v4891
        %v4930 = vmul.f32 %v4765, %v4893
        %v4931 = vmul.f32 %v4767, %v4895
        %v4932 = vmul.f32 %v4769, %v4897
        %v4933 = vmul.f32 %v4771, %v4899
        %v4934 = vmul.f32 %v4773, %v4901
        %v4935 = vmul.f32 %v4775, %v4903
        %v4936 = vadd.f32 %v3929, %v4920
        %v4937 = vadd.f32 %v3930, %v4921
        %v4938 = vadd.f32 %v3931, %v4922
        %v4939 = vadd.f32 %v3932, %v4923
        %v4940 = vadd.f32 %v3933, %v4924
        %v4941 = vadd.f32 %v3934, %v4925
        %v4942 = vadd.f32 %v3935, %v4926
        %v4943 = vadd.f32 %v3936, %v4927
        %v4944 = vadd.f32 %v3937, %v4928
        %v4945 = vadd.f32 %v3938, %v4929
        %v4946 = vadd.f32 %v3939, %v4930
        %v4947 = vadd.f32 %v3940, %v4931
        %v4948 = vadd.f32 %v3941, %v4932
        %v4949 = vadd.f32 %v3942, %v4933
        %v4950 = vadd.f32 %v3943, %v4934
        %v4951 = vadd.f32 %v3944, %v4935
        %v4952 = vld [vmem:[%s8 + $0x4] sm:$0x1]
        %v4953 = vpack.c.bf16 %v4937, %v4936
        %v4954 = vpack.c.bf16 %v4939, %v4938
        %v4955 = vpack.c.bf16 %v4941, %v4940
        %v4956 = vpack.c.bf16 %v4943, %v4942
        %v4957 = vpack.c.bf16 %v4945, %v4944
        %v4958 = vpack.c.bf16 %v4947, %v4946
        %v4959 = vpack.c.bf16 %v4949, %v4948
        %v4960 = vpack.c.bf16 %v4951, %v4950
        %4961 = vst.msk [vmem:[#allocation2 + $0x10] sm:$0xff] %vm867, %v4953
        %4962 = vst.msk [vmem:[#allocation2 + $0x18] sm:$0xff] %vm867, %v4954
        %4963 = vst.msk [vmem:[#allocation2 + $0x20] sm:$0xff] %vm867, %v4955
        %4964 = vst.msk [vmem:[#allocation2 + $0x28] sm:$0xff] %vm867, %v4956
        %4965 = vst.msk [vmem:[#allocation2 + $0x50] sm:$0xff] %vm867, %v4957
        %4966 = vst.msk [vmem:[#allocation2 + $0x58] sm:$0xff] %vm867, %v4958
        %4967 = vst.msk [vmem:[#allocation2 + $0x60] sm:$0xff] %vm867, %v4959
        %4968 = vst.msk [vmem:[#allocation2 + $0x68] sm:$0xff] %vm867, %v4960
        %v4969 = vld [vmem:[#allocation2 + $0x8] sm:$0x80]
        %v4970 = vld [vmem:[#allocation2 + $0x10] sm:$0xff]
        %v4971 = vld [vmem:[#allocation2 + $0x18] sm:$0xff]
        %v4972 = vld [vmem:[#allocation2 + $0x20] sm:$0xff]
        %v4973 = vld [vmem:[#allocation2 + $0x28] sm:$0xff]
        %v4974 = vld [vmem:[#allocation2 + $0x48] sm:$0x80]
        %v4975 = vld [vmem:[#allocation2 + $0x50] sm:$0xff]
        %v4976 = vld [vmem:[#allocation2 + $0x58] sm:$0xff]
        %v4977 = vld [vmem:[#allocation2 + $0x60] sm:$0xff]
        %v4978 = vld [vmem:[#allocation2 + $0x68] sm:$0xff]
        %v4980 = vshrl.u32 %v4969, 16
        %v4982 = vrot.slane %v4980, 7
        %v4984 = vshrl.u32 %v4970, 16
        %v4986 = vrot.slane %v4984, 7
        %v4987 = vshll.u32 %v4970, 16
        %v4989 = vor.u32 %v4986, %v4987
        %v4990 = vsel %vm1024, %v4982, %v4989
        %v4992 = vshrl.u32 %v4971, 16
        %v4994 = vrot.slane %v4992, 7
        %v4995 = vshll.u32 %v4971, 16
        %v4997 = vor.u32 %v4994, %v4995
        %v4998 = vsel %vm1024, %v4986, %v4997
        %v5000 = vshrl.u32 %v4972, 16
        %v5002 = vrot.slane %v5000, 7
        %v5003 = vshll.u32 %v4972, 16
        %v5005 = vor.u32 %v5002, %v5003
        %v5006 = vsel %vm1024, %v4994, %v5005
        %v5008 = vshrl.u32 %v4973, 16
        %v5010 = vrot.slane %v5008, 7
        %v5011 = vshll.u32 %v4973, 16
        %v5013 = vor.u32 %v5010, %v5011
        %v5014 = vsel %vm1024, %v5002, %v5013
        %v5016 = vshrl.u32 %v4974, 16
        %v5018 = vrot.slane %v5016, 7
        %v5020 = vshrl.u32 %v4975, 16
        %v5022 = vrot.slane %v5020, 7
        %v5023 = vshll.u32 %v4975, 16
        %v5025 = vor.u32 %v5022, %v5023
        %v5026 = vsel %vm1024, %v5018, %v5025
        %v5028 = vshrl.u32 %v4976, 16
        %v5030 = vrot.slane %v5028, 7
        %v5031 = vshll.u32 %v4976, 16
        %v5033 = vor.u32 %v5030, %v5031
        %v5034 = vsel %vm1024, %v5022, %v5033
        %v5036 = vshrl.u32 %v4977, 16
        %v5038 = vrot.slane %v5036, 7
        %v5039 = vshll.u32 %v4977, 16
        %v5041 = vor.u32 %v5038, %v5039
        %v5042 = vsel %vm1024, %v5030, %v5041
        %v5044 = vshrl.u32 %v4978, 16
        %v5046 = vrot.slane %v5044, 7
        %v5047 = vshll.u32 %v4978, 16
        %v5049 = vor.u32 %v5046, %v5047
        %v5050 = vsel %vm1024, %v5038, %v5049
        %s5051 = scalar_lea.vmem [#allocation3], 384
        %v5052 = vld [vmem:[%s5051] sm:$0xf]
        %v5053 = vld [vmem:[%s5051 + $0x4] sm:$0xf]
        %v5054 = vld [vmem:[%s5051 + $0x8] sm:$0xf]
        %v5055 = vld [vmem:[%s5051 + $0xc] sm:$0xf]
        %v5056 = vld [vmem:[%s5051 + $0x10] sm:$0xf]
        %v5057 = vld [vmem:[%s5051 + $0x14] sm:$0xf]
        %v5058 = vld [vmem:[%s5051 + $0x18] sm:$0xf]
        %v5059 = vld [vmem:[%s5051 + $0x1c] sm:$0xf]
        %v5068 = vunpack.c.l.b16 %v5052
        %v5069 = vunpack.c.l.b16 %v5053
        %v5070 = vunpack.c.l.b16 %v5054
        %v5071 = vunpack.c.l.b16 %v5055
        %v5072 = vunpack.c.l.b16 %v5056
        %v5073 = vunpack.c.l.b16 %v5057
        %v5074 = vunpack.c.l.b16 %v5058
        %v5075 = vunpack.c.l.b16 %v5059
        %v5076 = vpack.c.b16 %v5069, %v5068
        %v5077 = vpack.c.b16 %v5071, %v5070
        %v5078 = vpack.c.b16 %v5073, %v5072
        %v5079 = vpack.c.b16 %v5075, %v5074
        %v5085 = vsel %vm867, %v4990, 0
        %v5088 = vsel %vm867, %v4998, 0
        %v5091 = vsel %vm867, %v5006, 0
        %v5094 = vsel %vm867, %v5014, 0
        %v5097 = vsel %vm867, %v5026, 0
        %v5100 = vsel %vm867, %v5034, 0
        %v5103 = vsel %vm867, %v5042, 0
        %v5106 = vsel %vm867, %v5050, 0
        %5108 = vmatprep.subr.bf16.mxu0 0
        %5109 = vmatpush1.bf16.msra.mxu0 %v5076
        %5110 = vmatprep.subr.bf16.mxu0 0
        %5111 = vmatpush1.bf16.msra.mxu0 %v5077
        %5112 = vmatprep.subr.bf16.mxu0 0
        %5113 = vmatpush1.bf16.msra.mxu0 %v5078
        %5114 = vmatprep.subr.bf16.mxu0 0
        %5115 = vmatpush1.bf16.msra.mxu0 %v5079
        %5116 = vmatprep.subr.bf16.mxu0 0
        %5117 = vmatpush1.bf16.msra.mxu0 0
        %5118 = vmatprep.subr.bf16.mxu0 0
        %5119 = vmatpush1.bf16.msra.mxu0 0
        %5120 = vmatprep.subr.bf16.mxu0 0
        %5121 = vmatpush1.bf16.msra.mxu0 0
        %5122 = vmatprep.subr.bf16.mxu0 0
        %5123 = vmatpush1.bf16.msra.mxu0 0
        %5124 = vmatprep.subr.bf16.mxu0 0
        %5125 = vmatpush1.bf16.msra.mxu0 0
        %5126 = vmatprep.subr.bf16.mxu0 0
        %5127 = vmatpush1.bf16.msra.mxu0 0
        %5128 = vmatprep.subr.bf16.mxu0 0
        %5129 = vmatpush1.bf16.msra.mxu0 0
        %5130 = vmatprep.subr.bf16.mxu0 0
        %5131 = vmatpush1.bf16.msra.mxu0 0
        %5132 = vmatprep.subr.bf16.mxu0 0
        %5133 = vmatpush1.bf16.msra.mxu0 0
        %5134 = vmatprep.subr.bf16.mxu0 0
        %5135 = vmatpush1.bf16.msra.mxu0 0
        %5136 = vmatprep.subr.bf16.mxu0 0
        %5137 = vmatpush1.bf16.msra.mxu0 0
        %5138 = vmatprep.subr.bf16.mxu0 0
        %5139 = vmatpush1.bf16.msra.mxu0 0
        %5140 = vmatprep.mubr.bf16.mxu0 0
        %5141 = vmatmul.mubr.bf16.gmra.mrb[0].mxu0 %v5085
        %v5142 = vpop.f32.mrb[0].mxu0
        %v5143 = vadd.f32 0.0, %v5142
        %v5144 = vpop.f32.mrb[0].mxu0
        %v5145 = vpop.f32.mrb[0].mxu0
        %v5146 = vadd.f32 0.0, %v5145
        %v5147 = vpop.f32.mrb[0].mxu0
        %5148 = vmatprep.mubr.bf16.mxu0 0
        %5149 = vmatmul.mubr.bf16.gmra.mrb[0].mxu0 %v5088
        %v5150 = vpop.f32.mrb[0].mxu0
        %v5151 = vadd.f32 0.0, %v5150
        %v5152 = vpop.f32.mrb[0].mxu0
        %v5153 = vpop.f32.mrb[0].mxu0
        %v5154 = vadd.f32 0.0, %v5153
        %v5155 = vpop.f32.mrb[0].mxu0
        %5156 = vmatprep.mubr.bf16.mxu0 0
        %5157 = vmatmul.mubr.bf16.gmra.mrb[0].mxu0 %v5091
        %v5158 = vpop.f32.mrb[0].mxu0
        %v5159 = vadd.f32 0.0, %v5158
        %v5160 = vpop.f32.mrb[0].mxu0
        %v5161 = vpop.f32.mrb[0].mxu0
        %v5162 = vadd.f32 0.0, %v5161
        %v5163 = vpop.f32.mrb[0].mxu0
        %5164 = vmatprep.mubr.bf16.mxu0 0
        %5165 = vmatmul.mubr.bf16.gmra.mrb[0].mxu0 %v5094
        %v5166 = vpop.f32.mrb[0].mxu0
        %v5167 = vadd.f32 0.0, %v5166
        %v5168 = vpop.f32.mrb[0].mxu0
        %v5169 = vpop.f32.mrb[0].mxu0
        %v5170 = vadd.f32 0.0, %v5169
        %v5171 = vpop.f32.mrb[0].mxu0
        %5172 = vmatprep.mubr.bf16.mxu0 0
        %5173 = vmatmul.mubr.bf16.gmra.mrb[0].mxu0 %v5097
        %v5174 = vpop.f32.mrb[0].mxu0
        %v5175 = vadd.f32 0.0, %v5174
        %v5176 = vpop.f32.mrb[0].mxu0
        %v5177 = vpop.f32.mrb[0].mxu0
        %v5178 = vadd.f32 0.0, %v5177
        %v5179 = vpop.f32.mrb[0].mxu0
        %5180 = vmatprep.mubr.bf16.mxu0 0
        %5181 = vmatmul.mubr.bf16.gmra.mrb[0].mxu0 %v5100
        %v5182 = vpop.f32.mrb[0].mxu0
        %v5183 = vadd.f32 0.0, %v5182
        %v5184 = vpop.f32.mrb[0].mxu0
        %v5185 = vpop.f32.mrb[0].mxu0
        %v5186 = vadd.f32 0.0, %v5185
        %v5187 = vpop.f32.mrb[0].mxu0
        %5188 = vmatprep.mubr.bf16.mxu0 0
        %5189 = vmatmul.mubr.bf16.gmra.mrb[0].mxu0 %v5103
        %v5190 = vpop.f32.mrb[0].mxu0
        %v5191 = vadd.f32 0.0, %v5190
        %v5192 = vpop.f32.mrb[0].mxu0
        %v5193 = vpop.f32.mrb[0].mxu0
        %v5194 = vadd.f32 0.0, %v5193
        %v5195 = vpop.f32.mrb[0].mxu0
        %5196 = vmatprep.mubr.bf16.mxu0 0
        %5197 = vmatmul.mubr.bf16.gmra.mrb[0].mxu0 %v5106
        %v5198 = vpop.f32.mrb[0].mxu0
        %v5199 = vadd.f32 0.0, %v5198
        %v5200 = vpop.f32.mrb[0].mxu0
        %v5201 = vpop.f32.mrb[0].mxu0
        %v5202 = vadd.f32 0.0, %v5201
        %v5203 = vpop.f32.mrb[0].mxu0
        %5204 = vdwg.mxu0
        %v5205 = vlaneseq
        %v5206 = vshrl.u32 %v5205, 7
        %v5207 = vsub.s32 0, %v5206
        %v5208 = vrot.slane %v4952, %v5207
        %v5209 = vadd.f32 %v5208, %v5143
        %v5210 = vadd.f32 %v5208, %v5146
        %v5211 = vadd.f32 %v5208, %v5151
        %v5212 = vadd.f32 %v5208, %v5154
        %v5213 = vadd.f32 %v5208, %v5159
        %v5214 = vadd.f32 %v5208, %v5162
        %v5215 = vadd.f32 %v5208, %v5167
        %v5216 = vadd.f32 %v5208, %v5170
        %v5217 = vadd.f32 %v5208, %v5175
        %v5218 = vadd.f32 %v5208, %v5178
        %v5219 = vadd.f32 %v5208, %v5183
        %v5220 = vadd.f32 %v5208, %v5186
        %v5221 = vadd.f32 %v5208, %v5191
        %v5222 = vadd.f32 %v5208, %v5194
        %v5223 = vadd.f32 %v5208, %v5199
        %v5224 = vadd.f32 %v5208, %v5202
        %v5225 = vld [vmem:[%s5051 + $0x20] sm:$0xf]
        %v5226 = vld [vmem:[%s5051 + $0x24] sm:$0xf]
        %v5227 = vld [vmem:[%s5051 + $0x28] sm:$0xf]
        %v5228 = vld [vmem:[%s5051 + $0x2c] sm:$0xf]
        %v5229 = vld [vmem:[%s5051 + $0x30] sm:$0xf]
        %v5230 = vld [vmem:[%s5051 + $0x34] sm:$0xf]
        %v5231 = vld [vmem:[%s5051 + $0x38] sm:$0xf]
        %v5232 = vld [vmem:[%s5051 + $0x3c] sm:$0xf]
        %v5241 = vunpack.c.l.b16 %v5225
        %v5242 = vunpack.c.l.b16 %v5226
        %v5243 = vunpack.c.l.b16 %v5227
        %v5244 = vunpack.c.l.b16 %v5228
        %v5245 = vunpack.c.l.b16 %v5229
        %v5246 = vunpack.c.l.b16 %v5230
        %v5247 = vunpack.c.l.b16 %v5231
        %v5248 = vunpack.c.l.b16 %v5232
        %v5249 = vpack.c.b16 %v5242, %v5241
        %v5250 = vpack.c.b16 %v5244, %v5243
        %v5251 = vpack.c.b16 %v5246, %v5245
        %v5252 = vpack.c.b16 %v5248, %v5247
        %v5257 = vsel %vm867, %v4970, 0
        %v5259 = vsel %vm867, %v4971, 0
        %v5261 = vsel %vm867, %v4972, 0
        %v5263 = vsel %vm867, %v4973, 0
        %v5265 = vsel %vm867, %v4975, 0
        %v5267 = vsel %vm867, %v4976, 0
        %v5269 = vsel %vm867, %v4977, 0
        %v5271 = vsel %vm867, %v4978, 0
        %5273 = vmatprep.subr.bf16.mxu0 0
        %5274 = vmatpush1.bf16.msra.mxu0 %v5249
        %5275 = vmatprep.subr.bf16.mxu0 0
        %5276 = vmatpush1.bf16.msra.mxu0 %v5250
        %5277 = vmatprep.subr.bf16.mxu0 0
        %5278 = vmatpush1.bf16.msra.mxu0 %v5251
        %5279 = vmatprep.subr.bf16.mxu0 0
        %5280 = vmatpush1.bf16.msra.mxu0 %v5252
        %5281 = vmatprep.subr.bf16.mxu0 0
        %5282 = vmatpush1.bf16.msra.mxu0 0
        %5283 = vmatprep.subr.bf16.mxu0 0
        %5284 = vmatpush1.bf16.msra.mxu0 0
        %5285 = vmatprep.subr.bf16.mxu0 0
        %5286 = vmatpush1.bf16.msra.mxu0 0
        %5287 = vmatprep.subr.bf16.mxu0 0
        %5288 = vmatpush1.bf16.msra.mxu0 0
        %5289 = vmatprep.subr.bf16.mxu0 0
        %5290 = vmatpush1.bf16.msra.mxu0 0
        %5291 = vmatprep.subr.bf16.mxu0 0
        %5292 = vmatpush1.bf16.msra.mxu0 0
        %5293 = vmatprep.subr.bf16.mxu0 0
        %5294 = vmatpush1.bf16.msra.mxu0 0
        %5295 = vmatprep.subr.bf16.mxu0 0
        %5296 = vmatpush1.bf16.msra.mxu0 0
        %5297 = vmatprep.subr.bf16.mxu0 0
        %5298 = vmatpush1.bf16.msra.mxu0 0
        %5299 = vmatprep.subr.bf16.mxu0 0
        %5300 = vmatpush1.bf16.msra.mxu0 0
        %5301 = vmatprep.subr.bf16.mxu0 0
        %5302 = vmatpush1.bf16.msra.mxu0 0
        %5303 = vmatprep.subr.bf16.mxu0 0
        %5304 = vmatpush1.bf16.msra.mxu0 0
        %5305 = vmatprep.mubr.bf16.mxu0 0
        %5306 = vmatmul.mubr.bf16.gmra.mrb[0].mxu0 %v5257
        %v5307 = vpop.f32.mrb[0].mxu0
        %v5308 = vadd.f32 0.0, %v5307
        %v5309 = vpop.f32.mrb[0].mxu0
        %v5310 = vpop.f32.mrb[0].mxu0
        %v5311 = vadd.f32 0.0, %v5310
        %v5312 = vpop.f32.mrb[0].mxu0
        %5313 = vmatprep.mubr.bf16.mxu0 0
        %5314 = vmatmul.mubr.bf16.gmra.mrb[0].mxu0 %v5259
        %v5315 = vpop.f32.mrb[0].mxu0
        %v5316 = vadd.f32 0.0, %v5315
        %v5317 = vpop.f32.mrb[0].mxu0
        %v5318 = vpop.f32.mrb[0].mxu0
        %v5319 = vadd.f32 0.0, %v5318
        %v5320 = vpop.f32.mrb[0].mxu0
        %5321 = vmatprep.mubr.bf16.mxu0 0
        %5322 = vmatmul.mubr.bf16.gmra.mrb[0].mxu0 %v5261
        %v5323 = vpop.f32.mrb[0].mxu0
        %v5324 = vadd.f32 0.0, %v5323
        %v5325 = vpop.f32.mrb[0].mxu0
        %v5326 = vpop.f32.mrb[0].mxu0
        %v5327 = vadd.f32 0.0, %v5326
        %v5328 = vpop.f32.mrb[0].mxu0
        %5329 = vmatprep.mubr.bf16.mxu0 0
        %5330 = vmatmul.mubr.bf16.gmra.mrb[0].mxu0 %v5263
        %v5331 = vpop.f32.mrb[0].mxu0
        %v5332 = vadd.f32 0.0, %v5331
        %v5333 = vpop.f32.mrb[0].mxu0
        %v5334 = vpop.f32.mrb[0].mxu0
        %v5335 = vadd.f32 0.0, %v5334
        %v5336 = vpop.f32.mrb[0].mxu0
        %5337 = vmatprep.mubr.bf16.mxu0 0
        %5338 = vmatmul.mubr.bf16.gmra.mrb[0].mxu0 %v5265
        %v5339 = vpop.f32.mrb[0].mxu0
        %v5340 = vadd.f32 0.0, %v5339
        %v5341 = vpop.f32.mrb[0].mxu0
        %v5342 = vpop.f32.mrb[0].mxu0
        %v5343 = vadd.f32 0.0, %v5342
        %v5344 = vpop.f32.mrb[0].mxu0
        %5345 = vmatprep.mubr.bf16.mxu0 0
        %5346 = vmatmul.mubr.bf16.gmra.mrb[0].mxu0 %v5267
        %v5347 = vpop.f32.mrb[0].mxu0
        %v5348 = vadd.f32 0.0, %v5347
        %v5349 = vpop.f32.mrb[0].mxu0
        %v5350 = vpop.f32.mrb[0].mxu0
        %v5351 = vadd.f32 0.0, %v5350
        %v5352 = vpop.f32.mrb[0].mxu0
        %5353 = vmatprep.mubr.bf16.mxu0 0
        %5354 = vmatmul.mubr.bf16.gmra.mrb[0].mxu0 %v5269
        %v5355 = vpop.f32.mrb[0].mxu0
        %v5356 = vadd.f32 0.0, %v5355
        %v5357 = vpop.f32.mrb[0].mxu0
        %v5358 = vpop.f32.mrb[0].mxu0
        %v5359 = vadd.f32 0.0, %v5358
        %v5360 = vpop.f32.mrb[0].mxu0
        %5361 = vmatprep.mubr.bf16.mxu0 0
        %5362 = vmatmul.mubr.bf16.gmra.mrb[0].mxu0 %v5271
        %v5363 = vpop.f32.mrb[0].mxu0
        %v5364 = vadd.f32 0.0, %v5363
        %v5365 = vpop.f32.mrb[0].mxu0
        %v5366 = vpop.f32.mrb[0].mxu0
        %v5367 = vadd.f32 0.0, %v5366
        %v5368 = vpop.f32.mrb[0].mxu0
        %5369 = vdwg.mxu0
        %v5370 = vadd.f32 %v5209, %v5308
        %v5371 = vadd.f32 %v5210, %v5311
        %v5372 = vadd.f32 %v5211, %v5316
        %v5373 = vadd.f32 %v5212, %v5319
        %v5374 = vadd.f32 %v5213, %v5324
        %v5375 = vadd.f32 %v5214, %v5327
        %v5376 = vadd.f32 %v5215, %v5332
        %v5377 = vadd.f32 %v5216, %v5335
        %v5378 = vadd.f32 %v5217, %v5340
        %v5379 = vadd.f32 %v5218, %v5343
        %v5380 = vadd.f32 %v5219, %v5348
        %v5381 = vadd.f32 %v5220, %v5351
        %v5382 = vadd.f32 %v5221, %v5356
        %v5383 = vadd.f32 %v5222, %v5359
        %v5384 = vadd.f32 %v5223, %v5364
        %v5385 = vadd.f32 %v5224, %v5367
        %v5386 = vld [vmem:[#allocation2 + $0x10] sm:$0xff]
        %v5387 = vld [vmem:[#allocation2 + $0x18] sm:$0xff]
        %v5388 = vld [vmem:[#allocation2 + $0x20] sm:$0xff]
        %v5389 = vld [vmem:[#allocation2 + $0x28] sm:$0xff]
        %v5390 = vld [vmem:[#allocation2 + $0x30] sm:$0x1]
        %v5391 = vld [vmem:[#allocation2 + $0x50] sm:$0xff]
        %v5392 = vld [vmem:[#allocation2 + $0x58] sm:$0xff]
        %v5393 = vld [vmem:[#allocation2 + $0x60] sm:$0xff]
        %v5394 = vld [vmem:[#allocation2 + $0x68] sm:$0xff]
        %v5395 = vld [vmem:[#allocation2 + $0x70] sm:$0x1]
        %v5397 = vshrl.u32 %v5386, 16
        %v5399 = vshll.u32 %v5386, 16
        %v5401 = vrot.slane %v5399, 1
        %v5402 = vor.u32 %v5397, %v5401
        %v5404 = vshll.u32 %v5387, 16
        %v5406 = vrot.slane %v5404, 1
        %v5407 = vsel %vm1441, %v5402, %v5406
        %v5408 = vshrl.u32 %v5387, 16
        %v5410 = vor.u32 %v5408, %v5406
        %v5412 = vshll.u32 %v5388, 16
        %v5414 = vrot.slane %v5412, 1
        %v5415 = vsel %vm1441, %v5410, %v5414
        %v5416 = vshrl.u32 %v5388, 16
        %v5418 = vor.u32 %v5416, %v5414
        %v5420 = vshll.u32 %v5389, 16
        %v5422 = vrot.slane %v5420, 1
        %v5423 = vsel %vm1441, %v5418, %v5422
        %v5424 = vshrl.u32 %v5389, 16
        %v5426 = vor.u32 %v5424, %v5422
        %v5428 = vshll.u32 %v5390, 16
        %v5430 = vrot.slane %v5428, 1
        %v5431 = vsel %vm1441, %v5426, %v5430
        %v5433 = vshrl.u32 %v5391, 16
        %v5435 = vshll.u32 %v5391, 16
        %v5437 = vrot.slane %v5435, 1
        %v5438 = vor.u32 %v5433, %v5437
        %v5440 = vshll.u32 %v5392, 16
        %v5442 = vrot.slane %v5440, 1
        %v5443 = vsel %vm1441, %v5438, %v5442
        %v5444 = vshrl.u32 %v5392, 16
        %v5446 = vor.u32 %v5444, %v5442
        %v5448 = vshll.u32 %v5393, 16
        %v5450 = vrot.slane %v5448, 1
        %v5451 = vsel %vm1441, %v5446, %v5450
        %v5452 = vshrl.u32 %v5393, 16
        %v5454 = vor.u32 %v5452, %v5450
        %v5456 = vshll.u32 %v5394, 16
        %v5458 = vrot.slane %v5456, 1
        %v5459 = vsel %vm1441, %v5454, %v5458
        %v5460 = vshrl.u32 %v5394, 16
        %v5462 = vor.u32 %v5460, %v5458
        %v5464 = vshll.u32 %v5395, 16
        %v5466 = vrot.slane %v5464, 1
        %v5467 = vsel %vm1441, %v5462, %v5466
        %v5468 = vld [vmem:[%s5051 + $0x40] sm:$0xf]
        %v5469 = vld [vmem:[%s5051 + $0x44] sm:$0xf]
        %v5470 = vld [vmem:[%s5051 + $0x48] sm:$0xf]
        %v5471 = vld [vmem:[%s5051 + $0x4c] sm:$0xf]
        %v5472 = vld [vmem:[%s5051 + $0x50] sm:$0xf]
        %v5473 = vld [vmem:[%s5051 + $0x54] sm:$0xf]
        %v5474 = vld [vmem:[%s5051 + $0x58] sm:$0xf]
        %v5475 = vld [vmem:[%s5051 + $0x5c] sm:$0xf]
        %v5484 = vunpack.c.l.b16 %v5468
        %v5485 = vunpack.c.l.b16 %v5469
        %v5486 = vunpack.c.l.b16 %v5470
        %v5487 = vunpack.c.l.b16 %v5471
        %v5488 = vunpack.c.l.b16 %v5472
        %v5489 = vunpack.c.l.b16 %v5473
        %v5490 = vunpack.c.l.b16 %v5474
        %v5491 = vunpack.c.l.b16 %v5475
        %v5492 = vpack.c.b16 %v5485, %v5484
        %v5493 = vpack.c.b16 %v5487, %v5486
        %v5494 = vpack.c.b16 %v5489, %v5488
        %v5495 = vpack.c.b16 %v5491, %v5490
        %v5501 = vsel %vm867, %v5407, 0
        %v5504 = vsel %vm867, %v5415, 0
        %v5507 = vsel %vm867, %v5423, 0
        %v5510 = vsel %vm867, %v5431, 0
        %v5513 = vsel %vm867, %v5443, 0
        %v5516 = vsel %vm867, %v5451, 0
        %v5519 = vsel %vm867, %v5459, 0
        %v5522 = vsel %vm867, %v5467, 0
        %5524 = vmatprep.subr.bf16.mxu0 0
        %5525 = vmatpush1.bf16.msra.mxu0 %v5492
        %5526 = vmatprep.subr.bf16.mxu0 0
        %5527 = vmatpush1.bf16.msra.mxu0 %v5493
        %5528 = vmatprep.subr.bf16.mxu0 0
        %5529 = vmatpush1.bf16.msra.mxu0 %v5494
        %5530 = vmatprep.subr.bf16.mxu0 0
        %5531 = vmatpush1.bf16.msra.mxu0 %v5495
        %5532 = vmatprep.subr.bf16.mxu0 0
        %5533 = vmatpush1.bf16.msra.mxu0 0
        %5534 = vmatprep.subr.bf16.mxu0 0
        %5535 = vmatpush1.bf16.msra.mxu0 0
        %5536 = vmatprep.subr.bf16.mxu0 0
        %5537 = vmatpush1.bf16.msra.mxu0 0
        %5538 = vmatprep.subr.bf16.mxu0 0
        %5539 = vmatpush1.bf16.msra.mxu0 0
        %5540 = vmatprep.subr.bf16.mxu0 0
        %5541 = vmatpush1.bf16.msra.mxu0 0
        %5542 = vmatprep.subr.bf16.mxu0 0
        %5543 = vmatpush1.bf16.msra.mxu0 0
        %5544 = vmatprep.subr.bf16.mxu0 0
        %5545 = vmatpush1.bf16.msra.mxu0 0
        %5546 = vmatprep.subr.bf16.mxu0 0
        %5547 = vmatpush1.bf16.msra.mxu0 0
        %5548 = vmatprep.subr.bf16.mxu0 0
        %5549 = vmatpush1.bf16.msra.mxu0 0
        %5550 = vmatprep.subr.bf16.mxu0 0
        %5551 = vmatpush1.bf16.msra.mxu0 0
        %5552 = vmatprep.subr.bf16.mxu0 0
        %5553 = vmatpush1.bf16.msra.mxu0 0
        %5554 = vmatprep.subr.bf16.mxu0 0
        %5555 = vmatpush1.bf16.msra.mxu0 0
        %5556 = vmatprep.mubr.bf16.mxu0 0
        %5557 = vmatmul.mubr.bf16.gmra.mrb[0].mxu0 %v5501
        %v5558 = vpop.f32.mrb[0].mxu0
        %v5559 = vadd.f32 0.0, %v5558
        %v5560 = vpop.f32.mrb[0].mxu0
        %v5561 = vpop.f32.mrb[0].mxu0
        %v5562 = vadd.f32 0.0, %v5561
        %v5563 = vpop.f32.mrb[0].mxu0
        %5564 = vmatprep.mubr.bf16.mxu0 0
        %5565 = vmatmul.mubr.bf16.gmra.mrb[0].mxu0 %v5504
        %v5566 = vpop.f32.mrb[0].mxu0
        %v5567 = vadd.f32 0.0, %v5566
        %v5568 = vpop.f32.mrb[0].mxu0
        %v5569 = vpop.f32.mrb[0].mxu0
        %v5570 = vadd.f32 0.0, %v5569
        %v5571 = vpop.f32.mrb[0].mxu0
        %5572 = vmatprep.mubr.bf16.mxu0 0
        %5573 = vmatmul.mubr.bf16.gmra.mrb[0].mxu0 %v5507
        %v5574 = vpop.f32.mrb[0].mxu0
        %v5575 = vadd.f32 0.0, %v5574
        %v5576 = vpop.f32.mrb[0].mxu0
        %v5577 = vpop.f32.mrb[0].mxu0
        %v5578 = vadd.f32 0.0, %v5577
        %v5579 = vpop.f32.mrb[0].mxu0
        %5580 = vmatprep.mubr.bf16.mxu0 0
        %5581 = vmatmul.mubr.bf16.gmra.mrb[0].mxu0 %v5510
        %v5582 = vpop.f32.mrb[0].mxu0
        %v5583 = vadd.f32 0.0, %v5582
        %v5584 = vpop.f32.mrb[0].mxu0
        %v5585 = vpop.f32.mrb[0].mxu0
        %v5586 = vadd.f32 0.0, %v5585
        %v5587 = vpop.f32.mrb[0].mxu0
        %5588 = vmatprep.mubr.bf16.mxu0 0
        %5589 = vmatmul.mubr.bf16.gmra.mrb[0].mxu0 %v5513
        %v5590 = vpop.f32.mrb[0].mxu0
        %v5591 = vadd.f32 0.0, %v5590
        %v5592 = vpop.f32.mrb[0].mxu0
        %v5593 = vpop.f32.mrb[0].mxu0
        %v5594 = vadd.f32 0.0, %v5593
        %v5595 = vpop.f32.mrb[0].mxu0
        %5596 = vmatprep.mubr.bf16.mxu0 0
        %5597 = vmatmul.mubr.bf16.gmra.mrb[0].mxu0 %v5516
        %v5598 = vpop.f32.mrb[0].mxu0
        %v5599 = vadd.f32 0.0, %v5598
        %v5600 = vpop.f32.mrb[0].mxu0
        %v5601 = vpop.f32.mrb[0].mxu0
        %v5602 = vadd.f32 0.0, %v5601
        %v5603 = vpop.f32.mrb[0].mxu0
        %5604 = vmatprep.mubr.bf16.mxu0 0
        %5605 = vmatmul.mubr.bf16.gmra.mrb[0].mxu0 %v5519
        %v5606 = vpop.f32.mrb[0].mxu0
        %v5607 = vadd.f32 0.0, %v5606
        %v5608 = vpop.f32.mrb[0].mxu0
        %v5609 = vpop.f32.mrb[0].mxu0
        %v5610 = vadd.f32 0.0, %v5609
        %v5611 = vpop.f32.mrb[0].mxu0
        %5612 = vmatprep.mubr.bf16.mxu0 0
        %5613 = vmatmul.mubr.bf16.gmra.mrb[0].mxu0 %v5522
        %v5614 = vpop.f32.mrb[0].mxu0
        %v5615 = vadd.f32 0.0, %v5614
        %v5616 = vpop.f32.mrb[0].mxu0
        %v5617 = vpop.f32.mrb[0].mxu0
        %v5618 = vadd.f32 0.0, %v5617
        %v5619 = vpop.f32.mrb[0].mxu0
        %5620 = vdwg.mxu0
        %v5621 = vadd.f32 %v5370, %v5559
        %v5622 = vadd.f32 %v5371, %v5562
        %v5623 = vadd.f32 %v5372, %v5567
        %v5624 = vadd.f32 %v5373, %v5570
        %v5625 = vadd.f32 %v5374, %v5575
        %v5626 = vadd.f32 %v5375, %v5578
        %v5627 = vadd.f32 %v5376, %v5583
        %v5628 = vadd.f32 %v5377, %v5586
        %v5629 = vadd.f32 %v5378, %v5591
        %v5630 = vadd.f32 %v5379, %v5594
        %v5631 = vadd.f32 %v5380, %v5599
        %v5632 = vadd.f32 %v5381, %v5602
        %v5633 = vadd.f32 %v5382, %v5607
        %v5634 = vadd.f32 %v5383, %v5610
        %v5635 = vadd.f32 %v5384, %v5615
        %v5636 = vadd.f32 %v5385, %v5618
        %v5637 = vxor.u32 %v5621, 2147483648
        %v5638 = vxor.u32 %v5622, 2147483648
        %v5639 = vxor.u32 %v5623, 2147483648
        %v5640 = vxor.u32 %v5624, 2147483648
        %v5641 = vxor.u32 %v5625, 2147483648
        %v5642 = vxor.u32 %v5626, 2147483648
        %v5643 = vxor.u32 %v5627, 2147483648
        %v5644 = vxor.u32 %v5628, 2147483648
        %v5645 = vxor.u32 %v5629, 2147483648
        %v5646 = vxor.u32 %v5630, 2147483648
        %v5647 = vxor.u32 %v5631, 2147483648
        %v5648 = vxor.u32 %v5632, 2147483648
        %v5649 = vxor.u32 %v5633, 2147483648
        %v5650 = vxor.u32 %v5634, 2147483648
        %v5651 = vxor.u32 %v5635, 2147483648
        %v5652 = vxor.u32 %v5636, 2147483648
        %v5653 = vmul.f32 %v5637, 1.442695
        %v5654 = vpow.pop %v5653
        %v5655 = vmul.f32 %v5638, 1.442695
        %v5656 = vpow.pop %v5655
        %v5657 = vmul.f32 %v5639, 1.442695
        %v5658 = vpow.pop %v5657
        %v5659 = vmul.f32 %v5640, 1.442695
        %v5660 = vpow.pop %v5659
        %v5661 = vmul.f32 %v5641, 1.442695
        %v5662 = vpow.pop %v5661
        %v5663 = vmul.f32 %v5642, 1.442695
        %v5664 = vpow.pop %v5663
        %v5665 = vmul.f32 %v5643, 1.442695
        %v5666 = vpow.pop %v5665
        %v5667 = vmul.f32 %v5644, 1.442695
        %v5668 = vpow.pop %v5667
        %v5669 = vmul.f32 %v5645, 1.442695
        %v5670 = vpow.pop %v5669
        %v5671 = vmul.f32 %v5646, 1.442695
        %v5672 = vpow.pop %v5671
        %v5673 = vmul.f32 %v5647, 1.442695
        %v5674 = vpow.pop %v5673
        %v5675 = vmul.f32 %v5648, 1.442695
        %v5676 = vpow.pop %v5675
        %v5677 = vmul.f32 %v5649, 1.442695
        %v5678 = vpow.pop %v5677
        %v5679 = vmul.f32 %v5650, 1.442695
        %v5680 = vpow.pop %v5679
        %v5681 = vmul.f32 %v5651, 1.442695
        %v5682 = vpow.pop %v5681
        %v5683 = vmul.f32 %v5652, 1.442695
        %v5684 = vpow.pop %v5683
        %v5685 = vadd.f32 %v5654, 1.0
        %v5686 = vadd.f32 %v5656, 1.0
        %v5687 = vadd.f32 %v5658, 1.0
        %v5688 = vadd.f32 %v5660, 1.0
        %v5689 = vadd.f32 %v5662, 1.0
        %v5690 = vadd.f32 %v5664, 1.0
        %v5691 = vadd.f32 %v5666, 1.0
        %v5692 = vadd.f32 %v5668, 1.0
        %v5693 = vadd.f32 %v5670, 1.0
        %v5694 = vadd.f32 %v5672, 1.0
        %v5695 = vadd.f32 %v5674, 1.0
        %v5696 = vadd.f32 %v5676, 1.0
        %v5697 = vadd.f32 %v5678, 1.0
        %v5698 = vadd.f32 %v5680, 1.0
        %v5699 = vadd.f32 %v5682, 1.0
        %v5700 = vadd.f32 %v5684, 1.0
        %v5701 = vrcp.pop %v5685
        %v5702 = vmul.f32 1.0, %v5701
        %v5703 = vrcp.pop %v5686
        %v5704 = vmul.f32 1.0, %v5703
        %v5705 = vrcp.pop %v5687
        %v5706 = vmul.f32 1.0, %v5705
        %v5707 = vrcp.pop %v5688
        %v5708 = vmul.f32 1.0, %v5707
        %v5709 = vrcp.pop %v5689
        %v5710 = vmul.f32 1.0, %v5709
        %v5711 = vrcp.pop %v5690
        %v5712 = vmul.f32 1.0, %v5711
        %v5713 = vrcp.pop %v5691
        %v5714 = vmul.f32 1.0, %v5713
        %v5715 = vrcp.pop %v5692
        %v5716 = vmul.f32 1.0, %v5715
        %v5717 = vrcp.pop %v5693
        %v5718 = vmul.f32 1.0, %v5717
        %v5719 = vrcp.pop %v5694
        %v5720 = vmul.f32 1.0, %v5719
        %v5721 = vrcp.pop %v5695
        %v5722 = vmul.f32 1.0, %v5721
        %v5723 = vrcp.pop %v5696
        %v5724 = vmul.f32 1.0, %v5723
        %v5725 = vrcp.pop %v5697
        %v5726 = vmul.f32 1.0, %v5725
        %v5727 = vrcp.pop %v5698
        %v5728 = vmul.f32 1.0, %v5727
        %v5729 = vrcp.pop %v5699
        %v5730 = vmul.f32 1.0, %v5729
        %v5731 = vrcp.pop %v5700
        %v5732 = vmul.f32 1.0, %v5731
        %5749 = vrot.lane.b32.xlu0 %v4936, 64
        %v5750 = vpop.permute.xlu0 %5749
        %5751 = vrot.lane.b32.xlu0 %v4937, 64
        %v5752 = vpop.permute.xlu0 %5751
        %5753 = vrot.lane.b32.xlu0 %v4938, 64
        %v5754 = vpop.permute.xlu0 %5753
        %5755 = vrot.lane.b32.xlu0 %v4939, 64
        %v5756 = vpop.permute.xlu0 %5755
        %5757 = vrot.lane.b32.xlu0 %v4940, 64
        %v5758 = vpop.permute.xlu0 %5757
        %5759 = vrot.lane.b32.xlu0 %v4941, 64
        %v5760 = vpop.permute.xlu0 %5759
        %5761 = vrot.lane.b32.xlu0 %v4942, 64
        %v5762 = vpop.permute.xlu0 %5761
        %5763 = vrot.lane.b32.xlu0 %v4943, 64
        %v5764 = vpop.permute.xlu0 %5763
        %5765 = vrot.lane.b32.xlu0 %v4944, 64
        %v5766 = vpop.permute.xlu0 %5765
        %5767 = vrot.lane.b32.xlu0 %v4945, 64
        %v5768 = vpop.permute.xlu0 %5767
        %5769 = vrot.lane.b32.xlu0 %v4946, 64
        %v5770 = vpop.permute.xlu0 %5769
        %5771 = vrot.lane.b32.xlu0 %v4947, 64
        %v5772 = vpop.permute.xlu0 %5771
        %5773 = vrot.lane.b32.xlu0 %v4948, 64
        %v5774 = vpop.permute.xlu0 %5773
        %5775 = vrot.lane.b32.xlu0 %v4949, 64
        %v5776 = vpop.permute.xlu0 %5775
        %5777 = vrot.lane.b32.xlu0 %v4950, 64
        %v5778 = vpop.permute.xlu0 %5777
        %5779 = vrot.lane.b32.xlu0 %v4951, 64
        %v5780 = vpop.permute.xlu0 %5779
        %v5797 = vsub.f32 %v5621, %v5750
        %v5798 = vsub.f32 %v5622, %v5752
        %v5799 = vsub.f32 %v5623, %v5754
        %v5800 = vsub.f32 %v5624, %v5756
        %v5801 = vsub.f32 %v5625, %v5758
        %v5802 = vsub.f32 %v5626, %v5760
        %v5803 = vsub.f32 %v5627, %v5762
        %v5804 = vsub.f32 %v5628, %v5764
        %v5805 = vsub.f32 %v5629, %v5766
        %v5806 = vsub.f32 %v5630, %v5768
        %v5807 = vsub.f32 %v5631, %v5770
        %v5808 = vsub.f32 %v5632, %v5772
        %v5809 = vsub.f32 %v5633, %v5774
        %v5810 = vsub.f32 %v5634, %v5776
        %v5811 = vsub.f32 %v5635, %v5778
        %v5812 = vsub.f32 %v5636, %v5780
        %5829 = vrot.lane.b32.xlu0 %v5797, 64
        %v5830 = vpop.permute.xlu0 %5829
        %5831 = vrot.lane.b32.xlu0 %v5798, 64
        %v5832 = vpop.permute.xlu0 %5831
        %5833 = vrot.lane.b32.xlu0 %v5799, 64
        %v5834 = vpop.permute.xlu0 %5833
        %5835 = vrot.lane.b32.xlu0 %v5800, 64
        %v5836 = vpop.permute.xlu0 %5835
        %5837 = vrot.lane.b32.xlu0 %v5801, 64
        %v5838 = vpop.permute.xlu0 %5837
        %5839 = vrot.lane.b32.xlu0 %v5802, 64
        %v5840 = vpop.permute.xlu0 %5839
        %5841 = vrot.lane.b32.xlu0 %v5803, 64
        %v5842 = vpop.permute.xlu0 %5841
        %5843 = vrot.lane.b32.xlu0 %v5804, 64
        %v5844 = vpop.permute.xlu0 %5843
        %5845 = vrot.lane.b32.xlu0 %v5805, 64
        %v5846 = vpop.permute.xlu0 %5845
        %5847 = vrot.lane.b32.xlu0 %v5806, 64
        %v5848 = vpop.permute.xlu0 %5847
        %5849 = vrot.lane.b32.xlu0 %v5807, 64
        %v5850 = vpop.permute.xlu0 %5849
        %5851 = vrot.lane.b32.xlu0 %v5808, 64
        %v5852 = vpop.permute.xlu0 %5851
        %5853 = vrot.lane.b32.xlu0 %v5809, 64
        %v5854 = vpop.permute.xlu0 %5853
        %5855 = vrot.lane.b32.xlu0 %v5810, 64
        %v5856 = vpop.permute.xlu0 %5855
        %5857 = vrot.lane.b32.xlu0 %v5811, 64
        %v5858 = vpop.permute.xlu0 %5857
        %5859 = vrot.lane.b32.xlu0 %v5812, 64
        %v5860 = vpop.permute.xlu0 %5859
        %v5877 = vmul.f32 %v5702, %v5830
        %v5878 = vmul.f32 %v5704, %v5832
        %v5879 = vmul.f32 %v5706, %v5834
        %v5880 = vmul.f32 %v5708, %v5836
        %v5881 = vmul.f32 %v5710, %v5838
        %v5882 = vmul.f32 %v5712, %v5840
        %v5883 = vmul.f32 %v5714, %v5842
        %v5884 = vmul.f32 %v5716, %v5844
        %v5885 = vmul.f32 %v5718, %v5846
        %v5886 = vmul.f32 %v5720, %v5848
        %v5887 = vmul.f32 %v5722, %v5850
        %v5888 = vmul.f32 %v5724, %v5852
        %v5889 = vmul.f32 %v5726, %v5854
        %v5890 = vmul.f32 %v5728, %v5856
        %v5891 = vmul.f32 %v5730, %v5858
        %v5892 = vmul.f32 %v5732, %v5860
        %v5893 = vadd.f32 %v4936, %v5877
        %v5894 = vadd.f32 %v4937, %v5878
        %v5895 = vadd.f32 %v4938, %v5879
        %v5896 = vadd.f32 %v4939, %v5880
        %v5897 = vadd.f32 %v4940, %v5881
        %v5898 = vadd.f32 %v4941, %v5882
        %v5899 = vadd.f32 %v4942, %v5883
        %v5900 = vadd.f32 %v4943, %v5884
        %v5901 = vadd.f32 %v4944, %v5885
        %v5902 = vadd.f32 %v4945, %v5886
        %v5903 = vadd.f32 %v4946, %v5887
        %v5904 = vadd.f32 %v4947, %v5888
        %v5905 = vadd.f32 %v4948, %v5889
        %v5906 = vadd.f32 %v4949, %v5890
        %v5907 = vadd.f32 %v4950, %v5891
        %v5908 = vadd.f32 %v4951, %v5892
        %v5909 = vld [vmem:[%s8 + $0x5] sm:$0x1]
        %v5910 = vpack.c.bf16 %v5894, %v5893
        %v5911 = vpack.c.bf16 %v5896, %v5895
        %v5912 = vpack.c.bf16 %v5898, %v5897
        %v5913 = vpack.c.bf16 %v5900, %v5899
        %v5914 = vpack.c.bf16 %v5902, %v5901
        %v5915 = vpack.c.bf16 %v5904, %v5903
        %v5916 = vpack.c.bf16 %v5906, %v5905
        %v5917 = vpack.c.bf16 %v5908, %v5907
        %5918 = vst.msk [vmem:[#allocation2 + $0x10] sm:$0xff] %vm867, %v5910
        %5919 = vst.msk [vmem:[#allocation2 + $0x18] sm:$0xff] %vm867, %v5911
        %5920 = vst.msk [vmem:[#allocation2 + $0x20] sm:$0xff] %vm867, %v5912
        %5921 = vst.msk [vmem:[#allocation2 + $0x28] sm:$0xff] %vm867, %v5913
        %5922 = vst.msk [vmem:[#allocation2 + $0x50] sm:$0xff] %vm867, %v5914
        %5923 = vst.msk [vmem:[#allocation2 + $0x58] sm:$0xff] %vm867, %v5915
        %5924 = vst.msk [vmem:[#allocation2 + $0x60] sm:$0xff] %vm867, %v5916
        %5925 = vst.msk [vmem:[#allocation2 + $0x68] sm:$0xff] %vm867, %v5917
        %v5926 = vld [vmem:[#allocation2 + $0x8] sm:$0xc0]
        %v5927 = vld [vmem:[#allocation2 + $0x10] sm:$0xff]
        %v5928 = vld [vmem:[#allocation2 + $0x18] sm:$0xff]
        %v5929 = vld [vmem:[#allocation2 + $0x20] sm:$0xff]
        %v5930 = vld [vmem:[#allocation2 + $0x28] sm:$0x7f]
        %v5931 = vld [vmem:[#allocation2 + $0x48] sm:$0xc0]
        %v5932 = vld [vmem:[#allocation2 + $0x50] sm:$0xff]
        %v5933 = vld [vmem:[#allocation2 + $0x58] sm:$0xff]
        %v5934 = vld [vmem:[#allocation2 + $0x60] sm:$0xff]
        %v5935 = vld [vmem:[#allocation2 + $0x68] sm:$0x7f]
        %v5937 = vshrl.u32 %v5926, 16
        %v5939 = vrot.slane %v5937, 6
        %v5940 = vshll.u32 %v5926, 16
        %v5942 = vrot.slane %v5940, 7
        %v5943 = vor.u32 %v5939, %v5942
        %v5945 = vshrl.u32 %v5927, 16
        %v5947 = vrot.slane %v5945, 6
        %v5948 = vshll.u32 %v5927, 16
        %v5950 = vrot.slane %v5948, 7
        %v5951 = vor.u32 %v5947, %v5950
        %v5952 = vsel %vm1982, %v5943, %v5951
        %v5954 = vshrl.u32 %v5928, 16
        %v5956 = vrot.slane %v5954, 6
        %v5957 = vshll.u32 %v5928, 16
        %v5959 = vrot.slane %v5957, 7
        %v5960 = vor.u32 %v5956, %v5959
        %v5961 = vsel %vm1982, %v5951, %v5960
        %v5963 = vshrl.u32 %v5929, 16
        %v5965 = vrot.slane %v5963, 6
        %v5966 = vshll.u32 %v5929, 16
        %v5968 = vrot.slane %v5966, 7
        %v5969 = vor.u32 %v5965, %v5968
        %v5970 = vsel %vm1982, %v5960, %v5969
        %v5972 = vshrl.u32 %v5930, 16
        %v5974 = vrot.slane %v5972, 6
        %v5975 = vshll.u32 %v5930, 16
        %v5977 = vrot.slane %v5975, 7
        %v5978 = vor.u32 %v5974, %v5977
        %v5979 = vsel %vm1982, %v5969, %v5978
        %v5981 = vshrl.u32 %v5931, 16
        %v5983 = vrot.slane %v5981, 6
        %v5984 = vshll.u32 %v5931, 16
        %v5986 = vrot.slane %v5984, 7
        %v5987 = vor.u32 %v5983, %v5986
        %v5989 = vshrl.u32 %v5932, 16
        %v5991 = vrot.slane %v5989, 6
        %v5992 = vshll.u32 %v5932, 16
        %v5994 = vrot.slane %v5992, 7
        %v5995 = vor.u32 %v5991, %v5994
        %v5996 = vsel %vm1982, %v5987, %v5995
        %v5998 = vshrl.u32 %v5933, 16
        %v6000 = vrot.slane %v5998, 6
        %v6001 = vshll.u32 %v5933, 16
        %v6003 = vrot.slane %v6001, 7
        %v6004 = vor.u32 %v6000, %v6003
        %v6005 = vsel %vm1982, %v5995, %v6004
        %v6007 = vshrl.u32 %v5934, 16
        %v6009 = vrot.slane %v6007, 6
        %v6010 = vshll.u32 %v5934, 16
        %v6012 = vrot.slane %v6010, 7
        %v6013 = vor.u32 %v6009, %v6012
        %v6014 = vsel %vm1982, %v6004, %v6013
        %v6016 = vshrl.u32 %v5935, 16
        %v6018 = vrot.slane %v6016, 6
        %v6019 = vshll.u32 %v5935, 16
        %v6021 = vrot.slane %v6019, 7
        %v6022 = vor.u32 %v6018, %v6021
        %v6023 = vsel %vm1982, %v6013, %v6022
        %s6024 = scalar_lea.vmem [#allocation3], 480
        %v6025 = vld [vmem:[%s6024] sm:$0xf]
        %v6026 = vld [vmem:[%s6024 + $0x4] sm:$0xf]
        %v6027 = vld [vmem:[%s6024 + $0x8] sm:$0xf]
        %v6028 = vld [vmem:[%s6024 + $0xc] sm:$0xf]
        %v6029 = vld [vmem:[%s6024 + $0x10] sm:$0xf]
        %v6030 = vld [vmem:[%s6024 + $0x14] sm:$0xf]
        %v6031 = vld [vmem:[%s6024 + $0x18] sm:$0xf]
        %v6032 = vld [vmem:[%s6024 + $0x1c] sm:$0xf]
        %v6041 = vunpack.c.l.b16 %v6025
        %v6042 = vunpack.c.l.b16 %v6026
        %v6043 = vunpack.c.l.b16 %v6027
        %v6044 = vunpack.c.l.b16 %v6028
        %v6045 = vunpack.c.l.b16 %v6029
        %v6046 = vunpack.c.l.b16 %v6030
        %v6047 = vunpack.c.l.b16 %v6031
        %v6048 = vunpack.c.l.b16 %v6032
        %v6049 = vpack.c.b16 %v6042, %v6041
        %v6050 = vpack.c.b16 %v6044, %v6043
        %v6051 = vpack.c.b16 %v6046, %v6045
        %v6052 = vpack.c.b16 %v6048, %v6047
        %v6058 = vsel %vm867, %v5952, 0
        %v6061 = vsel %vm867, %v5961, 0
        %v6064 = vsel %vm867, %v5970, 0
        %v6067 = vsel %vm867, %v5979, 0
        %v6070 = vsel %vm867, %v5996, 0
        %v6073 = vsel %vm867, %v6005, 0
        %v6076 = vsel %vm867, %v6014, 0
        %v6079 = vsel %vm867, %v6023, 0
        %6081 = vmatprep.subr.bf16.mxu0 0
        %6082 = vmatpush1.bf16.msra.mxu0 %v6049
        %6083 = vmatprep.subr.bf16.mxu0 0
        %6084 = vmatpush1.bf16.msra.mxu0 %v6050
        %6085 = vmatprep.subr.bf16.mxu0 0
        %6086 = vmatpush1.bf16.msra.mxu0 %v6051
        %6087 = vmatprep.subr.bf16.mxu0 0
        %6088 = vmatpush1.bf16.msra.mxu0 %v6052
        %6089 = vmatprep.subr.bf16.mxu0 0
        %6090 = vmatpush1.bf16.msra.mxu0 0
        %6091 = vmatprep.subr.bf16.mxu0 0
        %6092 = vmatpush1.bf16.msra.mxu0 0
        %6093 = vmatprep.subr.bf16.mxu0 0
        %6094 = vmatpush1.bf16.msra.mxu0 0
        %6095 = vmatprep.subr.bf16.mxu0 0
        %6096 = vmatpush1.bf16.msra.mxu0 0
        %6097 = vmatprep.subr.bf16.mxu0 0
        %6098 = vmatpush1.bf16.msra.mxu0 0
        %6099 = vmatprep.subr.bf16.mxu0 0
        %6100 = vmatpush1.bf16.msra.mxu0 0
        %6101 = vmatprep.subr.bf16.mxu0 0
        %6102 = vmatpush1.bf16.msra.mxu0 0
        %6103 = vmatprep.subr.bf16.mxu0 0
        %6104 = vmatpush1.bf16.msra.mxu0 0
        %6105 = vmatprep.subr.bf16.mxu0 0
        %6106 = vmatpush1.bf16.msra.mxu0 0
        %6107 = vmatprep.subr.bf16.mxu0 0
        %6108 = vmatpush1.bf16.msra.mxu0 0
        %6109 = vmatprep.subr.bf16.mxu0 0
        %6110 = vmatpush1.bf16.msra.mxu0 0
        %6111 = vmatprep.subr.bf16.mxu0 0
        %6112 = vmatpush1.bf16.msra.mxu0 0
        %6113 = vmatprep.mubr.bf16.mxu0 0
        %6114 = vmatmul.mubr.bf16.gmra.mrb[0].mxu0 %v6058
        %v6115 = vpop.f32.mrb[0].mxu0
        %v6116 = vadd.f32 0.0, %v6115
        %v6117 = vpop.f32.mrb[0].mxu0
        %v6118 = vpop.f32.mrb[0].mxu0
        %v6119 = vadd.f32 0.0, %v6118
        %v6120 = vpop.f32.mrb[0].mxu0
        %6121 = vmatprep.mubr.bf16.mxu0 0
        %6122 = vmatmul.mubr.bf16.gmra.mrb[0].mxu0 %v6061
        %v6123 = vpop.f32.mrb[0].mxu0
        %v6124 = vadd.f32 0.0, %v6123
        %v6125 = vpop.f32.mrb[0].mxu0
        %v6126 = vpop.f32.mrb[0].mxu0
        %v6127 = vadd.f32 0.0, %v6126
        %v6128 = vpop.f32.mrb[0].mxu0
        %6129 = vmatprep.mubr.bf16.mxu0 0
        %6130 = vmatmul.mubr.bf16.gmra.mrb[0].mxu0 %v6064
        %v6131 = vpop.f32.mrb[0].mxu0
        %v6132 = vadd.f32 0.0, %v6131
        %v6133 = vpop.f32.mrb[0].mxu0
        %v6134 = vpop.f32.mrb[0].mxu0
        %v6135 = vadd.f32 0.0, %v6134
        %v6136 = vpop.f32.mrb[0].mxu0
        %6137 = vmatprep.mubr.bf16.mxu0 0
        %6138 = vmatmul.mubr.bf16.gmra.mrb[0].mxu0 %v6067
        %v6139 = vpop.f32.mrb[0].mxu0
        %v6140 = vadd.f32 0.0, %v6139
        %v6141 = vpop.f32.mrb[0].mxu0
        %v6142 = vpop.f32.mrb[0].mxu0
        %v6143 = vadd.f32 0.0, %v6142
        %v6144 = vpop.f32.mrb[0].mxu0
        %6145 = vmatprep.mubr.bf16.mxu0 0
        %6146 = vmatmul.mubr.bf16.gmra.mrb[0].mxu0 %v6070
        %v6147 = vpop.f32.mrb[0].mxu0
        %v6148 = vadd.f32 0.0, %v6147
        %v6149 = vpop.f32.mrb[0].mxu0
        %v6150 = vpop.f32.mrb[0].mxu0
        %v6151 = vadd.f32 0.0, %v6150
        %v6152 = vpop.f32.mrb[0].mxu0
        %6153 = vmatprep.mubr.bf16.mxu0 0
        %6154 = vmatmul.mubr.bf16.gmra.mrb[0].mxu0 %v6073
        %v6155 = vpop.f32.mrb[0].mxu0
        %v6156 = vadd.f32 0.0, %v6155
        %v6157 = vpop.f32.mrb[0].mxu0
        %v6158 = vpop.f32.mrb[0].mxu0
        %v6159 = vadd.f32 0.0, %v6158
        %v6160 = vpop.f32.mrb[0].mxu0
        %6161 = vmatprep.mubr.bf16.mxu0 0
        %6162 = vmatmul.mubr.bf16.gmra.mrb[0].mxu0 %v6076
        %v6163 = vpop.f32.mrb[0].mxu0
        %v6164 = vadd.f32 0.0, %v6163
        %v6165 = vpop.f32.mrb[0].mxu0
        %v6166 = vpop.f32.mrb[0].mxu0
        %v6167 = vadd.f32 0.0, %v6166
        %v6168 = vpop.f32.mrb[0].mxu0
        %6169 = vmatprep.mubr.bf16.mxu0 0
        %6170 = vmatmul.mubr.bf16.gmra.mrb[0].mxu0 %v6079
        %v6171 = vpop.f32.mrb[0].mxu0
        %v6172 = vadd.f32 0.0, %v6171
        %v6173 = vpop.f32.mrb[0].mxu0
        %v6174 = vpop.f32.mrb[0].mxu0
        %v6175 = vadd.f32 0.0, %v6174
        %v6176 = vpop.f32.mrb[0].mxu0
        %6177 = vdwg.mxu0
        %v6178 = vlaneseq
        %v6179 = vshrl.u32 %v6178, 7
        %v6180 = vsub.s32 0, %v6179
        %v6181 = vrot.slane %v5909, %v6180
        %v6182 = vadd.f32 %v6181, %v6116
        %v6183 = vadd.f32 %v6181, %v6119
        %v6184 = vadd.f32 %v6181, %v6124
        %v6185 = vadd.f32 %v6181, %v6127
        %v6186 = vadd.f32 %v6181, %v6132
        %v6187 = vadd.f32 %v6181, %v6135
        %v6188 = vadd.f32 %v6181, %v6140
        %v6189 = vadd.f32 %v6181, %v6143
        %v6190 = vadd.f32 %v6181, %v6148
        %v6191 = vadd.f32 %v6181, %v6151
        %v6192 = vadd.f32 %v6181, %v6156
        %v6193 = vadd.f32 %v6181, %v6159
        %v6194 = vadd.f32 %v6181, %v6164
        %v6195 = vadd.f32 %v6181, %v6167
        %v6196 = vadd.f32 %v6181, %v6172
        %v6197 = vadd.f32 %v6181, %v6175
        %v6198 = vld [vmem:[#allocation2 + $0x28] sm:$0xff]
        %v6199 = vld [vmem:[#allocation2 + $0x68] sm:$0xff]
        %v6200 = vld [vmem:[%s6024 + $0x20] sm:$0xf]
        %v6201 = vld [vmem:[%s6024 + $0x24] sm:$0xf]
        %v6202 = vld [vmem:[%s6024 + $0x28] sm:$0xf]
        %v6203 = vld [vmem:[%s6024 + $0x2c] sm:$0xf]
        %v6204 = vld [vmem:[%s6024 + $0x30] sm:$0xf]
        %v6205 = vld [vmem:[%s6024 + $0x34] sm:$0xf]
        %v6206 = vld [vmem:[%s6024 + $0x38] sm:$0xf]
        %v6207 = vld [vmem:[%s6024 + $0x3c] sm:$0xf]
        %v6216 = vunpack.c.l.b16 %v6200
        %v6217 = vunpack.c.l.b16 %v6201
        %v6218 = vunpack.c.l.b16 %v6202
        %v6219 = vunpack.c.l.b16 %v6203
        %v6220 = vunpack.c.l.b16 %v6204
        %v6221 = vunpack.c.l.b16 %v6205
        %v6222 = vunpack.c.l.b16 %v6206
        %v6223 = vunpack.c.l.b16 %v6207
        %v6224 = vpack.c.b16 %v6217, %v6216
        %v6225 = vpack.c.b16 %v6219, %v6218
        %v6226 = vpack.c.b16 %v6221, %v6220
        %v6227 = vpack.c.b16 %v6223, %v6222
        %v6232 = vsel %vm867, %v5927, 0
        %v6234 = vsel %vm867, %v5928, 0
        %v6236 = vsel %vm867, %v5929, 0
        %v6239 = vsel %vm867, %v6198, 0
        %v6241 = vsel %vm867, %v5932, 0
        %v6243 = vsel %vm867, %v5933, 0
        %v6245 = vsel %vm867, %v5934, 0
        %v6248 = vsel %vm867, %v6199, 0
        %6250 = vmatprep.subr.bf16.mxu0 0
        %6251 = vmatpush1.bf16.msra.mxu0 %v6224
        %6252 = vmatprep.subr.bf16.mxu0 0
        %6253 = vmatpush1.bf16.msra.mxu0 %v6225
        %6254 = vmatprep.subr.bf16.mxu0 0
        %6255 = vmatpush1.bf16.msra.mxu0 %v6226
        %6256 = vmatprep.subr.bf16.mxu0 0
        %6257 = vmatpush1.bf16.msra.mxu0 %v6227
        %6258 = vmatprep.subr.bf16.mxu0 0
        %6259 = vmatpush1.bf16.msra.mxu0 0
        %6260 = vmatprep.subr.bf16.mxu0 0
        %6261 = vmatpush1.bf16.msra.mxu0 0
        %6262 = vmatprep.subr.bf16.mxu0 0
        %6263 = vmatpush1.bf16.msra.mxu0 0
        %6264 = vmatprep.subr.bf16.mxu0 0
        %6265 = vmatpush1.bf16.msra.mxu0 0
        %6266 = vmatprep.subr.bf16.mxu0 0
        %6267 = vmatpush1.bf16.msra.mxu0 0
        %6268 = vmatprep.subr.bf16.mxu0 0
        %6269 = vmatpush1.bf16.msra.mxu0 0
        %6270 = vmatprep.subr.bf16.mxu0 0
        %6271 = vmatpush1.bf16.msra.mxu0 0
        %6272 = vmatprep.subr.bf16.mxu0 0
        %6273 = vmatpush1.bf16.msra.mxu0 0
        %6274 = vmatprep.subr.bf16.mxu0 0
        %6275 = vmatpush1.bf16.msra.mxu0 0
        %6276 = vmatprep.subr.bf16.mxu0 0
        %6277 = vmatpush1.bf16.msra.mxu0 0
        %6278 = vmatprep.subr.bf16.mxu0 0
        %6279 = vmatpush1.bf16.msra.mxu0 0
        %6280 = vmatprep.subr.bf16.mxu0 0
        %6281 = vmatpush1.bf16.msra.mxu0 0
        %6282 = vmatprep.mubr.bf16.mxu0 0
        %6283 = vmatmul.mubr.bf16.gmra.mrb[0].mxu0 %v6232
        %v6284 = vpop.f32.mrb[0].mxu0
        %v6285 = vadd.f32 0.0, %v6284
        %v6286 = vpop.f32.mrb[0].mxu0
        %v6287 = vpop.f32.mrb[0].mxu0
        %v6288 = vadd.f32 0.0, %v6287
        %v6289 = vpop.f32.mrb[0].mxu0
        %6290 = vmatprep.mubr.bf16.mxu0 0
        %6291 = vmatmul.mubr.bf16.gmra.mrb[0].mxu0 %v6234
        %v6292 = vpop.f32.mrb[0].mxu0
        %v6293 = vadd.f32 0.0, %v6292
        %v6294 = vpop.f32.mrb[0].mxu0
        %v6295 = vpop.f32.mrb[0].mxu0
        %v6296 = vadd.f32 0.0, %v6295
        %v6297 = vpop.f32.mrb[0].mxu0
        %6298 = vmatprep.mubr.bf16.mxu0 0
        %6299 = vmatmul.mubr.bf16.gmra.mrb[0].mxu0 %v6236
        %v6300 = vpop.f32.mrb[0].mxu0
        %v6301 = vadd.f32 0.0, %v6300
        %v6302 = vpop.f32.mrb[0].mxu0
        %v6303 = vpop.f32.mrb[0].mxu0
        %v6304 = vadd.f32 0.0, %v6303
        %v6305 = vpop.f32.mrb[0].mxu0
        %6306 = vmatprep.mubr.bf16.mxu0 0
        %6307 = vmatmul.mubr.bf16.gmra.mrb[0].mxu0 %v6239
        %v6308 = vpop.f32.mrb[0].mxu0
        %v6309 = vadd.f32 0.0, %v6308
        %v6310 = vpop.f32.mrb[0].mxu0
        %v6311 = vpop.f32.mrb[0].mxu0
        %v6312 = vadd.f32 0.0, %v6311
        %v6313 = vpop.f32.mrb[0].mxu0
        %6314 = vmatprep.mubr.bf16.mxu0 0
        %6315 = vmatmul.mubr.bf16.gmra.mrb[0].mxu0 %v6241
        %v6316 = vpop.f32.mrb[0].mxu0
        %v6317 = vadd.f32 0.0, %v6316
        %v6318 = vpop.f32.mrb[0].mxu0
        %v6319 = vpop.f32.mrb[0].mxu0
        %v6320 = vadd.f32 0.0, %v6319
        %v6321 = vpop.f32.mrb[0].mxu0
        %6322 = vmatprep.mubr.bf16.mxu0 0
        %6323 = vmatmul.mubr.bf16.gmra.mrb[0].mxu0 %v6243
        %v6324 = vpop.f32.mrb[0].mxu0
        %v6325 = vadd.f32 0.0, %v6324
        %v6326 = vpop.f32.mrb[0].mxu0
        %v6327 = vpop.f32.mrb[0].mxu0
        %v6328 = vadd.f32 0.0, %v6327
        %v6329 = vpop.f32.mrb[0].mxu0
        %6330 = vmatprep.mubr.bf16.mxu0 0
        %6331 = vmatmul.mubr.bf16.gmra.mrb[0].mxu0 %v6245
        %v6332 = vpop.f32.mrb[0].mxu0
        %v6333 = vadd.f32 0.0, %v6332
        %v6334 = vpop.f32.mrb[0].mxu0
        %v6335 = vpop.f32.mrb[0].mxu0
        %v6336 = vadd.f32 0.0, %v6335
        %v6337 = vpop.f32.mrb[0].mxu0
        %6338 = vmatprep.mubr.bf16.mxu0 0
        %6339 = vmatmul.mubr.bf16.gmra.mrb[0].mxu0 %v6248
        %v6340 = vpop.f32.mrb[0].mxu0
        %v6341 = vadd.f32 0.0, %v6340
        %v6342 = vpop.f32.mrb[0].mxu0
        %v6343 = vpop.f32.mrb[0].mxu0
        %v6344 = vadd.f32 0.0, %v6343
        %v6345 = vpop.f32.mrb[0].mxu0
        %6346 = vdwg.mxu0
        %v6347 = vadd.f32 %v6182, %v6285
        %v6348 = vadd.f32 %v6183, %v6288
        %v6349 = vadd.f32 %v6184, %v6293
        %v6350 = vadd.f32 %v6185, %v6296
        %v6351 = vadd.f32 %v6186, %v6301
        %v6352 = vadd.f32 %v6187, %v6304
        %v6353 = vadd.f32 %v6188, %v6309
        %v6354 = vadd.f32 %v6189, %v6312
        %v6355 = vadd.f32 %v6190, %v6317
        %v6356 = vadd.f32 %v6191, %v6320
        %v6357 = vadd.f32 %v6192, %v6325
        %v6358 = vadd.f32 %v6193, %v6328
        %v6359 = vadd.f32 %v6194, %v6333
        %v6360 = vadd.f32 %v6195, %v6336
        %v6361 = vadd.f32 %v6196, %v6341
        %v6362 = vadd.f32 %v6197, %v6344
        %v6363 = vld [vmem:[#allocation2 + $0x10] sm:$0xfe]
        %v6364 = vld [vmem:[#allocation2 + $0x18] sm:$0xff]
        %v6365 = vld [vmem:[#allocation2 + $0x20] sm:$0xff]
        %v6366 = vld [vmem:[#allocation2 + $0x28] sm:$0xff]
        %v6367 = vld [vmem:[#allocation2 + $0x30] sm:$0x3]
        %v6368 = vld [vmem:[#allocation2 + $0x50] sm:$0xfe]
        %v6369 = vld [vmem:[#allocation2 + $0x58] sm:$0xff]
        %v6370 = vld [vmem:[#allocation2 + $0x60] sm:$0xff]
        %v6371 = vld [vmem:[#allocation2 + $0x68] sm:$0xff]
        %v6372 = vld [vmem:[#allocation2 + $0x70] sm:$0x3]
        %v6374 = vshrl.u32 %v6363, 16
        %v6376 = vrot.slane %v6374, 1
        %v6377 = vshll.u32 %v6363, 16
        %v6379 = vrot.slane %v6377, 2
        %v6380 = vor.u32 %v6376, %v6379
        %v6382 = vshrl.u32 %v6364, 16
        %v6384 = vrot.slane %v6382, 1
        %v6385 = vshll.u32 %v6364, 16
        %v6387 = vrot.slane %v6385, 2
        %v6388 = vor.u32 %v6384, %v6387
        %v6389 = vsel %vm2420, %v6380, %v6388
        %v6391 = vshrl.u32 %v6365, 16
        %v6393 = vrot.slane %v6391, 1
        %v6394 = vshll.u32 %v6365, 16
        %v6396 = vrot.slane %v6394, 2
        %v6397 = vor.u32 %v6393, %v6396
        %v6398 = vsel %vm2420, %v6388, %v6397
        %v6400 = vshrl.u32 %v6366, 16
        %v6402 = vrot.slane %v6400, 1
        %v6403 = vshll.u32 %v6366, 16
        %v6405 = vrot.slane %v6403, 2
        %v6406 = vor.u32 %v6402, %v6405
        %v6407 = vsel %vm2420, %v6397, %v6406
        %v6409 = vshrl.u32 %v6367, 16
        %v6411 = vrot.slane %v6409, 1
        %v6412 = vshll.u32 %v6367, 16
        %v6414 = vrot.slane %v6412, 2
        %v6415 = vor.u32 %v6411, %v6414
        %v6416 = vsel %vm2420, %v6406, %v6415
        %v6418 = vshrl.u32 %v6368, 16
        %v6420 = vrot.slane %v6418, 1
        %v6421 = vshll.u32 %v6368, 16
        %v6423 = vrot.slane %v6421, 2
        %v6424 = vor.u32 %v6420, %v6423
        %v6426 = vshrl.u32 %v6369, 16
        %v6428 = vrot.slane %v6426, 1
        %v6429 = vshll.u32 %v6369, 16
        %v6431 = vrot.slane %v6429, 2
        %v6432 = vor.u32 %v6428, %v6431
        %v6433 = vsel %vm2420, %v6424, %v6432
        %v6435 = vshrl.u32 %v6370, 16
        %v6437 = vrot.slane %v6435, 1
        %v6438 = vshll.u32 %v6370, 16
        %v6440 = vrot.slane %v6438, 2
        %v6441 = vor.u32 %v6437, %v6440
        %v6442 = vsel %vm2420, %v6432, %v6441
        %v6444 = vshrl.u32 %v6371, 16
        %v6446 = vrot.slane %v6444, 1
        %v6447 = vshll.u32 %v6371, 16
        %v6449 = vrot.slane %v6447, 2
        %v6450 = vor.u32 %v6446, %v6449
        %v6451 = vsel %vm2420, %v6441, %v6450
        %v6453 = vshrl.u32 %v6372, 16
        %v6455 = vrot.slane %v6453, 1
        %v6456 = vshll.u32 %v6372, 16
        %v6458 = vrot.slane %v6456, 2
        %v6459 = vor.u32 %v6455, %v6458
        %v6460 = vsel %vm2420, %v6450, %v6459
        %v6461 = vld [vmem:[%s6024 + $0x40] sm:$0xf]
        %v6462 = vld [vmem:[%s6024 + $0x44] sm:$0xf]
        %v6463 = vld [vmem:[%s6024 + $0x48] sm:$0xf]
        %v6464 = vld [vmem:[%s6024 + $0x4c] sm:$0xf]
        %v6465 = vld [vmem:[%s6024 + $0x50] sm:$0xf]
        %v6466 = vld [vmem:[%s6024 + $0x54] sm:$0xf]
        %v6467 = vld [vmem:[%s6024 + $0x58] sm:$0xf]
        %v6468 = vld [vmem:[%s6024 + $0x5c] sm:$0xf]
        %v6477 = vunpack.c.l.b16 %v6461
        %v6478 = vunpack.c.l.b16 %v6462
        %v6479 = vunpack.c.l.b16 %v6463
        %v6480 = vunpack.c.l.b16 %v6464
        %v6481 = vunpack.c.l.b16 %v6465
        %v6482 = vunpack.c.l.b16 %v6466
        %v6483 = vunpack.c.l.b16 %v6467
        %v6484 = vunpack.c.l.b16 %v6468
        %v6485 = vpack.c.b16 %v6478, %v6477
        %v6486 = vpack.c.b16 %v6480, %v6479
        %v6487 = vpack.c.b16 %v6482, %v6481
        %v6488 = vpack.c.b16 %v6484, %v6483
        %v6494 = vsel %vm867, %v6389, 0
        %v6497 = vsel %vm867, %v6398, 0
        %v6500 = vsel %vm867, %v6407, 0
        %v6503 = vsel %vm867, %v6416, 0
        %v6506 = vsel %vm867, %v6433, 0
        %v6509 = vsel %vm867, %v6442, 0
        %v6512 = vsel %vm867, %v6451, 0
        %v6515 = vsel %vm867, %v6460, 0
        %6517 = vmatprep.subr.bf16.mxu0 0
        %6518 = vmatpush1.bf16.msra.mxu0 %v6485
        %6519 = vmatprep.subr.bf16.mxu0 0
        %6520 = vmatpush1.bf16.msra.mxu0 %v6486
        %6521 = vmatprep.subr.bf16.mxu0 0
        %6522 = vmatpush1.bf16.msra.mxu0 %v6487
        %6523 = vmatprep.subr.bf16.mxu0 0
        %6524 = vmatpush1.bf16.msra.mxu0 %v6488
        %6525 = vmatprep.subr.bf16.mxu0 0
        %6526 = vmatpush1.bf16.msra.mxu0 0
        %6527 = vmatprep.subr.bf16.mxu0 0
        %6528 = vmatpush1.bf16.msra.mxu0 0
        %6529 = vmatprep.subr.bf16.mxu0 0
        %6530 = vmatpush1.bf16.msra.mxu0 0
        %6531 = vmatprep.subr.bf16.mxu0 0
        %6532 = vmatpush1.bf16.msra.mxu0 0
        %6533 = vmatprep.subr.bf16.mxu0 0
        %6534 = vmatpush1.bf16.msra.mxu0 0
        %6535 = vmatprep.subr.bf16.mxu0 0
        %6536 = vmatpush1.bf16.msra.mxu0 0
        %6537 = vmatprep.subr.bf16.mxu0 0
        %6538 = vmatpush1.bf16.msra.mxu0 0
        %6539 = vmatprep.subr.bf16.mxu0 0
        %6540 = vmatpush1.bf16.msra.mxu0 0
        %6541 = vmatprep.subr.bf16.mxu0 0
        %6542 = vmatpush1.bf16.msra.mxu0 0
        %6543 = vmatprep.subr.bf16.mxu0 0
        %6544 = vmatpush1.bf16.msra.mxu0 0
        %6545 = vmatprep.subr.bf16.mxu0 0
        %6546 = vmatpush1.bf16.msra.mxu0 0
        %6547 = vmatprep.subr.bf16.mxu0 0
        %6548 = vmatpush1.bf16.msra.mxu0 0
        %6549 = vmatprep.mubr.bf16.mxu0 0
        %6550 = vmatmul.mubr.bf16.gmra.mrb[0].mxu0 %v6494
        %v6551 = vpop.f32.mrb[0].mxu0
        %v6552 = vadd.f32 0.0, %v6551
        %v6553 = vpop.f32.mrb[0].mxu0
        %v6554 = vpop.f32.mrb[0].mxu0
        %v6555 = vadd.f32 0.0, %v6554
        %v6556 = vpop.f32.mrb[0].mxu0
        %6557 = vmatprep.mubr.bf16.mxu0 0
        %6558 = vmatmul.mubr.bf16.gmra.mrb[0].mxu0 %v6497
        %v6559 = vpop.f32.mrb[0].mxu0
        %v6560 = vadd.f32 0.0, %v6559
        %v6561 = vpop.f32.mrb[0].mxu0
        %v6562 = vpop.f32.mrb[0].mxu0
        %v6563 = vadd.f32 0.0, %v6562
        %v6564 = vpop.f32.mrb[0].mxu0
        %6565 = vmatprep.mubr.bf16.mxu0 0
        %6566 = vmatmul.mubr.bf16.gmra.mrb[0].mxu0 %v6500
        %v6567 = vpop.f32.mrb[0].mxu0
        %v6568 = vadd.f32 0.0, %v6567
        %v6569 = vpop.f32.mrb[0].mxu0
        %v6570 = vpop.f32.mrb[0].mxu0
        %v6571 = vadd.f32 0.0, %v6570
        %v6572 = vpop.f32.mrb[0].mxu0
        %6573 = vmatprep.mubr.bf16.mxu0 0
        %6574 = vmatmul.mubr.bf16.gmra.mrb[0].mxu0 %v6503
        %v6575 = vpop.f32.mrb[0].mxu0
        %v6576 = vadd.f32 0.0, %v6575
        %v6577 = vpop.f32.mrb[0].mxu0
        %v6578 = vpop.f32.mrb[0].mxu0
        %v6579 = vadd.f32 0.0, %v6578
        %v6580 = vpop.f32.mrb[0].mxu0
        %6581 = vmatprep.mubr.bf16.mxu0 0
        %6582 = vmatmul.mubr.bf16.gmra.mrb[0].mxu0 %v6506
        %v6583 = vpop.f32.mrb[0].mxu0
        %v6584 = vadd.f32 0.0, %v6583
        %v6585 = vpop.f32.mrb[0].mxu0
        %v6586 = vpop.f32.mrb[0].mxu0
        %v6587 = vadd.f32 0.0, %v6586
        %v6588 = vpop.f32.mrb[0].mxu0
        %6589 = vmatprep.mubr.bf16.mxu0 0
        %6590 = vmatmul.mubr.bf16.gmra.mrb[0].mxu0 %v6509
        %v6591 = vpop.f32.mrb[0].mxu0
        %v6592 = vadd.f32 0.0, %v6591
        %v6593 = vpop.f32.mrb[0].mxu0
        %v6594 = vpop.f32.mrb[0].mxu0
        %v6595 = vadd.f32 0.0, %v6594
        %v6596 = vpop.f32.mrb[0].mxu0
        %6597 = vmatprep.mubr.bf16.mxu0 0
        %6598 = vmatmul.mubr.bf16.gmra.mrb[0].mxu0 %v6512
        %v6599 = vpop.f32.mrb[0].mxu0
        %v6600 = vadd.f32 0.0, %v6599
        %v6601 = vpop.f32.mrb[0].mxu0
        %v6602 = vpop.f32.mrb[0].mxu0
        %v6603 = vadd.f32 0.0, %v6602
        %v6604 = vpop.f32.mrb[0].mxu0
        %6605 = vmatprep.mubr.bf16.mxu0 0
        %6606 = vmatmul.mubr.bf16.gmra.mrb[0].mxu0 %v6515
        %v6607 = vpop.f32.mrb[0].mxu0
        %v6608 = vadd.f32 0.0, %v6607
        %v6609 = vpop.f32.mrb[0].mxu0
        %v6610 = vpop.f32.mrb[0].mxu0
        %v6611 = vadd.f32 0.0, %v6610
        %v6612 = vpop.f32.mrb[0].mxu0
        %6613 = vdwg.mxu0
        %v6614 = vadd.f32 %v6347, %v6552
        %v6615 = vadd.f32 %v6348, %v6555
        %v6616 = vadd.f32 %v6349, %v6560
        %v6617 = vadd.f32 %v6350, %v6563
        %v6618 = vadd.f32 %v6351, %v6568
        %v6619 = vadd.f32 %v6352, %v6571
        %v6620 = vadd.f32 %v6353, %v6576
        %v6621 = vadd.f32 %v6354, %v6579
        %v6622 = vadd.f32 %v6355, %v6584
        %v6623 = vadd.f32 %v6356, %v6587
        %v6624 = vadd.f32 %v6357, %v6592
        %v6625 = vadd.f32 %v6358, %v6595
        %v6626 = vadd.f32 %v6359, %v6600
        %v6627 = vadd.f32 %v6360, %v6603
        %v6628 = vadd.f32 %v6361, %v6608
        %v6629 = vadd.f32 %v6362, %v6611
        %v6630 = vxor.u32 %v6614, 2147483648
        %v6631 = vxor.u32 %v6615, 2147483648
        %v6632 = vxor.u32 %v6616, 2147483648
        %v6633 = vxor.u32 %v6617, 2147483648
        %v6634 = vxor.u32 %v6618, 2147483648
        %v6635 = vxor.u32 %v6619, 2147483648
        %v6636 = vxor.u32 %v6620, 2147483648
        %v6637 = vxor.u32 %v6621, 2147483648
        %v6638 = vxor.u32 %v6622, 2147483648
        %v6639 = vxor.u32 %v6623, 2147483648
        %v6640 = vxor.u32 %v6624, 2147483648
        %v6641 = vxor.u32 %v6625, 2147483648
        %v6642 = vxor.u32 %v6626, 2147483648
        %v6643 = vxor.u32 %v6627, 2147483648
        %v6644 = vxor.u32 %v6628, 2147483648
        %v6645 = vxor.u32 %v6629, 2147483648
        %v6646 = vmul.f32 %v6630, 1.442695
        %v6647 = vpow.pop %v6646
        %v6648 = vmul.f32 %v6631, 1.442695
        %v6649 = vpow.pop %v6648
        %v6650 = vmul.f32 %v6632, 1.442695
        %v6651 = vpow.pop %v6650
        %v6652 = vmul.f32 %v6633, 1.442695
        %v6653 = vpow.pop %v6652
        %v6654 = vmul.f32 %v6634, 1.442695
        %v6655 = vpow.pop %v6654
        %v6656 = vmul.f32 %v6635, 1.442695
        %v6657 = vpow.pop %v6656
        %v6658 = vmul.f32 %v6636, 1.442695
        %v6659 = vpow.pop %v6658
        %v6660 = vmul.f32 %v6637, 1.442695
        %v6661 = vpow.pop %v6660
        %v6662 = vmul.f32 %v6638, 1.442695
        %v6663 = vpow.pop %v6662
        %v6664 = vmul.f32 %v6639, 1.442695
        %v6665 = vpow.pop %v6664
        %v6666 = vmul.f32 %v6640, 1.442695
        %v6667 = vpow.pop %v6666
        %v6668 = vmul.f32 %v6641, 1.442695
        %v6669 = vpow.pop %v6668
        %v6670 = vmul.f32 %v6642, 1.442695
        %v6671 = vpow.pop %v6670
        %v6672 = vmul.f32 %v6643, 1.442695
        %v6673 = vpow.pop %v6672
        %v6674 = vmul.f32 %v6644, 1.442695
        %v6675 = vpow.pop %v6674
        %v6676 = vmul.f32 %v6645, 1.442695
        %v6677 = vpow.pop %v6676
        %v6678 = vadd.f32 %v6647, 1.0
        %v6679 = vadd.f32 %v6649, 1.0
        %v6680 = vadd.f32 %v6651, 1.0
        %v6681 = vadd.f32 %v6653, 1.0
        %v6682 = vadd.f32 %v6655, 1.0
        %v6683 = vadd.f32 %v6657, 1.0
        %v6684 = vadd.f32 %v6659, 1.0
        %v6685 = vadd.f32 %v6661, 1.0
        %v6686 = vadd.f32 %v6663, 1.0
        %v6687 = vadd.f32 %v6665, 1.0
        %v6688 = vadd.f32 %v6667, 1.0
        %v6689 = vadd.f32 %v6669, 1.0
        %v6690 = vadd.f32 %v6671, 1.0
        %v6691 = vadd.f32 %v6673, 1.0
        %v6692 = vadd.f32 %v6675, 1.0
        %v6693 = vadd.f32 %v6677, 1.0
        %v6694 = vrcp.pop %v6678
        %v6695 = vmul.f32 1.0, %v6694
        %v6696 = vrcp.pop %v6679
        %v6697 = vmul.f32 1.0, %v6696
        %v6698 = vrcp.pop %v6680
        %v6699 = vmul.f32 1.0, %v6698
        %v6700 = vrcp.pop %v6681
        %v6701 = vmul.f32 1.0, %v6700
        %v6702 = vrcp.pop %v6682
        %v6703 = vmul.f32 1.0, %v6702
        %v6704 = vrcp.pop %v6683
        %v6705 = vmul.f32 1.0, %v6704
        %v6706 = vrcp.pop %v6684
        %v6707 = vmul.f32 1.0, %v6706
        %v6708 = vrcp.pop %v6685
        %v6709 = vmul.f32 1.0, %v6708
        %v6710 = vrcp.pop %v6686
        %v6711 = vmul.f32 1.0, %v6710
        %v6712 = vrcp.pop %v6687
        %v6713 = vmul.f32 1.0, %v6712
        %v6714 = vrcp.pop %v6688
        %v6715 = vmul.f32 1.0, %v6714
        %v6716 = vrcp.pop %v6689
        %v6717 = vmul.f32 1.0, %v6716
        %v6718 = vrcp.pop %v6690
        %v6719 = vmul.f32 1.0, %v6718
        %v6720 = vrcp.pop %v6691
        %v6721 = vmul.f32 1.0, %v6720
        %v6722 = vrcp.pop %v6692
        %v6723 = vmul.f32 1.0, %v6722
        %v6724 = vrcp.pop %v6693
        %v6725 = vmul.f32 1.0, %v6724
        %6742 = vrot.lane.b32.xlu0 %v5893, 64
        %v6743 = vpop.permute.xlu0 %6742
        %6744 = vrot.lane.b32.xlu0 %v5894, 64
        %v6745 = vpop.permute.xlu0 %6744
        %6746 = vrot.lane.b32.xlu0 %v5895, 64
        %v6747 = vpop.permute.xlu0 %6746
        %6748 = vrot.lane.b32.xlu0 %v5896, 64
        %v6749 = vpop.permute.xlu0 %6748
        %6750 = vrot.lane.b32.xlu0 %v5897, 64
        %v6751 = vpop.permute.xlu0 %6750
        %6752 = vrot.lane.b32.xlu0 %v5898, 64
        %v6753 = vpop.permute.xlu0 %6752
        %6754 = vrot.lane.b32.xlu0 %v5899, 64
        %v6755 = vpop.permute.xlu0 %6754
        %6756 = vrot.lane.b32.xlu0 %v5900, 64
        %v6757 = vpop.permute.xlu0 %6756
        %6758 = vrot.lane.b32.xlu0 %v5901, 64
        %v6759 = vpop.permute.xlu0 %6758
        %6760 = vrot.lane.b32.xlu0 %v5902, 64
        %v6761 = vpop.permute.xlu0 %6760
        %6762 = vrot.lane.b32.xlu0 %v5903, 64
        %v6763 = vpop.permute.xlu0 %6762
        %6764 = vrot.lane.b32.xlu0 %v5904, 64
        %v6765 = vpop.permute.xlu0 %6764
        %6766 = vrot.lane.b32.xlu0 %v5905, 64
        %v6767 = vpop.permute.xlu0 %6766
        %6768 = vrot.lane.b32.xlu0 %v5906, 64
        %v6769 = vpop.permute.xlu0 %6768
        %6770 = vrot.lane.b32.xlu0 %v5907, 64
        %v6771 = vpop.permute.xlu0 %6770
        %6772 = vrot.lane.b32.xlu0 %v5908, 64
        %v6773 = vpop.permute.xlu0 %6772
        %v6790 = vsub.f32 %v6614, %v6743
        %v6791 = vsub.f32 %v6615, %v6745
        %v6792 = vsub.f32 %v6616, %v6747
        %v6793 = vsub.f32 %v6617, %v6749
        %v6794 = vsub.f32 %v6618, %v6751
        %v6795 = vsub.f32 %v6619, %v6753
        %v6796 = vsub.f32 %v6620, %v6755
        %v6797 = vsub.f32 %v6621, %v6757
        %v6798 = vsub.f32 %v6622, %v6759
        %v6799 = vsub.f32 %v6623, %v6761
        %v6800 = vsub.f32 %v6624, %v6763
        %v6801 = vsub.f32 %v6625, %v6765
        %v6802 = vsub.f32 %v6626, %v6767
        %v6803 = vsub.f32 %v6627, %v6769
        %v6804 = vsub.f32 %v6628, %v6771
        %v6805 = vsub.f32 %v6629, %v6773
        %6822 = vrot.lane.b32.xlu0 %v6790, 64
        %v6823 = vpop.permute.xlu0 %6822
        %6824 = vrot.lane.b32.xlu0 %v6791, 64
        %v6825 = vpop.permute.xlu0 %6824
        %6826 = vrot.lane.b32.xlu0 %v6792, 64
        %v6827 = vpop.permute.xlu0 %6826
        %6828 = vrot.lane.b32.xlu0 %v6793, 64
        %v6829 = vpop.permute.xlu0 %6828
        %6830 = vrot.lane.b32.xlu0 %v6794, 64
        %v6831 = vpop.permute.xlu0 %6830
        %6832 = vrot.lane.b32.xlu0 %v6795, 64
        %v6833 = vpop.permute.xlu0 %6832
        %6834 = vrot.lane.b32.xlu0 %v6796, 64
        %v6835 = vpop.permute.xlu0 %6834
        %6836 = vrot.lane.b32.xlu0 %v6797, 64
        %v6837 = vpop.permute.xlu0 %6836
        %6838 = vrot.lane.b32.xlu0 %v6798, 64
        %v6839 = vpop.permute.xlu0 %6838
        %6840 = vrot.lane.b32.xlu0 %v6799, 64
        %v6841 = vpop.permute.xlu0 %6840
        %6842 = vrot.lane.b32.xlu0 %v6800, 64
        %v6843 = vpop.permute.xlu0 %6842
        %6844 = vrot.lane.b32.xlu0 %v6801, 64
        %v6845 = vpop.permute.xlu0 %6844
        %6846 = vrot.lane.b32.xlu0 %v6802, 64
        %v6847 = vpop.permute.xlu0 %6846
        %6848 = vrot.lane.b32.xlu0 %v6803, 64
        %v6849 = vpop.permute.xlu0 %6848
        %6850 = vrot.lane.b32.xlu0 %v6804, 64
        %v6851 = vpop.permute.xlu0 %6850
        %6852 = vrot.lane.b32.xlu0 %v6805, 64
        %v6853 = vpop.permute.xlu0 %6852
        %v6870 = vmul.f32 %v6695, %v6823
        %v6871 = vmul.f32 %v6697, %v6825
        %v6872 = vmul.f32 %v6699, %v6827
        %v6873 = vmul.f32 %v6701, %v6829
        %v6874 = vmul.f32 %v6703, %v6831
        %v6875 = vmul.f32 %v6705, %v6833
        %v6876 = vmul.f32 %v6707, %v6835
        %v6877 = vmul.f32 %v6709, %v6837
        %v6878 = vmul.f32 %v6711, %v6839
        %v6879 = vmul.f32 %v6713, %v6841
        %v6880 = vmul.f32 %v6715, %v6843
        %v6881 = vmul.f32 %v6717, %v6845
        %v6882 = vmul.f32 %v6719, %v6847
        %v6883 = vmul.f32 %v6721, %v6849
        %v6884 = vmul.f32 %v6723, %v6851
        %v6885 = vmul.f32 %v6725, %v6853
        %v6886 = vadd.f32 %v5893, %v6870
        %v6887 = vadd.f32 %v5894, %v6871
        %v6888 = vadd.f32 %v5895, %v6872
        %v6889 = vadd.f32 %v5896, %v6873
        %v6890 = vadd.f32 %v5897, %v6874
        %v6891 = vadd.f32 %v5898, %v6875
        %v6892 = vadd.f32 %v5899, %v6876
        %v6893 = vadd.f32 %v5900, %v6877
        %v6894 = vadd.f32 %v5901, %v6878
        %v6895 = vadd.f32 %v5902, %v6879
        %v6896 = vadd.f32 %v5903, %v6880
        %v6897 = vadd.f32 %v5904, %v6881
        %v6898 = vadd.f32 %v5905, %v6882
        %v6899 = vadd.f32 %v5906, %v6883
        %v6900 = vadd.f32 %v5907, %v6884
        %v6901 = vadd.f32 %v5908, %v6885
        %v6902 = vld [vmem:[%s8 + $0x6] sm:$0x1]
        %v6903 = vpack.c.bf16 %v6887, %v6886
        %v6904 = vpack.c.bf16 %v6889, %v6888
        %v6905 = vpack.c.bf16 %v6891, %v6890
        %v6906 = vpack.c.bf16 %v6893, %v6892
        %v6907 = vpack.c.bf16 %v6895, %v6894
        %v6908 = vpack.c.bf16 %v6897, %v6896
        %v6909 = vpack.c.bf16 %v6899, %v6898
        %v6910 = vpack.c.bf16 %v6901, %v6900
        %6911 = vst.msk [vmem:[#allocation2 + $0x10] sm:$0xff] %vm867, %v6903
        %6912 = vst.msk [vmem:[#allocation2 + $0x18] sm:$0xff] %vm867, %v6904
        %6913 = vst.msk [vmem:[#allocation2 + $0x20] sm:$0xff] %vm867, %v6905
        %6914 = vst.msk [vmem:[#allocation2 + $0x28] sm:$0xff] %vm867, %v6906
        %6915 = vst.msk [vmem:[#allocation2 + $0x50] sm:$0xff] %vm867, %v6907
        %6916 = vst.msk [vmem:[#allocation2 + $0x58] sm:$0xff] %vm867, %v6908
        %6917 = vst.msk [vmem:[#allocation2 + $0x60] sm:$0xff] %vm867, %v6909
        %6918 = vst.msk [vmem:[#allocation2 + $0x68] sm:$0xff] %vm867, %v6910
        %v6919 = vld [vmem:[#allocation2 + $0x8] sm:$0xf8]
        %v6920 = vld [vmem:[#allocation2 + $0x10] sm:$0xff]
        %v6921 = vld [vmem:[#allocation2 + $0x18] sm:$0xff]
        %v6922 = vld [vmem:[#allocation2 + $0x20] sm:$0xff]
        %v6923 = vld [vmem:[#allocation2 + $0x28] sm:$0xf]
        %v6924 = vld [vmem:[#allocation2 + $0x48] sm:$0xf8]
        %v6925 = vld [vmem:[#allocation2 + $0x50] sm:$0xff]
        %v6926 = vld [vmem:[#allocation2 + $0x58] sm:$0xff]
        %v6927 = vld [vmem:[#allocation2 + $0x60] sm:$0xff]
        %v6928 = vld [vmem:[#allocation2 + $0x68] sm:$0xf]
        %v6930 = vshrl.u32 %v6919, 16
        %v6932 = vrot.slane %v6930, 3
        %v6933 = vshll.u32 %v6919, 16
        %v6935 = vrot.slane %v6933, 4
        %v6936 = vor.u32 %v6932, %v6935
        %v6938 = vshrl.u32 %v6920, 16
        %v6940 = vrot.slane %v6938, 3
        %v6941 = vshll.u32 %v6920, 16
        %v6943 = vrot.slane %v6941, 4
        %v6944 = vor.u32 %v6940, %v6943
        %v6945 = vsel %vm2977, %v6936, %v6944
        %v6947 = vshrl.u32 %v6921, 16
        %v6949 = vrot.slane %v6947, 3
        %v6950 = vshll.u32 %v6921, 16
        %v6952 = vrot.slane %v6950, 4
        %v6953 = vor.u32 %v6949, %v6952
        %v6954 = vsel %vm2977, %v6944, %v6953
        %v6956 = vshrl.u32 %v6922, 16
        %v6958 = vrot.slane %v6956, 3
        %v6959 = vshll.u32 %v6922, 16
        %v6961 = vrot.slane %v6959, 4
        %v6962 = vor.u32 %v6958, %v6961
        %v6963 = vsel %vm2977, %v6953, %v6962
        %v6965 = vshrl.u32 %v6923, 16
        %v6967 = vrot.slane %v6965, 3
        %v6968 = vshll.u32 %v6923, 16
        %v6970 = vrot.slane %v6968, 4
        %v6971 = vor.u32 %v6967, %v6970
        %v6972 = vsel %vm2977, %v6962, %v6971
        %v6974 = vshrl.u32 %v6924, 16
        %v6976 = vrot.slane %v6974, 3
        %v6977 = vshll.u32 %v6924, 16
        %v6979 = vrot.slane %v6977, 4
        %v6980 = vor.u32 %v6976, %v6979
        %v6982 = vshrl.u32 %v6925, 16
        %v6984 = vrot.slane %v6982, 3
        %v6985 = vshll.u32 %v6925, 16
        %v6987 = vrot.slane %v6985, 4
        %v6988 = vor.u32 %v6984, %v6987
        %v6989 = vsel %vm2977, %v6980, %v6988
        %v6991 = vshrl.u32 %v6926, 16
        %v6993 = vrot.slane %v6991, 3
        %v6994 = vshll.u32 %v6926, 16
        %v6996 = vrot.slane %v6994, 4
        %v6997 = vor.u32 %v6993, %v6996
        %v6998 = vsel %vm2977, %v6988, %v6997
        %v7000 = vshrl.u32 %v6927, 16
        %v7002 = vrot.slane %v7000, 3
        %v7003 = vshll.u32 %v6927, 16
        %v7005 = vrot.slane %v7003, 4
        %v7006 = vor.u32 %v7002, %v7005
        %v7007 = vsel %vm2977, %v6997, %v7006
        %v7009 = vshrl.u32 %v6928, 16
        %v7011 = vrot.slane %v7009, 3
        %v7012 = vshll.u32 %v6928, 16
        %v7014 = vrot.slane %v7012, 4
        %v7015 = vor.u32 %v7011, %v7014
        %v7016 = vsel %vm2977, %v7006, %v7015
        %s7017 = scalar_lea.vmem [#allocation3], 576
        %v7018 = vld [vmem:[%s7017] sm:$0xf]
        %v7019 = vld [vmem:[%s7017 + $0x4] sm:$0xf]
        %v7020 = vld [vmem:[%s7017 + $0x8] sm:$0xf]
        %v7021 = vld [vmem:[%s7017 + $0xc] sm:$0xf]
        %v7022 = vld [vmem:[%s7017 + $0x10] sm:$0xf]
        %v7023 = vld [vmem:[%s7017 + $0x14] sm:$0xf]
        %v7024 = vld [vmem:[%s7017 + $0x18] sm:$0xf]
        %v7025 = vld [vmem:[%s7017 + $0x1c] sm:$0xf]
        %v7034 = vunpack.c.l.b16 %v7018
        %v7035 = vunpack.c.l.b16 %v7019
        %v7036 = vunpack.c.l.b16 %v7020
        %v7037 = vunpack.c.l.b16 %v7021
        %v7038 = vunpack.c.l.b16 %v7022
        %v7039 = vunpack.c.l.b16 %v7023
        %v7040 = vunpack.c.l.b16 %v7024
        %v7041 = vunpack.c.l.b16 %v7025
        %v7042 = vpack.c.b16 %v7035, %v7034
        %v7043 = vpack.c.b16 %v7037, %v7036
        %v7044 = vpack.c.b16 %v7039, %v7038
        %v7045 = vpack.c.b16 %v7041, %v7040
        %v7051 = vsel %vm867, %v6945, 0
        %v7054 = vsel %vm867, %v6954, 0
        %v7057 = vsel %vm867, %v6963, 0
        %v7060 = vsel %vm867, %v6972, 0
        %v7063 = vsel %vm867, %v6989, 0
        %v7066 = vsel %vm867, %v6998, 0
        %v7069 = vsel %vm867, %v7007, 0
        %v7072 = vsel %vm867, %v7016, 0
        %7074 = vmatprep.subr.bf16.mxu0 0
        %7075 = vmatpush1.bf16.msra.mxu0 %v7042
        %7076 = vmatprep.subr.bf16.mxu0 0
        %7077 = vmatpush1.bf16.msra.mxu0 %v7043
        %7078 = vmatprep.subr.bf16.mxu0 0
        %7079 = vmatpush1.bf16.msra.mxu0 %v7044
        %7080 = vmatprep.subr.bf16.mxu0 0
        %7081 = vmatpush1.bf16.msra.mxu0 %v7045
        %7082 = vmatprep.subr.bf16.mxu0 0
        %7083 = vmatpush1.bf16.msra.mxu0 0
        %7084 = vmatprep.subr.bf16.mxu0 0
        %7085 = vmatpush1.bf16.msra.mxu0 0
        %7086 = vmatprep.subr.bf16.mxu0 0
        %7087 = vmatpush1.bf16.msra.mxu0 0
        %7088 = vmatprep.subr.bf16.mxu0 0
        %7089 = vmatpush1.bf16.msra.mxu0 0
        %7090 = vmatprep.subr.bf16.mxu0 0
        %7091 = vmatpush1.bf16.msra.mxu0 0
        %7092 = vmatprep.subr.bf16.mxu0 0
        %7093 = vmatpush1.bf16.msra.mxu0 0
        %7094 = vmatprep.subr.bf16.mxu0 0
        %7095 = vmatpush1.bf16.msra.mxu0 0
        %7096 = vmatprep.subr.bf16.mxu0 0
        %7097 = vmatpush1.bf16.msra.mxu0 0
        %7098 = vmatprep.subr.bf16.mxu0 0
        %7099 = vmatpush1.bf16.msra.mxu0 0
        %7100 = vmatprep.subr.bf16.mxu0 0
        %7101 = vmatpush1.bf16.msra.mxu0 0
        %7102 = vmatprep.subr.bf16.mxu0 0
        %7103 = vmatpush1.bf16.msra.mxu0 0
        %7104 = vmatprep.subr.bf16.mxu0 0
        %7105 = vmatpush1.bf16.msra.mxu0 0
        %7106 = vmatprep.mubr.bf16.mxu0 0
        %7107 = vmatmul.mubr.bf16.gmra.mrb[0].mxu0 %v7051
        %v7108 = vpop.f32.mrb[0].mxu0
        %v7109 = vadd.f32 0.0, %v7108
        %v7110 = vpop.f32.mrb[0].mxu0
        %v7111 = vpop.f32.mrb[0].mxu0
        %v7112 = vadd.f32 0.0, %v7111
        %v7113 = vpop.f32.mrb[0].mxu0
        %7114 = vmatprep.mubr.bf16.mxu0 0
        %7115 = vmatmul.mubr.bf16.gmra.mrb[0].mxu0 %v7054
        %v7116 = vpop.f32.mrb[0].mxu0
        %v7117 = vadd.f32 0.0, %v7116
        %v7118 = vpop.f32.mrb[0].mxu0
        %v7119 = vpop.f32.mrb[0].mxu0
        %v7120 = vadd.f32 0.0, %v7119
        %v7121 = vpop.f32.mrb[0].mxu0
        %7122 = vmatprep.mubr.bf16.mxu0 0
        %7123 = vmatmul.mubr.bf16.gmra.mrb[0].mxu0 %v7057
        %v7124 = vpop.f32.mrb[0].mxu0
        %v7125 = vadd.f32 0.0, %v7124
        %v7126 = vpop.f32.mrb[0].mxu0
        %v7127 = vpop.f32.mrb[0].mxu0
        %v7128 = vadd.f32 0.0, %v7127
        %v7129 = vpop.f32.mrb[0].mxu0
        %7130 = vmatprep.mubr.bf16.mxu0 0
        %7131 = vmatmul.mubr.bf16.gmra.mrb[0].mxu0 %v7060
        %v7132 = vpop.f32.mrb[0].mxu0
        %v7133 = vadd.f32 0.0, %v7132
        %v7134 = vpop.f32.mrb[0].mxu0
        %v7135 = vpop.f32.mrb[0].mxu0
        %v7136 = vadd.f32 0.0, %v7135
        %v7137 = vpop.f32.mrb[0].mxu0
        %7138 = vmatprep.mubr.bf16.mxu0 0
        %7139 = vmatmul.mubr.bf16.gmra.mrb[0].mxu0 %v7063
        %v7140 = vpop.f32.mrb[0].mxu0
        %v7141 = vadd.f32 0.0, %v7140
        %v7142 = vpop.f32.mrb[0].mxu0
        %v7143 = vpop.f32.mrb[0].mxu0
        %v7144 = vadd.f32 0.0, %v7143
        %v7145 = vpop.f32.mrb[0].mxu0
        %7146 = vmatprep.mubr.bf16.mxu0 0
        %7147 = vmatmul.mubr.bf16.gmra.mrb[0].mxu0 %v7066
        %v7148 = vpop.f32.mrb[0].mxu0
        %v7149 = vadd.f32 0.0, %v7148
        %v7150 = vpop.f32.mrb[0].mxu0
        %v7151 = vpop.f32.mrb[0].mxu0
        %v7152 = vadd.f32 0.0, %v7151
        %v7153 = vpop.f32.mrb[0].mxu0
        %7154 = vmatprep.mubr.bf16.mxu0 0
        %7155 = vmatmul.mubr.bf16.gmra.mrb[0].mxu0 %v7069
        %v7156 = vpop.f32.mrb[0].mxu0
        %v7157 = vadd.f32 0.0, %v7156
        %v7158 = vpop.f32.mrb[0].mxu0
        %v7159 = vpop.f32.mrb[0].mxu0
        %v7160 = vadd.f32 0.0, %v7159
        %v7161 = vpop.f32.mrb[0].mxu0
        %7162 = vmatprep.mubr.bf16.mxu0 0
        %7163 = vmatmul.mubr.bf16.gmra.mrb[0].mxu0 %v7072
        %v7164 = vpop.f32.mrb[0].mxu0
        %v7165 = vadd.f32 0.0, %v7164
        %v7166 = vpop.f32.mrb[0].mxu0
        %v7167 = vpop.f32.mrb[0].mxu0
        %v7168 = vadd.f32 0.0, %v7167
        %v7169 = vpop.f32.mrb[0].mxu0
        %7170 = vdwg.mxu0
        %v7171 = vlaneseq
        %v7172 = vshrl.u32 %v7171, 7
        %v7173 = vsub.s32 0, %v7172
        %v7174 = vrot.slane %v6902, %v7173
        %v7175 = vadd.f32 %v7174, %v7109
        %v7176 = vadd.f32 %v7174, %v7112
        %v7177 = vadd.f32 %v7174, %v7117
        %v7178 = vadd.f32 %v7174, %v7120
        %v7179 = vadd.f32 %v7174, %v7125
        %v7180 = vadd.f32 %v7174, %v7128
        %v7181 = vadd.f32 %v7174, %v7133
        %v7182 = vadd.f32 %v7174, %v7136
        %v7183 = vadd.f32 %v7174, %v7141
        %v7184 = vadd.f32 %v7174, %v7144
        %v7185 = vadd.f32 %v7174, %v7149
        %v7186 = vadd.f32 %v7174, %v7152
        %v7187 = vadd.f32 %v7174, %v7157
        %v7188 = vadd.f32 %v7174, %v7160
        %v7189 = vadd.f32 %v7174, %v7165
        %v7190 = vadd.f32 %v7174, %v7168
        %v7191 = vld [vmem:[#allocation2 + $0x28] sm:$0xff]
        %v7192 = vld [vmem:[#allocation2 + $0x68] sm:$0xff]
        %v7193 = vld [vmem:[%s7017 + $0x20] sm:$0xf]
        %v7194 = vld [vmem:[%s7017 + $0x24] sm:$0xf]
        %v7195 = vld [vmem:[%s7017 + $0x28] sm:$0xf]
        %v7196 = vld [vmem:[%s7017 + $0x2c] sm:$0xf]
        %v7197 = vld [vmem:[%s7017 + $0x30] sm:$0xf]
        %v7198 = vld [vmem:[%s7017 + $0x34] sm:$0xf]
        %v7199 = vld [vmem:[%s7017 + $0x38] sm:$0xf]
        %v7200 = vld [vmem:[%s7017 + $0x3c] sm:$0xf]
        %v7209 = vunpack.c.l.b16 %v7193
        %v7210 = vunpack.c.l.b16 %v7194
        %v7211 = vunpack.c.l.b16 %v7195
        %v7212 = vunpack.c.l.b16 %v7196
        %v7213 = vunpack.c.l.b16 %v7197
        %v7214 = vunpack.c.l.b16 %v7198
        %v7215 = vunpack.c.l.b16 %v7199
        %v7216 = vunpack.c.l.b16 %v7200
        %v7217 = vpack.c.b16 %v7210, %v7209
        %v7218 = vpack.c.b16 %v7212, %v7211
        %v7219 = vpack.c.b16 %v7214, %v7213
        %v7220 = vpack.c.b16 %v7216, %v7215
        %v7225 = vsel %vm867, %v6920, 0
        %v7227 = vsel %vm867, %v6921, 0
        %v7229 = vsel %vm867, %v6922, 0
        %v7232 = vsel %vm867, %v7191, 0
        %v7234 = vsel %vm867, %v6925, 0
        %v7236 = vsel %vm867, %v6926, 0
        %v7238 = vsel %vm867, %v6927, 0
        %v7241 = vsel %vm867, %v7192, 0
        %7243 = vmatprep.subr.bf16.mxu0 0
        %7244 = vmatpush1.bf16.msra.mxu0 %v7217
        %7245 = vmatprep.subr.bf16.mxu0 0
        %7246 = vmatpush1.bf16.msra.mxu0 %v7218
        %7247 = vmatprep.subr.bf16.mxu0 0
        %7248 = vmatpush1.bf16.msra.mxu0 %v7219
        %7249 = vmatprep.subr.bf16.mxu0 0
        %7250 = vmatpush1.bf16.msra.mxu0 %v7220
        %7251 = vmatprep.subr.bf16.mxu0 0
        %7252 = vmatpush1.bf16.msra.mxu0 0
        %7253 = vmatprep.subr.bf16.mxu0 0
        %7254 = vmatpush1.bf16.msra.mxu0 0
        %7255 = vmatprep.subr.bf16.mxu0 0
        %7256 = vmatpush1.bf16.msra.mxu0 0
        %7257 = vmatprep.subr.bf16.mxu0 0
        %7258 = vmatpush1.bf16.msra.mxu0 0
        %7259 = vmatprep.subr.bf16.mxu0 0
        %7260 = vmatpush1.bf16.msra.mxu0 0
        %7261 = vmatprep.subr.bf16.mxu0 0
        %7262 = vmatpush1.bf16.msra.mxu0 0
        %7263 = vmatprep.subr.bf16.mxu0 0
        %7264 = vmatpush1.bf16.msra.mxu0 0
        %7265 = vmatprep.subr.bf16.mxu0 0
        %7266 = vmatpush1.bf16.msra.mxu0 0
        %7267 = vmatprep.subr.bf16.mxu0 0
        %7268 = vmatpush1.bf16.msra.mxu0 0
        %7269 = vmatprep.subr.bf16.mxu0 0
        %7270 = vmatpush1.bf16.msra.mxu0 0
        %7271 = vmatprep.subr.bf16.mxu0 0
        %7272 = vmatpush1.bf16.msra.mxu0 0
        %7273 = vmatprep.subr.bf16.mxu0 0
        %7274 = vmatpush1.bf16.msra.mxu0 0
        %7275 = vmatprep.mubr.bf16.mxu0 0
        %7276 = vmatmul.mubr.bf16.gmra.mrb[0].mxu0 %v7225
        %v7277 = vpop.f32.mrb[0].mxu0
        %v7278 = vadd.f32 0.0, %v7277
        %v7279 = vpop.f32.mrb[0].mxu0
        %v7280 = vpop.f32.mrb[0].mxu0
        %v7281 = vadd.f32 0.0, %v7280
        %v7282 = vpop.f32.mrb[0].mxu0
        %7283 = vmatprep.mubr.bf16.mxu0 0
        %7284 = vmatmul.mubr.bf16.gmra.mrb[0].mxu0 %v7227
        %v7285 = vpop.f32.mrb[0].mxu0
        %v7286 = vadd.f32 0.0, %v7285
        %v7287 = vpop.f32.mrb[0].mxu0
        %v7288 = vpop.f32.mrb[0].mxu0
        %v7289 = vadd.f32 0.0, %v7288
        %v7290 = vpop.f32.mrb[0].mxu0
        %7291 = vmatprep.mubr.bf16.mxu0 0
        %7292 = vmatmul.mubr.bf16.gmra.mrb[0].mxu0 %v7229
        %v7293 = vpop.f32.mrb[0].mxu0
        %v7294 = vadd.f32 0.0, %v7293
        %v7295 = vpop.f32.mrb[0].mxu0
        %v7296 = vpop.f32.mrb[0].mxu0
        %v7297 = vadd.f32 0.0, %v7296
        %v7298 = vpop.f32.mrb[0].mxu0
        %7299 = vmatprep.mubr.bf16.mxu0 0
        %7300 = vmatmul.mubr.bf16.gmra.mrb[0].mxu0 %v7232
        %v7301 = vpop.f32.mrb[0].mxu0
        %v7302 = vadd.f32 0.0, %v7301
        %v7303 = vpop.f32.mrb[0].mxu0
        %v7304 = vpop.f32.mrb[0].mxu0
        %v7305 = vadd.f32 0.0, %v7304
        %v7306 = vpop.f32.mrb[0].mxu0
        %7307 = vmatprep.mubr.bf16.mxu0 0
        %7308 = vmatmul.mubr.bf16.gmra.mrb[0].mxu0 %v7234
        %v7309 = vpop.f32.mrb[0].mxu0
        %v7310 = vadd.f32 0.0, %v7309
        %v7311 = vpop.f32.mrb[0].mxu0
        %v7312 = vpop.f32.mrb[0].mxu0
        %v7313 = vadd.f32 0.0, %v7312
        %v7314 = vpop.f32.mrb[0].mxu0
        %7315 = vmatprep.mubr.bf16.mxu0 0
        %7316 = vmatmul.mubr.bf16.gmra.mrb[0].mxu0 %v7236
        %v7317 = vpop.f32.mrb[0].mxu0
        %v7318 = vadd.f32 0.0, %v7317
        %v7319 = vpop.f32.mrb[0].mxu0
        %v7320 = vpop.f32.mrb[0].mxu0
        %v7321 = vadd.f32 0.0, %v7320
        %v7322 = vpop.f32.mrb[0].mxu0
        %7323 = vmatprep.mubr.bf16.mxu0 0
        %7324 = vmatmul.mubr.bf16.gmra.mrb[0].mxu0 %v7238
        %v7325 = vpop.f32.mrb[0].mxu0
        %v7326 = vadd.f32 0.0, %v7325
        %v7327 = vpop.f32.mrb[0].mxu0
        %v7328 = vpop.f32.mrb[0].mxu0
        %v7329 = vadd.f32 0.0, %v7328
        %v7330 = vpop.f32.mrb[0].mxu0
        %7331 = vmatprep.mubr.bf16.mxu0 0
        %7332 = vmatmul.mubr.bf16.gmra.mrb[0].mxu0 %v7241
        %v7333 = vpop.f32.mrb[0].mxu0
        %v7334 = vadd.f32 0.0, %v7333
        %v7335 = vpop.f32.mrb[0].mxu0
        %v7336 = vpop.f32.mrb[0].mxu0
        %v7337 = vadd.f32 0.0, %v7336
        %v7338 = vpop.f32.mrb[0].mxu0
        %7339 = vdwg.mxu0
        %v7340 = vadd.f32 %v7175, %v7278
        %v7341 = vadd.f32 %v7176, %v7281
        %v7342 = vadd.f32 %v7177, %v7286
        %v7343 = vadd.f32 %v7178, %v7289
        %v7344 = vadd.f32 %v7179, %v7294
        %v7345 = vadd.f32 %v7180, %v7297
        %v7346 = vadd.f32 %v7181, %v7302
        %v7347 = vadd.f32 %v7182, %v7305
        %v7348 = vadd.f32 %v7183, %v7310
        %v7349 = vadd.f32 %v7184, %v7313
        %v7350 = vadd.f32 %v7185, %v7318
        %v7351 = vadd.f32 %v7186, %v7321
        %v7352 = vadd.f32 %v7187, %v7326
        %v7353 = vadd.f32 %v7188, %v7329
        %v7354 = vadd.f32 %v7189, %v7334
        %v7355 = vadd.f32 %v7190, %v7337
        %v7356 = vld [vmem:[#allocation2 + $0x10] sm:$0xf0]
        %v7357 = vld [vmem:[#allocation2 + $0x18] sm:$0xff]
        %v7358 = vld [vmem:[#allocation2 + $0x20] sm:$0xff]
        %v7359 = vld [vmem:[#allocation2 + $0x28] sm:$0xff]
        %v7360 = vld [vmem:[#allocation2 + $0x30] sm:$0x1f]
        %v7361 = vld [vmem:[#allocation2 + $0x50] sm:$0xf0]
        %v7362 = vld [vmem:[#allocation2 + $0x58] sm:$0xff]
        %v7363 = vld [vmem:[#allocation2 + $0x60] sm:$0xff]
        %v7364 = vld [vmem:[#allocation2 + $0x68] sm:$0xff]
        %v7365 = vld [vmem:[#allocation2 + $0x70] sm:$0x1f]
        %v7367 = vshrl.u32 %v7356, 16
        %v7369 = vrot.slane %v7367, 4
        %v7370 = vshll.u32 %v7356, 16
        %v7372 = vrot.slane %v7370, 5
        %v7373 = vor.u32 %v7369, %v7372
        %v7375 = vshrl.u32 %v7357, 16
        %v7377 = vrot.slane %v7375, 4
        %v7378 = vshll.u32 %v7357, 16
        %v7380 = vrot.slane %v7378, 5
        %v7381 = vor.u32 %v7377, %v7380
        %v7382 = vsel %vm3415, %v7373, %v7381
        %v7384 = vshrl.u32 %v7358, 16
        %v7386 = vrot.slane %v7384, 4
        %v7387 = vshll.u32 %v7358, 16
        %v7389 = vrot.slane %v7387, 5
        %v7390 = vor.u32 %v7386, %v7389
        %v7391 = vsel %vm3415, %v7381, %v7390
        %v7393 = vshrl.u32 %v7359, 16
        %v7395 = vrot.slane %v7393, 4
        %v7396 = vshll.u32 %v7359, 16
        %v7398 = vrot.slane %v7396, 5
        %v7399 = vor.u32 %v7395, %v7398
        %v7400 = vsel %vm3415, %v7390, %v7399
        %v7402 = vshrl.u32 %v7360, 16
        %v7404 = vrot.slane %v7402, 4
        %v7405 = vshll.u32 %v7360, 16
        %v7407 = vrot.slane %v7405, 5
        %v7408 = vor.u32 %v7404, %v7407
        %v7409 = vsel %vm3415, %v7399, %v7408
        %v7411 = vshrl.u32 %v7361, 16
        %v7413 = vrot.slane %v7411, 4
        %v7414 = vshll.u32 %v7361, 16
        %v7416 = vrot.slane %v7414, 5
        %v7417 = vor.u32 %v7413, %v7416
        %v7419 = vshrl.u32 %v7362, 16
        %v7421 = vrot.slane %v7419, 4
        %v7422 = vshll.u32 %v7362, 16
        %v7424 = vrot.slane %v7422, 5
        %v7425 = vor.u32 %v7421, %v7424
        %v7426 = vsel %vm3415, %v7417, %v7425
        %v7428 = vshrl.u32 %v7363, 16
        %v7430 = vrot.slane %v7428, 4
        %v7431 = vshll.u32 %v7363, 16
        %v7433 = vrot.slane %v7431, 5
        %v7434 = vor.u32 %v7430, %v7433
        %v7435 = vsel %vm3415, %v7425, %v7434
        %v7437 = vshrl.u32 %v7364, 16
        %v7439 = vrot.slane %v7437, 4
        %v7440 = vshll.u32 %v7364, 16
        %v7442 = vrot.slane %v7440, 5
        %v7443 = vor.u32 %v7439, %v7442
        %v7444 = vsel %vm3415, %v7434, %v7443
        %v7446 = vshrl.u32 %v7365, 16
        %v7448 = vrot.slane %v7446, 4
        %v7449 = vshll.u32 %v7365, 16
        %v7451 = vrot.slane %v7449, 5
        %v7452 = vor.u32 %v7448, %v7451
        %v7453 = vsel %vm3415, %v7443, %v7452
        %v7454 = vld [vmem:[%s7017 + $0x40] sm:$0xf]
        %v7455 = vld [vmem:[%s7017 + $0x44] sm:$0xf]
        %v7456 = vld [vmem:[%s7017 + $0x48] sm:$0xf]
        %v7457 = vld [vmem:[%s7017 + $0x4c] sm:$0xf]
        %v7458 = vld [vmem:[%s7017 + $0x50] sm:$0xf]
        %v7459 = vld [vmem:[%s7017 + $0x54] sm:$0xf]
        %v7460 = vld [vmem:[%s7017 + $0x58] sm:$0xf]
        %v7461 = vld [vmem:[%s7017 + $0x5c] sm:$0xf]
        %v7470 = vunpack.c.l.b16 %v7454
        %v7471 = vunpack.c.l.b16 %v7455
        %v7472 = vunpack.c.l.b16 %v7456
        %v7473 = vunpack.c.l.b16 %v7457
        %v7474 = vunpack.c.l.b16 %v7458
        %v7475 = vunpack.c.l.b16 %v7459
        %v7476 = vunpack.c.l.b16 %v7460
        %v7477 = vunpack.c.l.b16 %v7461
        %v7478 = vpack.c.b16 %v7471, %v7470
        %v7479 = vpack.c.b16 %v7473, %v7472
        %v7480 = vpack.c.b16 %v7475, %v7474
        %v7481 = vpack.c.b16 %v7477, %v7476
        %v7487 = vsel %vm867, %v7382, 0
        %v7490 = vsel %vm867, %v7391, 0
        %v7493 = vsel %vm867, %v7400, 0
        %v7496 = vsel %vm867, %v7409, 0
        %v7499 = vsel %vm867, %v7426, 0
        %v7502 = vsel %vm867, %v7435, 0
        %v7505 = vsel %vm867, %v7444, 0
        %v7508 = vsel %vm867, %v7453, 0
        %7510 = vmatprep.subr.bf16.mxu0 0
        %7511 = vmatpush1.bf16.msra.mxu0 %v7478
        %7512 = vmatprep.subr.bf16.mxu0 0
        %7513 = vmatpush1.bf16.msra.mxu0 %v7479
        %7514 = vmatprep.subr.bf16.mxu0 0
        %7515 = vmatpush1.bf16.msra.mxu0 %v7480
        %7516 = vmatprep.subr.bf16.mxu0 0
        %7517 = vmatpush1.bf16.msra.mxu0 %v7481
        %7518 = vmatprep.subr.bf16.mxu0 0
        %7519 = vmatpush1.bf16.msra.mxu0 0
        %7520 = vmatprep.subr.bf16.mxu0 0
        %7521 = vmatpush1.bf16.msra.mxu0 0
        %7522 = vmatprep.subr.bf16.mxu0 0
        %7523 = vmatpush1.bf16.msra.mxu0 0
        %7524 = vmatprep.subr.bf16.mxu0 0
        %7525 = vmatpush1.bf16.msra.mxu0 0
        %7526 = vmatprep.subr.bf16.mxu0 0
        %7527 = vmatpush1.bf16.msra.mxu0 0
        %7528 = vmatprep.subr.bf16.mxu0 0
        %7529 = vmatpush1.bf16.msra.mxu0 0
        %7530 = vmatprep.subr.bf16.mxu0 0
        %7531 = vmatpush1.bf16.msra.mxu0 0
        %7532 = vmatprep.subr.bf16.mxu0 0
        %7533 = vmatpush1.bf16.msra.mxu0 0
        %7534 = vmatprep.subr.bf16.mxu0 0
        %7535 = vmatpush1.bf16.msra.mxu0 0
        %7536 = vmatprep.subr.bf16.mxu0 0
        %7537 = vmatpush1.bf16.msra.mxu0 0
        %7538 = vmatprep.subr.bf16.mxu0 0
        %7539 = vmatpush1.bf16.msra.mxu0 0
        %7540 = vmatprep.subr.bf16.mxu0 0
        %7541 = vmatpush1.bf16.msra.mxu0 0
        %7542 = vmatprep.mubr.bf16.mxu0 0
        %7543 = vmatmul.mubr.bf16.gmra.mrb[0].mxu0 %v7487
        %v7544 = vpop.f32.mrb[0].mxu0
        %v7545 = vadd.f32 0.0, %v7544
        %v7546 = vpop.f32.mrb[0].mxu0
        %v7547 = vpop.f32.mrb[0].mxu0
        %v7548 = vadd.f32 0.0, %v7547
        %v7549 = vpop.f32.mrb[0].mxu0
        %7550 = vmatprep.mubr.bf16.mxu0 0
        %7551 = vmatmul.mubr.bf16.gmra.mrb[0].mxu0 %v7490
        %v7552 = vpop.f32.mrb[0].mxu0
        %v7553 = vadd.f32 0.0, %v7552
        %v7554 = vpop.f32.mrb[0].mxu0
        %v7555 = vpop.f32.mrb[0].mxu0
        %v7556 = vadd.f32 0.0, %v7555
        %v7557 = vpop.f32.mrb[0].mxu0
        %7558 = vmatprep.mubr.bf16.mxu0 0
        %7559 = vmatmul.mubr.bf16.gmra.mrb[0].mxu0 %v7493
        %v7560 = vpop.f32.mrb[0].mxu0
        %v7561 = vadd.f32 0.0, %v7560
        %v7562 = vpop.f32.mrb[0].mxu0
        %v7563 = vpop.f32.mrb[0].mxu0
        %v7564 = vadd.f32 0.0, %v7563
        %v7565 = vpop.f32.mrb[0].mxu0
        %7566 = vmatprep.mubr.bf16.mxu0 0
        %7567 = vmatmul.mubr.bf16.gmra.mrb[0].mxu0 %v7496
        %v7568 = vpop.f32.mrb[0].mxu0
        %v7569 = vadd.f32 0.0, %v7568
        %v7570 = vpop.f32.mrb[0].mxu0
        %v7571 = vpop.f32.mrb[0].mxu0
        %v7572 = vadd.f32 0.0, %v7571
        %v7573 = vpop.f32.mrb[0].mxu0
        %7574 = vmatprep.mubr.bf16.mxu0 0
        %7575 = vmatmul.mubr.bf16.gmra.mrb[0].mxu0 %v7499
        %v7576 = vpop.f32.mrb[0].mxu0
        %v7577 = vadd.f32 0.0, %v7576
        %v7578 = vpop.f32.mrb[0].mxu0
        %v7579 = vpop.f32.mrb[0].mxu0
        %v7580 = vadd.f32 0.0, %v7579
        %v7581 = vpop.f32.mrb[0].mxu0
        %7582 = vmatprep.mubr.bf16.mxu0 0
        %7583 = vmatmul.mubr.bf16.gmra.mrb[0].mxu0 %v7502
        %v7584 = vpop.f32.mrb[0].mxu0
        %v7585 = vadd.f32 0.0, %v7584
        %v7586 = vpop.f32.mrb[0].mxu0
        %v7587 = vpop.f32.mrb[0].mxu0
        %v7588 = vadd.f32 0.0, %v7587
        %v7589 = vpop.f32.mrb[0].mxu0
        %7590 = vmatprep.mubr.bf16.mxu0 0
        %7591 = vmatmul.mubr.bf16.gmra.mrb[0].mxu0 %v7505
        %v7592 = vpop.f32.mrb[0].mxu0
        %v7593 = vadd.f32 0.0, %v7592
        %v7594 = vpop.f32.mrb[0].mxu0
        %v7595 = vpop.f32.mrb[0].mxu0
        %v7596 = vadd.f32 0.0, %v7595
        %v7597 = vpop.f32.mrb[0].mxu0
        %7598 = vmatprep.mubr.bf16.mxu0 0
        %7599 = vmatmul.mubr.bf16.gmra.mrb[0].mxu0 %v7508
        %v7600 = vpop.f32.mrb[0].mxu0
        %v7601 = vadd.f32 0.0, %v7600
        %v7602 = vpop.f32.mrb[0].mxu0
        %v7603 = vpop.f32.mrb[0].mxu0
        %v7604 = vadd.f32 0.0, %v7603
        %v7605 = vpop.f32.mrb[0].mxu0
        %7606 = vdwg.mxu0
        %v7607 = vadd.f32 %v7340, %v7545
        %v7608 = vadd.f32 %v7341, %v7548
        %v7609 = vadd.f32 %v7342, %v7553
        %v7610 = vadd.f32 %v7343, %v7556
        %v7611 = vadd.f32 %v7344, %v7561
        %v7612 = vadd.f32 %v7345, %v7564
        %v7613 = vadd.f32 %v7346, %v7569
        %v7614 = vadd.f32 %v7347, %v7572
        %v7615 = vadd.f32 %v7348, %v7577
        %v7616 = vadd.f32 %v7349, %v7580
        %v7617 = vadd.f32 %v7350, %v7585
        %v7618 = vadd.f32 %v7351, %v7588
        %v7619 = vadd.f32 %v7352, %v7593
        %v7620 = vadd.f32 %v7353, %v7596
        %v7621 = vadd.f32 %v7354, %v7601
        %v7622 = vadd.f32 %v7355, %v7604
        %v7623 = vxor.u32 %v7607, 2147483648
        %v7624 = vxor.u32 %v7608, 2147483648
        %v7625 = vxor.u32 %v7609, 2147483648
        %v7626 = vxor.u32 %v7610, 2147483648
        %v7627 = vxor.u32 %v7611, 2147483648
        %v7628 = vxor.u32 %v7612, 2147483648
        %v7629 = vxor.u32 %v7613, 2147483648
        %v7630 = vxor.u32 %v7614, 2147483648
        %v7631 = vxor.u32 %v7615, 2147483648
        %v7632 = vxor.u32 %v7616, 2147483648
        %v7633 = vxor.u32 %v7617, 2147483648
        %v7634 = vxor.u32 %v7618, 2147483648
        %v7635 = vxor.u32 %v7619, 2147483648
        %v7636 = vxor.u32 %v7620, 2147483648
        %v7637 = vxor.u32 %v7621, 2147483648
        %v7638 = vxor.u32 %v7622, 2147483648
        %v7639 = vmul.f32 %v7623, 1.442695
        %v7640 = vpow.pop %v7639
        %v7641 = vmul.f32 %v7624, 1.442695
        %v7642 = vpow.pop %v7641
        %v7643 = vmul.f32 %v7625, 1.442695
        %v7644 = vpow.pop %v7643
        %v7645 = vmul.f32 %v7626, 1.442695
        %v7646 = vpow.pop %v7645
        %v7647 = vmul.f32 %v7627, 1.442695
        %v7648 = vpow.pop %v7647
        %v7649 = vmul.f32 %v7628, 1.442695
        %v7650 = vpow.pop %v7649
        %v7651 = vmul.f32 %v7629, 1.442695
        %v7652 = vpow.pop %v7651
        %v7653 = vmul.f32 %v7630, 1.442695
        %v7654 = vpow.pop %v7653
        %v7655 = vmul.f32 %v7631, 1.442695
        %v7656 = vpow.pop %v7655
        %v7657 = vmul.f32 %v7632, 1.442695
        %v7658 = vpow.pop %v7657
        %v7659 = vmul.f32 %v7633, 1.442695
        %v7660 = vpow.pop %v7659
        %v7661 = vmul.f32 %v7634, 1.442695
        %v7662 = vpow.pop %v7661
        %v7663 = vmul.f32 %v7635, 1.442695
        %v7664 = vpow.pop %v7663
        %v7665 = vmul.f32 %v7636, 1.442695
        %v7666 = vpow.pop %v7665
        %v7667 = vmul.f32 %v7637, 1.442695
        %v7668 = vpow.pop %v7667
        %v7669 = vmul.f32 %v7638, 1.442695
        %v7670 = vpow.pop %v7669
        %v7671 = vadd.f32 %v7640, 1.0
        %v7672 = vadd.f32 %v7642, 1.0
        %v7673 = vadd.f32 %v7644, 1.0
        %v7674 = vadd.f32 %v7646, 1.0
        %v7675 = vadd.f32 %v7648, 1.0
        %v7676 = vadd.f32 %v7650, 1.0
        %v7677 = vadd.f32 %v7652, 1.0
        %v7678 = vadd.f32 %v7654, 1.0
        %v7679 = vadd.f32 %v7656, 1.0
        %v7680 = vadd.f32 %v7658, 1.0
        %v7681 = vadd.f32 %v7660, 1.0
        %v7682 = vadd.f32 %v7662, 1.0
        %v7683 = vadd.f32 %v7664, 1.0
        %v7684 = vadd.f32 %v7666, 1.0
        %v7685 = vadd.f32 %v7668, 1.0
        %v7686 = vadd.f32 %v7670, 1.0
        %v7687 = vrcp.pop %v7671
        %v7688 = vmul.f32 1.0, %v7687
        %v7689 = vrcp.pop %v7672
        %v7690 = vmul.f32 1.0, %v7689
        %v7691 = vrcp.pop %v7673
        %v7692 = vmul.f32 1.0, %v7691
        %v7693 = vrcp.pop %v7674
        %v7694 = vmul.f32 1.0, %v7693
        %v7695 = vrcp.pop %v7675
        %v7696 = vmul.f32 1.0, %v7695
        %v7697 = vrcp.pop %v7676
        %v7698 = vmul.f32 1.0, %v7697
        %v7699 = vrcp.pop %v7677
        %v7700 = vmul.f32 1.0, %v7699
        %v7701 = vrcp.pop %v7678
        %v7702 = vmul.f32 1.0, %v7701
        %v7703 = vrcp.pop %v7679
        %v7704 = vmul.f32 1.0, %v7703
        %v7705 = vrcp.pop %v7680
        %v7706 = vmul.f32 1.0, %v7705
        %v7707 = vrcp.pop %v7681
        %v7708 = vmul.f32 1.0, %v7707
        %v7709 = vrcp.pop %v7682
        %v7710 = vmul.f32 1.0, %v7709
        %v7711 = vrcp.pop %v7683
        %v7712 = vmul.f32 1.0, %v7711
        %v7713 = vrcp.pop %v7684
        %v7714 = vmul.f32 1.0, %v7713
        %v7715 = vrcp.pop %v7685
        %v7716 = vmul.f32 1.0, %v7715
        %v7717 = vrcp.pop %v7686
        %v7718 = vmul.f32 1.0, %v7717
        %7735 = vrot.lane.b32.xlu0 %v6886, 64
        %v7736 = vpop.permute.xlu0 %7735
        %7737 = vrot.lane.b32.xlu0 %v6887, 64
        %v7738 = vpop.permute.xlu0 %7737
        %7739 = vrot.lane.b32.xlu0 %v6888, 64
        %v7740 = vpop.permute.xlu0 %7739
        %7741 = vrot.lane.b32.xlu0 %v6889, 64
        %v7742 = vpop.permute.xlu0 %7741
        %7743 = vrot.lane.b32.xlu0 %v6890, 64
        %v7744 = vpop.permute.xlu0 %7743
        %7745 = vrot.lane.b32.xlu0 %v6891, 64
        %v7746 = vpop.permute.xlu0 %7745
        %7747 = vrot.lane.b32.xlu0 %v6892, 64
        %v7748 = vpop.permute.xlu0 %7747
        %7749 = vrot.lane.b32.xlu0 %v6893, 64
        %v7750 = vpop.permute.xlu0 %7749
        %7751 = vrot.lane.b32.xlu0 %v6894, 64
        %v7752 = vpop.permute.xlu0 %7751
        %7753 = vrot.lane.b32.xlu0 %v6895, 64
        %v7754 = vpop.permute.xlu0 %7753
        %7755 = vrot.lane.b32.xlu0 %v6896, 64
        %v7756 = vpop.permute.xlu0 %7755
        %7757 = vrot.lane.b32.xlu0 %v6897, 64
        %v7758 = vpop.permute.xlu0 %7757
        %7759 = vrot.lane.b32.xlu0 %v6898, 64
        %v7760 = vpop.permute.xlu0 %7759
        %7761 = vrot.lane.b32.xlu0 %v6899, 64
        %v7762 = vpop.permute.xlu0 %7761
        %7763 = vrot.lane.b32.xlu0 %v6900, 64
        %v7764 = vpop.permute.xlu0 %7763
        %7765 = vrot.lane.b32.xlu0 %v6901, 64
        %v7766 = vpop.permute.xlu0 %7765
        %v7783 = vsub.f32 %v7607, %v7736
        %v7784 = vsub.f32 %v7608, %v7738
        %v7785 = vsub.f32 %v7609, %v7740
        %v7786 = vsub.f32 %v7610, %v7742
        %v7787 = vsub.f32 %v7611, %v7744
        %v7788 = vsub.f32 %v7612, %v7746
        %v7789 = vsub.f32 %v7613, %v7748
        %v7790 = vsub.f32 %v7614, %v7750
        %v7791 = vsub.f32 %v7615, %v7752
        %v7792 = vsub.f32 %v7616, %v7754
        %v7793 = vsub.f32 %v7617, %v7756
        %v7794 = vsub.f32 %v7618, %v7758
        %v7795 = vsub.f32 %v7619, %v7760
        %v7796 = vsub.f32 %v7620, %v7762
        %v7797 = vsub.f32 %v7621, %v7764
        %v7798 = vsub.f32 %v7622, %v7766
        %7815 = vrot.lane.b32.xlu0 %v7783, 64
        %v7816 = vpop.permute.xlu0 %7815
        %7817 = vrot.lane.b32.xlu0 %v7784, 64
        %v7818 = vpop.permute.xlu0 %7817
        %7819 = vrot.lane.b32.xlu0 %v7785, 64
        %v7820 = vpop.permute.xlu0 %7819
        %7821 = vrot.lane.b32.xlu0 %v7786, 64
        %v7822 = vpop.permute.xlu0 %7821
        %7823 = vrot.lane.b32.xlu0 %v7787, 64
        %v7824 = vpop.permute.xlu0 %7823
        %7825 = vrot.lane.b32.xlu0 %v7788, 64
        %v7826 = vpop.permute.xlu0 %7825
        %7827 = vrot.lane.b32.xlu0 %v7789, 64
        %v7828 = vpop.permute.xlu0 %7827
        %7829 = vrot.lane.b32.xlu0 %v7790, 64
        %v7830 = vpop.permute.xlu0 %7829
        %7831 = vrot.lane.b32.xlu0 %v7791, 64
        %v7832 = vpop.permute.xlu0 %7831
        %7833 = vrot.lane.b32.xlu0 %v7792, 64
        %v7834 = vpop.permute.xlu0 %7833
        %7835 = vrot.lane.b32.xlu0 %v7793, 64
        %v7836 = vpop.permute.xlu0 %7835
        %7837 = vrot.lane.b32.xlu0 %v7794, 64
        %v7838 = vpop.permute.xlu0 %7837
        %7839 = vrot.lane.b32.xlu0 %v7795, 64
        %v7840 = vpop.permute.xlu0 %7839
        %7841 = vrot.lane.b32.xlu0 %v7796, 64
        %v7842 = vpop.permute.xlu0 %7841
        %7843 = vrot.lane.b32.xlu0 %v7797, 64
        %v7844 = vpop.permute.xlu0 %7843
        %7845 = vrot.lane.b32.xlu0 %v7798, 64
        %v7846 = vpop.permute.xlu0 %7845
        %v7863 = vmul.f32 %v7688, %v7816
        %v7864 = vmul.f32 %v7690, %v7818
        %v7865 = vmul.f32 %v7692, %v7820
        %v7866 = vmul.f32 %v7694, %v7822
        %v7867 = vmul.f32 %v7696, %v7824
        %v7868 = vmul.f32 %v7698, %v7826
        %v7869 = vmul.f32 %v7700, %v7828
        %v7870 = vmul.f32 %v7702, %v7830
        %v7871 = vmul.f32 %v7704, %v7832
        %v7872 = vmul.f32 %v7706, %v7834
        %v7873 = vmul.f32 %v7708, %v7836
        %v7874 = vmul.f32 %v7710, %v7838
        %v7875 = vmul.f32 %v7712, %v7840
        %v7876 = vmul.f32 %v7714, %v7842
        %v7877 = vmul.f32 %v7716, %v7844
        %v7878 = vmul.f32 %v7718, %v7846
        %v7879 = vadd.f32 %v6886, %v7863
        %v7880 = vadd.f32 %v6887, %v7864
        %v7881 = vadd.f32 %v6888, %v7865
        %v7882 = vadd.f32 %v6889, %v7866
        %v7883 = vadd.f32 %v6890, %v7867
        %v7884 = vadd.f32 %v6891, %v7868
        %v7885 = vadd.f32 %v6892, %v7869
        %v7886 = vadd.f32 %v6893, %v7870
        %v7887 = vadd.f32 %v6894, %v7871
        %v7888 = vadd.f32 %v6895, %v7872
        %v7889 = vadd.f32 %v6896, %v7873
        %v7890 = vadd.f32 %v6897, %v7874
        %v7891 = vadd.f32 %v6898, %v7875
        %v7892 = vadd.f32 %v6899, %v7876
        %v7893 = vadd.f32 %v6900, %v7877
        %v7894 = vadd.f32 %v6901, %v7878
        %v7895 = vld [vmem:[%s8 + $0x7] sm:$0x1]
        %v7896 = vpack.c.bf16 %v7880, %v7879
        %v7897 = vpack.c.bf16 %v7882, %v7881
        %v7898 = vpack.c.bf16 %v7884, %v7883
        %v7899 = vpack.c.bf16 %v7886, %v7885
        %v7900 = vpack.c.bf16 %v7888, %v7887
        %v7901 = vpack.c.bf16 %v7890, %v7889
        %v7902 = vpack.c.bf16 %v7892, %v7891
        %v7903 = vpack.c.bf16 %v7894, %v7893
        %7904 = vst.msk [vmem:[#allocation2 + $0x10] sm:$0xff] %vm867, %v7896
        %7905 = vst.msk [vmem:[#allocation2 + $0x18] sm:$0xff] %vm867, %v7897
        %7906 = vst.msk [vmem:[#allocation2 + $0x20] sm:$0xff] %vm867, %v7898
        %7907 = vst.msk [vmem:[#allocation2 + $0x28] sm:$0xff] %vm867, %v7899
        %7908 = vst.msk [vmem:[#allocation2 + $0x50] sm:$0xff] %vm867, %v7900
        %7909 = vst.msk [vmem:[#allocation2 + $0x58] sm:$0xff] %vm867, %v7901
        %7910 = vst.msk [vmem:[#allocation2 + $0x60] sm:$0xff] %vm867, %v7902
        %7911 = vst.msk [vmem:[#allocation2 + $0x68] sm:$0xff] %vm867, %v7903
        %v7912 = vld [vmem:[#allocation2] sm:$0xfc]
        %v7913 = vld [vmem:[#allocation2 + $0x8] sm:$0xff]
        %v7914 = vld [vmem:[#allocation2 + $0x10] sm:$0xff]
        %v7915 = vld [vmem:[#allocation2 + $0x18] sm:$0xff]
        %v7916 = vld [vmem:[#allocation2 + $0x20] sm:$0x7]
        %v7917 = vld [vmem:[#allocation2 + $0x40] sm:$0xfc]
        %v7918 = vld [vmem:[#allocation2 + $0x48] sm:$0xff]
        %v7919 = vld [vmem:[#allocation2 + $0x50] sm:$0xff]
        %v7920 = vld [vmem:[#allocation2 + $0x58] sm:$0xff]
        %v7921 = vld [vmem:[#allocation2 + $0x60] sm:$0x7]
        %v7923 = vshrl.u32 %v7912, 16
        %v7925 = vrot.slane %v7923, 2
        %v7926 = vshll.u32 %v7912, 16
        %v7928 = vrot.slane %v7926, 3
        %v7929 = vor.u32 %v7925, %v7928
        %v7931 = vshrl.u32 %v7913, 16
        %v7933 = vrot.slane %v7931, 2
        %v7934 = vshll.u32 %v7913, 16
        %v7936 = vrot.slane %v7934, 3
        %v7937 = vor.u32 %v7933, %v7936
        %v7938 = vsel %vm3972, %v7929, %v7937
        %v7940 = vshrl.u32 %v7914, 16
        %v7942 = vrot.slane %v7940, 2
        %v7943 = vshll.u32 %v7914, 16
        %v7945 = vrot.slane %v7943, 3
        %v7946 = vor.u32 %v7942, %v7945
        %v7947 = vsel %vm3972, %v7937, %v7946
        %v7949 = vshrl.u32 %v7915, 16
        %v7951 = vrot.slane %v7949, 2
        %v7952 = vshll.u32 %v7915, 16
        %v7954 = vrot.slane %v7952, 3
        %v7955 = vor.u32 %v7951, %v7954
        %v7956 = vsel %vm3972, %v7946, %v7955
        %v7958 = vshrl.u32 %v7916, 16
        %v7960 = vrot.slane %v7958, 2
        %v7961 = vshll.u32 %v7916, 16
        %v7963 = vrot.slane %v7961, 3
        %v7964 = vor.u32 %v7960, %v7963
        %v7965 = vsel %vm3972, %v7955, %v7964
        %v7967 = vshrl.u32 %v7917, 16
        %v7969 = vrot.slane %v7967, 2
        %v7970 = vshll.u32 %v7917, 16
        %v7972 = vrot.slane %v7970, 3
        %v7973 = vor.u32 %v7969, %v7972
        %v7975 = vshrl.u32 %v7918, 16
        %v7977 = vrot.slane %v7975, 2
        %v7978 = vshll.u32 %v7918, 16
        %v7980 = vrot.slane %v7978, 3
        %v7981 = vor.u32 %v7977, %v7980
        %v7982 = vsel %vm3972, %v7973, %v7981
        %v7984 = vshrl.u32 %v7919, 16
        %v7986 = vrot.slane %v7984, 2
        %v7987 = vshll.u32 %v7919, 16
        %v7989 = vrot.slane %v7987, 3
        %v7990 = vor.u32 %v7986, %v7989
        %v7991 = vsel %vm3972, %v7981, %v7990
        %v7993 = vshrl.u32 %v7920, 16
        %v7995 = vrot.slane %v7993, 2
        %v7996 = vshll.u32 %v7920, 16
        %v7998 = vrot.slane %v7996, 3
        %v7999 = vor.u32 %v7995, %v7998
        %v8000 = vsel %vm3972, %v7990, %v7999
        %v8002 = vshrl.u32 %v7921, 16
        %v8004 = vrot.slane %v8002, 2
        %v8005 = vshll.u32 %v7921, 16
        %v8007 = vrot.slane %v8005, 3
        %v8008 = vor.u32 %v8004, %v8007
        %v8009 = vsel %vm3972, %v7999, %v8008
        %s8010 = scalar_lea.vmem [#allocation3], 672
        %v8011 = vld [vmem:[%s8010] sm:$0xf]
        %v8012 = vld [vmem:[%s8010 + $0x4] sm:$0xf]
        %v8013 = vld [vmem:[%s8010 + $0x8] sm:$0xf]
        %v8014 = vld [vmem:[%s8010 + $0xc] sm:$0xf]
        %v8015 = vld [vmem:[%s8010 + $0x10] sm:$0xf]
        %v8016 = vld [vmem:[%s8010 + $0x14] sm:$0xf]
        %v8017 = vld [vmem:[%s8010 + $0x18] sm:$0xf]
        %v8018 = vld [vmem:[%s8010 + $0x1c] sm:$0xf]
        %v8027 = vunpack.c.l.b16 %v8011
        %v8028 = vunpack.c.l.b16 %v8012
        %v8029 = vunpack.c.l.b16 %v8013
        %v8030 = vunpack.c.l.b16 %v8014
        %v8031 = vunpack.c.l.b16 %v8015
        %v8032 = vunpack.c.l.b16 %v8016
        %v8033 = vunpack.c.l.b16 %v8017
        %v8034 = vunpack.c.l.b16 %v8018
        %v8035 = vpack.c.b16 %v8028, %v8027
        %v8036 = vpack.c.b16 %v8030, %v8029
        %v8037 = vpack.c.b16 %v8032, %v8031
        %v8038 = vpack.c.b16 %v8034, %v8033
        %v8044 = vsel %vm867, %v7938, 0
        %v8047 = vsel %vm867, %v7947, 0
        %v8050 = vsel %vm867, %v7956, 0
        %v8053 = vsel %vm867, %v7965, 0
        %v8056 = vsel %vm867, %v7982, 0
        %v8059 = vsel %vm867, %v7991, 0
        %v8062 = vsel %vm867, %v8000, 0
        %v8065 = vsel %vm867, %v8009, 0
        %8067 = vmatprep.subr.bf16.mxu0 0
        %8068 = vmatpush1.bf16.msra.mxu0 %v8035
        %8069 = vmatprep.subr.bf16.mxu0 0
        %8070 = vmatpush1.bf16.msra.mxu0 %v8036
        %8071 = vmatprep.subr.bf16.mxu0 0
        %8072 = vmatpush1.bf16.msra.mxu0 %v8037
        %8073 = vmatprep.subr.bf16.mxu0 0
        %8074 = vmatpush1.bf16.msra.mxu0 %v8038
        %8075 = vmatprep.subr.bf16.mxu0 0
        %8076 = vmatpush1.bf16.msra.mxu0 0
        %8077 = vmatprep.subr.bf16.mxu0 0
        %8078 = vmatpush1.bf16.msra.mxu0 0
        %8079 = vmatprep.subr.bf16.mxu0 0
        %8080 = vmatpush1.bf16.msra.mxu0 0
        %8081 = vmatprep.subr.bf16.mxu0 0
        %8082 = vmatpush1.bf16.msra.mxu0 0
        %8083 = vmatprep.subr.bf16.mxu0 0
        %8084 = vmatpush1.bf16.msra.mxu0 0
        %8085 = vmatprep.subr.bf16.mxu0 0
        %8086 = vmatpush1.bf16.msra.mxu0 0
        %8087 = vmatprep.subr.bf16.mxu0 0
        %8088 = vmatpush1.bf16.msra.mxu0 0
        %8089 = vmatprep.subr.bf16.mxu0 0
        %8090 = vmatpush1.bf16.msra.mxu0 0
        %8091 = vmatprep.subr.bf16.mxu0 0
        %8092 = vmatpush1.bf16.msra.mxu0 0
        %8093 = vmatprep.subr.bf16.mxu0 0
        %8094 = vmatpush1.bf16.msra.mxu0 0
        %8095 = vmatprep.subr.bf16.mxu0 0
        %8096 = vmatpush1.bf16.msra.mxu0 0
        %8097 = vmatprep.subr.bf16.mxu0 0
        %8098 = vmatpush1.bf16.msra.mxu0 0
        %8099 = vmatprep.mubr.bf16.mxu0 0
        %8100 = vmatmul.mubr.bf16.gmra.mrb[0].mxu0 %v8044
        %v8101 = vpop.f32.mrb[0].mxu0
        %v8102 = vadd.f32 0.0, %v8101
        %v8103 = vpop.f32.mrb[0].mxu0
        %v8104 = vpop.f32.mrb[0].mxu0
        %v8105 = vadd.f32 0.0, %v8104
        %v8106 = vpop.f32.mrb[0].mxu0
        %8107 = vmatprep.mubr.bf16.mxu0 0
        %8108 = vmatmul.mubr.bf16.gmra.mrb[0].mxu0 %v8047
        %v8109 = vpop.f32.mrb[0].mxu0
        %v8110 = vadd.f32 0.0, %v8109
        %v8111 = vpop.f32.mrb[0].mxu0
        %v8112 = vpop.f32.mrb[0].mxu0
        %v8113 = vadd.f32 0.0, %v8112
        %v8114 = vpop.f32.mrb[0].mxu0
        %8115 = vmatprep.mubr.bf16.mxu0 0
        %8116 = vmatmul.mubr.bf16.gmra.mrb[0].mxu0 %v8050
        %v8117 = vpop.f32.mrb[0].mxu0
        %v8118 = vadd.f32 0.0, %v8117
        %v8119 = vpop.f32.mrb[0].mxu0
        %v8120 = vpop.f32.mrb[0].mxu0
        %v8121 = vadd.f32 0.0, %v8120
        %v8122 = vpop.f32.mrb[0].mxu0
        %8123 = vmatprep.mubr.bf16.mxu0 0
        %8124 = vmatmul.mubr.bf16.gmra.mrb[0].mxu0 %v8053
        %v8125 = vpop.f32.mrb[0].mxu0
        %v8126 = vadd.f32 0.0, %v8125
        %v8127 = vpop.f32.mrb[0].mxu0
        %v8128 = vpop.f32.mrb[0].mxu0
        %v8129 = vadd.f32 0.0, %v8128
        %v8130 = vpop.f32.mrb[0].mxu0
        %8131 = vmatprep.mubr.bf16.mxu0 0
        %8132 = vmatmul.mubr.bf16.gmra.mrb[0].mxu0 %v8056
        %v8133 = vpop.f32.mrb[0].mxu0
        %v8134 = vadd.f32 0.0, %v8133
        %v8135 = vpop.f32.mrb[0].mxu0
        %v8136 = vpop.f32.mrb[0].mxu0
        %v8137 = vadd.f32 0.0, %v8136
        %v8138 = vpop.f32.mrb[0].mxu0
        %8139 = vmatprep.mubr.bf16.mxu0 0
        %8140 = vmatmul.mubr.bf16.gmra.mrb[0].mxu0 %v8059
        %v8141 = vpop.f32.mrb[0].mxu0
        %v8142 = vadd.f32 0.0, %v8141
        %v8143 = vpop.f32.mrb[0].mxu0
        %v8144 = vpop.f32.mrb[0].mxu0
        %v8145 = vadd.f32 0.0, %v8144
        %v8146 = vpop.f32.mrb[0].mxu0
        %8147 = vmatprep.mubr.bf16.mxu0 0
        %8148 = vmatmul.mubr.bf16.gmra.mrb[0].mxu0 %v8062
        %v8149 = vpop.f32.mrb[0].mxu0
        %v8150 = vadd.f32 0.0, %v8149
        %v8151 = vpop.f32.mrb[0].mxu0
        %v8152 = vpop.f32.mrb[0].mxu0
        %v8153 = vadd.f32 0.0, %v8152
        %v8154 = vpop.f32.mrb[0].mxu0
        %8155 = vmatprep.mubr.bf16.mxu0 0
        %8156 = vmatmul.mubr.bf16.gmra.mrb[0].mxu0 %v8065
        %v8157 = vpop.f32.mrb[0].mxu0
        %v8158 = vadd.f32 0.0, %v8157
        %v8159 = vpop.f32.mrb[0].mxu0
        %v8160 = vpop.f32.mrb[0].mxu0
        %v8161 = vadd.f32 0.0, %v8160
        %v8162 = vpop.f32.mrb[0].mxu0
        %8163 = vdwg.mxu0
        %v8164 = vlaneseq
        %v8165 = vshrl.u32 %v8164, 7
        %v8166 = vsub.s32 0, %v8165
        %v8167 = vrot.slane %v7895, %v8166
        %v8168 = vadd.f32 %v8167, %v8102
        %v8169 = vadd.f32 %v8167, %v8105
        %v8170 = vadd.f32 %v8167, %v8110
        %v8171 = vadd.f32 %v8167, %v8113
        %v8172 = vadd.f32 %v8167, %v8118
        %v8173 = vadd.f32 %v8167, %v8121
        %v8174 = vadd.f32 %v8167, %v8126
        %v8175 = vadd.f32 %v8167, %v8129
        %v8176 = vadd.f32 %v8167, %v8134
        %v8177 = vadd.f32 %v8167, %v8137
        %v8178 = vadd.f32 %v8167, %v8142
        %v8179 = vadd.f32 %v8167, %v8145
        %v8180 = vadd.f32 %v8167, %v8150
        %v8181 = vadd.f32 %v8167, %v8153
        %v8182 = vadd.f32 %v8167, %v8158
        %v8183 = vadd.f32 %v8167, %v8161
        %v8184 = vld [vmem:[#allocation2 + $0x10] sm:$0xff]
        %v8185 = vld [vmem:[#allocation2 + $0x18] sm:$0xff]
        %v8186 = vld [vmem:[#allocation2 + $0x20] sm:$0xff]
        %v8187 = vld [vmem:[#allocation2 + $0x28] sm:$0xff]
        %v8188 = vld [vmem:[#allocation2 + $0x50] sm:$0xff]
        %v8189 = vld [vmem:[#allocation2 + $0x58] sm:$0xff]
        %v8190 = vld [vmem:[#allocation2 + $0x60] sm:$0xff]
        %v8191 = vld [vmem:[#allocation2 + $0x68] sm:$0xff]
        %v8192 = vld [vmem:[%s8010 + $0x20] sm:$0xf]
        %v8193 = vld [vmem:[%s8010 + $0x24] sm:$0xf]
        %v8194 = vld [vmem:[%s8010 + $0x28] sm:$0xf]
        %v8195 = vld [vmem:[%s8010 + $0x2c] sm:$0xf]
        %v8196 = vld [vmem:[%s8010 + $0x30] sm:$0xf]
        %v8197 = vld [vmem:[%s8010 + $0x34] sm:$0xf]
        %v8198 = vld [vmem:[%s8010 + $0x38] sm:$0xf]
        %v8199 = vld [vmem:[%s8010 + $0x3c] sm:$0xf]
        %v8208 = vunpack.c.l.b16 %v8192
        %v8209 = vunpack.c.l.b16 %v8193
        %v8210 = vunpack.c.l.b16 %v8194
        %v8211 = vunpack.c.l.b16 %v8195
        %v8212 = vunpack.c.l.b16 %v8196
        %v8213 = vunpack.c.l.b16 %v8197
        %v8214 = vunpack.c.l.b16 %v8198
        %v8215 = vunpack.c.l.b16 %v8199
        %v8216 = vpack.c.b16 %v8209, %v8208
        %v8217 = vpack.c.b16 %v8211, %v8210
        %v8218 = vpack.c.b16 %v8213, %v8212
        %v8219 = vpack.c.b16 %v8215, %v8214
        %v8225 = vsel %vm867, %v8184, 0
        %v8228 = vsel %vm867, %v8185, 0
        %v8231 = vsel %vm867, %v8186, 0
        %v8234 = vsel %vm867, %v8187, 0
        %v8237 = vsel %vm867, %v8188, 0
        %v8240 = vsel %vm867, %v8189, 0
        %v8243 = vsel %vm867, %v8190, 0
        %v8246 = vsel %vm867, %v8191, 0
        %8248 = vmatprep.subr.bf16.mxu0 0
        %8249 = vmatpush1.bf16.msra.mxu0 %v8216
        %8250 = vmatprep.subr.bf16.mxu0 0
        %8251 = vmatpush1.bf16.msra.mxu0 %v8217
        %8252 = vmatprep.subr.bf16.mxu0 0
        %8253 = vmatpush1.bf16.msra.mxu0 %v8218
        %8254 = vmatprep.subr.bf16.mxu0 0
        %8255 = vmatpush1.bf16.msra.mxu0 %v8219
        %8256 = vmatprep.subr.bf16.mxu0 0
        %8257 = vmatpush1.bf16.msra.mxu0 0
        %8258 = vmatprep.subr.bf16.mxu0 0
        %8259 = vmatpush1.bf16.msra.mxu0 0
        %8260 = vmatprep.subr.bf16.mxu0 0
        %8261 = vmatpush1.bf16.msra.mxu0 0
        %8262 = vmatprep.subr.bf16.mxu0 0
        %8263 = vmatpush1.bf16.msra.mxu0 0
        %8264 = vmatprep.subr.bf16.mxu0 0
        %8265 = vmatpush1.bf16.msra.mxu0 0
        %8266 = vmatprep.subr.bf16.mxu0 0
        %8267 = vmatpush1.bf16.msra.mxu0 0
        %8268 = vmatprep.subr.bf16.mxu0 0
        %8269 = vmatpush1.bf16.msra.mxu0 0
        %8270 = vmatprep.subr.bf16.mxu0 0
        %8271 = vmatpush1.bf16.msra.mxu0 0
        %8272 = vmatprep.subr.bf16.mxu0 0
        %8273 = vmatpush1.bf16.msra.mxu0 0
        %8274 = vmatprep.subr.bf16.mxu0 0
        %8275 = vmatpush1.bf16.msra.mxu0 0
        %8276 = vmatprep.subr.bf16.mxu0 0
        %8277 = vmatpush1.bf16.msra.mxu0 0
        %8278 = vmatprep.subr.bf16.mxu0 0
        %8279 = vmatpush1.bf16.msra.mxu0 0
        %8280 = vmatprep.mubr.bf16.mxu0 0
        %8281 = vmatmul.mubr.bf16.gmra.mrb[0].mxu0 %v8225
        %v8282 = vpop.f32.mrb[0].mxu0
        %v8283 = vadd.f32 0.0, %v8282
        %v8284 = vpop.f32.mrb[0].mxu0
        %v8285 = vpop.f32.mrb[0].mxu0
        %v8286 = vadd.f32 0.0, %v8285
        %v8287 = vpop.f32.mrb[0].mxu0
        %8288 = vmatprep.mubr.bf16.mxu0 0
        %8289 = vmatmul.mubr.bf16.gmra.mrb[0].mxu0 %v8228
        %v8290 = vpop.f32.mrb[0].mxu0
        %v8291 = vadd.f32 0.0, %v8290
        %v8292 = vpop.f32.mrb[0].mxu0
        %v8293 = vpop.f32.mrb[0].mxu0
        %v8294 = vadd.f32 0.0, %v8293
        %v8295 = vpop.f32.mrb[0].mxu0
        %8296 = vmatprep.mubr.bf16.mxu0 0
        %8297 = vmatmul.mubr.bf16.gmra.mrb[0].mxu0 %v8231
        %v8298 = vpop.f32.mrb[0].mxu0
        %v8299 = vadd.f32 0.0, %v8298
        %v8300 = vpop.f32.mrb[0].mxu0
        %v8301 = vpop.f32.mrb[0].mxu0
        %v8302 = vadd.f32 0.0, %v8301
        %v8303 = vpop.f32.mrb[0].mxu0
        %8304 = vmatprep.mubr.bf16.mxu0 0
        %8305 = vmatmul.mubr.bf16.gmra.mrb[0].mxu0 %v8234
        %v8306 = vpop.f32.mrb[0].mxu0
        %v8307 = vadd.f32 0.0, %v8306
        %v8308 = vpop.f32.mrb[0].mxu0
        %v8309 = vpop.f32.mrb[0].mxu0
        %v8310 = vadd.f32 0.0, %v8309
        %v8311 = vpop.f32.mrb[0].mxu0
        %8312 = vmatprep.mubr.bf16.mxu0 0
        %8313 = vmatmul.mubr.bf16.gmra.mrb[0].mxu0 %v8237
        %v8314 = vpop.f32.mrb[0].mxu0
        %v8315 = vadd.f32 0.0, %v8314
        %v8316 = vpop.f32.mrb[0].mxu0
        %v8317 = vpop.f32.mrb[0].mxu0
        %v8318 = vadd.f32 0.0, %v8317
        %v8319 = vpop.f32.mrb[0].mxu0
        %8320 = vmatprep.mubr.bf16.mxu0 0
        %8321 = vmatmul.mubr.bf16.gmra.mrb[0].mxu0 %v8240
        %v8322 = vpop.f32.mrb[0].mxu0
        %v8323 = vadd.f32 0.0, %v8322
        %v8324 = vpop.f32.mrb[0].mxu0
        %v8325 = vpop.f32.mrb[0].mxu0
        %v8326 = vadd.f32 0.0, %v8325
        %v8327 = vpop.f32.mrb[0].mxu0
        %8328 = vmatprep.mubr.bf16.mxu0 0
        %8329 = vmatmul.mubr.bf16.gmra.mrb[0].mxu0 %v8243
        %v8330 = vpop.f32.mrb[0].mxu0
        %v8331 = vadd.f32 0.0, %v8330
        %v8332 = vpop.f32.mrb[0].mxu0
        %v8333 = vpop.f32.mrb[0].mxu0
        %v8334 = vadd.f32 0.0, %v8333
        %v8335 = vpop.f32.mrb[0].mxu0
        %8336 = vmatprep.mubr.bf16.mxu0 0
        %8337 = vmatmul.mubr.bf16.gmra.mrb[0].mxu0 %v8246
        %v8338 = vpop.f32.mrb[0].mxu0
        %v8339 = vadd.f32 0.0, %v8338
        %v8340 = vpop.f32.mrb[0].mxu0
        %v8341 = vpop.f32.mrb[0].mxu0
        %v8342 = vadd.f32 0.0, %v8341
        %v8343 = vpop.f32.mrb[0].mxu0
        %8344 = vdwg.mxu0
        %v8345 = vadd.f32 %v8168, %v8283
        %v8346 = vadd.f32 %v8169, %v8286
        %v8347 = vadd.f32 %v8170, %v8291
        %v8348 = vadd.f32 %v8171, %v8294
        %v8349 = vadd.f32 %v8172, %v8299
        %v8350 = vadd.f32 %v8173, %v8302
        %v8351 = vadd.f32 %v8174, %v8307
        %v8352 = vadd.f32 %v8175, %v8310
        %v8353 = vadd.f32 %v8176, %v8315
        %v8354 = vadd.f32 %v8177, %v8318
        %v8355 = vadd.f32 %v8178, %v8323
        %v8356 = vadd.f32 %v8179, %v8326
        %v8357 = vadd.f32 %v8180, %v8331
        %v8358 = vadd.f32 %v8181, %v8334
        %v8359 = vadd.f32 %v8182, %v8339
        %v8360 = vadd.f32 %v8183, %v8342
        %v8361 = vld [vmem:[#allocation2 + $0x18] sm:$0xe0]
        %v8362 = vld [vmem:[#allocation2 + $0x20] sm:$0xff]
        %v8363 = vld [vmem:[#allocation2 + $0x28] sm:$0xff]
        %v8364 = vld [vmem:[#allocation2 + $0x30] sm:$0xff]
        %v8365 = vld [vmem:[#allocation2 + $0x38] sm:$0x3f]
        %v8366 = vld [vmem:[#allocation2 + $0x58] sm:$0xe0]
        %v8367 = vld [vmem:[#allocation2 + $0x60] sm:$0xff]
        %v8368 = vld [vmem:[#allocation2 + $0x68] sm:$0xff]
        %v8369 = vld [vmem:[#allocation2 + $0x70] sm:$0xff]
        %v8370 = vld [vmem:[#allocation2 + $0x78] sm:$0x3f]
        %v8372 = vshrl.u32 %v8361, 16
        %v8374 = vrot.slane %v8372, 5
        %v8375 = vshll.u32 %v8361, 16
        %v8377 = vrot.slane %v8375, 6
        %v8378 = vor.u32 %v8374, %v8377
        %v8380 = vshrl.u32 %v8362, 16
        %v8382 = vrot.slane %v8380, 5
        %v8383 = vshll.u32 %v8362, 16
        %v8385 = vrot.slane %v8383, 6
        %v8386 = vor.u32 %v8382, %v8385
        %v8387 = vsel %vm4422, %v8378, %v8386
        %v8389 = vshrl.u32 %v8363, 16
        %v8391 = vrot.slane %v8389, 5
        %v8392 = vshll.u32 %v8363, 16
        %v8394 = vrot.slane %v8392, 6
        %v8395 = vor.u32 %v8391, %v8394
        %v8396 = vsel %vm4422, %v8386, %v8395
        %v8398 = vshrl.u32 %v8364, 16
        %v8400 = vrot.slane %v8398, 5
        %v8401 = vshll.u32 %v8364, 16
        %v8403 = vrot.slane %v8401, 6
        %v8404 = vor.u32 %v8400, %v8403
        %v8405 = vsel %vm4422, %v8395, %v8404
        %v8407 = vshrl.u32 %v8365, 16
        %v8409 = vrot.slane %v8407, 5
        %v8410 = vshll.u32 %v8365, 16
        %v8412 = vrot.slane %v8410, 6
        %v8413 = vor.u32 %v8409, %v8412
        %v8414 = vsel %vm4422, %v8404, %v8413
        %v8416 = vshrl.u32 %v8366, 16
        %v8418 = vrot.slane %v8416, 5
        %v8419 = vshll.u32 %v8366, 16
        %v8421 = vrot.slane %v8419, 6
        %v8422 = vor.u32 %v8418, %v8421
        %v8424 = vshrl.u32 %v8367, 16
        %v8426 = vrot.slane %v8424, 5
        %v8427 = vshll.u32 %v8367, 16
        %v8429 = vrot.slane %v8427, 6
        %v8430 = vor.u32 %v8426, %v8429
        %v8431 = vsel %vm4422, %v8422, %v8430
        %v8433 = vshrl.u32 %v8368, 16
        %v8435 = vrot.slane %v8433, 5
        %v8436 = vshll.u32 %v8368, 16
        %v8438 = vrot.slane %v8436, 6
        %v8439 = vor.u32 %v8435, %v8438
        %v8440 = vsel %vm4422, %v8430, %v8439
        %v8442 = vshrl.u32 %v8369, 16
        %v8444 = vrot.slane %v8442, 5
        %v8445 = vshll.u32 %v8369, 16
        %v8447 = vrot.slane %v8445, 6
        %v8448 = vor.u32 %v8444, %v8447
        %v8449 = vsel %vm4422, %v8439, %v8448
        %v8451 = vshrl.u32 %v8370, 16
        %v8453 = vrot.slane %v8451, 5
        %v8454 = vshll.u32 %v8370, 16
        %v8456 = vrot.slane %v8454, 6
        %v8457 = vor.u32 %v8453, %v8456
        %v8458 = vsel %vm4422, %v8448, %v8457
        %v8459 = vld [vmem:[%s8010 + $0x40] sm:$0xf]
        %v8460 = vld [vmem:[%s8010 + $0x44] sm:$0xf]
        %v8461 = vld [vmem:[%s8010 + $0x48] sm:$0xf]
        %v8462 = vld [vmem:[%s8010 + $0x4c] sm:$0xf]
        %v8463 = vld [vmem:[%s8010 + $0x50] sm:$0xf]
        %v8464 = vld [vmem:[%s8010 + $0x54] sm:$0xf]
        %v8465 = vld [vmem:[%s8010 + $0x58] sm:$0xf]
        %v8466 = vld [vmem:[%s8010 + $0x5c] sm:$0xf]
        %v8475 = vunpack.c.l.b16 %v8459
        %v8476 = vunpack.c.l.b16 %v8460
        %v8477 = vunpack.c.l.b16 %v8461
        %v8478 = vunpack.c.l.b16 %v8462
        %v8479 = vunpack.c.l.b16 %v8463
        %v8480 = vunpack.c.l.b16 %v8464
        %v8481 = vunpack.c.l.b16 %v8465
        %v8482 = vunpack.c.l.b16 %v8466
        %v8483 = vpack.c.b16 %v8476, %v8475
        %v8484 = vpack.c.b16 %v8478, %v8477
        %v8485 = vpack.c.b16 %v8480, %v8479
        %v8486 = vpack.c.b16 %v8482, %v8481
        %v8492 = vsel %vm867, %v8387, 0
        %v8495 = vsel %vm867, %v8396, 0
        %v8498 = vsel %vm867, %v8405, 0
        %v8501 = vsel %vm867, %v8414, 0
        %v8504 = vsel %vm867, %v8431, 0
        %v8507 = vsel %vm867, %v8440, 0
        %v8510 = vsel %vm867, %v8449, 0
        %v8513 = vsel %vm867, %v8458, 0
        %8515 = vmatprep.subr.bf16.mxu0 0
        %8516 = vmatpush1.bf16.msra.mxu0 %v8483
        %8517 = vmatprep.subr.bf16.mxu0 0
        %8518 = vmatpush1.bf16.msra.mxu0 %v8484
        %8519 = vmatprep.subr.bf16.mxu0 0
        %8520 = vmatpush1.bf16.msra.mxu0 %v8485
        %8521 = vmatprep.subr.bf16.mxu0 0
        %8522 = vmatpush1.bf16.msra.mxu0 %v8486
        %8523 = vmatprep.subr.bf16.mxu0 0
        %8524 = vmatpush1.bf16.msra.mxu0 0
        %8525 = vmatprep.subr.bf16.mxu0 0
        %8526 = vmatpush1.bf16.msra.mxu0 0
        %8527 = vmatprep.subr.bf16.mxu0 0
        %8528 = vmatpush1.bf16.msra.mxu0 0
        %8529 = vmatprep.subr.bf16.mxu0 0
        %8530 = vmatpush1.bf16.msra.mxu0 0
        %8531 = vmatprep.subr.bf16.mxu0 0
        %8532 = vmatpush1.bf16.msra.mxu0 0
        %8533 = vmatprep.subr.bf16.mxu0 0
        %8534 = vmatpush1.bf16.msra.mxu0 0
        %8535 = vmatprep.subr.bf16.mxu0 0
        %8536 = vmatpush1.bf16.msra.mxu0 0
        %8537 = vmatprep.subr.bf16.mxu0 0
        %8538 = vmatpush1.bf16.msra.mxu0 0
        %8539 = vmatprep.subr.bf16.mxu0 0
        %8540 = vmatpush1.bf16.msra.mxu0 0
        %8541 = vmatprep.subr.bf16.mxu0 0
        %8542 = vmatpush1.bf16.msra.mxu0 0
        %8543 = vmatprep.subr.bf16.mxu0 0
        %8544 = vmatpush1.bf16.msra.mxu0 0
        %8545 = vmatprep.subr.bf16.mxu0 0
        %8546 = vmatpush1.bf16.msra.mxu0 0
        %8547 = vmatprep.mubr.bf16.mxu0 0
        %8548 = vmatmul.mubr.bf16.gmra.mrb[0].mxu0 %v8492
        %v8549 = vpop.f32.mrb[0].mxu0
        %v8550 = vadd.f32 0.0, %v8549
        %v8551 = vpop.f32.mrb[0].mxu0
        %v8552 = vpop.f32.mrb[0].mxu0
        %v8553 = vadd.f32 0.0, %v8552
        %v8554 = vpop.f32.mrb[0].mxu0
        %8555 = vmatprep.mubr.bf16.mxu0 0
        %8556 = vmatmul.mubr.bf16.gmra.mrb[0].mxu0 %v8495
        %v8557 = vpop.f32.mrb[0].mxu0
        %v8558 = vadd.f32 0.0, %v8557
        %v8559 = vpop.f32.mrb[0].mxu0
        %v8560 = vpop.f32.mrb[0].mxu0
        %v8561 = vadd.f32 0.0, %v8560
        %v8562 = vpop.f32.mrb[0].mxu0
        %8563 = vmatprep.mubr.bf16.mxu0 0
        %8564 = vmatmul.mubr.bf16.gmra.mrb[0].mxu0 %v8498
        %v8565 = vpop.f32.mrb[0].mxu0
        %v8566 = vadd.f32 0.0, %v8565
        %v8567 = vpop.f32.mrb[0].mxu0
        %v8568 = vpop.f32.mrb[0].mxu0
        %v8569 = vadd.f32 0.0, %v8568
        %v8570 = vpop.f32.mrb[0].mxu0
        %8571 = vmatprep.mubr.bf16.mxu0 0
        %8572 = vmatmul.mubr.bf16.gmra.mrb[0].mxu0 %v8501
        %v8573 = vpop.f32.mrb[0].mxu0
        %v8574 = vadd.f32 0.0, %v8573
        %v8575 = vpop.f32.mrb[0].mxu0
        %v8576 = vpop.f32.mrb[0].mxu0
        %v8577 = vadd.f32 0.0, %v8576
        %v8578 = vpop.f32.mrb[0].mxu0
        %8579 = vmatprep.mubr.bf16.mxu0 0
        %8580 = vmatmul.mubr.bf16.gmra.mrb[0].mxu0 %v8504
        %v8581 = vpop.f32.mrb[0].mxu0
        %v8582 = vadd.f32 0.0, %v8581
        %v8583 = vpop.f32.mrb[0].mxu0
        %v8584 = vpop.f32.mrb[0].mxu0
        %v8585 = vadd.f32 0.0, %v8584
        %v8586 = vpop.f32.mrb[0].mxu0
        %8587 = vmatprep.mubr.bf16.mxu0 0
        %8588 = vmatmul.mubr.bf16.gmra.mrb[0].mxu0 %v8507
        %v8589 = vpop.f32.mrb[0].mxu0
        %v8590 = vadd.f32 0.0, %v8589
        %v8591 = vpop.f32.mrb[0].mxu0
        %v8592 = vpop.f32.mrb[0].mxu0
        %v8593 = vadd.f32 0.0, %v8592
        %v8594 = vpop.f32.mrb[0].mxu0
        %8595 = vmatprep.mubr.bf16.mxu0 0
        %8596 = vmatmul.mubr.bf16.gmra.mrb[0].mxu0 %v8510
        %v8597 = vpop.f32.mrb[0].mxu0
        %v8598 = vadd.f32 0.0, %v8597
        %v8599 = vpop.f32.mrb[0].mxu0
        %v8600 = vpop.f32.mrb[0].mxu0
        %v8601 = vadd.f32 0.0, %v8600
        %v8602 = vpop.f32.mrb[0].mxu0
        %8603 = vmatprep.mubr.bf16.mxu0 0
        %8604 = vmatmul.mubr.bf16.gmra.mrb[0].mxu0 %v8513
        %v8605 = vpop.f32.mrb[0].mxu0
        %v8606 = vadd.f32 0.0, %v8605
        %v8607 = vpop.f32.mrb[0].mxu0
        %v8608 = vpop.f32.mrb[0].mxu0
        %v8609 = vadd.f32 0.0, %v8608
        %v8610 = vpop.f32.mrb[0].mxu0
        %8611 = vdwg.mxu0
        %v8612 = vadd.f32 %v8345, %v8550
        %v8613 = vadd.f32 %v8346, %v8553
        %v8614 = vadd.f32 %v8347, %v8558
        %v8615 = vadd.f32 %v8348, %v8561
        %v8616 = vadd.f32 %v8349, %v8566
        %v8617 = vadd.f32 %v8350, %v8569
        %v8618 = vadd.f32 %v8351, %v8574
        %v8619 = vadd.f32 %v8352, %v8577
        %v8620 = vadd.f32 %v8353, %v8582
        %v8621 = vadd.f32 %v8354, %v8585
        %v8622 = vadd.f32 %v8355, %v8590
        %v8623 = vadd.f32 %v8356, %v8593
        %v8624 = vadd.f32 %v8357, %v8598
        %v8625 = vadd.f32 %v8358, %v8601
        %v8626 = vadd.f32 %v8359, %v8606
        %v8627 = vadd.f32 %v8360, %v8609
        %v8628 = vxor.u32 %v8612, 2147483648
        %v8629 = vxor.u32 %v8613, 2147483648
        %v8630 = vxor.u32 %v8614, 2147483648
        %v8631 = vxor.u32 %v8615, 2147483648
        %v8632 = vxor.u32 %v8616, 2147483648
        %v8633 = vxor.u32 %v8617, 2147483648
        %v8634 = vxor.u32 %v8618, 2147483648
        %v8635 = vxor.u32 %v8619, 2147483648
        %v8636 = vxor.u32 %v8620, 2147483648
        %v8637 = vxor.u32 %v8621, 2147483648
        %v8638 = vxor.u32 %v8622, 2147483648
        %v8639 = vxor.u32 %v8623, 2147483648
        %v8640 = vxor.u32 %v8624, 2147483648
        %v8641 = vxor.u32 %v8625, 2147483648
        %v8642 = vxor.u32 %v8626, 2147483648
        %v8643 = vxor.u32 %v8627, 2147483648
        %v8644 = vmul.f32 %v8628, 1.442695
        %v8645 = vpow.pop %v8644
        %v8646 = vmul.f32 %v8629, 1.442695
        %v8647 = vpow.pop %v8646
        %v8648 = vmul.f32 %v8630, 1.442695
        %v8649 = vpow.pop %v8648
        %v8650 = vmul.f32 %v8631, 1.442695
        %v8651 = vpow.pop %v8650
        %v8652 = vmul.f32 %v8632, 1.442695
        %v8653 = vpow.pop %v8652
        %v8654 = vmul.f32 %v8633, 1.442695
        %v8655 = vpow.pop %v8654
        %v8656 = vmul.f32 %v8634, 1.442695
        %v8657 = vpow.pop %v8656
        %v8658 = vmul.f32 %v8635, 1.442695
        %v8659 = vpow.pop %v8658
        %v8660 = vmul.f32 %v8636, 1.442695
        %v8661 = vpow.pop %v8660
        %v8662 = vmul.f32 %v8637, 1.442695
        %v8663 = vpow.pop %v8662
        %v8664 = vmul.f32 %v8638, 1.442695
        %v8665 = vpow.pop %v8664
        %v8666 = vmul.f32 %v8639, 1.442695
        %v8667 = vpow.pop %v8666
        %v8668 = vmul.f32 %v8640, 1.442695
        %v8669 = vpow.pop %v8668
        %v8670 = vmul.f32 %v8641, 1.442695
        %v8671 = vpow.pop %v8670
        %v8672 = vmul.f32 %v8642, 1.442695
        %v8673 = vpow.pop %v8672
        %v8674 = vmul.f32 %v8643, 1.442695
        %v8675 = vpow.pop %v8674
        %v8676 = vadd.f32 %v8645, 1.0
        %v8677 = vadd.f32 %v8647, 1.0
        %v8678 = vadd.f32 %v8649, 1.0
        %v8679 = vadd.f32 %v8651, 1.0
        %v8680 = vadd.f32 %v8653, 1.0
        %v8681 = vadd.f32 %v8655, 1.0
        %v8682 = vadd.f32 %v8657, 1.0
        %v8683 = vadd.f32 %v8659, 1.0
        %v8684 = vadd.f32 %v8661, 1.0
        %v8685 = vadd.f32 %v8663, 1.0
        %v8686 = vadd.f32 %v8665, 1.0
        %v8687 = vadd.f32 %v8667, 1.0
        %v8688 = vadd.f32 %v8669, 1.0
        %v8689 = vadd.f32 %v8671, 1.0
        %v8690 = vadd.f32 %v8673, 1.0
        %v8691 = vadd.f32 %v8675, 1.0
        %v8692 = vrcp.pop %v8676
        %v8693 = vmul.f32 1.0, %v8692
        %v8694 = vrcp.pop %v8677
        %v8695 = vmul.f32 1.0, %v8694
        %v8696 = vrcp.pop %v8678
        %v8697 = vmul.f32 1.0, %v8696
        %v8698 = vrcp.pop %v8679
        %v8699 = vmul.f32 1.0, %v8698
        %v8700 = vrcp.pop %v8680
        %v8701 = vmul.f32 1.0, %v8700
        %v8702 = vrcp.pop %v8681
        %v8703 = vmul.f32 1.0, %v8702
        %v8704 = vrcp.pop %v8682
        %v8705 = vmul.f32 1.0, %v8704
        %v8706 = vrcp.pop %v8683
        %v8707 = vmul.f32 1.0, %v8706
        %v8708 = vrcp.pop %v8684
        %v8709 = vmul.f32 1.0, %v8708
        %v8710 = vrcp.pop %v8685
        %v8711 = vmul.f32 1.0, %v8710
        %v8712 = vrcp.pop %v8686
        %v8713 = vmul.f32 1.0, %v8712
        %v8714 = vrcp.pop %v8687
        %v8715 = vmul.f32 1.0, %v8714
        %v8716 = vrcp.pop %v8688
        %v8717 = vmul.f32 1.0, %v8716
        %v8718 = vrcp.pop %v8689
        %v8719 = vmul.f32 1.0, %v8718
        %v8720 = vrcp.pop %v8690
        %v8721 = vmul.f32 1.0, %v8720
        %v8722 = vrcp.pop %v8691
        %v8723 = vmul.f32 1.0, %v8722
        %8740 = vrot.lane.b32.xlu0 %v7879, 64
        %v8741 = vpop.permute.xlu0 %8740
        %8742 = vrot.lane.b32.xlu0 %v7880, 64
        %v8743 = vpop.permute.xlu0 %8742
        %8744 = vrot.lane.b32.xlu0 %v7881, 64
        %v8745 = vpop.permute.xlu0 %8744
        %8746 = vrot.lane.b32.xlu0 %v7882, 64
        %v8747 = vpop.permute.xlu0 %8746
        %8748 = vrot.lane.b32.xlu0 %v7883, 64
        %v8749 = vpop.permute.xlu0 %8748
        %8750 = vrot.lane.b32.xlu0 %v7884, 64
        %v8751 = vpop.permute.xlu0 %8750
        %8752 = vrot.lane.b32.xlu0 %v7885, 64
        %v8753 = vpop.permute.xlu0 %8752
        %8754 = vrot.lane.b32.xlu0 %v7886, 64
        %v8755 = vpop.permute.xlu0 %8754
        %8756 = vrot.lane.b32.xlu0 %v7887, 64
        %v8757 = vpop.permute.xlu0 %8756
        %8758 = vrot.lane.b32.xlu0 %v7888, 64
        %v8759 = vpop.permute.xlu0 %8758
        %8760 = vrot.lane.b32.xlu0 %v7889, 64
        %v8761 = vpop.permute.xlu0 %8760
        %8762 = vrot.lane.b32.xlu0 %v7890, 64
        %v8763 = vpop.permute.xlu0 %8762
        %8764 = vrot.lane.b32.xlu0 %v7891, 64
        %v8765 = vpop.permute.xlu0 %8764
        %8766 = vrot.lane.b32.xlu0 %v7892, 64
        %v8767 = vpop.permute.xlu0 %8766
        %8768 = vrot.lane.b32.xlu0 %v7893, 64
        %v8769 = vpop.permute.xlu0 %8768
        %8770 = vrot.lane.b32.xlu0 %v7894, 64
        %v8771 = vpop.permute.xlu0 %8770
        %v8788 = vsub.f32 %v8612, %v8741
        %v8789 = vsub.f32 %v8613, %v8743
        %v8790 = vsub.f32 %v8614, %v8745
        %v8791 = vsub.f32 %v8615, %v8747
        %v8792 = vsub.f32 %v8616, %v8749
        %v8793 = vsub.f32 %v8617, %v8751
        %v8794 = vsub.f32 %v8618, %v8753
        %v8795 = vsub.f32 %v8619, %v8755
        %v8796 = vsub.f32 %v8620, %v8757
        %v8797 = vsub.f32 %v8621, %v8759
        %v8798 = vsub.f32 %v8622, %v8761
        %v8799 = vsub.f32 %v8623, %v8763
        %v8800 = vsub.f32 %v8624, %v8765
        %v8801 = vsub.f32 %v8625, %v8767
        %v8802 = vsub.f32 %v8626, %v8769
        %v8803 = vsub.f32 %v8627, %v8771
        %8820 = vrot.lane.b32.xlu0 %v8788, 64
        %v8821 = vpop.permute.xlu0 %8820
        %8822 = vrot.lane.b32.xlu0 %v8789, 64
        %v8823 = vpop.permute.xlu0 %8822
        %8824 = vrot.lane.b32.xlu0 %v8790, 64
        %v8825 = vpop.permute.xlu0 %8824
        %8826 = vrot.lane.b32.xlu0 %v8791, 64
        %v8827 = vpop.permute.xlu0 %8826
        %8828 = vrot.lane.b32.xlu0 %v8792, 64
        %v8829 = vpop.permute.xlu0 %8828
        %8830 = vrot.lane.b32.xlu0 %v8793, 64
        %v8831 = vpop.permute.xlu0 %8830
        %8832 = vrot.lane.b32.xlu0 %v8794, 64
        %v8833 = vpop.permute.xlu0 %8832
        %8834 = vrot.lane.b32.xlu0 %v8795, 64
        %v8835 = vpop.permute.xlu0 %8834
        %8836 = vrot.lane.b32.xlu0 %v8796, 64
        %v8837 = vpop.permute.xlu0 %8836
        %8838 = vrot.lane.b32.xlu0 %v8797, 64
        %v8839 = vpop.permute.xlu0 %8838
        %8840 = vrot.lane.b32.xlu0 %v8798, 64
        %v8841 = vpop.permute.xlu0 %8840
        %8842 = vrot.lane.b32.xlu0 %v8799, 64
        %v8843 = vpop.permute.xlu0 %8842
        %8844 = vrot.lane.b32.xlu0 %v8800, 64
        %v8845 = vpop.permute.xlu0 %8844
        %8846 = vrot.lane.b32.xlu0 %v8801, 64
        %v8847 = vpop.permute.xlu0 %8846
        %8848 = vrot.lane.b32.xlu0 %v8802, 64
        %v8849 = vpop.permute.xlu0 %8848
        %8850 = vrot.lane.b32.xlu0 %v8803, 64
        %v8851 = vpop.permute.xlu0 %8850
        %v8868 = vmul.f32 %v8693, %v8821
        %v8869 = vmul.f32 %v8695, %v8823
        %v8870 = vmul.f32 %v8697, %v8825
        %v8871 = vmul.f32 %v8699, %v8827
        %v8872 = vmul.f32 %v8701, %v8829
        %v8873 = vmul.f32 %v8703, %v8831
        %v8874 = vmul.f32 %v8705, %v8833
        %v8875 = vmul.f32 %v8707, %v8835
        %v8876 = vmul.f32 %v8709, %v8837
        %v8877 = vmul.f32 %v8711, %v8839
        %v8878 = vmul.f32 %v8713, %v8841
        %v8879 = vmul.f32 %v8715, %v8843
        %v8880 = vmul.f32 %v8717, %v8845
        %v8881 = vmul.f32 %v8719, %v8847
        %v8882 = vmul.f32 %v8721, %v8849
        %v8883 = vmul.f32 %v8723, %v8851
        %v8884 = vadd.f32 %v7879, %v8868
        %v8885 = vadd.f32 %v7880, %v8869
        %v8886 = vadd.f32 %v7881, %v8870
        %v8887 = vadd.f32 %v7882, %v8871
        %v8888 = vadd.f32 %v7883, %v8872
        %v8889 = vadd.f32 %v7884, %v8873
        %v8890 = vadd.f32 %v7885, %v8874
        %v8891 = vadd.f32 %v7886, %v8875
        %v8892 = vadd.f32 %v7887, %v8876
        %v8893 = vadd.f32 %v7888, %v8877
        %v8894 = vadd.f32 %v7889, %v8878
        %v8895 = vadd.f32 %v7890, %v8879
        %v8896 = vadd.f32 %v7891, %v8880
        %v8897 = vadd.f32 %v7892, %v8881
        %v8898 = vadd.f32 %v7893, %v8882
        %v8899 = vadd.f32 %v7894, %v8883
        %v8900 = vld [vmem:[%s8 + $0x8] sm:$0x1]
        %v8901 = vpack.c.bf16 %v8885, %v8884
        %v8902 = vpack.c.bf16 %v8887, %v8886
        %v8903 = vpack.c.bf16 %v8889, %v8888
        %v8904 = vpack.c.bf16 %v8891, %v8890
        %v8905 = vpack.c.bf16 %v8893, %v8892
        %v8906 = vpack.c.bf16 %v8895, %v8894
        %v8907 = vpack.c.bf16 %v8897, %v8896
        %v8908 = vpack.c.bf16 %v8899, %v8898
        %8909 = vst.msk [vmem:[#allocation2 + $0x10] sm:$0xff] %vm867, %v8901
        %8910 = vst.msk [vmem:[#allocation2 + $0x18] sm:$0xff] %vm867, %v8902
        %8911 = vst.msk [vmem:[#allocation2 + $0x20] sm:$0xff] %vm867, %v8903
        %8912 = vst.msk [vmem:[#allocation2 + $0x28] sm:$0xff] %vm867, %v8904
        %8913 = vst.msk [vmem:[#allocation2 + $0x50] sm:$0xff] %vm867, %v8905
        %8914 = vst.msk [vmem:[#allocation2 + $0x58] sm:$0xff] %vm867, %v8906
        %8915 = vst.msk [vmem:[#allocation2 + $0x60] sm:$0xff] %vm867, %v8907
        %8916 = vst.msk [vmem:[#allocation2 + $0x68] sm:$0xff] %vm867, %v8908
        %v8917 = vld [vmem:[#allocation2 + $0x8] sm:$0x80]
        %v8918 = vld [vmem:[#allocation2 + $0x10] sm:$0xff]
        %v8919 = vld [vmem:[#allocation2 + $0x18] sm:$0xff]
        %v8920 = vld [vmem:[#allocation2 + $0x20] sm:$0xff]
        %v8921 = vld [vmem:[#allocation2 + $0x28] sm:$0xff]
        %v8922 = vld [vmem:[#allocation2 + $0x48] sm:$0x80]
        %v8923 = vld [vmem:[#allocation2 + $0x50] sm:$0xff]
        %v8924 = vld [vmem:[#allocation2 + $0x58] sm:$0xff]
        %v8925 = vld [vmem:[#allocation2 + $0x60] sm:$0xff]
        %v8926 = vld [vmem:[#allocation2 + $0x68] sm:$0xff]
        %v8928 = vshrl.u32 %v8917, 16
        %v8930 = vrot.slane %v8928, 7
        %v8932 = vshrl.u32 %v8918, 16
        %v8934 = vrot.slane %v8932, 7
        %v8935 = vshll.u32 %v8918, 16
        %v8937 = vor.u32 %v8934, %v8935
        %v8938 = vsel %vm1024, %v8930, %v8937
        %v8940 = vshrl.u32 %v8919, 16
        %v8942 = vrot.slane %v8940, 7
        %v8943 = vshll.u32 %v8919, 16
        %v8945 = vor.u32 %v8942, %v8943
        %v8946 = vsel %vm1024, %v8934, %v8945
        %v8948 = vshrl.u32 %v8920, 16
        %v8950 = vrot.slane %v8948, 7
        %v8951 = vshll.u32 %v8920, 16
        %v8953 = vor.u32 %v8950, %v8951
        %v8954 = vsel %vm1024, %v8942, %v8953
        %v8956 = vshrl.u32 %v8921, 16
        %v8958 = vrot.slane %v8956, 7
        %v8959 = vshll.u32 %v8921, 16
        %v8961 = vor.u32 %v8958, %v8959
        %v8962 = vsel %vm1024, %v8950, %v8961
        %v8964 = vshrl.u32 %v8922, 16
        %v8966 = vrot.slane %v8964, 7
        %v8968 = vshrl.u32 %v8923, 16
        %v8970 = vrot.slane %v8968, 7
        %v8971 = vshll.u32 %v8923, 16
        %v8973 = vor.u32 %v8970, %v8971
        %v8974 = vsel %vm1024, %v8966, %v8973
        %v8976 = vshrl.u32 %v8924, 16
        %v8978 = vrot.slane %v8976, 7
        %v8979 = vshll.u32 %v8924, 16
        %v8981 = vor.u32 %v8978, %v8979
        %v8982 = vsel %vm1024, %v8970, %v8981
        %v8984 = vshrl.u32 %v8925, 16
        %v8986 = vrot.slane %v8984, 7
        %v8987 = vshll.u32 %v8925, 16
        %v8989 = vor.u32 %v8986, %v8987
        %v8990 = vsel %vm1024, %v8978, %v8989
        %v8992 = vshrl.u32 %v8926, 16
        %v8994 = vrot.slane %v8992, 7
        %v8995 = vshll.u32 %v8926, 16
        %v8997 = vor.u32 %v8994, %v8995
        %v8998 = vsel %vm1024, %v8986, %v8997
        %s8999 = scalar_lea.vmem [#allocation3], 768
        %v9000 = vld [vmem:[%s8999] sm:$0xf]
        %v9001 = vld [vmem:[%s8999 + $0x4] sm:$0xf]
        %v9002 = vld [vmem:[%s8999 + $0x8] sm:$0xf]
        %v9003 = vld [vmem:[%s8999 + $0xc] sm:$0xf]
        %v9004 = vld [vmem:[%s8999 + $0x10] sm:$0xf]
        %v9005 = vld [vmem:[%s8999 + $0x14] sm:$0xf]
        %v9006 = vld [vmem:[%s8999 + $0x18] sm:$0xf]
        %v9007 = vld [vmem:[%s8999 + $0x1c] sm:$0xf]
        %v9016 = vunpack.c.l.b16 %v9000
        %v9017 = vunpack.c.l.b16 %v9001
        %v9018 = vunpack.c.l.b16 %v9002
        %v9019 = vunpack.c.l.b16 %v9003
        %v9020 = vunpack.c.l.b16 %v9004
        %v9021 = vunpack.c.l.b16 %v9005
        %v9022 = vunpack.c.l.b16 %v9006
        %v9023 = vunpack.c.l.b16 %v9007
        %v9024 = vpack.c.b16 %v9017, %v9016
        %v9025 = vpack.c.b16 %v9019, %v9018
        %v9026 = vpack.c.b16 %v9021, %v9020
        %v9027 = vpack.c.b16 %v9023, %v9022
        %v9033 = vsel %vm867, %v8938, 0
        %v9036 = vsel %vm867, %v8946, 0
        %v9039 = vsel %vm867, %v8954, 0
        %v9042 = vsel %vm867, %v8962, 0
        %v9045 = vsel %vm867, %v8974, 0
        %v9048 = vsel %vm867, %v8982, 0
        %v9051 = vsel %vm867, %v8990, 0
        %v9054 = vsel %vm867, %v8998, 0
        %9056 = vmatprep.subr.bf16.mxu0 0
        %9057 = vmatpush1.bf16.msra.mxu0 %v9024
        %9058 = vmatprep.subr.bf16.mxu0 0
        %9059 = vmatpush1.bf16.msra.mxu0 %v9025
        %9060 = vmatprep.subr.bf16.mxu0 0
        %9061 = vmatpush1.bf16.msra.mxu0 %v9026
        %9062 = vmatprep.subr.bf16.mxu0 0
        %9063 = vmatpush1.bf16.msra.mxu0 %v9027
        %9064 = vmatprep.subr.bf16.mxu0 0
        %9065 = vmatpush1.bf16.msra.mxu0 0
        %9066 = vmatprep.subr.bf16.mxu0 0
        %9067 = vmatpush1.bf16.msra.mxu0 0
        %9068 = vmatprep.subr.bf16.mxu0 0
        %9069 = vmatpush1.bf16.msra.mxu0 0
        %9070 = vmatprep.subr.bf16.mxu0 0
        %9071 = vmatpush1.bf16.msra.mxu0 0
        %9072 = vmatprep.subr.bf16.mxu0 0
        %9073 = vmatpush1.bf16.msra.mxu0 0
        %9074 = vmatprep.subr.bf16.mxu0 0
        %9075 = vmatpush1.bf16.msra.mxu0 0
        %9076 = vmatprep.subr.bf16.mxu0 0
        %9077 = vmatpush1.bf16.msra.mxu0 0
        %9078 = vmatprep.subr.bf16.mxu0 0
        %9079 = vmatpush1.bf16.msra.mxu0 0
        %9080 = vmatprep.subr.bf16.mxu0 0
        %9081 = vmatpush1.bf16.msra.mxu0 0
        %9082 = vmatprep.subr.bf16.mxu0 0
        %9083 = vmatpush1.bf16.msra.mxu0 0
        %9084 = vmatprep.subr.bf16.mxu0 0
        %9085 = vmatpush1.bf16.msra.mxu0 0
        %9086 = vmatprep.subr.bf16.mxu0 0
        %9087 = vmatpush1.bf16.msra.mxu0 0
        %9088 = vmatprep.mubr.bf16.mxu0 0
        %9089 = vmatmul.mubr.bf16.gmra.mrb[0].mxu0 %v9033
        %v9090 = vpop.f32.mrb[0].mxu0
        %v9091 = vadd.f32 0.0, %v9090
        %v9092 = vpop.f32.mrb[0].mxu0
        %v9093 = vpop.f32.mrb[0].mxu0
        %v9094 = vadd.f32 0.0, %v9093
        %v9095 = vpop.f32.mrb[0].mxu0
        %9096 = vmatprep.mubr.bf16.mxu0 0
        %9097 = vmatmul.mubr.bf16.gmra.mrb[0].mxu0 %v9036
        %v9098 = vpop.f32.mrb[0].mxu0
        %v9099 = vadd.f32 0.0, %v9098
        %v9100 = vpop.f32.mrb[0].mxu0
        %v9101 = vpop.f32.mrb[0].mxu0
        %v9102 = vadd.f32 0.0, %v9101
        %v9103 = vpop.f32.mrb[0].mxu0
        %9104 = vmatprep.mubr.bf16.mxu0 0
        %9105 = vmatmul.mubr.bf16.gmra.mrb[0].mxu0 %v9039
        %v9106 = vpop.f32.mrb[0].mxu0
        %v9107 = vadd.f32 0.0, %v9106
        %v9108 = vpop.f32.mrb[0].mxu0
        %v9109 = vpop.f32.mrb[0].mxu0
        %v9110 = vadd.f32 0.0, %v9109
        %v9111 = vpop.f32.mrb[0].mxu0
        %9112 = vmatprep.mubr.bf16.mxu0 0
        %9113 = vmatmul.mubr.bf16.gmra.mrb[0].mxu0 %v9042
        %v9114 = vpop.f32.mrb[0].mxu0
        %v9115 = vadd.f32 0.0, %v9114
        %v9116 = vpop.f32.mrb[0].mxu0
        %v9117 = vpop.f32.mrb[0].mxu0
        %v9118 = vadd.f32 0.0, %v9117
        %v9119 = vpop.f32.mrb[0].mxu0
        %9120 = vmatprep.mubr.bf16.mxu0 0
        %9121 = vmatmul.mubr.bf16.gmra.mrb[0].mxu0 %v9045
        %v9122 = vpop.f32.mrb[0].mxu0
        %v9123 = vadd.f32 0.0, %v9122
        %v9124 = vpop.f32.mrb[0].mxu0
        %v9125 = vpop.f32.mrb[0].mxu0
        %v9126 = vadd.f32 0.0, %v9125
        %v9127 = vpop.f32.mrb[0].mxu0
        %9128 = vmatprep.mubr.bf16.mxu0 0
        %9129 = vmatmul.mubr.bf16.gmra.mrb[0].mxu0 %v9048
        %v9130 = vpop.f32.mrb[0].mxu0
        %v9131 = vadd.f32 0.0, %v9130
        %v9132 = vpop.f32.mrb[0].mxu0
        %v9133 = vpop.f32.mrb[0].mxu0
        %v9134 = vadd.f32 0.0, %v9133
        %v9135 = vpop.f32.mrb[0].mxu0
        %9136 = vmatprep.mubr.bf16.mxu0 0
        %9137 = vmatmul.mubr.bf16.gmra.mrb[0].mxu0 %v9051
        %v9138 = vpop.f32.mrb[0].mxu0
        %v9139 = vadd.f32 0.0, %v9138
        %v9140 = vpop.f32.mrb[0].mxu0
        %v9141 = vpop.f32.mrb[0].mxu0
        %v9142 = vadd.f32 0.0, %v9141
        %v9143 = vpop.f32.mrb[0].mxu0
        %9144 = vmatprep.mubr.bf16.mxu0 0
        %9145 = vmatmul.mubr.bf16.gmra.mrb[0].mxu0 %v9054
        %v9146 = vpop.f32.mrb[0].mxu0
        %v9147 = vadd.f32 0.0, %v9146
        %v9148 = vpop.f32.mrb[0].mxu0
        %v9149 = vpop.f32.mrb[0].mxu0
        %v9150 = vadd.f32 0.0, %v9149
        %v9151 = vpop.f32.mrb[0].mxu0
        %9152 = vdwg.mxu0
        %v9153 = vlaneseq
        %v9154 = vshrl.u32 %v9153, 7
        %v9155 = vsub.s32 0, %v9154
        %v9156 = vrot.slane %v8900, %v9155
        %v9157 = vadd.f32 %v9156, %v9091
        %v9158 = vadd.f32 %v9156, %v9094
        %v9159 = vadd.f32 %v9156, %v9099
        %v9160 = vadd.f32 %v9156, %v9102
        %v9161 = vadd.f32 %v9156, %v9107
        %v9162 = vadd.f32 %v9156, %v9110
        %v9163 = vadd.f32 %v9156, %v9115
        %v9164 = vadd.f32 %v9156, %v9118
        %v9165 = vadd.f32 %v9156, %v9123
        %v9166 = vadd.f32 %v9156, %v9126
        %v9167 = vadd.f32 %v9156, %v9131
        %v9168 = vadd.f32 %v9156, %v9134
        %v9169 = vadd.f32 %v9156, %v9139
        %v9170 = vadd.f32 %v9156, %v9142
        %v9171 = vadd.f32 %v9156, %v9147
        %v9172 = vadd.f32 %v9156, %v9150
        %v9173 = vld [vmem:[%s8999 + $0x20] sm:$0xf]
        %v9174 = vld [vmem:[%s8999 + $0x24] sm:$0xf]
        %v9175 = vld [vmem:[%s8999 + $0x28] sm:$0xf]
        %v9176 = vld [vmem:[%s8999 + $0x2c] sm:$0xf]
        %v9177 = vld [vmem:[%s8999 + $0x30] sm:$0xf]
        %v9178 = vld [vmem:[%s8999 + $0x34] sm:$0xf]
        %v9179 = vld [vmem:[%s8999 + $0x38] sm:$0xf]
        %v9180 = vld [vmem:[%s8999 + $0x3c] sm:$0xf]
        %v9189 = vunpack.c.l.b16 %v9173
        %v9190 = vunpack.c.l.b16 %v9174
        %v9191 = vunpack.c.l.b16 %v9175
        %v9192 = vunpack.c.l.b16 %v9176
        %v9193 = vunpack.c.l.b16 %v9177
        %v9194 = vunpack.c.l.b16 %v9178
        %v9195 = vunpack.c.l.b16 %v9179
        %v9196 = vunpack.c.l.b16 %v9180
        %v9197 = vpack.c.b16 %v9190, %v9189
        %v9198 = vpack.c.b16 %v9192, %v9191
        %v9199 = vpack.c.b16 %v9194, %v9193
        %v9200 = vpack.c.b16 %v9196, %v9195
        %v9205 = vsel %vm867, %v8918, 0
        %v9207 = vsel %vm867, %v8919, 0
        %v9209 = vsel %vm867, %v8920, 0
        %v9211 = vsel %vm867, %v8921, 0
        %v9213 = vsel %vm867, %v8923, 0
        %v9215 = vsel %vm867, %v8924, 0
        %v9217 = vsel %vm867, %v8925, 0
        %v9219 = vsel %vm867, %v8926, 0
        %9221 = vmatprep.subr.bf16.mxu0 0
        %9222 = vmatpush1.bf16.msra.mxu0 %v9197
        %9223 = vmatprep.subr.bf16.mxu0 0
        %9224 = vmatpush1.bf16.msra.mxu0 %v9198
        %9225 = vmatprep.subr.bf16.mxu0 0
        %9226 = vmatpush1.bf16.msra.mxu0 %v9199
        %9227 = vmatprep.subr.bf16.mxu0 0
        %9228 = vmatpush1.bf16.msra.mxu0 %v9200
        %9229 = vmatprep.subr.bf16.mxu0 0
        %9230 = vmatpush1.bf16.msra.mxu0 0
        %9231 = vmatprep.subr.bf16.mxu0 0
        %9232 = vmatpush1.bf16.msra.mxu0 0
        %9233 = vmatprep.subr.bf16.mxu0 0
        %9234 = vmatpush1.bf16.msra.mxu0 0
        %9235 = vmatprep.subr.bf16.mxu0 0
        %9236 = vmatpush1.bf16.msra.mxu0 0
        %9237 = vmatprep.subr.bf16.mxu0 0
        %9238 = vmatpush1.bf16.msra.mxu0 0
        %9239 = vmatprep.subr.bf16.mxu0 0
        %9240 = vmatpush1.bf16.msra.mxu0 0
        %9241 = vmatprep.subr.bf16.mxu0 0
        %9242 = vmatpush1.bf16.msra.mxu0 0
        %9243 = vmatprep.subr.bf16.mxu0 0
        %9244 = vmatpush1.bf16.msra.mxu0 0
        %9245 = vmatprep.subr.bf16.mxu0 0
        %9246 = vmatpush1.bf16.msra.mxu0 0
        %9247 = vmatprep.subr.bf16.mxu0 0
        %9248 = vmatpush1.bf16.msra.mxu0 0
        %9249 = vmatprep.subr.bf16.mxu0 0
        %9250 = vmatpush1.bf16.msra.mxu0 0
        %9251 = vmatprep.subr.bf16.mxu0 0
        %9252 = vmatpush1.bf16.msra.mxu0 0
        %9253 = vmatprep.mubr.bf16.mxu0 0
        %9254 = vmatmul.mubr.bf16.gmra.mrb[0].mxu0 %v9205
        %v9255 = vpop.f32.mrb[0].mxu0
        %v9256 = vadd.f32 0.0, %v9255
        %v9257 = vpop.f32.mrb[0].mxu0
        %v9258 = vpop.f32.mrb[0].mxu0
        %v9259 = vadd.f32 0.0, %v9258
        %v9260 = vpop.f32.mrb[0].mxu0
        %9261 = vmatprep.mubr.bf16.mxu0 0
        %9262 = vmatmul.mubr.bf16.gmra.mrb[0].mxu0 %v9207
        %v9263 = vpop.f32.mrb[0].mxu0
        %v9264 = vadd.f32 0.0, %v9263
        %v9265 = vpop.f32.mrb[0].mxu0
        %v9266 = vpop.f32.mrb[0].mxu0
        %v9267 = vadd.f32 0.0, %v9266
        %v9268 = vpop.f32.mrb[0].mxu0
        %9269 = vmatprep.mubr.bf16.mxu0 0
        %9270 = vmatmul.mubr.bf16.gmra.mrb[0].mxu0 %v9209
        %v9271 = vpop.f32.mrb[0].mxu0
        %v9272 = vadd.f32 0.0, %v9271
        %v9273 = vpop.f32.mrb[0].mxu0
        %v9274 = vpop.f32.mrb[0].mxu0
        %v9275 = vadd.f32 0.0, %v9274
        %v9276 = vpop.f32.mrb[0].mxu0
        %9277 = vmatprep.mubr.bf16.mxu0 0
        %9278 = vmatmul.mubr.bf16.gmra.mrb[0].mxu0 %v9211
        %v9279 = vpop.f32.mrb[0].mxu0
        %v9280 = vadd.f32 0.0, %v9279
        %v9281 = vpop.f32.mrb[0].mxu0
        %v9282 = vpop.f32.mrb[0].mxu0
        %v9283 = vadd.f32 0.0, %v9282
        %v9284 = vpop.f32.mrb[0].mxu0
        %9285 = vmatprep.mubr.bf16.mxu0 0
        %9286 = vmatmul.mubr.bf16.gmra.mrb[0].mxu0 %v9213
        %v9287 = vpop.f32.mrb[0].mxu0
        %v9288 = vadd.f32 0.0, %v9287
        %v9289 = vpop.f32.mrb[0].mxu0
        %v9290 = vpop.f32.mrb[0].mxu0
        %v9291 = vadd.f32 0.0, %v9290
        %v9292 = vpop.f32.mrb[0].mxu0
        %9293 = vmatprep.mubr.bf16.mxu0 0
        %9294 = vmatmul.mubr.bf16.gmra.mrb[0].mxu0 %v9215
        %v9295 = vpop.f32.mrb[0].mxu0
        %v9296 = vadd.f32 0.0, %v9295
        %v9297 = vpop.f32.mrb[0].mxu0
        %v9298 = vpop.f32.mrb[0].mxu0
        %v9299 = vadd.f32 0.0, %v9298
        %v9300 = vpop.f32.mrb[0].mxu0
        %9301 = vmatprep.mubr.bf16.mxu0 0
        %9302 = vmatmul.mubr.bf16.gmra.mrb[0].mxu0 %v9217
        %v9303 = vpop.f32.mrb[0].mxu0
        %v9304 = vadd.f32 0.0, %v9303
        %v9305 = vpop.f32.mrb[0].mxu0
        %v9306 = vpop.f32.mrb[0].mxu0
        %v9307 = vadd.f32 0.0, %v9306
        %v9308 = vpop.f32.mrb[0].mxu0
        %9309 = vmatprep.mubr.bf16.mxu0 0
        %9310 = vmatmul.mubr.bf16.gmra.mrb[0].mxu0 %v9219
        %v9311 = vpop.f32.mrb[0].mxu0
        %v9312 = vadd.f32 0.0, %v9311
        %v9313 = vpop.f32.mrb[0].mxu0
        %v9314 = vpop.f32.mrb[0].mxu0
        %v9315 = vadd.f32 0.0, %v9314
        %v9316 = vpop.f32.mrb[0].mxu0
        %9317 = vdwg.mxu0
        %v9318 = vadd.f32 %v9157, %v9256
        %v9319 = vadd.f32 %v9158, %v9259
        %v9320 = vadd.f32 %v9159, %v9264
        %v9321 = vadd.f32 %v9160, %v9267
        %v9322 = vadd.f32 %v9161, %v9272
        %v9323 = vadd.f32 %v9162, %v9275
        %v9324 = vadd.f32 %v9163, %v9280
        %v9325 = vadd.f32 %v9164, %v9283
        %v9326 = vadd.f32 %v9165, %v9288
        %v9327 = vadd.f32 %v9166, %v9291
        %v9328 = vadd.f32 %v9167, %v9296
        %v9329 = vadd.f32 %v9168, %v9299
        %v9330 = vadd.f32 %v9169, %v9304
        %v9331 = vadd.f32 %v9170, %v9307
        %v9332 = vadd.f32 %v9171, %v9312
        %v9333 = vadd.f32 %v9172, %v9315
        %v9334 = vld [vmem:[#allocation2 + $0x10] sm:$0xff]
        %v9335 = vld [vmem:[#allocation2 + $0x18] sm:$0xff]
        %v9336 = vld [vmem:[#allocation2 + $0x20] sm:$0xff]
        %v9337 = vld [vmem:[#allocation2 + $0x28] sm:$0xff]
        %v9338 = vld [vmem:[#allocation2 + $0x30] sm:$0x1]
        %v9339 = vld [vmem:[#allocation2 + $0x50] sm:$0xff]
        %v9340 = vld [vmem:[#allocation2 + $0x58] sm:$0xff]
        %v9341 = vld [vmem:[#allocation2 + $0x60] sm:$0xff]
        %v9342 = vld [vmem:[#allocation2 + $0x68] sm:$0xff]
        %v9343 = vld [vmem:[#allocation2 + $0x70] sm:$0x1]
        %v9345 = vshrl.u32 %v9334, 16
        %v9347 = vshll.u32 %v9334, 16
        %v9349 = vrot.slane %v9347, 1
        %v9350 = vor.u32 %v9345, %v9349
        %v9352 = vshll.u32 %v9335, 16
        %v9354 = vrot.slane %v9352, 1
        %v9355 = vsel %vm1441, %v9350, %v9354
        %v9356 = vshrl.u32 %v9335, 16
        %v9358 = vor.u32 %v9356, %v9354
        %v9360 = vshll.u32 %v9336, 16
        %v9362 = vrot.slane %v9360, 1
        %v9363 = vsel %vm1441, %v9358, %v9362
        %v9364 = vshrl.u32 %v9336, 16
        %v9366 = vor.u32 %v9364, %v9362
        %v9368 = vshll.u32 %v9337, 16
        %v9370 = vrot.slane %v9368, 1
        %v9371 = vsel %vm1441, %v9366, %v9370
        %v9372 = vshrl.u32 %v9337, 16
        %v9374 = vor.u32 %v9372, %v9370
        %v9376 = vshll.u32 %v9338, 16
        %v9378 = vrot.slane %v9376, 1
        %v9379 = vsel %vm1441, %v9374, %v9378
        %v9381 = vshrl.u32 %v9339, 16
        %v9383 = vshll.u32 %v9339, 16
        %v9385 = vrot.slane %v9383, 1
        %v9386 = vor.u32 %v9381, %v9385
        %v9388 = vshll.u32 %v9340, 16
        %v9390 = vrot.slane %v9388, 1
        %v9391 = vsel %vm1441, %v9386, %v9390
        %v9392 = vshrl.u32 %v9340, 16
        %v9394 = vor.u32 %v9392, %v9390
        %v9396 = vshll.u32 %v9341, 16
        %v9398 = vrot.slane %v9396, 1
        %v9399 = vsel %vm1441, %v9394, %v9398
        %v9400 = vshrl.u32 %v9341, 16
        %v9402 = vor.u32 %v9400, %v9398
        %v9404 = vshll.u32 %v9342, 16
        %v9406 = vrot.slane %v9404, 1
        %v9407 = vsel %vm1441, %v9402, %v9406
        %v9408 = vshrl.u32 %v9342, 16
        %v9410 = vor.u32 %v9408, %v9406
        %v9412 = vshll.u32 %v9343, 16
        %v9414 = vrot.slane %v9412, 1
        %v9415 = vsel %vm1441, %v9410, %v9414
        %v9416 = vld [vmem:[%s8999 + $0x40] sm:$0xf]
        %v9417 = vld [vmem:[%s8999 + $0x44] sm:$0xf]
        %v9418 = vld [vmem:[%s8999 + $0x48] sm:$0xf]
        %v9419 = vld [vmem:[%s8999 + $0x4c] sm:$0xf]
        %v9420 = vld [vmem:[%s8999 + $0x50] sm:$0xf]
        %v9421 = vld [vmem:[%s8999 + $0x54] sm:$0xf]
        %v9422 = vld [vmem:[%s8999 + $0x58] sm:$0xf]
        %v9423 = vld [vmem:[%s8999 + $0x5c] sm:$0xf]
        %v9432 = vunpack.c.l.b16 %v9416
        %v9433 = vunpack.c.l.b16 %v9417
        %v9434 = vunpack.c.l.b16 %v9418
        %v9435 = vunpack.c.l.b16 %v9419
        %v9436 = vunpack.c.l.b16 %v9420
        %v9437 = vunpack.c.l.b16 %v9421
        %v9438 = vunpack.c.l.b16 %v9422
        %v9439 = vunpack.c.l.b16 %v9423
        %v9440 = vpack.c.b16 %v9433, %v9432
        %v9441 = vpack.c.b16 %v9435, %v9434
        %v9442 = vpack.c.b16 %v9437, %v9436
        %v9443 = vpack.c.b16 %v9439, %v9438
        %v9449 = vsel %vm867, %v9355, 0
        %v9452 = vsel %vm867, %v9363, 0
        %v9455 = vsel %vm867, %v9371, 0
        %v9458 = vsel %vm867, %v9379, 0
        %v9461 = vsel %vm867, %v9391, 0
        %v9464 = vsel %vm867, %v9399, 0
        %v9467 = vsel %vm867, %v9407, 0
        %v9470 = vsel %vm867, %v9415, 0
        %9472 = vmatprep.subr.bf16.mxu0 0
        %9473 = vmatpush1.bf16.msra.mxu0 %v9440
        %9474 = vmatprep.subr.bf16.mxu0 0
        %9475 = vmatpush1.bf16.msra.mxu0 %v9441
        %9476 = vmatprep.subr.bf16.mxu0 0
        %9477 = vmatpush1.bf16.msra.mxu0 %v9442
        %9478 = vmatprep.subr.bf16.mxu0 0
        %9479 = vmatpush1.bf16.msra.mxu0 %v9443
        %9480 = vmatprep.subr.bf16.mxu0 0
        %9481 = vmatpush1.bf16.msra.mxu0 0
        %9482 = vmatprep.subr.bf16.mxu0 0
        %9483 = vmatpush1.bf16.msra.mxu0 0
        %9484 = vmatprep.subr.bf16.mxu0 0
        %9485 = vmatpush1.bf16.msra.mxu0 0
        %9486 = vmatprep.subr.bf16.mxu0 0
        %9487 = vmatpush1.bf16.msra.mxu0 0
        %9488 = vmatprep.subr.bf16.mxu0 0
        %9489 = vmatpush1.bf16.msra.mxu0 0
        %9490 = vmatprep.subr.bf16.mxu0 0
        %9491 = vmatpush1.bf16.msra.mxu0 0
        %9492 = vmatprep.subr.bf16.mxu0 0
        %9493 = vmatpush1.bf16.msra.mxu0 0
        %9494 = vmatprep.subr.bf16.mxu0 0
        %9495 = vmatpush1.bf16.msra.mxu0 0
        %9496 = vmatprep.subr.bf16.mxu0 0
        %9497 = vmatpush1.bf16.msra.mxu0 0
        %9498 = vmatprep.subr.bf16.mxu0 0
        %9499 = vmatpush1.bf16.msra.mxu0 0
        %9500 = vmatprep.subr.bf16.mxu0 0
        %9501 = vmatpush1.bf16.msra.mxu0 0
        %9502 = vmatprep.subr.bf16.mxu0 0
        %9503 = vmatpush1.bf16.msra.mxu0 0
        %9504 = vmatprep.mubr.bf16.mxu0 0
        %9505 = vmatmul.mubr.bf16.gmra.mrb[0].mxu0 %v9449
        %v9506 = vpop.f32.mrb[0].mxu0
        %v9507 = vadd.f32 0.0, %v9506
        %v9508 = vpop.f32.mrb[0].mxu0
        %v9509 = vpop.f32.mrb[0].mxu0
        %v9510 = vadd.f32 0.0, %v9509
        %v9511 = vpop.f32.mrb[0].mxu0
        %9512 = vmatprep.mubr.bf16.mxu0 0
        %9513 = vmatmul.mubr.bf16.gmra.mrb[0].mxu0 %v9452
        %v9514 = vpop.f32.mrb[0].mxu0
        %v9515 = vadd.f32 0.0, %v9514
        %v9516 = vpop.f32.mrb[0].mxu0
        %v9517 = vpop.f32.mrb[0].mxu0
        %v9518 = vadd.f32 0.0, %v9517
        %v9519 = vpop.f32.mrb[0].mxu0
        %9520 = vmatprep.mubr.bf16.mxu0 0
        %9521 = vmatmul.mubr.bf16.gmra.mrb[0].mxu0 %v9455
        %v9522 = vpop.f32.mrb[0].mxu0
        %v9523 = vadd.f32 0.0, %v9522
        %v9524 = vpop.f32.mrb[0].mxu0
        %v9525 = vpop.f32.mrb[0].mxu0
        %v9526 = vadd.f32 0.0, %v9525
        %v9527 = vpop.f32.mrb[0].mxu0
        %9528 = vmatprep.mubr.bf16.mxu0 0
        %9529 = vmatmul.mubr.bf16.gmra.mrb[0].mxu0 %v9458
        %v9530 = vpop.f32.mrb[0].mxu0
        %v9531 = vadd.f32 0.0, %v9530
        %v9532 = vpop.f32.mrb[0].mxu0
        %v9533 = vpop.f32.mrb[0].mxu0
        %v9534 = vadd.f32 0.0, %v9533
        %v9535 = vpop.f32.mrb[0].mxu0
        %9536 = vmatprep.mubr.bf16.mxu0 0
        %9537 = vmatmul.mubr.bf16.gmra.mrb[0].mxu0 %v9461
        %v9538 = vpop.f32.mrb[0].mxu0
        %v9539 = vadd.f32 0.0, %v9538
        %v9540 = vpop.f32.mrb[0].mxu0
        %v9541 = vpop.f32.mrb[0].mxu0
        %v9542 = vadd.f32 0.0, %v9541
        %v9543 = vpop.f32.mrb[0].mxu0
        %9544 = vmatprep.mubr.bf16.mxu0 0
        %9545 = vmatmul.mubr.bf16.gmra.mrb[0].mxu0 %v9464
        %v9546 = vpop.f32.mrb[0].mxu0
        %v9547 = vadd.f32 0.0, %v9546
        %v9548 = vpop.f32.mrb[0].mxu0
        %v9549 = vpop.f32.mrb[0].mxu0
        %v9550 = vadd.f32 0.0, %v9549
        %v9551 = vpop.f32.mrb[0].mxu0
        %9552 = vmatprep.mubr.bf16.mxu0 0
        %9553 = vmatmul.mubr.bf16.gmra.mrb[0].mxu0 %v9467
        %v9554 = vpop.f32.mrb[0].mxu0
        %v9555 = vadd.f32 0.0, %v9554
        %v9556 = vpop.f32.mrb[0].mxu0
        %v9557 = vpop.f32.mrb[0].mxu0
        %v9558 = vadd.f32 0.0, %v9557
        %v9559 = vpop.f32.mrb[0].mxu0
        %9560 = vmatprep.mubr.bf16.mxu0 0
        %9561 = vmatmul.mubr.bf16.gmra.mrb[0].mxu0 %v9470
        %v9562 = vpop.f32.mrb[0].mxu0
        %v9563 = vadd.f32 0.0, %v9562
        %v9564 = vpop.f32.mrb[0].mxu0
        %v9565 = vpop.f32.mrb[0].mxu0
        %v9566 = vadd.f32 0.0, %v9565
        %v9567 = vpop.f32.mrb[0].mxu0
        %9568 = vdwg.mxu0
        %v9569 = vadd.f32 %v9318, %v9507
        %v9570 = vadd.f32 %v9319, %v9510
        %v9571 = vadd.f32 %v9320, %v9515
        %v9572 = vadd.f32 %v9321, %v9518
        %v9573 = vadd.f32 %v9322, %v9523
        %v9574 = vadd.f32 %v9323, %v9526
        %v9575 = vadd.f32 %v9324, %v9531
        %v9576 = vadd.f32 %v9325, %v9534
        %v9577 = vadd.f32 %v9326, %v9539
        %v9578 = vadd.f32 %v9327, %v9542
        %v9579 = vadd.f32 %v9328, %v9547
        %v9580 = vadd.f32 %v9329, %v9550
        %v9581 = vadd.f32 %v9330, %v9555
        %v9582 = vadd.f32 %v9331, %v9558
        %v9583 = vadd.f32 %v9332, %v9563
        %v9584 = vadd.f32 %v9333, %v9566
        %v9585 = vxor.u32 %v9569, 2147483648
        %v9586 = vxor.u32 %v9570, 2147483648
        %v9587 = vxor.u32 %v9571, 2147483648
        %v9588 = vxor.u32 %v9572, 2147483648
        %v9589 = vxor.u32 %v9573, 2147483648
        %v9590 = vxor.u32 %v9574, 2147483648
        %v9591 = vxor.u32 %v9575, 2147483648
        %v9592 = vxor.u32 %v9576, 2147483648
        %v9593 = vxor.u32 %v9577, 2147483648
        %v9594 = vxor.u32 %v9578, 2147483648
        %v9595 = vxor.u32 %v9579, 2147483648
        %v9596 = vxor.u32 %v9580, 2147483648
        %v9597 = vxor.u32 %v9581, 2147483648
        %v9598 = vxor.u32 %v9582, 2147483648
        %v9599 = vxor.u32 %v9583, 2147483648
        %v9600 = vxor.u32 %v9584, 2147483648
        %v9601 = vmul.f32 %v9585, 1.442695
        %v9602 = vpow.pop %v9601
        %v9603 = vmul.f32 %v9586, 1.442695
        %v9604 = vpow.pop %v9603
        %v9605 = vmul.f32 %v9587, 1.442695
        %v9606 = vpow.pop %v9605
        %v9607 = vmul.f32 %v9588, 1.442695
        %v9608 = vpow.pop %v9607
        %v9609 = vmul.f32 %v9589, 1.442695
        %v9610 = vpow.pop %v9609
        %v9611 = vmul.f32 %v9590, 1.442695
        %v9612 = vpow.pop %v9611
        %v9613 = vmul.f32 %v9591, 1.442695
        %v9614 = vpow.pop %v9613
        %v9615 = vmul.f32 %v9592, 1.442695
        %v9616 = vpow.pop %v9615
        %v9617 = vmul.f32 %v9593, 1.442695
        %v9618 = vpow.pop %v9617
        %v9619 = vmul.f32 %v9594, 1.442695
        %v9620 = vpow.pop %v9619
        %v9621 = vmul.f32 %v9595, 1.442695
        %v9622 = vpow.pop %v9621
        %v9623 = vmul.f32 %v9596, 1.442695
        %v9624 = vpow.pop %v9623
        %v9625 = vmul.f32 %v9597, 1.442695
        %v9626 = vpow.pop %v9625
        %v9627 = vmul.f32 %v9598, 1.442695
        %v9628 = vpow.pop %v9627
        %v9629 = vmul.f32 %v9599, 1.442695
        %v9630 = vpow.pop %v9629
        %v9631 = vmul.f32 %v9600, 1.442695
        %v9632 = vpow.pop %v9631
        %v9633 = vadd.f32 %v9602, 1.0
        %v9634 = vadd.f32 %v9604, 1.0
        %v9635 = vadd.f32 %v9606, 1.0
        %v9636 = vadd.f32 %v9608, 1.0
        %v9637 = vadd.f32 %v9610, 1.0
        %v9638 = vadd.f32 %v9612, 1.0
        %v9639 = vadd.f32 %v9614, 1.0
        %v9640 = vadd.f32 %v9616, 1.0
        %v9641 = vadd.f32 %v9618, 1.0
        %v9642 = vadd.f32 %v9620, 1.0
        %v9643 = vadd.f32 %v9622, 1.0
        %v9644 = vadd.f32 %v9624, 1.0
        %v9645 = vadd.f32 %v9626, 1.0
        %v9646 = vadd.f32 %v9628, 1.0
        %v9647 = vadd.f32 %v9630, 1.0
        %v9648 = vadd.f32 %v9632, 1.0
        %v9649 = vrcp.pop %v9633
        %v9650 = vmul.f32 1.0, %v9649
        %v9651 = vrcp.pop %v9634
        %v9652 = vmul.f32 1.0, %v9651
        %v9653 = vrcp.pop %v9635
        %v9654 = vmul.f32 1.0, %v9653
        %v9655 = vrcp.pop %v9636
        %v9656 = vmul.f32 1.0, %v9655
        %v9657 = vrcp.pop %v9637
        %v9658 = vmul.f32 1.0, %v9657
        %v9659 = vrcp.pop %v9638
        %v9660 = vmul.f32 1.0, %v9659
        %v9661 = vrcp.pop %v9639
        %v9662 = vmul.f32 1.0, %v9661
        %v9663 = vrcp.pop %v9640
        %v9664 = vmul.f32 1.0, %v9663
        %v9665 = vrcp.pop %v9641
        %v9666 = vmul.f32 1.0, %v9665
        %v9667 = vrcp.pop %v9642
        %v9668 = vmul.f32 1.0, %v9667
        %v9669 = vrcp.pop %v9643
        %v9670 = vmul.f32 1.0, %v9669
        %v9671 = vrcp.pop %v9644
        %v9672 = vmul.f32 1.0, %v9671
        %v9673 = vrcp.pop %v9645
        %v9674 = vmul.f32 1.0, %v9673
        %v9675 = vrcp.pop %v9646
        %v9676 = vmul.f32 1.0, %v9675
        %v9677 = vrcp.pop %v9647
        %v9678 = vmul.f32 1.0, %v9677
        %v9679 = vrcp.pop %v9648
        %v9680 = vmul.f32 1.0, %v9679
        %9697 = vrot.lane.b32.xlu0 %v8884, 64
        %v9698 = vpop.permute.xlu0 %9697
        %9699 = vrot.lane.b32.xlu0 %v8885, 64
        %v9700 = vpop.permute.xlu0 %9699
        %9701 = vrot.lane.b32.xlu0 %v8886, 64
        %v9702 = vpop.permute.xlu0 %9701
        %9703 = vrot.lane.b32.xlu0 %v8887, 64
        %v9704 = vpop.permute.xlu0 %9703
        %9705 = vrot.lane.b32.xlu0 %v8888, 64
        %v9706 = vpop.permute.xlu0 %9705
        %9707 = vrot.lane.b32.xlu0 %v8889, 64
        %v9708 = vpop.permute.xlu0 %9707
        %9709 = vrot.lane.b32.xlu0 %v8890, 64
        %v9710 = vpop.permute.xlu0 %9709
        %9711 = vrot.lane.b32.xlu0 %v8891, 64
        %v9712 = vpop.permute.xlu0 %9711
        %9713 = vrot.lane.b32.xlu0 %v8892, 64
        %v9714 = vpop.permute.xlu0 %9713
        %9715 = vrot.lane.b32.xlu0 %v8893, 64
        %v9716 = vpop.permute.xlu0 %9715
        %9717 = vrot.lane.b32.xlu0 %v8894, 64
        %v9718 = vpop.permute.xlu0 %9717
        %9719 = vrot.lane.b32.xlu0 %v8895, 64
        %v9720 = vpop.permute.xlu0 %9719
        %9721 = vrot.lane.b32.xlu0 %v8896, 64
        %v9722 = vpop.permute.xlu0 %9721
        %9723 = vrot.lane.b32.xlu0 %v8897, 64
        %v9724 = vpop.permute.xlu0 %9723
        %9725 = vrot.lane.b32.xlu0 %v8898, 64
        %v9726 = vpop.permute.xlu0 %9725
        %9727 = vrot.lane.b32.xlu0 %v8899, 64
        %v9728 = vpop.permute.xlu0 %9727
        %v9745 = vsub.f32 %v9569, %v9698
        %v9746 = vsub.f32 %v9570, %v9700
        %v9747 = vsub.f32 %v9571, %v9702
        %v9748 = vsub.f32 %v9572, %v9704
        %v9749 = vsub.f32 %v9573, %v9706
        %v9750 = vsub.f32 %v9574, %v9708
        %v9751 = vsub.f32 %v9575, %v9710
        %v9752 = vsub.f32 %v9576, %v9712
        %v9753 = vsub.f32 %v9577, %v9714
        %v9754 = vsub.f32 %v9578, %v9716
        %v9755 = vsub.f32 %v9579, %v9718
        %v9756 = vsub.f32 %v9580, %v9720
        %v9757 = vsub.f32 %v9581, %v9722
        %v9758 = vsub.f32 %v9582, %v9724
        %v9759 = vsub.f32 %v9583, %v9726
        %v9760 = vsub.f32 %v9584, %v9728
        %9777 = vrot.lane.b32.xlu0 %v9745, 64
        %v9778 = vpop.permute.xlu0 %9777
        %9779 = vrot.lane.b32.xlu0 %v9746, 64
        %v9780 = vpop.permute.xlu0 %9779
        %9781 = vrot.lane.b32.xlu0 %v9747, 64
        %v9782 = vpop.permute.xlu0 %9781
        %9783 = vrot.lane.b32.xlu0 %v9748, 64
        %v9784 = vpop.permute.xlu0 %9783
        %9785 = vrot.lane.b32.xlu0 %v9749, 64
        %v9786 = vpop.permute.xlu0 %9785
        %9787 = vrot.lane.b32.xlu0 %v9750, 64
        %v9788 = vpop.permute.xlu0 %9787
        %9789 = vrot.lane.b32.xlu0 %v9751, 64
        %v9790 = vpop.permute.xlu0 %9789
        %9791 = vrot.lane.b32.xlu0 %v9752, 64
        %v9792 = vpop.permute.xlu0 %9791
        %9793 = vrot.lane.b32.xlu0 %v9753, 64
        %v9794 = vpop.permute.xlu0 %9793
        %9795 = vrot.lane.b32.xlu0 %v9754, 64
        %v9796 = vpop.permute.xlu0 %9795
        %9797 = vrot.lane.b32.xlu0 %v9755, 64
        %v9798 = vpop.permute.xlu0 %9797
        %9799 = vrot.lane.b32.xlu0 %v9756, 64
        %v9800 = vpop.permute.xlu0 %9799
        %9801 = vrot.lane.b32.xlu0 %v9757, 64
        %v9802 = vpop.permute.xlu0 %9801
        %9803 = vrot.lane.b32.xlu0 %v9758, 64
        %v9804 = vpop.permute.xlu0 %9803
        %9805 = vrot.lane.b32.xlu0 %v9759, 64
        %v9806 = vpop.permute.xlu0 %9805
        %9807 = vrot.lane.b32.xlu0 %v9760, 64
        %v9808 = vpop.permute.xlu0 %9807
        %v9825 = vmul.f32 %v9650, %v9778
        %v9826 = vmul.f32 %v9652, %v9780
        %v9827 = vmul.f32 %v9654, %v9782
        %v9828 = vmul.f32 %v9656, %v9784
        %v9829 = vmul.f32 %v9658, %v9786
        %v9830 = vmul.f32 %v9660, %v9788
        %v9831 = vmul.f32 %v9662, %v9790
        %v9832 = vmul.f32 %v9664, %v9792
        %v9833 = vmul.f32 %v9666, %v9794
        %v9834 = vmul.f32 %v9668, %v9796
        %v9835 = vmul.f32 %v9670, %v9798
        %v9836 = vmul.f32 %v9672, %v9800
        %v9837 = vmul.f32 %v9674, %v9802
        %v9838 = vmul.f32 %v9676, %v9804
        %v9839 = vmul.f32 %v9678, %v9806
        %v9840 = vmul.f32 %v9680, %v9808
        %v9841 = vadd.f32 %v8884, %v9825
        %v9842 = vadd.f32 %v8885, %v9826
        %v9843 = vadd.f32 %v8886, %v9827
        %v9844 = vadd.f32 %v8887, %v9828
        %v9845 = vadd.f32 %v8888, %v9829
        %v9846 = vadd.f32 %v8889, %v9830
        %v9847 = vadd.f32 %v8890, %v9831
        %v9848 = vadd.f32 %v8891, %v9832
        %v9849 = vadd.f32 %v8892, %v9833
        %v9850 = vadd.f32 %v8893, %v9834
        %v9851 = vadd.f32 %v8894, %v9835
        %v9852 = vadd.f32 %v8895, %v9836
        %v9853 = vadd.f32 %v8896, %v9837
        %v9854 = vadd.f32 %v8897, %v9838
        %v9855 = vadd.f32 %v8898, %v9839
        %v9856 = vadd.f32 %v8899, %v9840
        %v9857 = vld [vmem:[%s8 + $0x9] sm:$0x1]
        %v9858 = vpack.c.bf16 %v9842, %v9841
        %v9859 = vpack.c.bf16 %v9844, %v9843
        %v9860 = vpack.c.bf16 %v9846, %v9845
        %v9861 = vpack.c.bf16 %v9848, %v9847
        %v9862 = vpack.c.bf16 %v9850, %v9849
        %v9863 = vpack.c.bf16 %v9852, %v9851
        %v9864 = vpack.c.bf16 %v9854, %v9853
        %v9865 = vpack.c.bf16 %v9856, %v9855
        %9866 = vst.msk [vmem:[#allocation2 + $0x10] sm:$0xff] %vm867, %v9858
        %9867 = vst.msk [vmem:[#allocation2 + $0x18] sm:$0xff] %vm867, %v9859
        %9868 = vst.msk [vmem:[#allocation2 + $0x20] sm:$0xff] %vm867, %v9860
        %9869 = vst.msk [vmem:[#allocation2 + $0x28] sm:$0xff] %vm867, %v9861
        %9870 = vst.msk [vmem:[#allocation2 + $0x50] sm:$0xff] %vm867, %v9862
        %9871 = vst.msk [vmem:[#allocation2 + $0x58] sm:$0xff] %vm867, %v9863
        %9872 = vst.msk [vmem:[#allocation2 + $0x60] sm:$0xff] %vm867, %v9864
        %9873 = vst.msk [vmem:[#allocation2 + $0x68] sm:$0xff] %vm867, %v9865
        %v9874 = vld [vmem:[#allocation2 + $0x8] sm:$0x80]
        %v9875 = vld [vmem:[#allocation2 + $0x10] sm:$0xff]
        %v9876 = vld [vmem:[#allocation2 + $0x18] sm:$0xff]
        %v9877 = vld [vmem:[#allocation2 + $0x20] sm:$0xff]
        %v9878 = vld [vmem:[#allocation2 + $0x28] sm:$0xff]
        %v9879 = vld [vmem:[#allocation2 + $0x48] sm:$0x80]
        %v9880 = vld [vmem:[#allocation2 + $0x50] sm:$0xff]
        %v9881 = vld [vmem:[#allocation2 + $0x58] sm:$0xff]
        %v9882 = vld [vmem:[#allocation2 + $0x60] sm:$0xff]
        %v9883 = vld [vmem:[#allocation2 + $0x68] sm:$0xff]
        %v9885 = vshrl.u32 %v9874, 16
        %v9887 = vrot.slane %v9885, 7
        %v9889 = vshrl.u32 %v9875, 16
        %v9891 = vrot.slane %v9889, 7
        %v9892 = vshll.u32 %v9875, 16
        %v9894 = vor.u32 %v9891, %v9892
        %v9895 = vsel %vm1024, %v9887, %v9894
        %v9897 = vshrl.u32 %v9876, 16
        %v9899 = vrot.slane %v9897, 7
        %v9900 = vshll.u32 %v9876, 16
        %v9902 = vor.u32 %v9899, %v9900
        %v9903 = vsel %vm1024, %v9891, %v9902
        %v9905 = vshrl.u32 %v9877, 16
        %v9907 = vrot.slane %v9905, 7
        %v9908 = vshll.u32 %v9877, 16
        %v9910 = vor.u32 %v9907, %v9908
        %v9911 = vsel %vm1024, %v9899, %v9910
        %v9913 = vshrl.u32 %v9878, 16
        %v9915 = vrot.slane %v9913, 7
        %v9916 = vshll.u32 %v9878, 16
        %v9918 = vor.u32 %v9915, %v9916
        %v9919 = vsel %vm1024, %v9907, %v9918
        %v9921 = vshrl.u32 %v9879, 16
        %v9923 = vrot.slane %v9921, 7
        %v9925 = vshrl.u32 %v9880, 16
        %v9927 = vrot.slane %v9925, 7
        %v9928 = vshll.u32 %v9880, 16
        %v9930 = vor.u32 %v9927, %v9928
        %v9931 = vsel %vm1024, %v9923, %v9930
        %v9933 = vshrl.u32 %v9881, 16
        %v9935 = vrot.slane %v9933, 7
        %v9936 = vshll.u32 %v9881, 16
        %v9938 = vor.u32 %v9935, %v9936
        %v9939 = vsel %vm1024, %v9927, %v9938
        %v9941 = vshrl.u32 %v9882, 16
        %v9943 = vrot.slane %v9941, 7
        %v9944 = vshll.u32 %v9882, 16
        %v9946 = vor.u32 %v9943, %v9944
        %v9947 = vsel %vm1024, %v9935, %v9946
        %v9949 = vshrl.u32 %v9883, 16
        %v9951 = vrot.slane %v9949, 7
        %v9952 = vshll.u32 %v9883, 16
        %v9954 = vor.u32 %v9951, %v9952
        %v9955 = vsel %vm1024, %v9943, %v9954
        %s9956 = scalar_lea.vmem [#allocation3], 864
        %v9957 = vld [vmem:[%s9956] sm:$0xf]
        %v9958 = vld [vmem:[%s9956 + $0x4] sm:$0xf]
        %v9959 = vld [vmem:[%s9956 + $0x8] sm:$0xf]
        %v9960 = vld [vmem:[%s9956 + $0xc] sm:$0xf]
        %v9961 = vld [vmem:[%s9956 + $0x10] sm:$0xf]
        %v9962 = vld [vmem:[%s9956 + $0x14] sm:$0xf]
        %v9963 = vld [vmem:[%s9956 + $0x18] sm:$0xf]
        %v9964 = vld [vmem:[%s9956 + $0x1c] sm:$0xf]
        %v9973 = vunpack.c.l.b16 %v9957
        %v9974 = vunpack.c.l.b16 %v9958
        %v9975 = vunpack.c.l.b16 %v9959
        %v9976 = vunpack.c.l.b16 %v9960
        %v9977 = vunpack.c.l.b16 %v9961
        %v9978 = vunpack.c.l.b16 %v9962
        %v9979 = vunpack.c.l.b16 %v9963
        %v9980 = vunpack.c.l.b16 %v9964
        %v9981 = vpack.c.b16 %v9974, %v9973
        %v9982 = vpack.c.b16 %v9976, %v9975
        %v9983 = vpack.c.b16 %v9978, %v9977
        %v9984 = vpack.c.b16 %v9980, %v9979
        %v9990 = vsel %vm867, %v9895, 0
        %v9993 = vsel %vm867, %v9903, 0
        %v9996 = vsel %vm867, %v9911, 0
        %v9999 = vsel %vm867, %v9919, 0
        %v10002 = vsel %vm867, %v9931, 0
        %v10005 = vsel %vm867, %v9939, 0
        %v10008 = vsel %vm867, %v9947, 0
        %v10011 = vsel %vm867, %v9955, 0
        %10013 = vmatprep.subr.bf16.mxu0 0
        %10014 = vmatpush1.bf16.msra.mxu0 %v9981
        %10015 = vmatprep.subr.bf16.mxu0 0
        %10016 = vmatpush1.bf16.msra.mxu0 %v9982
        %10017 = vmatprep.subr.bf16.mxu0 0
        %10018 = vmatpush1.bf16.msra.mxu0 %v9983
        %10019 = vmatprep.subr.bf16.mxu0 0
        %10020 = vmatpush1.bf16.msra.mxu0 %v9984
        %10021 = vmatprep.subr.bf16.mxu0 0
        %10022 = vmatpush1.bf16.msra.mxu0 0
        %10023 = vmatprep.subr.bf16.mxu0 0
        %10024 = vmatpush1.bf16.msra.mxu0 0
        %10025 = vmatprep.subr.bf16.mxu0 0
        %10026 = vmatpush1.bf16.msra.mxu0 0
        %10027 = vmatprep.subr.bf16.mxu0 0
        %10028 = vmatpush1.bf16.msra.mxu0 0
        %10029 = vmatprep.subr.bf16.mxu0 0
        %10030 = vmatpush1.bf16.msra.mxu0 0
        %10031 = vmatprep.subr.bf16.mxu0 0
        %10032 = vmatpush1.bf16.msra.mxu0 0
        %10033 = vmatprep.subr.bf16.mxu0 0
        %10034 = vmatpush1.bf16.msra.mxu0 0
        %10035 = vmatprep.subr.bf16.mxu0 0
        %10036 = vmatpush1.bf16.msra.mxu0 0
        %10037 = vmatprep.subr.bf16.mxu0 0
        %10038 = vmatpush1.bf16.msra.mxu0 0
        %10039 = vmatprep.subr.bf16.mxu0 0
        %10040 = vmatpush1.bf16.msra.mxu0 0
        %10041 = vmatprep.subr.bf16.mxu0 0
        %10042 = vmatpush1.bf16.msra.mxu0 0
        %10043 = vmatprep.subr.bf16.mxu0 0
        %10044 = vmatpush1.bf16.msra.mxu0 0
        %10045 = vmatprep.mubr.bf16.mxu0 0
        %10046 = vmatmul.mubr.bf16.gmra.mrb[0].mxu0 %v9990
        %v10047 = vpop.f32.mrb[0].mxu0
        %v10048 = vadd.f32 0.0, %v10047
        %v10049 = vpop.f32.mrb[0].mxu0
        %v10050 = vpop.f32.mrb[0].mxu0
        %v10051 = vadd.f32 0.0, %v10050
        %v10052 = vpop.f32.mrb[0].mxu0
        %10053 = vmatprep.mubr.bf16.mxu0 0
        %10054 = vmatmul.mubr.bf16.gmra.mrb[0].mxu0 %v9993
        %v10055 = vpop.f32.mrb[0].mxu0
        %v10056 = vadd.f32 0.0, %v10055
        %v10057 = vpop.f32.mrb[0].mxu0
        %v10058 = vpop.f32.mrb[0].mxu0
        %v10059 = vadd.f32 0.0, %v10058
        %v10060 = vpop.f32.mrb[0].mxu0
        %10061 = vmatprep.mubr.bf16.mxu0 0
        %10062 = vmatmul.mubr.bf16.gmra.mrb[0].mxu0 %v9996
        %v10063 = vpop.f32.mrb[0].mxu0
        %v10064 = vadd.f32 0.0, %v10063
        %v10065 = vpop.f32.mrb[0].mxu0
        %v10066 = vpop.f32.mrb[0].mxu0
        %v10067 = vadd.f32 0.0, %v10066
        %v10068 = vpop.f32.mrb[0].mxu0
        %10069 = vmatprep.mubr.bf16.mxu0 0
        %10070 = vmatmul.mubr.bf16.gmra.mrb[0].mxu0 %v9999
        %v10071 = vpop.f32.mrb[0].mxu0
        %v10072 = vadd.f32 0.0, %v10071
        %v10073 = vpop.f32.mrb[0].mxu0
        %v10074 = vpop.f32.mrb[0].mxu0
        %v10075 = vadd.f32 0.0, %v10074
        %v10076 = vpop.f32.mrb[0].mxu0
        %10077 = vmatprep.mubr.bf16.mxu0 0
        %10078 = vmatmul.mubr.bf16.gmra.mrb[0].mxu0 %v10002
        %v10079 = vpop.f32.mrb[0].mxu0
        %v10080 = vadd.f32 0.0, %v10079
        %v10081 = vpop.f32.mrb[0].mxu0
        %v10082 = vpop.f32.mrb[0].mxu0
        %v10083 = vadd.f32 0.0, %v10082
        %v10084 = vpop.f32.mrb[0].mxu0
        %10085 = vmatprep.mubr.bf16.mxu0 0
        %10086 = vmatmul.mubr.bf16.gmra.mrb[0].mxu0 %v10005
        %v10087 = vpop.f32.mrb[0].mxu0
        %v10088 = vadd.f32 0.0, %v10087
        %v10089 = vpop.f32.mrb[0].mxu0
        %v10090 = vpop.f32.mrb[0].mxu0
        %v10091 = vadd.f32 0.0, %v10090
        %v10092 = vpop.f32.mrb[0].mxu0
        %10093 = vmatprep.mubr.bf16.mxu0 0
        %10094 = vmatmul.mubr.bf16.gmra.mrb[0].mxu0 %v10008
        %v10095 = vpop.f32.mrb[0].mxu0
        %v10096 = vadd.f32 0.0, %v10095
        %v10097 = vpop.f32.mrb[0].mxu0
        %v10098 = vpop.f32.mrb[0].mxu0
        %v10099 = vadd.f32 0.0, %v10098
        %v10100 = vpop.f32.mrb[0].mxu0
        %10101 = vmatprep.mubr.bf16.mxu0 0
        %10102 = vmatmul.mubr.bf16.gmra.mrb[0].mxu0 %v10011
        %v10103 = vpop.f32.mrb[0].mxu0
        %v10104 = vadd.f32 0.0, %v10103
        %v10105 = vpop.f32.mrb[0].mxu0
        %v10106 = vpop.f32.mrb[0].mxu0
        %v10107 = vadd.f32 0.0, %v10106
        %v10108 = vpop.f32.mrb[0].mxu0
        %10109 = vdwg.mxu0
        %v10110 = vlaneseq
        %v10111 = vshrl.u32 %v10110, 7
        %v10112 = vsub.s32 0, %v10111
        %v10113 = vrot.slane %v9857, %v10112
        %v10114 = vadd.f32 %v10113, %v10048
        %v10115 = vadd.f32 %v10113, %v10051
        %v10116 = vadd.f32 %v10113, %v10056
        %v10117 = vadd.f32 %v10113, %v10059
        %v10118 = vadd.f32 %v10113, %v10064
        %v10119 = vadd.f32 %v10113, %v10067
        %v10120 = vadd.f32 %v10113, %v10072
        %v10121 = vadd.f32 %v10113, %v10075
        %v10122 = vadd.f32 %v10113, %v10080
        %v10123 = vadd.f32 %v10113, %v10083
        %v10124 = vadd.f32 %v10113, %v10088
        %v10125 = vadd.f32 %v10113, %v10091
        %v10126 = vadd.f32 %v10113, %v10096
        %v10127 = vadd.f32 %v10113, %v10099
        %v10128 = vadd.f32 %v10113, %v10104
        %v10129 = vadd.f32 %v10113, %v10107
        %v10130 = vld [vmem:[%s9956 + $0x20] sm:$0xf]
        %v10131 = vld [vmem:[%s9956 + $0x24] sm:$0xf]
        %v10132 = vld [vmem:[%s9956 + $0x28] sm:$0xf]
        %v10133 = vld [vmem:[%s9956 + $0x2c] sm:$0xf]
        %v10134 = vld [vmem:[%s9956 + $0x30] sm:$0xf]
        %v10135 = vld [vmem:[%s9956 + $0x34] sm:$0xf]
        %v10136 = vld [vmem:[%s9956 + $0x38] sm:$0xf]
        %v10137 = vld [vmem:[%s9956 + $0x3c] sm:$0xf]
        %v10146 = vunpack.c.l.b16 %v10130
        %v10147 = vunpack.c.l.b16 %v10131
        %v10148 = vunpack.c.l.b16 %v10132
        %v10149 = vunpack.c.l.b16 %v10133
        %v10150 = vunpack.c.l.b16 %v10134
        %v10151 = vunpack.c.l.b16 %v10135
        %v10152 = vunpack.c.l.b16 %v10136
        %v10153 = vunpack.c.l.b16 %v10137
        %v10154 = vpack.c.b16 %v10147, %v10146
        %v10155 = vpack.c.b16 %v10149, %v10148
        %v10156 = vpack.c.b16 %v10151, %v10150
        %v10157 = vpack.c.b16 %v10153, %v10152
        %v10162 = vsel %vm867, %v9875, 0
        %v10164 = vsel %vm867, %v9876, 0
        %v10166 = vsel %vm867, %v9877, 0
        %v10168 = vsel %vm867, %v9878, 0
        %v10170 = vsel %vm867, %v9880, 0
        %v10172 = vsel %vm867, %v9881, 0
        %v10174 = vsel %vm867, %v9882, 0
        %v10176 = vsel %vm867, %v9883, 0
        %10178 = vmatprep.subr.bf16.mxu0 0
        %10179 = vmatpush1.bf16.msra.mxu0 %v10154
        %10180 = vmatprep.subr.bf16.mxu0 0
        %10181 = vmatpush1.bf16.msra.mxu0 %v10155
        %10182 = vmatprep.subr.bf16.mxu0 0
        %10183 = vmatpush1.bf16.msra.mxu0 %v10156
        %10184 = vmatprep.subr.bf16.mxu0 0
        %10185 = vmatpush1.bf16.msra.mxu0 %v10157
        %10186 = vmatprep.subr.bf16.mxu0 0
        %10187 = vmatpush1.bf16.msra.mxu0 0
        %10188 = vmatprep.subr.bf16.mxu0 0
        %10189 = vmatpush1.bf16.msra.mxu0 0
        %10190 = vmatprep.subr.bf16.mxu0 0
        %10191 = vmatpush1.bf16.msra.mxu0 0
        %10192 = vmatprep.subr.bf16.mxu0 0
        %10193 = vmatpush1.bf16.msra.mxu0 0
        %10194 = vmatprep.subr.bf16.mxu0 0
        %10195 = vmatpush1.bf16.msra.mxu0 0
        %10196 = vmatprep.subr.bf16.mxu0 0
        %10197 = vmatpush1.bf16.msra.mxu0 0
        %10198 = vmatprep.subr.bf16.mxu0 0
        %10199 = vmatpush1.bf16.msra.mxu0 0
        %10200 = vmatprep.subr.bf16.mxu0 0
        %10201 = vmatpush1.bf16.msra.mxu0 0
        %10202 = vmatprep.subr.bf16.mxu0 0
        %10203 = vmatpush1.bf16.msra.mxu0 0
        %10204 = vmatprep.subr.bf16.mxu0 0
        %10205 = vmatpush1.bf16.msra.mxu0 0
        %10206 = vmatprep.subr.bf16.mxu0 0
        %10207 = vmatpush1.bf16.msra.mxu0 0
        %10208 = vmatprep.subr.bf16.mxu0 0
        %10209 = vmatpush1.bf16.msra.mxu0 0
        %10210 = vmatprep.mubr.bf16.mxu0 0
        %10211 = vmatmul.mubr.bf16.gmra.mrb[0].mxu0 %v10162
        %v10212 = vpop.f32.mrb[0].mxu0
        %v10213 = vadd.f32 0.0, %v10212
        %v10214 = vpop.f32.mrb[0].mxu0
        %v10215 = vpop.f32.mrb[0].mxu0
        %v10216 = vadd.f32 0.0, %v10215
        %v10217 = vpop.f32.mrb[0].mxu0
        %10218 = vmatprep.mubr.bf16.mxu0 0
        %10219 = vmatmul.mubr.bf16.gmra.mrb[0].mxu0 %v10164
        %v10220 = vpop.f32.mrb[0].mxu0
        %v10221 = vadd.f32 0.0, %v10220
        %v10222 = vpop.f32.mrb[0].mxu0
        %v10223 = vpop.f32.mrb[0].mxu0
        %v10224 = vadd.f32 0.0, %v10223
        %v10225 = vpop.f32.mrb[0].mxu0
        %10226 = vmatprep.mubr.bf16.mxu0 0
        %10227 = vmatmul.mubr.bf16.gmra.mrb[0].mxu0 %v10166
        %v10228 = vpop.f32.mrb[0].mxu0
        %v10229 = vadd.f32 0.0, %v10228
        %v10230 = vpop.f32.mrb[0].mxu0
        %v10231 = vpop.f32.mrb[0].mxu0
        %v10232 = vadd.f32 0.0, %v10231
        %v10233 = vpop.f32.mrb[0].mxu0
        %10234 = vmatprep.mubr.bf16.mxu0 0
        %10235 = vmatmul.mubr.bf16.gmra.mrb[0].mxu0 %v10168
        %v10236 = vpop.f32.mrb[0].mxu0
        %v10237 = vadd.f32 0.0, %v10236
        %v10238 = vpop.f32.mrb[0].mxu0
        %v10239 = vpop.f32.mrb[0].mxu0
        %v10240 = vadd.f32 0.0, %v10239
        %v10241 = vpop.f32.mrb[0].mxu0
        %10242 = vmatprep.mubr.bf16.mxu0 0
        %10243 = vmatmul.mubr.bf16.gmra.mrb[0].mxu0 %v10170
        %v10244 = vpop.f32.mrb[0].mxu0
        %v10245 = vadd.f32 0.0, %v10244
        %v10246 = vpop.f32.mrb[0].mxu0
        %v10247 = vpop.f32.mrb[0].mxu0
        %v10248 = vadd.f32 0.0, %v10247
        %v10249 = vpop.f32.mrb[0].mxu0
        %10250 = vmatprep.mubr.bf16.mxu0 0
        %10251 = vmatmul.mubr.bf16.gmra.mrb[0].mxu0 %v10172
        %v10252 = vpop.f32.mrb[0].mxu0
        %v10253 = vadd.f32 0.0, %v10252
        %v10254 = vpop.f32.mrb[0].mxu0
        %v10255 = vpop.f32.mrb[0].mxu0
        %v10256 = vadd.f32 0.0, %v10255
        %v10257 = vpop.f32.mrb[0].mxu0
        %10258 = vmatprep.mubr.bf16.mxu0 0
        %10259 = vmatmul.mubr.bf16.gmra.mrb[0].mxu0 %v10174
        %v10260 = vpop.f32.mrb[0].mxu0
        %v10261 = vadd.f32 0.0, %v10260
        %v10262 = vpop.f32.mrb[0].mxu0
        %v10263 = vpop.f32.mrb[0].mxu0
        %v10264 = vadd.f32 0.0, %v10263
        %v10265 = vpop.f32.mrb[0].mxu0
        %10266 = vmatprep.mubr.bf16.mxu0 0
        %10267 = vmatmul.mubr.bf16.gmra.mrb[0].mxu0 %v10176
        %v10268 = vpop.f32.mrb[0].mxu0
        %v10269 = vadd.f32 0.0, %v10268
        %v10270 = vpop.f32.mrb[0].mxu0
        %v10271 = vpop.f32.mrb[0].mxu0
        %v10272 = vadd.f32 0.0, %v10271
        %v10273 = vpop.f32.mrb[0].mxu0
        %10274 = vdwg.mxu0
        %v10275 = vadd.f32 %v10114, %v10213
        %v10276 = vadd.f32 %v10115, %v10216
        %v10277 = vadd.f32 %v10116, %v10221
        %v10278 = vadd.f32 %v10117, %v10224
        %v10279 = vadd.f32 %v10118, %v10229
        %v10280 = vadd.f32 %v10119, %v10232
        %v10281 = vadd.f32 %v10120, %v10237
        %v10282 = vadd.f32 %v10121, %v10240
        %v10283 = vadd.f32 %v10122, %v10245
        %v10284 = vadd.f32 %v10123, %v10248
        %v10285 = vadd.f32 %v10124, %v10253
        %v10286 = vadd.f32 %v10125, %v10256
        %v10287 = vadd.f32 %v10126, %v10261
        %v10288 = vadd.f32 %v10127, %v10264
        %v10289 = vadd.f32 %v10128, %v10269
        %v10290 = vadd.f32 %v10129, %v10272
        %v10291 = vld [vmem:[#allocation2 + $0x10] sm:$0xff]
        %v10292 = vld [vmem:[#allocation2 + $0x18] sm:$0xff]
        %v10293 = vld [vmem:[#allocation2 + $0x20] sm:$0xff]
        %v10294 = vld [vmem:[#allocation2 + $0x28] sm:$0xff]
        %v10295 = vld [vmem:[#allocation2 + $0x30] sm:$0x1]
        %v10296 = vld [vmem:[#allocation2 + $0x50] sm:$0xff]
        %v10297 = vld [vmem:[#allocation2 + $0x58] sm:$0xff]
        %v10298 = vld [vmem:[#allocation2 + $0x60] sm:$0xff]
        %v10299 = vld [vmem:[#allocation2 + $0x68] sm:$0xff]
        %v10300 = vld [vmem:[#allocation2 + $0x70] sm:$0x1]
        %v10302 = vshrl.u32 %v10291, 16
        %v10304 = vshll.u32 %v10291, 16
        %v10306 = vrot.slane %v10304, 1
        %v10307 = vor.u32 %v10302, %v10306
        %v10309 = vshll.u32 %v10292, 16
        %v10311 = vrot.slane %v10309, 1
        %v10312 = vsel %vm1441, %v10307, %v10311
        %v10313 = vshrl.u32 %v10292, 16
        %v10315 = vor.u32 %v10313, %v10311
        %v10317 = vshll.u32 %v10293, 16
        %v10319 = vrot.slane %v10317, 1
        %v10320 = vsel %vm1441, %v10315, %v10319
        %v10321 = vshrl.u32 %v10293, 16
        %v10323 = vor.u32 %v10321, %v10319
        %v10325 = vshll.u32 %v10294, 16
        %v10327 = vrot.slane %v10325, 1
        %v10328 = vsel %vm1441, %v10323, %v10327
        %v10329 = vshrl.u32 %v10294, 16
        %v10331 = vor.u32 %v10329, %v10327
        %v10333 = vshll.u32 %v10295, 16
        %v10335 = vrot.slane %v10333, 1
        %v10336 = vsel %vm1441, %v10331, %v10335
        %v10338 = vshrl.u32 %v10296, 16
        %v10340 = vshll.u32 %v10296, 16
        %v10342 = vrot.slane %v10340, 1
        %v10343 = vor.u32 %v10338, %v10342
        %v10345 = vshll.u32 %v10297, 16
        %v10347 = vrot.slane %v10345, 1
        %v10348 = vsel %vm1441, %v10343, %v10347
        %v10349 = vshrl.u32 %v10297, 16
        %v10351 = vor.u32 %v10349, %v10347
        %v10353 = vshll.u32 %v10298, 16
        %v10355 = vrot.slane %v10353, 1
        %v10356 = vsel %vm1441, %v10351, %v10355
        %v10357 = vshrl.u32 %v10298, 16
        %v10359 = vor.u32 %v10357, %v10355
        %v10361 = vshll.u32 %v10299, 16
        %v10363 = vrot.slane %v10361, 1
        %v10364 = vsel %vm1441, %v10359, %v10363
        %v10365 = vshrl.u32 %v10299, 16
        %v10367 = vor.u32 %v10365, %v10363
        %v10369 = vshll.u32 %v10300, 16
        %v10371 = vrot.slane %v10369, 1
        %v10372 = vsel %vm1441, %v10367, %v10371
        %v10373 = vld [vmem:[%s9956 + $0x40] sm:$0xf]
        %v10374 = vld [vmem:[%s9956 + $0x44] sm:$0xf]
        %v10375 = vld [vmem:[%s9956 + $0x48] sm:$0xf]
        %v10376 = vld [vmem:[%s9956 + $0x4c] sm:$0xf]
        %v10377 = vld [vmem:[%s9956 + $0x50] sm:$0xf]
        %v10378 = vld [vmem:[%s9956 + $0x54] sm:$0xf]
        %v10379 = vld [vmem:[%s9956 + $0x58] sm:$0xf]
        %v10380 = vld [vmem:[%s9956 + $0x5c] sm:$0xf]
        %v10389 = vunpack.c.l.b16 %v10373
        %v10390 = vunpack.c.l.b16 %v10374
        %v10391 = vunpack.c.l.b16 %v10375
        %v10392 = vunpack.c.l.b16 %v10376
        %v10393 = vunpack.c.l.b16 %v10377
        %v10394 = vunpack.c.l.b16 %v10378
        %v10395 = vunpack.c.l.b16 %v10379
        %v10396 = vunpack.c.l.b16 %v10380
        %v10397 = vpack.c.b16 %v10390, %v10389
        %v10398 = vpack.c.b16 %v10392, %v10391
        %v10399 = vpack.c.b16 %v10394, %v10393
        %v10400 = vpack.c.b16 %v10396, %v10395
        %v10406 = vsel %vm867, %v10312, 0
        %v10409 = vsel %vm867, %v10320, 0
        %v10412 = vsel %vm867, %v10328, 0
        %v10415 = vsel %vm867, %v10336, 0
        %v10418 = vsel %vm867, %v10348, 0
        %v10421 = vsel %vm867, %v10356, 0
        %v10424 = vsel %vm867, %v10364, 0
        %v10427 = vsel %vm867, %v10372, 0
        %10429 = vmatprep.subr.bf16.mxu0 0
        %10430 = vmatpush1.bf16.msra.mxu0 %v10397
        %10431 = vmatprep.subr.bf16.mxu0 0
        %10432 = vmatpush1.bf16.msra.mxu0 %v10398
        %10433 = vmatprep.subr.bf16.mxu0 0
        %10434 = vmatpush1.bf16.msra.mxu0 %v10399
        %10435 = vmatprep.subr.bf16.mxu0 0
        %10436 = vmatpush1.bf16.msra.mxu0 %v10400
        %10437 = vmatprep.subr.bf16.mxu0 0
        %10438 = vmatpush1.bf16.msra.mxu0 0
        %10439 = vmatprep.subr.bf16.mxu0 0
        %10440 = vmatpush1.bf16.msra.mxu0 0
        %10441 = vmatprep.subr.bf16.mxu0 0
        %10442 = vmatpush1.bf16.msra.mxu0 0
        %10443 = vmatprep.subr.bf16.mxu0 0
        %10444 = vmatpush1.bf16.msra.mxu0 0
        %10445 = vmatprep.subr.bf16.mxu0 0
        %10446 = vmatpush1.bf16.msra.mxu0 0
        %10447 = vmatprep.subr.bf16.mxu0 0
        %10448 = vmatpush1.bf16.msra.mxu0 0
        %10449 = vmatprep.subr.bf16.mxu0 0
        %10450 = vmatpush1.bf16.msra.mxu0 0
        %10451 = vmatprep.subr.bf16.mxu0 0
        %10452 = vmatpush1.bf16.msra.mxu0 0
        %10453 = vmatprep.subr.bf16.mxu0 0
        %10454 = vmatpush1.bf16.msra.mxu0 0
        %10455 = vmatprep.subr.bf16.mxu0 0
        %10456 = vmatpush1.bf16.msra.mxu0 0
        %10457 = vmatprep.subr.bf16.mxu0 0
        %10458 = vmatpush1.bf16.msra.mxu0 0
        %10459 = vmatprep.subr.bf16.mxu0 0
        %10460 = vmatpush1.bf16.msra.mxu0 0
        %10461 = vmatprep.mubr.bf16.mxu0 0
        %10462 = vmatmul.mubr.bf16.gmra.mrb[0].mxu0 %v10406
        %v10463 = vpop.f32.mrb[0].mxu0
        %v10464 = vadd.f32 0.0, %v10463
        %v10465 = vpop.f32.mrb[0].mxu0
        %v10466 = vpop.f32.mrb[0].mxu0
        %v10467 = vadd.f32 0.0, %v10466
        %v10468 = vpop.f32.mrb[0].mxu0
        %10469 = vmatprep.mubr.bf16.mxu0 0
        %10470 = vmatmul.mubr.bf16.gmra.mrb[0].mxu0 %v10409
        %v10471 = vpop.f32.mrb[0].mxu0
        %v10472 = vadd.f32 0.0, %v10471
        %v10473 = vpop.f32.mrb[0].mxu0
        %v10474 = vpop.f32.mrb[0].mxu0
        %v10475 = vadd.f32 0.0, %v10474
        %v10476 = vpop.f32.mrb[0].mxu0
        %10477 = vmatprep.mubr.bf16.mxu0 0
        %10478 = vmatmul.mubr.bf16.gmra.mrb[0].mxu0 %v10412
        %v10479 = vpop.f32.mrb[0].mxu0
        %v10480 = vadd.f32 0.0, %v10479
        %v10481 = vpop.f32.mrb[0].mxu0
        %v10482 = vpop.f32.mrb[0].mxu0
        %v10483 = vadd.f32 0.0, %v10482
        %v10484 = vpop.f32.mrb[0].mxu0
        %10485 = vmatprep.mubr.bf16.mxu0 0
        %10486 = vmatmul.mubr.bf16.gmra.mrb[0].mxu0 %v10415
        %v10487 = vpop.f32.mrb[0].mxu0
        %v10488 = vadd.f32 0.0, %v10487
        %v10489 = vpop.f32.mrb[0].mxu0
        %v10490 = vpop.f32.mrb[0].mxu0
        %v10491 = vadd.f32 0.0, %v10490
        %v10492 = vpop.f32.mrb[0].mxu0
        %10493 = vmatprep.mubr.bf16.mxu0 0
        %10494 = vmatmul.mubr.bf16.gmra.mrb[0].mxu0 %v10418
        %v10495 = vpop.f32.mrb[0].mxu0
        %v10496 = vadd.f32 0.0, %v10495
        %v10497 = vpop.f32.mrb[0].mxu0
        %v10498 = vpop.f32.mrb[0].mxu0
        %v10499 = vadd.f32 0.0, %v10498
        %v10500 = vpop.f32.mrb[0].mxu0
        %10501 = vmatprep.mubr.bf16.mxu0 0
        %10502 = vmatmul.mubr.bf16.gmra.mrb[0].mxu0 %v10421
        %v10503 = vpop.f32.mrb[0].mxu0
        %v10504 = vadd.f32 0.0, %v10503
        %v10505 = vpop.f32.mrb[0].mxu0
        %v10506 = vpop.f32.mrb[0].mxu0
        %v10507 = vadd.f32 0.0, %v10506
        %v10508 = vpop.f32.mrb[0].mxu0
        %10509 = vmatprep.mubr.bf16.mxu0 0
        %10510 = vmatmul.mubr.bf16.gmra.mrb[0].mxu0 %v10424
        %v10511 = vpop.f32.mrb[0].mxu0
        %v10512 = vadd.f32 0.0, %v10511
        %v10513 = vpop.f32.mrb[0].mxu0
        %v10514 = vpop.f32.mrb[0].mxu0
        %v10515 = vadd.f32 0.0, %v10514
        %v10516 = vpop.f32.mrb[0].mxu0
        %10517 = vmatprep.mubr.bf16.mxu0 0
        %10518 = vmatmul.mubr.bf16.gmra.mrb[0].mxu0 %v10427
        %v10519 = vpop.f32.mrb[0].mxu0
        %v10520 = vadd.f32 0.0, %v10519
        %v10521 = vpop.f32.mrb[0].mxu0
        %v10522 = vpop.f32.mrb[0].mxu0
        %v10523 = vadd.f32 0.0, %v10522
        %v10524 = vpop.f32.mrb[0].mxu0
        %10525 = vdwg.mxu0
        %v10526 = vadd.f32 %v10275, %v10464
        %v10527 = vadd.f32 %v10276, %v10467
        %v10528 = vadd.f32 %v10277, %v10472
        %v10529 = vadd.f32 %v10278, %v10475
        %v10530 = vadd.f32 %v10279, %v10480
        %v10531 = vadd.f32 %v10280, %v10483
        %v10532 = vadd.f32 %v10281, %v10488
        %v10533 = vadd.f32 %v10282, %v10491
        %v10534 = vadd.f32 %v10283, %v10496
        %v10535 = vadd.f32 %v10284, %v10499
        %v10536 = vadd.f32 %v10285, %v10504
        %v10537 = vadd.f32 %v10286, %v10507
        %v10538 = vadd.f32 %v10287, %v10512
        %v10539 = vadd.f32 %v10288, %v10515
        %v10540 = vadd.f32 %v10289, %v10520
        %v10541 = vadd.f32 %v10290, %v10523
        %v10542 = vxor.u32 %v10526, 2147483648
        %v10543 = vxor.u32 %v10527, 2147483648
        %v10544 = vxor.u32 %v10528, 2147483648
        %v10545 = vxor.u32 %v10529, 2147483648
        %v10546 = vxor.u32 %v10530, 2147483648
        %v10547 = vxor.u32 %v10531, 2147483648
        %v10548 = vxor.u32 %v10532, 2147483648
        %v10549 = vxor.u32 %v10533, 2147483648
        %v10550 = vxor.u32 %v10534, 2147483648
        %v10551 = vxor.u32 %v10535, 2147483648
        %v10552 = vxor.u32 %v10536, 2147483648
        %v10553 = vxor.u32 %v10537, 2147483648
        %v10554 = vxor.u32 %v10538, 2147483648
        %v10555 = vxor.u32 %v10539, 2147483648
        %v10556 = vxor.u32 %v10540, 2147483648
        %v10557 = vxor.u32 %v10541, 2147483648
        %v10558 = vmul.f32 %v10542, 1.442695
        %v10559 = vpow.pop %v10558
        %v10560 = vmul.f32 %v10543, 1.442695
        %v10561 = vpow.pop %v10560
        %v10562 = vmul.f32 %v10544, 1.442695
        %v10563 = vpow.pop %v10562
        %v10564 = vmul.f32 %v10545, 1.442695
        %v10565 = vpow.pop %v10564
        %v10566 = vmul.f32 %v10546, 1.442695
        %v10567 = vpow.pop %v10566
        %v10568 = vmul.f32 %v10547, 1.442695
        %v10569 = vpow.pop %v10568
        %v10570 = vmul.f32 %v10548, 1.442695
        %v10571 = vpow.pop %v10570
        %v10572 = vmul.f32 %v10549, 1.442695
        %v10573 = vpow.pop %v10572
        %v10574 = vmul.f32 %v10550, 1.442695
        %v10575 = vpow.pop %v10574
        %v10576 = vmul.f32 %v10551, 1.442695
        %v10577 = vpow.pop %v10576
        %v10578 = vmul.f32 %v10552, 1.442695
        %v10579 = vpow.pop %v10578
        %v10580 = vmul.f32 %v10553, 1.442695
        %v10581 = vpow.pop %v10580
        %v10582 = vmul.f32 %v10554, 1.442695
        %v10583 = vpow.pop %v10582
        %v10584 = vmul.f32 %v10555, 1.442695
        %v10585 = vpow.pop %v10584
        %v10586 = vmul.f32 %v10556, 1.442695
        %v10587 = vpow.pop %v10586
        %v10588 = vmul.f32 %v10557, 1.442695
        %v10589 = vpow.pop %v10588
        %v10590 = vadd.f32 %v10559, 1.0
        %v10591 = vadd.f32 %v10561, 1.0
        %v10592 = vadd.f32 %v10563, 1.0
        %v10593 = vadd.f32 %v10565, 1.0
        %v10594 = vadd.f32 %v10567, 1.0
        %v10595 = vadd.f32 %v10569, 1.0
        %v10596 = vadd.f32 %v10571, 1.0
        %v10597 = vadd.f32 %v10573, 1.0
        %v10598 = vadd.f32 %v10575, 1.0
        %v10599 = vadd.f32 %v10577, 1.0
        %v10600 = vadd.f32 %v10579, 1.0
        %v10601 = vadd.f32 %v10581, 1.0
        %v10602 = vadd.f32 %v10583, 1.0
        %v10603 = vadd.f32 %v10585, 1.0
        %v10604 = vadd.f32 %v10587, 1.0
        %v10605 = vadd.f32 %v10589, 1.0
        %v10606 = vrcp.pop %v10590
        %v10607 = vmul.f32 1.0, %v10606
        %v10608 = vrcp.pop %v10591
        %v10609 = vmul.f32 1.0, %v10608
        %v10610 = vrcp.pop %v10592
        %v10611 = vmul.f32 1.0, %v10610
        %v10612 = vrcp.pop %v10593
        %v10613 = vmul.f32 1.0, %v10612
        %v10614 = vrcp.pop %v10594
        %v10615 = vmul.f32 1.0, %v10614
        %v10616 = vrcp.pop %v10595
        %v10617 = vmul.f32 1.0, %v10616
        %v10618 = vrcp.pop %v10596
        %v10619 = vmul.f32 1.0, %v10618
        %v10620 = vrcp.pop %v10597
        %v10621 = vmul.f32 1.0, %v10620
        %v10622 = vrcp.pop %v10598
        %v10623 = vmul.f32 1.0, %v10622
        %v10624 = vrcp.pop %v10599
        %v10625 = vmul.f32 1.0, %v10624
        %v10626 = vrcp.pop %v10600
        %v10627 = vmul.f32 1.0, %v10626
        %v10628 = vrcp.pop %v10601
        %v10629 = vmul.f32 1.0, %v10628
        %v10630 = vrcp.pop %v10602
        %v10631 = vmul.f32 1.0, %v10630
        %v10632 = vrcp.pop %v10603
        %v10633 = vmul.f32 1.0, %v10632
        %v10634 = vrcp.pop %v10604
        %v10635 = vmul.f32 1.0, %v10634
        %v10636 = vrcp.pop %v10605
        %v10637 = vmul.f32 1.0, %v10636
        %10654 = vrot.lane.b32.xlu0 %v9841, 64
        %v10655 = vpop.permute.xlu0 %10654
        %10656 = vrot.lane.b32.xlu0 %v9842, 64
        %v10657 = vpop.permute.xlu0 %10656
        %10658 = vrot.lane.b32.xlu0 %v9843, 64
        %v10659 = vpop.permute.xlu0 %10658
        %10660 = vrot.lane.b32.xlu0 %v9844, 64
        %v10661 = vpop.permute.xlu0 %10660
        %10662 = vrot.lane.b32.xlu0 %v9845, 64
        %v10663 = vpop.permute.xlu0 %10662
        %10664 = vrot.lane.b32.xlu0 %v9846, 64
        %v10665 = vpop.permute.xlu0 %10664
        %10666 = vrot.lane.b32.xlu0 %v9847, 64
        %v10667 = vpop.permute.xlu0 %10666
        %10668 = vrot.lane.b32.xlu0 %v9848, 64
        %v10669 = vpop.permute.xlu0 %10668
        %10670 = vrot.lane.b32.xlu0 %v9849, 64
        %v10671 = vpop.permute.xlu0 %10670
        %10672 = vrot.lane.b32.xlu0 %v9850, 64
        %v10673 = vpop.permute.xlu0 %10672
        %10674 = vrot.lane.b32.xlu0 %v9851, 64
        %v10675 = vpop.permute.xlu0 %10674
        %10676 = vrot.lane.b32.xlu0 %v9852, 64
        %v10677 = vpop.permute.xlu0 %10676
        %10678 = vrot.lane.b32.xlu0 %v9853, 64
        %v10679 = vpop.permute.xlu0 %10678
        %10680 = vrot.lane.b32.xlu0 %v9854, 64
        %v10681 = vpop.permute.xlu0 %10680
        %10682 = vrot.lane.b32.xlu0 %v9855, 64
        %v10683 = vpop.permute.xlu0 %10682
        %10684 = vrot.lane.b32.xlu0 %v9856, 64
        %v10685 = vpop.permute.xlu0 %10684
        %v10702 = vsub.f32 %v10526, %v10655
        %v10703 = vsub.f32 %v10527, %v10657
        %v10704 = vsub.f32 %v10528, %v10659
        %v10705 = vsub.f32 %v10529, %v10661
        %v10706 = vsub.f32 %v10530, %v10663
        %v10707 = vsub.f32 %v10531, %v10665
        %v10708 = vsub.f32 %v10532, %v10667
        %v10709 = vsub.f32 %v10533, %v10669
        %v10710 = vsub.f32 %v10534, %v10671
        %v10711 = vsub.f32 %v10535, %v10673
        %v10712 = vsub.f32 %v10536, %v10675
        %v10713 = vsub.f32 %v10537, %v10677
        %v10714 = vsub.f32 %v10538, %v10679
        %v10715 = vsub.f32 %v10539, %v10681
        %v10716 = vsub.f32 %v10540, %v10683
        %v10717 = vsub.f32 %v10541, %v10685
        %10734 = vrot.lane.b32.xlu0 %v10702, 64
        %v10735 = vpop.permute.xlu0 %10734
        %10736 = vrot.lane.b32.xlu0 %v10703, 64
        %v10737 = vpop.permute.xlu0 %10736
        %10738 = vrot.lane.b32.xlu0 %v10704, 64
        %v10739 = vpop.permute.xlu0 %10738
        %10740 = vrot.lane.b32.xlu0 %v10705, 64
        %v10741 = vpop.permute.xlu0 %10740
        %10742 = vrot.lane.b32.xlu0 %v10706, 64
        %v10743 = vpop.permute.xlu0 %10742
        %10744 = vrot.lane.b32.xlu0 %v10707, 64
        %v10745 = vpop.permute.xlu0 %10744
        %10746 = vrot.lane.b32.xlu0 %v10708, 64
        %v10747 = vpop.permute.xlu0 %10746
        %10748 = vrot.lane.b32.xlu0 %v10709, 64
        %v10749 = vpop.permute.xlu0 %10748
        %10750 = vrot.lane.b32.xlu0 %v10710, 64
        %v10751 = vpop.permute.xlu0 %10750
        %10752 = vrot.lane.b32.xlu0 %v10711, 64
        %v10753 = vpop.permute.xlu0 %10752
        %10754 = vrot.lane.b32.xlu0 %v10712, 64
        %v10755 = vpop.permute.xlu0 %10754
        %10756 = vrot.lane.b32.xlu0 %v10713, 64
        %v10757 = vpop.permute.xlu0 %10756
        %10758 = vrot.lane.b32.xlu0 %v10714, 64
        %v10759 = vpop.permute.xlu0 %10758
        %10760 = vrot.lane.b32.xlu0 %v10715, 64
        %v10761 = vpop.permute.xlu0 %10760
        %10762 = vrot.lane.b32.xlu0 %v10716, 64
        %v10763 = vpop.permute.xlu0 %10762
        %10764 = vrot.lane.b32.xlu0 %v10717, 64
        %v10765 = vpop.permute.xlu0 %10764
        %v10782 = vmul.f32 %v10607, %v10735
        %v10783 = vmul.f32 %v10609, %v10737
        %v10784 = vmul.f32 %v10611, %v10739
        %v10785 = vmul.f32 %v10613, %v10741
        %v10786 = vmul.f32 %v10615, %v10743
        %v10787 = vmul.f32 %v10617, %v10745
        %v10788 = vmul.f32 %v10619, %v10747
        %v10789 = vmul.f32 %v10621, %v10749
        %v10790 = vmul.f32 %v10623, %v10751
        %v10791 = vmul.f32 %v10625, %v10753
        %v10792 = vmul.f32 %v10627, %v10755
        %v10793 = vmul.f32 %v10629, %v10757
        %v10794 = vmul.f32 %v10631, %v10759
        %v10795 = vmul.f32 %v10633, %v10761
        %v10796 = vmul.f32 %v10635, %v10763
        %v10797 = vmul.f32 %v10637, %v10765
        %v10798 = vadd.f32 %v9841, %v10782
        %v10799 = vadd.f32 %v9842, %v10783
        %v10800 = vadd.f32 %v9843, %v10784
        %v10801 = vadd.f32 %v9844, %v10785
        %v10802 = vadd.f32 %v9845, %v10786
        %v10803 = vadd.f32 %v9846, %v10787
        %v10804 = vadd.f32 %v9847, %v10788
        %v10805 = vadd.f32 %v9848, %v10789
        %v10806 = vadd.f32 %v9849, %v10790
        %v10807 = vadd.f32 %v9850, %v10791
        %v10808 = vadd.f32 %v9851, %v10792
        %v10809 = vadd.f32 %v9852, %v10793
        %v10810 = vadd.f32 %v9853, %v10794
        %v10811 = vadd.f32 %v9854, %v10795
        %v10812 = vadd.f32 %v9855, %v10796
        %v10813 = vadd.f32 %v9856, %v10797
        %v10814 = vld [vmem:[%s8 + $0xa] sm:$0x1]
        %v10815 = vpack.c.bf16 %v10799, %v10798
        %v10816 = vpack.c.bf16 %v10801, %v10800
        %v10817 = vpack.c.bf16 %v10803, %v10802
        %v10818 = vpack.c.bf16 %v10805, %v10804
        %v10819 = vpack.c.bf16 %v10807, %v10806
        %v10820 = vpack.c.bf16 %v10809, %v10808
        %v10821 = vpack.c.bf16 %v10811, %v10810
        %v10822 = vpack.c.bf16 %v10813, %v10812
        %v10823 = vld [vmem:[%s7] sm:$0xf]
        %v10824 = vld [vmem:[%s7 + $0x4] sm:$0xf]
        %v10825 = vld [vmem:[%s7 + $0x8] sm:$0xf]
        %v10826 = vld [vmem:[%s7 + $0xc] sm:$0xf]
        %v10827 = vld [vmem:[%s7 + $0x10] sm:$0xf]
        %v10828 = vld [vmem:[%s7 + $0x14] sm:$0xf]
        %v10829 = vld [vmem:[%s7 + $0x18] sm:$0xf]
        %v10830 = vld [vmem:[%s7 + $0x1c] sm:$0xf]
        %v10831 = vlaneseq
        %v10832 = vshrl.u32 %v10831, 7
        %v10833 = vsub.s32 0, %v10832
        %v10834 = vrot.slane %v10814, %v10833
        %v10843 = vunpack.c.l.b16 %v10823
        %v10844 = vunpack.c.l.b16 %v10824
        %v10845 = vunpack.c.l.b16 %v10825
        %v10846 = vunpack.c.l.b16 %v10826
        %v10847 = vunpack.c.l.b16 %v10827
        %v10848 = vunpack.c.l.b16 %v10828
        %v10849 = vunpack.c.l.b16 %v10829
        %v10850 = vunpack.c.l.b16 %v10830
        %v10851 = vpack.c.b16 %v10844, %v10843
        %v10852 = vpack.c.b16 %v10846, %v10845
        %v10853 = vpack.c.b16 %v10848, %v10847
        %v10854 = vpack.c.b16 %v10850, %v10849
        %v10860 = vsel %vm867, %v10815, 0
        %v10863 = vsel %vm867, %v10816, 0
        %v10866 = vsel %vm867, %v10817, 0
        %v10869 = vsel %vm867, %v10818, 0
        %v10872 = vsel %vm867, %v10819, 0
        %v10875 = vsel %vm867, %v10820, 0
        %v10878 = vsel %vm867, %v10821, 0
        %v10881 = vsel %vm867, %v10822, 0
        %10883 = vmatprep.subr.bf16.mxu0 0
        %10884 = vmatpush1.bf16.msra.mxu0 %v10851
        %10885 = vmatprep.subr.bf16.mxu0 0
        %10886 = vmatpush1.bf16.msra.mxu0 %v10852
        %10887 = vmatprep.subr.bf16.mxu0 0
        %10888 = vmatpush1.bf16.msra.mxu0 %v10853
        %10889 = vmatprep.subr.bf16.mxu0 0
        %10890 = vmatpush1.bf16.msra.mxu0 %v10854
        %10891 = vmatprep.subr.bf16.mxu0 0
        %10892 = vmatpush1.bf16.msra.mxu0 0
        %10893 = vmatprep.subr.bf16.mxu0 0
        %10894 = vmatpush1.bf16.msra.mxu0 0
        %10895 = vmatprep.subr.bf16.mxu0 0
        %10896 = vmatpush1.bf16.msra.mxu0 0
        %10897 = vmatprep.subr.bf16.mxu0 0
        %10898 = vmatpush1.bf16.msra.mxu0 0
        %10899 = vmatprep.subr.bf16.mxu0 0
        %10900 = vmatpush1.bf16.msra.mxu0 0
        %10901 = vmatprep.subr.bf16.mxu0 0
        %10902 = vmatpush1.bf16.msra.mxu0 0
        %10903 = vmatprep.subr.bf16.mxu0 0
        %10904 = vmatpush1.bf16.msra.mxu0 0
        %10905 = vmatprep.subr.bf16.mxu0 0
        %10906 = vmatpush1.bf16.msra.mxu0 0
        %10907 = vmatprep.subr.bf16.mxu0 0
        %10908 = vmatpush1.bf16.msra.mxu0 0
        %10909 = vmatprep.subr.bf16.mxu0 0
        %10910 = vmatpush1.bf16.msra.mxu0 0
        %10911 = vmatprep.subr.bf16.mxu0 0
        %10912 = vmatpush1.bf16.msra.mxu0 0
        %10913 = vmatprep.subr.bf16.mxu0 0
        %10914 = vmatpush1.bf16.msra.mxu0 0
        %10915 = vmatprep.mubr.bf16.mxu0 0
        %10916 = vmatmul.mubr.bf16.gmra.mrb[0].mxu0 %v10860
        %v10917 = vpop.f32.mrb[0].mxu0
        %v10918 = vadd.f32 %v10834, %v10917
        %v10919 = vpop.f32.mrb[0].mxu0
        %v10920 = vpop.f32.mrb[0].mxu0
        %v10921 = vadd.f32 %v10834, %v10920
        %v10922 = vpop.f32.mrb[0].mxu0
        %10923 = vmatprep.mubr.bf16.mxu0 0
        %10924 = vmatmul.mubr.bf16.gmra.mrb[0].mxu0 %v10863
        %v10925 = vpop.f32.mrb[0].mxu0
        %v10926 = vadd.f32 %v10834, %v10925
        %v10927 = vpop.f32.mrb[0].mxu0
        %v10928 = vpop.f32.mrb[0].mxu0
        %v10929 = vadd.f32 %v10834, %v10928
        %v10930 = vpop.f32.mrb[0].mxu0
        %10931 = vmatprep.mubr.bf16.mxu0 0
        %10932 = vmatmul.mubr.bf16.gmra.mrb[0].mxu0 %v10866
        %v10933 = vpop.f32.mrb[0].mxu0
        %v10934 = vadd.f32 %v10834, %v10933
        %v10935 = vpop.f32.mrb[0].mxu0
        %v10936 = vpop.f32.mrb[0].mxu0
        %v10937 = vadd.f32 %v10834, %v10936
        %v10938 = vpop.f32.mrb[0].mxu0
        %10939 = vmatprep.mubr.bf16.mxu0 0
        %10940 = vmatmul.mubr.bf16.gmra.mrb[0].mxu0 %v10869
        %v10941 = vpop.f32.mrb[0].mxu0
        %v10942 = vadd.f32 %v10834, %v10941
        %v10943 = vpop.f32.mrb[0].mxu0
        %v10944 = vpop.f32.mrb[0].mxu0
        %v10945 = vadd.f32 %v10834, %v10944
        %v10946 = vpop.f32.mrb[0].mxu0
        %10947 = vmatprep.mubr.bf16.mxu0 0
        %10948 = vmatmul.mubr.bf16.gmra.mrb[0].mxu0 %v10872
        %v10949 = vpop.f32.mrb[0].mxu0
        %v10950 = vadd.f32 %v10834, %v10949
        %v10951 = vpop.f32.mrb[0].mxu0
        %v10952 = vpop.f32.mrb[0].mxu0
        %v10953 = vadd.f32 %v10834, %v10952
        %v10954 = vpop.f32.mrb[0].mxu0
        %10955 = vmatprep.mubr.bf16.mxu0 0
        %10956 = vmatmul.mubr.bf16.gmra.mrb[0].mxu0 %v10875
        %v10957 = vpop.f32.mrb[0].mxu0
        %v10958 = vadd.f32 %v10834, %v10957
        %v10959 = vpop.f32.mrb[0].mxu0
        %v10960 = vpop.f32.mrb[0].mxu0
        %v10961 = vadd.f32 %v10834, %v10960
        %v10962 = vpop.f32.mrb[0].mxu0
        %10963 = vmatprep.mubr.bf16.mxu0 0
        %10964 = vmatmul.mubr.bf16.gmra.mrb[0].mxu0 %v10878
        %v10965 = vpop.f32.mrb[0].mxu0
        %v10966 = vadd.f32 %v10834, %v10965
        %v10967 = vpop.f32.mrb[0].mxu0
        %v10968 = vpop.f32.mrb[0].mxu0
        %v10969 = vadd.f32 %v10834, %v10968
        %v10970 = vpop.f32.mrb[0].mxu0
        %10971 = vmatprep.mubr.bf16.mxu0 0
        %10972 = vmatmul.mubr.bf16.gmra.mrb[0].mxu0 %v10881
        %v10973 = vpop.f32.mrb[0].mxu0
        %v10974 = vadd.f32 %v10834, %v10973
        %v10975 = vpop.f32.mrb[0].mxu0
        %v10976 = vpop.f32.mrb[0].mxu0
        %v10977 = vadd.f32 %v10834, %v10976
        %v10978 = vpop.f32.mrb[0].mxu0
        %10979 = vdwg.mxu0
        %v10980 = vxor.u32 %v10918, 2147483648
        %v10981 = vxor.u32 %v10921, 2147483648
        %v10982 = vxor.u32 %v10926, 2147483648
        %v10983 = vxor.u32 %v10929, 2147483648
        %v10984 = vxor.u32 %v10934, 2147483648
        %v10985 = vxor.u32 %v10937, 2147483648
        %v10986 = vxor.u32 %v10942, 2147483648
        %v10987 = vxor.u32 %v10945, 2147483648
        %v10988 = vxor.u32 %v10950, 2147483648
        %v10989 = vxor.u32 %v10953, 2147483648
        %v10990 = vxor.u32 %v10958, 2147483648
        %v10991 = vxor.u32 %v10961, 2147483648
        %v10992 = vxor.u32 %v10966, 2147483648
        %v10993 = vxor.u32 %v10969, 2147483648
        %v10994 = vxor.u32 %v10974, 2147483648
        %v10995 = vxor.u32 %v10977, 2147483648
        %v10996 = vmul.f32 %v10980, 1.442695
        %v10997 = vpow.pop %v10996
        %v10998 = vmul.f32 %v10981, 1.442695
        %v10999 = vpow.pop %v10998
        %v11000 = vmul.f32 %v10982, 1.442695
        %v11001 = vpow.pop %v11000
        %v11002 = vmul.f32 %v10983, 1.442695
        %v11003 = vpow.pop %v11002
        %v11004 = vmul.f32 %v10984, 1.442695
        %v11005 = vpow.pop %v11004
        %v11006 = vmul.f32 %v10985, 1.442695
        %v11007 = vpow.pop %v11006
        %v11008 = vmul.f32 %v10986, 1.442695
        %v11009 = vpow.pop %v11008
        %v11010 = vmul.f32 %v10987, 1.442695
        %v11011 = vpow.pop %v11010
        %v11012 = vmul.f32 %v10988, 1.442695
        %v11013 = vpow.pop %v11012
        %v11014 = vmul.f32 %v10989, 1.442695
        %v11015 = vpow.pop %v11014
        %v11016 = vmul.f32 %v10990, 1.442695
        %v11017 = vpow.pop %v11016
        %v11018 = vmul.f32 %v10991, 1.442695
        %v11019 = vpow.pop %v11018
        %v11020 = vmul.f32 %v10992, 1.442695
        %v11021 = vpow.pop %v11020
        %v11022 = vmul.f32 %v10993, 1.442695
        %v11023 = vpow.pop %v11022
        %v11024 = vmul.f32 %v10994, 1.442695
        %v11025 = vpow.pop %v11024
        %v11026 = vmul.f32 %v10995, 1.442695
        %v11027 = vpow.pop %v11026
        %v11028 = vadd.f32 %v10997, 1.0
        %v11029 = vadd.f32 %v10999, 1.0
        %v11030 = vadd.f32 %v11001, 1.0
        %v11031 = vadd.f32 %v11003, 1.0
        %v11032 = vadd.f32 %v11005, 1.0
        %v11033 = vadd.f32 %v11007, 1.0
        %v11034 = vadd.f32 %v11009, 1.0
        %v11035 = vadd.f32 %v11011, 1.0
        %v11036 = vadd.f32 %v11013, 1.0
        %v11037 = vadd.f32 %v11015, 1.0
        %v11038 = vadd.f32 %v11017, 1.0
        %v11039 = vadd.f32 %v11019, 1.0
        %v11040 = vadd.f32 %v11021, 1.0
        %v11041 = vadd.f32 %v11023, 1.0
        %v11042 = vadd.f32 %v11025, 1.0
        %v11043 = vadd.f32 %v11027, 1.0
        %v11044 = vrcp.pop %v11028
        %v11045 = vmul.f32 1.0, %v11044
        %v11046 = vrcp.pop %v11029
        %v11047 = vmul.f32 1.0, %v11046
        %v11048 = vrcp.pop %v11030
        %v11049 = vmul.f32 1.0, %v11048
        %v11050 = vrcp.pop %v11031
        %v11051 = vmul.f32 1.0, %v11050
        %v11052 = vrcp.pop %v11032
        %v11053 = vmul.f32 1.0, %v11052
        %v11054 = vrcp.pop %v11033
        %v11055 = vmul.f32 1.0, %v11054
        %v11056 = vrcp.pop %v11034
        %v11057 = vmul.f32 1.0, %v11056
        %v11058 = vrcp.pop %v11035
        %v11059 = vmul.f32 1.0, %v11058
        %v11060 = vrcp.pop %v11036
        %v11061 = vmul.f32 1.0, %v11060
        %v11062 = vrcp.pop %v11037
        %v11063 = vmul.f32 1.0, %v11062
        %v11064 = vrcp.pop %v11038
        %v11065 = vmul.f32 1.0, %v11064
        %v11066 = vrcp.pop %v11039
        %v11067 = vmul.f32 1.0, %v11066
        %v11068 = vrcp.pop %v11040
        %v11069 = vmul.f32 1.0, %v11068
        %v11070 = vrcp.pop %v11041
        %v11071 = vmul.f32 1.0, %v11070
        %v11072 = vrcp.pop %v11042
        %v11073 = vmul.f32 1.0, %v11072
        %v11074 = vrcp.pop %v11043
        %v11075 = vmul.f32 1.0, %v11074
        %11092 = vrot.lane.b32.xlu0 %v10798, 64
        %v11093 = vpop.permute.xlu0 %11092
        %11094 = vrot.lane.b32.xlu0 %v10799, 64
        %v11095 = vpop.permute.xlu0 %11094
        %11096 = vrot.lane.b32.xlu0 %v10800, 64
        %v11097 = vpop.permute.xlu0 %11096
        %11098 = vrot.lane.b32.xlu0 %v10801, 64
        %v11099 = vpop.permute.xlu0 %11098
        %11100 = vrot.lane.b32.xlu0 %v10802, 64
        %v11101 = vpop.permute.xlu0 %11100
        %11102 = vrot.lane.b32.xlu0 %v10803, 64
        %v11103 = vpop.permute.xlu0 %11102
        %11104 = vrot.lane.b32.xlu0 %v10804, 64
        %v11105 = vpop.permute.xlu0 %11104
        %11106 = vrot.lane.b32.xlu0 %v10805, 64
        %v11107 = vpop.permute.xlu0 %11106
        %11108 = vrot.lane.b32.xlu0 %v10806, 64
        %v11109 = vpop.permute.xlu0 %11108
        %11110 = vrot.lane.b32.xlu0 %v10807, 64
        %v11111 = vpop.permute.xlu0 %11110
        %11112 = vrot.lane.b32.xlu0 %v10808, 64
        %v11113 = vpop.permute.xlu0 %11112
        %11114 = vrot.lane.b32.xlu0 %v10809, 64
        %v11115 = vpop.permute.xlu0 %11114
        %11116 = vrot.lane.b32.xlu0 %v10810, 64
        %v11117 = vpop.permute.xlu0 %11116
        %11118 = vrot.lane.b32.xlu0 %v10811, 64
        %v11119 = vpop.permute.xlu0 %11118
        %11120 = vrot.lane.b32.xlu0 %v10812, 64
        %v11121 = vpop.permute.xlu0 %11120
        %11122 = vrot.lane.b32.xlu0 %v10813, 64
        %v11123 = vpop.permute.xlu0 %11122
        %v11140 = vsub.f32 %v10918, %v11093
        %v11141 = vsub.f32 %v10921, %v11095
        %v11142 = vsub.f32 %v10926, %v11097
        %v11143 = vsub.f32 %v10929, %v11099
        %v11144 = vsub.f32 %v10934, %v11101
        %v11145 = vsub.f32 %v10937, %v11103
        %v11146 = vsub.f32 %v10942, %v11105
        %v11147 = vsub.f32 %v10945, %v11107
        %v11148 = vsub.f32 %v10950, %v11109
        %v11149 = vsub.f32 %v10953, %v11111
        %v11150 = vsub.f32 %v10958, %v11113
        %v11151 = vsub.f32 %v10961, %v11115
        %v11152 = vsub.f32 %v10966, %v11117
        %v11153 = vsub.f32 %v10969, %v11119
        %v11154 = vsub.f32 %v10974, %v11121
        %v11155 = vsub.f32 %v10977, %v11123
        %11172 = vrot.lane.b32.xlu0 %v11140, 64
        %v11173 = vpop.permute.xlu0 %11172
        %11174 = vrot.lane.b32.xlu0 %v11141, 64
        %v11175 = vpop.permute.xlu0 %11174
        %11176 = vrot.lane.b32.xlu0 %v11142, 64
        %v11177 = vpop.permute.xlu0 %11176
        %11178 = vrot.lane.b32.xlu0 %v11143, 64
        %v11179 = vpop.permute.xlu0 %11178
        %11180 = vrot.lane.b32.xlu0 %v11144, 64
        %v11181 = vpop.permute.xlu0 %11180
        %11182 = vrot.lane.b32.xlu0 %v11145, 64
        %v11183 = vpop.permute.xlu0 %11182
        %11184 = vrot.lane.b32.xlu0 %v11146, 64
        %v11185 = vpop.permute.xlu0 %11184
        %11186 = vrot.lane.b32.xlu0 %v11147, 64
        %v11187 = vpop.permute.xlu0 %11186
        %11188 = vrot.lane.b32.xlu0 %v11148, 64
        %v11189 = vpop.permute.xlu0 %11188
        %11190 = vrot.lane.b32.xlu0 %v11149, 64
        %v11191 = vpop.permute.xlu0 %11190
        %11192 = vrot.lane.b32.xlu0 %v11150, 64
        %v11193 = vpop.permute.xlu0 %11192
        %11194 = vrot.lane.b32.xlu0 %v11151, 64
        %v11195 = vpop.permute.xlu0 %11194
        %11196 = vrot.lane.b32.xlu0 %v11152, 64
        %v11197 = vpop.permute.xlu0 %11196
        %11198 = vrot.lane.b32.xlu0 %v11153, 64
        %v11199 = vpop.permute.xlu0 %11198
        %11200 = vrot.lane.b32.xlu0 %v11154, 64
        %v11201 = vpop.permute.xlu0 %11200
        %11202 = vrot.lane.b32.xlu0 %v11155, 64
        %v11203 = vpop.permute.xlu0 %11202
        %v11220 = vmul.f32 %v11045, %v11173
        %v11221 = vmul.f32 %v11047, %v11175
        %v11222 = vmul.f32 %v11049, %v11177
        %v11223 = vmul.f32 %v11051, %v11179
        %v11224 = vmul.f32 %v11053, %v11181
        %v11225 = vmul.f32 %v11055, %v11183
        %v11226 = vmul.f32 %v11057, %v11185
        %v11227 = vmul.f32 %v11059, %v11187
        %v11228 = vmul.f32 %v11061, %v11189
        %v11229 = vmul.f32 %v11063, %v11191
        %v11230 = vmul.f32 %v11065, %v11193
        %v11231 = vmul.f32 %v11067, %v11195
        %v11232 = vmul.f32 %v11069, %v11197
        %v11233 = vmul.f32 %v11071, %v11199
        %v11234 = vmul.f32 %v11073, %v11201
        %v11235 = vmul.f32 %v11075, %v11203
        %v11236 = vadd.f32 %v10798, %v11220
        %v11237 = vadd.f32 %v10799, %v11221
        %v11238 = vadd.f32 %v10800, %v11222
        %v11239 = vadd.f32 %v10801, %v11223
        %v11240 = vadd.f32 %v10802, %v11224
        %v11241 = vadd.f32 %v10803, %v11225
        %v11242 = vadd.f32 %v10804, %v11226
        %v11243 = vadd.f32 %v10805, %v11227
        %v11244 = vadd.f32 %v10806, %v11228
        %v11245 = vadd.f32 %v10807, %v11229
        %v11246 = vadd.f32 %v10808, %v11230
        %v11247 = vadd.f32 %v10809, %v11231
        %v11248 = vadd.f32 %v10810, %v11232
        %v11249 = vadd.f32 %v10811, %v11233
        %v11250 = vadd.f32 %v10812, %v11234
        %v11251 = vadd.f32 %v10813, %v11235
        %v11252 = vld [vmem:[%s8 + $0xb] sm:$0x1]
        %v11253 = vpack.c.bf16 %v11237, %v11236
        %v11254 = vpack.c.bf16 %v11239, %v11238
        %v11255 = vpack.c.bf16 %v11241, %v11240
        %v11256 = vpack.c.bf16 %v11243, %v11242
        %v11257 = vpack.c.bf16 %v11245, %v11244
        %v11258 = vpack.c.bf16 %v11247, %v11246
        %v11259 = vpack.c.bf16 %v11249, %v11248
        %v11260 = vpack.c.bf16 %v11251, %v11250
        %s11261 = scalar_lea.vmem %s7, 32
        %v11262 = vld [vmem:[%s11261] sm:$0xf]
        %v11263 = vld [vmem:[%s11261 + $0x4] sm:$0xf]
        %v11264 = vld [vmem:[%s11261 + $0x8] sm:$0xf]
        %v11265 = vld [vmem:[%s11261 + $0xc] sm:$0xf]
        %v11266 = vld [vmem:[%s11261 + $0x10] sm:$0xf]
        %v11267 = vld [vmem:[%s11261 + $0x14] sm:$0xf]
        %v11268 = vld [vmem:[%s11261 + $0x18] sm:$0xf]
        %v11269 = vld [vmem:[%s11261 + $0x1c] sm:$0xf]
        %v11270 = vlaneseq
        %v11271 = vshrl.u32 %v11270, 7
        %v11272 = vsub.s32 0, %v11271
        %v11273 = vrot.slane %v11252, %v11272
        %v11282 = vunpack.c.l.b16 %v11262
        %v11283 = vunpack.c.l.b16 %v11263
        %v11284 = vunpack.c.l.b16 %v11264
        %v11285 = vunpack.c.l.b16 %v11265
        %v11286 = vunpack.c.l.b16 %v11266
        %v11287 = vunpack.c.l.b16 %v11267
        %v11288 = vunpack.c.l.b16 %v11268
        %v11289 = vunpack.c.l.b16 %v11269
        %v11290 = vpack.c.b16 %v11283, %v11282
        %v11291 = vpack.c.b16 %v11285, %v11284
        %v11292 = vpack.c.b16 %v11287, %v11286
        %v11293 = vpack.c.b16 %v11289, %v11288
        %v11299 = vsel %vm867, %v11253, 0
        %v11302 = vsel %vm867, %v11254, 0
        %v11305 = vsel %vm867, %v11255, 0
        %v11308 = vsel %vm867, %v11256, 0
        %v11311 = vsel %vm867, %v11257, 0
        %v11314 = vsel %vm867, %v11258, 0
        %v11317 = vsel %vm867, %v11259, 0
        %v11320 = vsel %vm867, %v11260, 0
        %11322 = vmatprep.subr.bf16.mxu0 0
        %11323 = vmatpush1.bf16.msra.mxu0 %v11290
        %11324 = vmatprep.subr.bf16.mxu0 0
        %11325 = vmatpush1.bf16.msra.mxu0 %v11291
        %11326 = vmatprep.subr.bf16.mxu0 0
        %11327 = vmatpush1.bf16.msra.mxu0 %v11292
        %11328 = vmatprep.subr.bf16.mxu0 0
        %11329 = vmatpush1.bf16.msra.mxu0 %v11293
        %11330 = vmatprep.subr.bf16.mxu0 0
        %11331 = vmatpush1.bf16.msra.mxu0 0
        %11332 = vmatprep.subr.bf16.mxu0 0
        %11333 = vmatpush1.bf16.msra.mxu0 0
        %11334 = vmatprep.subr.bf16.mxu0 0
        %11335 = vmatpush1.bf16.msra.mxu0 0
        %11336 = vmatprep.subr.bf16.mxu0 0
        %11337 = vmatpush1.bf16.msra.mxu0 0
        %11338 = vmatprep.subr.bf16.mxu0 0
        %11339 = vmatpush1.bf16.msra.mxu0 0
        %11340 = vmatprep.subr.bf16.mxu0 0
        %11341 = vmatpush1.bf16.msra.mxu0 0
        %11342 = vmatprep.subr.bf16.mxu0 0
        %11343 = vmatpush1.bf16.msra.mxu0 0
        %11344 = vmatprep.subr.bf16.mxu0 0
        %11345 = vmatpush1.bf16.msra.mxu0 0
        %11346 = vmatprep.subr.bf16.mxu0 0
        %11347 = vmatpush1.bf16.msra.mxu0 0
        %11348 = vmatprep.subr.bf16.mxu0 0
        %11349 = vmatpush1.bf16.msra.mxu0 0
        %11350 = vmatprep.subr.bf16.mxu0 0
        %11351 = vmatpush1.bf16.msra.mxu0 0
        %11352 = vmatprep.subr.bf16.mxu0 0
        %11353 = vmatpush1.bf16.msra.mxu0 0
        %11354 = vmatprep.mubr.bf16.mxu0 0
        %11355 = vmatmul.mubr.bf16.gmra.mrb[0].mxu0 %v11299
        %v11356 = vpop.f32.mrb[0].mxu0
        %v11357 = vadd.f32 %v11273, %v11356
        %v11358 = vpop.f32.mrb[0].mxu0
        %v11359 = vpop.f32.mrb[0].mxu0
        %v11360 = vadd.f32 %v11273, %v11359
        %v11361 = vpop.f32.mrb[0].mxu0
        %11362 = vmatprep.mubr.bf16.mxu0 0
        %11363 = vmatmul.mubr.bf16.gmra.mrb[0].mxu0 %v11302
        %v11364 = vpop.f32.mrb[0].mxu0
        %v11365 = vadd.f32 %v11273, %v11364
        %v11366 = vpop.f32.mrb[0].mxu0
        %v11367 = vpop.f32.mrb[0].mxu0
        %v11368 = vadd.f32 %v11273, %v11367
        %v11369 = vpop.f32.mrb[0].mxu0
        %11370 = vmatprep.mubr.bf16.mxu0 0
        %11371 = vmatmul.mubr.bf16.gmra.mrb[0].mxu0 %v11305
        %v11372 = vpop.f32.mrb[0].mxu0
        %v11373 = vadd.f32 %v11273, %v11372
        %v11374 = vpop.f32.mrb[0].mxu0
        %v11375 = vpop.f32.mrb[0].mxu0
        %v11376 = vadd.f32 %v11273, %v11375
        %v11377 = vpop.f32.mrb[0].mxu0
        %11378 = vmatprep.mubr.bf16.mxu0 0
        %11379 = vmatmul.mubr.bf16.gmra.mrb[0].mxu0 %v11308
        %v11380 = vpop.f32.mrb[0].mxu0
        %v11381 = vadd.f32 %v11273, %v11380
        %v11382 = vpop.f32.mrb[0].mxu0
        %v11383 = vpop.f32.mrb[0].mxu0
        %v11384 = vadd.f32 %v11273, %v11383
        %v11385 = vpop.f32.mrb[0].mxu0
        %11386 = vmatprep.mubr.bf16.mxu0 0
        %11387 = vmatmul.mubr.bf16.gmra.mrb[0].mxu0 %v11311
        %v11388 = vpop.f32.mrb[0].mxu0
        %v11389 = vadd.f32 %v11273, %v11388
        %v11390 = vpop.f32.mrb[0].mxu0
        %v11391 = vpop.f32.mrb[0].mxu0
        %v11392 = vadd.f32 %v11273, %v11391
        %v11393 = vpop.f32.mrb[0].mxu0
        %11394 = vmatprep.mubr.bf16.mxu0 0
        %11395 = vmatmul.mubr.bf16.gmra.mrb[0].mxu0 %v11314
        %v11396 = vpop.f32.mrb[0].mxu0
        %v11397 = vadd.f32 %v11273, %v11396
        %v11398 = vpop.f32.mrb[0].mxu0
        %v11399 = vpop.f32.mrb[0].mxu0
        %v11400 = vadd.f32 %v11273, %v11399
        %v11401 = vpop.f32.mrb[0].mxu0
        %11402 = vmatprep.mubr.bf16.mxu0 0
        %11403 = vmatmul.mubr.bf16.gmra.mrb[0].mxu0 %v11317
        %v11404 = vpop.f32.mrb[0].mxu0
        %v11405 = vadd.f32 %v11273, %v11404
        %v11406 = vpop.f32.mrb[0].mxu0
        %v11407 = vpop.f32.mrb[0].mxu0
        %v11408 = vadd.f32 %v11273, %v11407
        %v11409 = vpop.f32.mrb[0].mxu0
        %11410 = vmatprep.mubr.bf16.mxu0 0
        %11411 = vmatmul.mubr.bf16.gmra.mrb[0].mxu0 %v11320
        %v11412 = vpop.f32.mrb[0].mxu0
        %v11413 = vadd.f32 %v11273, %v11412
        %v11414 = vpop.f32.mrb[0].mxu0
        %v11415 = vpop.f32.mrb[0].mxu0
        %v11416 = vadd.f32 %v11273, %v11415
        %v11417 = vpop.f32.mrb[0].mxu0
        %11418 = vdwg.mxu0
        %v11419 = vxor.u32 %v11357, 2147483648
        %v11420 = vxor.u32 %v11360, 2147483648
        %v11421 = vxor.u32 %v11365, 2147483648
        %v11422 = vxor.u32 %v11368, 2147483648
        %v11423 = vxor.u32 %v11373, 2147483648
        %v11424 = vxor.u32 %v11376, 2147483648
        %v11425 = vxor.u32 %v11381, 2147483648
        %v11426 = vxor.u32 %v11384, 2147483648
        %v11427 = vxor.u32 %v11389, 2147483648
        %v11428 = vxor.u32 %v11392, 2147483648
        %v11429 = vxor.u32 %v11397, 2147483648
        %v11430 = vxor.u32 %v11400, 2147483648
        %v11431 = vxor.u32 %v11405, 2147483648
        %v11432 = vxor.u32 %v11408, 2147483648
        %v11433 = vxor.u32 %v11413, 2147483648
        %v11434 = vxor.u32 %v11416, 2147483648
        %v11435 = vmul.f32 %v11419, 1.442695
        %v11436 = vpow.pop %v11435
        %v11437 = vmul.f32 %v11420, 1.442695
        %v11438 = vpow.pop %v11437
        %v11439 = vmul.f32 %v11421, 1.442695
        %v11440 = vpow.pop %v11439
        %v11441 = vmul.f32 %v11422, 1.442695
        %v11442 = vpow.pop %v11441
        %v11443 = vmul.f32 %v11423, 1.442695
        %v11444 = vpow.pop %v11443
        %v11445 = vmul.f32 %v11424, 1.442695
        %v11446 = vpow.pop %v11445
        %v11447 = vmul.f32 %v11425, 1.442695
        %v11448 = vpow.pop %v11447
        %v11449 = vmul.f32 %v11426, 1.442695
        %v11450 = vpow.pop %v11449
        %v11451 = vmul.f32 %v11427, 1.442695
        %v11452 = vpow.pop %v11451
        %v11453 = vmul.f32 %v11428, 1.442695
        %v11454 = vpow.pop %v11453
        %v11455 = vmul.f32 %v11429, 1.442695
        %v11456 = vpow.pop %v11455
        %v11457 = vmul.f32 %v11430, 1.442695
        %v11458 = vpow.pop %v11457
        %v11459 = vmul.f32 %v11431, 1.442695
        %v11460 = vpow.pop %v11459
        %v11461 = vmul.f32 %v11432, 1.442695
        %v11462 = vpow.pop %v11461
        %v11463 = vmul.f32 %v11433, 1.442695
        %v11464 = vpow.pop %v11463
        %v11465 = vmul.f32 %v11434, 1.442695
        %v11466 = vpow.pop %v11465
        %v11467 = vadd.f32 %v11436, 1.0
        %v11468 = vadd.f32 %v11438, 1.0
        %v11469 = vadd.f32 %v11440, 1.0
        %v11470 = vadd.f32 %v11442, 1.0
        %v11471 = vadd.f32 %v11444, 1.0
        %v11472 = vadd.f32 %v11446, 1.0
        %v11473 = vadd.f32 %v11448, 1.0
        %v11474 = vadd.f32 %v11450, 1.0
        %v11475 = vadd.f32 %v11452, 1.0
        %v11476 = vadd.f32 %v11454, 1.0
        %v11477 = vadd.f32 %v11456, 1.0
        %v11478 = vadd.f32 %v11458, 1.0
        %v11479 = vadd.f32 %v11460, 1.0
        %v11480 = vadd.f32 %v11462, 1.0
        %v11481 = vadd.f32 %v11464, 1.0
        %v11482 = vadd.f32 %v11466, 1.0
        %v11483 = vrcp.pop %v11467
        %v11484 = vmul.f32 1.0, %v11483
        %v11485 = vrcp.pop %v11468
        %v11486 = vmul.f32 1.0, %v11485
        %v11487 = vrcp.pop %v11469
        %v11488 = vmul.f32 1.0, %v11487
        %v11489 = vrcp.pop %v11470
        %v11490 = vmul.f32 1.0, %v11489
        %v11491 = vrcp.pop %v11471
        %v11492 = vmul.f32 1.0, %v11491
        %v11493 = vrcp.pop %v11472
        %v11494 = vmul.f32 1.0, %v11493
        %v11495 = vrcp.pop %v11473
        %v11496 = vmul.f32 1.0, %v11495
        %v11497 = vrcp.pop %v11474
        %v11498 = vmul.f32 1.0, %v11497
        %v11499 = vrcp.pop %v11475
        %v11500 = vmul.f32 1.0, %v11499
        %v11501 = vrcp.pop %v11476
        %v11502 = vmul.f32 1.0, %v11501
        %v11503 = vrcp.pop %v11477
        %v11504 = vmul.f32 1.0, %v11503
        %v11505 = vrcp.pop %v11478
        %v11506 = vmul.f32 1.0, %v11505
        %v11507 = vrcp.pop %v11479
        %v11508 = vmul.f32 1.0, %v11507
        %v11509 = vrcp.pop %v11480
        %v11510 = vmul.f32 1.0, %v11509
        %v11511 = vrcp.pop %v11481
        %v11512 = vmul.f32 1.0, %v11511
        %v11513 = vrcp.pop %v11482
        %v11514 = vmul.f32 1.0, %v11513
        %11531 = vrot.lane.b32.xlu0 %v11236, 64
        %v11532 = vpop.permute.xlu0 %11531
        %11533 = vrot.lane.b32.xlu0 %v11237, 64
        %v11534 = vpop.permute.xlu0 %11533
        %11535 = vrot.lane.b32.xlu0 %v11238, 64
        %v11536 = vpop.permute.xlu0 %11535
        %11537 = vrot.lane.b32.xlu0 %v11239, 64
        %v11538 = vpop.permute.xlu0 %11537
        %11539 = vrot.lane.b32.xlu0 %v11240, 64
        %v11540 = vpop.permute.xlu0 %11539
        %11541 = vrot.lane.b32.xlu0 %v11241, 64
        %v11542 = vpop.permute.xlu0 %11541
        %11543 = vrot.lane.b32.xlu0 %v11242, 64
        %v11544 = vpop.permute.xlu0 %11543
        %11545 = vrot.lane.b32.xlu0 %v11243, 64
        %v11546 = vpop.permute.xlu0 %11545
        %11547 = vrot.lane.b32.xlu0 %v11244, 64
        %v11548 = vpop.permute.xlu0 %11547
        %11549 = vrot.lane.b32.xlu0 %v11245, 64
        %v11550 = vpop.permute.xlu0 %11549
        %11551 = vrot.lane.b32.xlu0 %v11246, 64
        %v11552 = vpop.permute.xlu0 %11551
        %11553 = vrot.lane.b32.xlu0 %v11247, 64
        %v11554 = vpop.permute.xlu0 %11553
        %11555 = vrot.lane.b32.xlu0 %v11248, 64
        %v11556 = vpop.permute.xlu0 %11555
        %11557 = vrot.lane.b32.xlu0 %v11249, 64
        %v11558 = vpop.permute.xlu0 %11557
        %11559 = vrot.lane.b32.xlu0 %v11250, 64
        %v11560 = vpop.permute.xlu0 %11559
        %11561 = vrot.lane.b32.xlu0 %v11251, 64
        %v11562 = vpop.permute.xlu0 %11561
        %v11579 = vsub.f32 %v11357, %v11532
        %v11580 = vsub.f32 %v11360, %v11534
        %v11581 = vsub.f32 %v11365, %v11536
        %v11582 = vsub.f32 %v11368, %v11538
        %v11583 = vsub.f32 %v11373, %v11540
        %v11584 = vsub.f32 %v11376, %v11542
        %v11585 = vsub.f32 %v11381, %v11544
        %v11586 = vsub.f32 %v11384, %v11546
        %v11587 = vsub.f32 %v11389, %v11548
        %v11588 = vsub.f32 %v11392, %v11550
        %v11589 = vsub.f32 %v11397, %v11552
        %v11590 = vsub.f32 %v11400, %v11554
        %v11591 = vsub.f32 %v11405, %v11556
        %v11592 = vsub.f32 %v11408, %v11558
        %v11593 = vsub.f32 %v11413, %v11560
        %v11594 = vsub.f32 %v11416, %v11562
        %11611 = vrot.lane.b32.xlu0 %v11579, 64
        %v11612 = vpop.permute.xlu0 %11611
        %11613 = vrot.lane.b32.xlu0 %v11580, 64
        %v11614 = vpop.permute.xlu0 %11613
        %11615 = vrot.lane.b32.xlu0 %v11581, 64
        %v11616 = vpop.permute.xlu0 %11615
        %11617 = vrot.lane.b32.xlu0 %v11582, 64
        %v11618 = vpop.permute.xlu0 %11617
        %11619 = vrot.lane.b32.xlu0 %v11583, 64
        %v11620 = vpop.permute.xlu0 %11619
        %11621 = vrot.lane.b32.xlu0 %v11584, 64
        %v11622 = vpop.permute.xlu0 %11621
        %11623 = vrot.lane.b32.xlu0 %v11585, 64
        %v11624 = vpop.permute.xlu0 %11623
        %11625 = vrot.lane.b32.xlu0 %v11586, 64
        %v11626 = vpop.permute.xlu0 %11625
        %11627 = vrot.lane.b32.xlu0 %v11587, 64
        %v11628 = vpop.permute.xlu0 %11627
        %11629 = vrot.lane.b32.xlu0 %v11588, 64
        %v11630 = vpop.permute.xlu0 %11629
        %11631 = vrot.lane.b32.xlu0 %v11589, 64
        %v11632 = vpop.permute.xlu0 %11631
        %11633 = vrot.lane.b32.xlu0 %v11590, 64
        %v11634 = vpop.permute.xlu0 %11633
        %11635 = vrot.lane.b32.xlu0 %v11591, 64
        %v11636 = vpop.permute.xlu0 %11635
        %11637 = vrot.lane.b32.xlu0 %v11592, 64
        %v11638 = vpop.permute.xlu0 %11637
        %11639 = vrot.lane.b32.xlu0 %v11593, 64
        %v11640 = vpop.permute.xlu0 %11639
        %11641 = vrot.lane.b32.xlu0 %v11594, 64
        %v11642 = vpop.permute.xlu0 %11641
        %v11659 = vmul.f32 %v11484, %v11612
        %v11660 = vmul.f32 %v11486, %v11614
        %v11661 = vmul.f32 %v11488, %v11616
        %v11662 = vmul.f32 %v11490, %v11618
        %v11663 = vmul.f32 %v11492, %v11620
        %v11664 = vmul.f32 %v11494, %v11622
        %v11665 = vmul.f32 %v11496, %v11624
        %v11666 = vmul.f32 %v11498, %v11626
        %v11667 = vmul.f32 %v11500, %v11628
        %v11668 = vmul.f32 %v11502, %v11630
        %v11669 = vmul.f32 %v11504, %v11632
        %v11670 = vmul.f32 %v11506, %v11634
        %v11671 = vmul.f32 %v11508, %v11636
        %v11672 = vmul.f32 %v11510, %v11638
        %v11673 = vmul.f32 %v11512, %v11640
        %v11674 = vmul.f32 %v11514, %v11642
        %v11675 = vadd.f32 %v11236, %v11659
        %v11676 = vadd.f32 %v11237, %v11660
        %v11677 = vadd.f32 %v11238, %v11661
        %v11678 = vadd.f32 %v11239, %v11662
        %v11679 = vadd.f32 %v11240, %v11663
        %v11680 = vadd.f32 %v11241, %v11664
        %v11681 = vadd.f32 %v11242, %v11665
        %v11682 = vadd.f32 %v11243, %v11666
        %v11683 = vadd.f32 %v11244, %v11667
        %v11684 = vadd.f32 %v11245, %v11668
        %v11685 = vadd.f32 %v11246, %v11669
        %v11686 = vadd.f32 %v11247, %v11670
        %v11687 = vadd.f32 %v11248, %v11671
        %v11688 = vadd.f32 %v11249, %v11672
        %v11689 = vadd.f32 %v11250, %v11673
        %v11690 = vadd.f32 %v11251, %v11674
        %11691 = vxpose.xlu0.b32.start [1/16] %v11675, 128
        %11692 = vxpose.xlu0.b32.cont [2/16] %v11676, 128
        %11693 = vxpose.xlu0.b32.cont [3/16] %v11677, 128
        %11694 = vxpose.xlu0.b32.cont [4/16] %v11678, 128
        %11695 = vxpose.xlu0.b32.cont [5/16] %v11679, 128
        %11696 = vxpose.xlu0.b32.cont [6/16] %v11680, 128
        %11697 = vxpose.xlu0.b32.cont [7/16] %v11681, 128
        %11698 = vxpose.xlu0.b32.cont [8/16] %v11682, 128
        %11699 = vxpose.xlu0.b32.cont [9/16] 0.0, 128
        %11700 = vxpose.xlu0.b32.cont [10/16] 0.0, 128
        %11701 = vxpose.xlu0.b32.cont [11/16] 0.0, 128
        %11702 = vxpose.xlu0.b32.cont [12/16] 0.0, 128
        %11703 = vxpose.xlu0.b32.cont [13/16] 0.0, 128
        %11704 = vxpose.xlu0.b32.cont [14/16] 0.0, 128
        %11705 = vxpose.xlu0.b32.cont [15/16] 0.0, 128
        %11706 = vxpose.xlu0.b32.end [16/16] 0.0, 128
        %v11707 = vpop.trf.xlu0
        %v11708 = vpop.trf.xlu0
        %v11709 = vpop.trf.xlu0
        %v11710 = vpop.trf.xlu0
        %v11711 = vpop.trf.xlu0
        %v11712 = vpop.trf.xlu0
        %v11713 = vpop.trf.xlu0
        %v11714 = vpop.trf.xlu0
        %v11715 = vpop.trf.xlu0
        %v11716 = vpop.trf.xlu0
        %v11717 = vpop.trf.xlu0
        %v11718 = vpop.trf.xlu0
        %v11719 = vpop.trf.xlu0
        %v11720 = vpop.trf.xlu0
        %v11721 = vpop.trf.xlu0
        %v11722 = vpop.trf.xlu0
        %11723 = vst.msk [vmem:[%s374] sm:$0xff] %vm867, %v11707
        %11724 = vst.msk [vmem:[%s374 + $0x8] sm:$0xff] %vm867, %v11708
        %11725 = vst.msk [vmem:[%s374 + $0x10] sm:$0xff] %vm867, %v11709
        %11726 = vst.msk [vmem:[%s374 + $0x18] sm:$0xff] %vm867, %v11710
        %11727 = vst.msk [vmem:[%s381] sm:$0xff] %vm867, %v11711
        %11728 = vst.msk [vmem:[%s381 + $0x8] sm:$0xff] %vm867, %v11712
        %11729 = vst.msk [vmem:[%s381 + $0x10] sm:$0xff] %vm867, %v11713
        %11730 = vst.msk [vmem:[%s381 + $0x18] sm:$0xff] %vm867, %v11714
        %11731 = vxpose.xlu0.b32.start [1/16] %v11683, 128
        %11732 = vxpose.xlu0.b32.cont [2/16] %v11684, 128
        %11733 = vxpose.xlu0.b32.cont [3/16] %v11685, 128
        %11734 = vxpose.xlu0.b32.cont [4/16] %v11686, 128
        %11735 = vxpose.xlu0.b32.cont [5/16] %v11687, 128
        %11736 = vxpose.xlu0.b32.cont [6/16] %v11688, 128
        %11737 = vxpose.xlu0.b32.cont [7/16] %v11689, 128
        %11738 = vxpose.xlu0.b32.cont [8/16] %v11690, 128
        %11739 = vxpose.xlu0.b32.cont [9/16] 0.0, 128
        %11740 = vxpose.xlu0.b32.cont [10/16] 0.0, 128
        %11741 = vxpose.xlu0.b32.cont [11/16] 0.0, 128
        %11742 = vxpose.xlu0.b32.cont [12/16] 0.0, 128
        %11743 = vxpose.xlu0.b32.cont [13/16] 0.0, 128
        %11744 = vxpose.xlu0.b32.cont [14/16] 0.0, 128
        %11745 = vxpose.xlu0.b32.cont [15/16] 0.0, 128
        %11746 = vxpose.xlu0.b32.end [16/16] 0.0, 128
        %v11747 = vpop.trf.xlu0
        %v11748 = vpop.trf.xlu0
        %v11749 = vpop.trf.xlu0
        %v11750 = vpop.trf.xlu0
        %v11751 = vpop.trf.xlu0
        %v11752 = vpop.trf.xlu0
        %v11753 = vpop.trf.xlu0
        %v11754 = vpop.trf.xlu0
        %v11755 = vpop.trf.xlu0
        %v11756 = vpop.trf.xlu0
        %v11757 = vpop.trf.xlu0
        %v11758 = vpop.trf.xlu0
        %v11759 = vpop.trf.xlu0
        %v11760 = vpop.trf.xlu0
        %v11761 = vpop.trf.xlu0
        %v11762 = vpop.trf.xlu0
        %s11763 = scalar_lea.vmem %s374, 32 [#allocation6]
        %11764 = vst.msk [vmem:[%s11763] sm:$0xff] %vm867, %v11747
        %11765 = vst.msk [vmem:[%s11763 + $0x8] sm:$0xff] %vm867, %v11748
        %11766 = vst.msk [vmem:[%s11763 + $0x10] sm:$0xff] %vm867, %v11749
        %11767 = vst.msk [vmem:[%s11763 + $0x18] sm:$0xff] %vm867, %v11750
        %s11768 = scalar_lea.vmem %s381, 32 [#allocation7]
        %11769 = vst.msk [vmem:[%s11768] sm:$0xff] %vm867, %v11751
        %11770 = vst.msk [vmem:[%s11768 + $0x8] sm:$0xff] %vm867, %v11752
        %11771 = vst.msk [vmem:[%s11768 + $0x10] sm:$0xff] %vm867, %v11753
        %11772 = vst.msk [vmem:[%s11768 + $0x18] sm:$0xff] %vm867, %v11754
        %s11773 = sand.u32 %s231, 1
        %s11774 = scalar_lea.sflag [#allocation5], %s11773
        %s11775 = sand.u32 %s231, 1
        %s11776 = smul.addr %s11775, 64
        %s11777 = scalar_lea.vmem [#allocation6], %s11776
        %s11778 = sand.u32 %s257, 1
        %s11779 = scalar_lea.sflag [#allocation8], %s11778
        %s11780 = sand.u32 %s257, 1
        %s11781 = smul.addr %s11780, 64
        %s11782 = scalar_lea.vmem [#allocation7], %s11781
        // Predicated region
        $region61: #{text_encoder.1} parent=55 // pred_check
          %p11783 = pneg %p241
        $region62: #{text_encoder.1} parent=55 // pred_check_branch
          %11785 = sbr.rel (%p11783) target = $region64
        $region63: #{text_encoder.1} parent=55 // pred_region
          %s11786 = smul.u32 2, %s29
          %s11788 = ssub.s32 1024, 1024
          %11789 = vsyncadd %s11774, %s11788
          %s11790 = smul.addr %s11786, 4
          %s11791 = smul.addr %s11790, 128
          %s11792 = scalar_lea.hbm %s9, %s11791
          %s11793 = sshll.u32 %s11777, 4
          %s11794 = int_to_ptr.vmem [resolvable:$true] %s11793
          %11799 = dma.vmem_to_hbm [thread:$0]  %s11794, 1024, %s11792, %s11774, 128, 128, 8
        $region64: #{text_encoder.1} parent=55 // pred_fallthru
          _
        // Predicated region
        $region65: #{text_encoder.1} parent=55 // pred_check
          %p11800 = pneg %p267
        $region66: #{text_encoder.1} parent=55 // pred_check_branch
          %11802 = sbr.rel (%p11800) target = $region68
        $region67: #{text_encoder.1} parent=55 // pred_region
          %s11803 = smul.u32 2, %s29
          %s11805 = ssub.s32 1024, 1024
          %11806 = vsyncadd %s11779, %s11805
          %s11807 = smul.addr %s11803, 4
          %s11808 = smul.addr %s11807, 128
          %s11809 = scalar_lea.hbm %s10, %s11808
          %s11810 = sshll.u32 %s11782, 4
          %s11811 = int_to_ptr.vmem [resolvable:$true] %s11810
          %11816 = dma.vmem_to_hbm [thread:$0]  %s11811, 1024, %s11809, %s11779, 128, 128, 8
        $region68: #{text_encoder.1} parent=55 // pred_fallthru
          _
      $region56: #{text_encoder.1} parent=5 // pred_fallthru
        _
      %p11817 = scmp.le.s32.totalorder 2, %s24
      // Predicated region
      $region69: #{text_encoder.1} parent=5 // pred_check
        %p11818 = pneg %p11817
      $region70: #{text_encoder.1} parent=5 // pred_check_branch
        %11820 = sbr.rel (%p11818) target = $region72
      $region71: #{text_encoder.1} parent=5 // pred_region
        %s11821 = ssub.s32 %s24, 2
        // Predicated region
        $region73: #{text_encoder.1} parent=71 // pred_check
          %p11822 = pneg %p247
        $region74: #{text_encoder.1} parent=71 // pred_check_branch
          %11824 = sbr.rel (%p11822) target = $region76
        $region75: #{text_encoder.1} parent=71 // pred_region
          %s11825 = sand.u32 %s232, 1
          %s11826 = scalar_lea.sflag [#allocation5], %s11825
          %s11827 = sand.u32 %s232, 1
          %s11828 = smul.addr %s11827, 64
          %s11829 = scalar_lea.vmem [#allocation6], %s11828
          %11830 = dma.done %s11826, 1024
        $region76: #{text_encoder.1} parent=71 // pred_fallthru
          _
        // Predicated region
        $region77: #{text_encoder.1} parent=71 // pred_check
          %p11831 = pneg %p273
        $region78: #{text_encoder.1} parent=71 // pred_check_branch
          %11833 = sbr.rel (%p11831) target = $region80
        $region79: #{text_encoder.1} parent=71 // pred_region
          %s11834 = sand.u32 %s258, 1
          %s11835 = scalar_lea.sflag [#allocation8], %s11834
          %s11836 = sand.u32 %s258, 1
          %s11837 = smul.addr %s11836, 64
          %s11838 = scalar_lea.vmem [#allocation7], %s11837
          %11839 = dma.done %s11835, 1024
        $region80: #{text_encoder.1} parent=71 // pred_fallthru
          _
      $region72: #{text_encoder.1} parent=5 // pred_fallthru
        _
    $region6: #{text_encoder.1} parent=1 // loop_footer
      %s28 = sadd.s32 1, %s24
    $region7: #{text_encoder.1} parent=1 // loop_footer_branch
      %23 = sbr.rel target = $region3
    $region8: #{text_encoder.1} parent=1 // loop_exit
      _
    %11840 = vsyncpa [#allocation4], 1
    %s11841 = scalar_lea.sflag [#allocation4], 1
    %11842 = vsyncpa %s11841, 1
    %11843 = vsyncpa [#allocation5], 1
    %s11844 = scalar_lea.sflag [#allocation5], 1
    %11845 = vsyncpa %s11844, 1
    %11846 = vsyncpa [#allocation8], 1
    %s11847 = scalar_lea.sflag [#allocation8], 1
    %11848 = vsyncpa %s11847, 1

</llo_original>
